<compile_context>
chip_gen: v5e
topology: v5e:2x2
jax: 0.10.0
libtpu: 0.0.40
codegen_flags: <defaults>
</compile_context>

<pallas_src>
import jax
import jax.numpy as jnp
from jax.experimental import pallas as pl
from jax.experimental.pallas import tpu as pltpu

LPAD = 128   # left zero-pad of the flattened spatial axis (lane-aligned centre store)
RPAD = 32    # right zero-pad (>= max positive tap shift W + 1)


# ----------------------------------------------------------------------------
# Parameters (PyTorch-like layouts) and one-time conversion to kernel layouts.
# ----------------------------------------------------------------------------
def init_params(key, cin=4, cmid=32, cout=32, hw=256, attn_dim=4,
                n_experts=32, hidden=32, e_out=8, final_out=16):
    ks = jax.random.split(key, 16)
    n = lambda k, shape, s=0.1: s * jax.random.normal(k, shape, jnp.float32)
    return dict(
        conv1_w=n(ks[0], (cmid, cin, 3, 3)), conv1_b=n(ks[1], (cmid,)),
        conv2_w=n(ks[2], (cout, cmid, 3, 3)), conv2_b=n(ks[3], (cout,)),
        wq=n(ks[4], (1, attn_dim)), bq=n(ks[5], (1, attn_dim)),
        wk=n(ks[6], (1, attn_dim)), bk=n(ks[7], (1, attn_dim)),
        wv=n(ks[8], (1, attn_dim)), bv=n(ks[9], (1, attn_dim)),
        wo=n(ks[10], (attn_dim, attn_dim)), bo=n(ks[11], (1, attn_dim)),
        e_w1f=n(ks[12], (n_experts, hw, hidden)),
        e_w1a=n(ks[13], (n_experts, attn_dim, hidden)),
        e_b1=jnp.zeros((n_experts, 1, hidden), jnp.float32),
        e_w2=n(ks[14], (n_experts, hidden, e_out)),
        e_b2=jnp.zeros((n_experts, 1, e_out), jnp.float32),
        wf=n(ks[15], (n_experts * e_out, final_out)),
        bf=jnp.zeros((1, final_out), jnp.float32),
    )


def prepare_kernel_params(p):
    """One-time re-layout of the weights into the shapes the fused kernel wants."""
    cmid, cin = p["conv1_w"].shape[0], p["conv1_w"].shape[1]
    cout = p["conv2_w"].shape[0]
    return dict(
        # conv weights packed along the contraction dim: col = tap*Cin + ci
        conv1_wp=jnp.transpose(p["conv1_w"], (0, 2, 3, 1)).reshape(cmid, 9 * cin),
        conv1_b=p["conv1_b"].reshape(cmid, 1),
        conv2_wp=jnp.transpose(p["conv2_w"], (0, 2, 3, 1)).reshape(cout, 9 * cmid),
        conv2_b=p["conv2_b"].reshape(cout, 1),
        # attention (tiny)
        wq=p["wq"], bq=p["bq"], wk=p["wk"], bk=p["bk"], wv=p["wv"], bv=p["bv"],
        wo=p["wo"], bo=p["bo"],
        # expert first layer: feature + attention weights concatenated along the
        # contraction dim (HW + A), stored bf16 (kept in HBM, manually DMA'd).
        e_w1cat=jnp.concatenate(
            [jnp.transpose(p["e_w1f"], (0, 2, 1)),      # (E, hidden, HW)
             jnp.transpose(p["e_w1a"], (0, 2, 1))],     # (E, hidden, A)
            axis=-1).astype(jnp.bfloat16),               # (E, hidden, HW+A)
        e_b1=p["e_b1"],                                  # (E, 1, hidden)
        e_w2T=jnp.transpose(p["e_w2"], (0, 2, 1)),       # (E, e_out, hidden)
        e_b2=p["e_b2"],                                  # (E, 1, e_out)
        # final Linear kept in its original (E*e_out, FOUT) layout
        wf=p["wf"], bf=p["bf"],
    )


# ----------------------------------------------------------------------------
# Fused forward: one pallas_call, no grid, everything resident in VMEM.
# ----------------------------------------------------------------------------
def prototype1_forward(x, kp):
    B, Cin, H, W = x.shape
    HW = H * W
    N = B * HW                                # batch folded into the lane (N) dim
    Cmid = kp["conv1_wp"].shape[0]
    Cout = kp["conv2_wp"].shape[0]
    A = kp["wq"].shape[1]                     # attention output dim per channel
    E, HID, DCAT = kp["e_w1cat"].shape        # experts, hidden, HW+A
    EOUT = kp["e_w2T"].shape[1]
    FOUT = kp["wf"].shape[1]
    PW = LPAD + N + RPAD                      # padded flattened-spatial width

    assert E == Cout, "model structure requires one expert per conv channel"
    assert DCAT == HW + A
    # The shifted-slab convolutions rely on the pads covering the max tap shift.
    assert LPAD >= W + 1 and RPAD >= W + 1, "LPAD/RPAD must cover the W+1 tap shift"

    # Channel-major, flattened, zero-padded input: (Cin, LPAD + B*HW + RPAD).
    x2d = jnp.pad(jnp.transpose(x, (1, 0, 2, 3)).reshape(Cin, N),
                  ((0, 0), (LPAD, RPAD)))

    # Per-tap validity masks over the flattened (b, y, x) axis: (9, 1, N).
    qidx = jnp.arange(N, dtype=jnp.int32)
    pp = qidx % HW
    yy = pp // W
    xx = pp % W
    mlist = []
    for ky in range(3):
        for kx in range(3):
            dy, dx = ky - 1, kx - 1
            mlist.append((yy + dy >= 0) & (yy + dy < H) &
                         (xx + dx >= 0) & (xx + dx < W))
    masks = jnp.stack(mlist).astype(jnp.float32).reshape(9, 1, N)

    def kernel(x_ref, m_ref, w1_ref, b1_ref, w2_ref, b2_ref,
               wq_ref, bq_ref, wk_ref, bk_ref, wv_ref, bv_ref, wo_ref, bo_ref,
               ew1_hbm, eb1_ref, ew2_ref, eb2_ref, wf_ref, bf_ref,
               o_ref, pad_scr, slab1_scr, slab2_scr, ew1_vmem, dma_sem):
        # Kick off the big (~0.5 MB) expert-weight DMA now so it overlaps the
        # whole conv + attention phase; waited on just before the expert einsum.
        w1_copy = pltpu.make_async_copy(ew1_hbm, ew1_vmem, dma_sem)
        w1_copy.start()

        # ---------------- CNNBlock conv1: packed-K im2col, one MXU dot -------
        for tap in range(9):
            d = (tap // 3 - 1) * W + (tap % 3 - 1)
            slab1_scr[tap * Cin:(tap + 1) * Cin, :] = (
                x_ref[:, LPAD + d: LPAD + d + N] * m_ref[tap])
        feat1 = jnp.maximum(
            jnp.dot(w1_ref[...], slab1_scr[...],
                    preferred_element_type=jnp.float32) + b1_ref[...], 0.0)  # (Cmid,N)

        # ---------------- CNNBlock conv2: packed-K im2col, one MXU dot -------
        # only the pad columns are zeroed; the centre is overwritten below
        pad_scr[:, :LPAD] = jnp.zeros((Cmid, LPAD), jnp.float32)
        pad_scr[:, LPAD + N:] = jnp.zeros((Cmid, RPAD), jnp.float32)
        pad_scr[:, LPAD: LPAD + N] = feat1
        for tap in range(9):
            d = (tap // 3 - 1) * W + (tap % 3 - 1)
            slab2_scr[tap * Cmid:(tap + 1) * Cmid, :] = (
                pad_scr[:, LPAD + d: LPAD + d + N] * m_ref[tap])
        feat2 = jnp.maximum(
            jnp.dot(w2_ref[...], slab2_scr[...],
                    preferred_element_type=jnp.float32) + b2_ref[...], 0.0)  # (Cout,B*HW)

        # -------- AttentionBlock: batched over B, keys on lanes, loop heads --
        f3 = feat2.reshape(Cout, B, HW)                     # expert/channel-major
        tB = jnp.transpose(jnp.mean(f3, axis=2))            # (B, Cout) tokens
        q = tB[:, :, None] * wq_ref[...].reshape(1, 1, A) + bq_ref[...].reshape(1, 1, A)
        k = tB[:, :, None] * wk_ref[...].reshape(1, 1, A) + bk_ref[...].reshape(1, 1, A)
        v = tB[:, :, None] * wv_ref[...].reshape(1, 1, A) + bv_ref[...].reshape(1, 1, A)
        ctx = []
        for hd in range(A):                                  # 4 heads, head_dim=1
            s = q[:, :, hd][:, :, None] * k[:, :, hd][:, None, :]   # (B, Cq, Ck)
            s = s - jnp.max(s, axis=-1, keepdims=True)
            e = jnp.exp(s)
            p_att = e / jnp.sum(e, axis=-1, keepdims=True)           # softmax over keys (lanes)
            ctx.append(jnp.sum(p_att * v[:, :, hd][:, None, :], axis=-1))  # (B, Cout)
        ctx = jnp.stack(ctx, axis=-1)                        # (B, Cout, A)
        attn = (jnp.dot(ctx.reshape(B * Cout, A), wo_ref[...],
                        preferred_element_type=jnp.float32) + bo_ref[...])
        attnE = jnp.transpose(attn.reshape(B, Cout, A), (1, 0, 2))   # (E, B, A)

        # -------- 32 FC experts (one fused K=HW+A einsum) + final linear -----
        featcat = jnp.concatenate(
            [f3.astype(jnp.bfloat16), attnE.astype(jnp.bfloat16)], axis=-1)  # (E,B,HW+A)
        w1_copy.wait()                                       # expert weights now in VMEM
        h1 = (jnp.einsum('ebd,ekd->ebk', featcat, ew1_vmem[...],
                         preferred_element_type=jnp.float32) + eb1_ref[...])
        h1 = jnp.maximum(h1, 0.0)                            # (E, B, hidden)
        eo = (jnp.einsum('ebk,eok->ebo', h1, ew2_ref[...],
                         preferred_element_type=jnp.float32) + eb2_ref[...])  # (E,B,e_out)
        # FinalExpert: flatten experts into lanes -> one (B, E*e_out)@(E*e_out, FOUT) matmul
        eoB = jnp.transpose(eo, (1, 0, 2)).reshape(B, E * EOUT)      # (B, 256)
        o_ref[...] = (jnp.dot(eoB, wf_ref[...],
                              preferred_element_type=jnp.float32) + bf_ref[...])

    inputs = (x2d, masks,
              kp["conv1_wp"], kp["conv1_b"], kp["conv2_wp"], kp["conv2_b"],
              kp["wq"], kp["bq"], kp["wk"], kp["bk"], kp["wv"], kp["bv"],
              kp["wo"], kp["bo"],
              kp["e_w1cat"], kp["e_b1"], kp["e_w2T"], kp["e_b2"],
              kp["wf"], kp["bf"])

    vmem = pl.BlockSpec(memory_space=pltpu.MemorySpace.VMEM)
    in_specs = [vmem] * len(inputs)
    in_specs[14] = pl.BlockSpec(memory_space=pl.ANY)   # e_w1cat stays in HBM (manual DMA)

    # Single invocation (no grid): resident working set is ~2 MiB, well under
    # the scoped VMEM limit on v5e/v6e/v7x.
    return pl.pallas_call(
        kernel,
        out_shape=jax.ShapeDtypeStruct((B, FOUT), jnp.float32),
        in_specs=in_specs,
        out_specs=vmem,
        scratch_shapes=[
            pltpu.VMEM((Cmid, PW), jnp.float32),        # padded conv2 input slab
            pltpu.VMEM((9 * Cin, N), jnp.float32),      # conv1 packed-tap slab (36, N)
            pltpu.VMEM((9 * Cmid, N), jnp.float32),     # conv2 packed-tap slab (288, N)
            pltpu.VMEM((E, HID, DCAT), jnp.bfloat16),   # expert w1 landing buffer
            pltpu.SemaphoreType.DMA,                    # completion sem for that DMA
        ],
    )(*inputs)


if __name__ == "__main__":
    key = jax.random.PRNGKey(0)
    x = jax.random.normal(key, (2, 4, 16, 16), jnp.float32)   # NCHW input
    params = init_params(jax.random.PRNGKey(42))
    kparams = prepare_kernel_params(params)                   # one-time re-layout
    fwd = jax.jit(prototype1_forward)
    y = fwd(x, kparams)
    jax.block_until_ready(y)
    assert y.shape == (2, 16) and y.dtype == jnp.float32
    print("KERNEL_OK")
</pallas_src>

<mosaic_0001>
module attributes {stable_mosaic.version = 11 : i64} {
  func.func @kernel(%arg0: memref<4x672xf32, #tpu.memory_space<vmem>>, %arg1: memref<9x1x512xf32, #tpu.memory_space<vmem>>, %arg2: memref<32x36xf32, #tpu.memory_space<vmem>>, %arg3: memref<32x1xf32, #tpu.memory_space<vmem>>, %arg4: memref<32x288xf32, #tpu.memory_space<vmem>>, %arg5: memref<32x1xf32, #tpu.memory_space<vmem>>, %arg6: memref<1x4xf32, #tpu.memory_space<vmem>>, %arg7: memref<1x4xf32, #tpu.memory_space<vmem>>, %arg8: memref<1x4xf32, #tpu.memory_space<vmem>>, %arg9: memref<1x4xf32, #tpu.memory_space<vmem>>, %arg10: memref<1x4xf32, #tpu.memory_space<vmem>>, %arg11: memref<1x4xf32, #tpu.memory_space<vmem>>, %arg12: memref<4x4xf32, #tpu.memory_space<vmem>>, %arg13: memref<1x4xf32, #tpu.memory_space<vmem>>, %arg14: memref<32x32x260xbf16, #tpu.memory_space<any>>, %arg15: memref<32x1x32xf32, #tpu.memory_space<vmem>>, %arg16: memref<32x8x32xf32, #tpu.memory_space<vmem>>, %arg17: memref<32x1x8xf32, #tpu.memory_space<vmem>>, %arg18: memref<256x16xf32, #tpu.memory_space<vmem>>, %arg19: memref<1x16xf32, #tpu.memory_space<vmem>>, %arg20: memref<2x16xf32, #tpu.memory_space<vmem>>, %arg21: memref<32x672xf32, #tpu.memory_space<vmem>>, %arg22: memref<36x512xf32, #tpu.memory_space<vmem>>, %arg23: memref<288x512xf32, #tpu.memory_space<vmem>>, %arg24: memref<32x32x260xbf16, #tpu.memory_space<vmem>>, %arg25: memref<!tpu.dma_semaphore, #tpu.memory_space<semaphore_mem>>) attributes {dimension_semantics = [], scalar_prefetch = 0 : i64, scratch_operands = 5 : i64, tpu.core_type = #tpu.core_type<tc>} {
    tpu.enqueue_dma source(%arg14 : memref<32x32x260xbf16, #tpu.memory_space<any>>) target(%arg24 : memref<32x32x260xbf16, #tpu.memory_space<vmem>>) target_semaphore(%arg25 : memref<!tpu.dma_semaphore, #tpu.memory_space<semaphore_mem>>)
    %c0 = arith.constant 0 : index
    %c111 = arith.constant 111 : index
    %0 = vector.load %arg0[%c0, %c111] : memref<4x672xf32, #tpu.memory_space<vmem>>, vector<4x512xf32>
    %c0_0 = arith.constant 0 : index
    %c0_1 = arith.constant 0 : index
    %c0_2 = arith.constant 0 : index
    %1 = vector.load %arg1[%c0_0, %c0_1, %c0_2] : memref<9x1x512xf32, #tpu.memory_space<vmem>>, vector<1x1x512xf32>
    %2 = vector.shape_cast %1 : vector<1x1x512xf32> to vector<1x512xf32>
    %3 = vector.broadcast %2 : vector<1x512xf32> to vector<4x512xf32>
    %4 = arith.mulf %0, %3 : vector<4x512xf32>
    %c0_3 = arith.constant 0 : index
    %c0_4 = arith.constant 0 : index
    %5 = vector.load %arg22[%c0_3, %c0_4] : memref<36x512xf32, #tpu.memory_space<vmem>>, vector<4x512xf32>
    tpu.vector_store %arg22[%c0_3, %c0_4], %4 {strides = array<i32>} : memref<36x512xf32, #tpu.memory_space<vmem>>, vector<4x512xf32>,
    %c0_5 = arith.constant 0 : index
    %c112 = arith.constant 112 : index
    %6 = vector.load %arg0[%c0_5, %c112] : memref<4x672xf32, #tpu.memory_space<vmem>>, vector<4x512xf32>
    %c1 = arith.constant 1 : index
    %c0_6 = arith.constant 0 : index
    %c0_7 = arith.constant 0 : index
    %7 = vector.load %arg1[%c1, %c0_6, %c0_7] : memref<9x1x512xf32, #tpu.memory_space<vmem>>, vector<1x1x512xf32>
    %8 = vector.shape_cast %7 : vector<1x1x512xf32> to vector<1x512xf32>
    %9 = vector.broadcast %8 : vector<1x512xf32> to vector<4x512xf32>
    %10 = arith.mulf %6, %9 : vector<4x512xf32>
    %c4 = arith.constant 4 : index
    %c0_8 = arith.constant 0 : index
    %11 = vector.load %arg22[%c4, %c0_8] : memref<36x512xf32, #tpu.memory_space<vmem>>, vector<4x512xf32>
    tpu.vector_store %arg22[%c4, %c0_8], %10 {strides = array<i32>} : memref<36x512xf32, #tpu.memory_space<vmem>>, vector<4x512xf32>,
    %c0_9 = arith.constant 0 : index
    %c113 = arith.constant 113 : index
    %12 = vector.load %arg0[%c0_9, %c113] : memref<4x672xf32, #tpu.memory_space<vmem>>, vector<4x512xf32>
    %c2 = arith.constant 2 : index
    %c0_10 = arith.constant 0 : index
    %c0_11 = arith.constant 0 : index
    %13 = vector.load %arg1[%c2, %c0_10, %c0_11] : memref<9x1x512xf32, #tpu.memory_space<vmem>>, vector<1x1x512xf32>
    %14 = vector.shape_cast %13 : vector<1x1x512xf32> to vector<1x512xf32>
    %15 = vector.broadcast %14 : vector<1x512xf32> to vector<4x512xf32>
    %16 = arith.mulf %12, %15 : vector<4x512xf32>
    %c8 = arith.constant 8 : index
    %c0_12 = arith.constant 0 : index
    %17 = vector.load %arg22[%c8, %c0_12] : memref<36x512xf32, #tpu.memory_space<vmem>>, vector<4x512xf32>
    tpu.vector_store %arg22[%c8, %c0_12], %16 {strides = array<i32>} : memref<36x512xf32, #tpu.memory_space<vmem>>, vector<4x512xf32>,
    %c0_13 = arith.constant 0 : index
    %c127 = arith.constant 127 : index
    %18 = vector.load %arg0[%c0_13, %c127] : memref<4x672xf32, #tpu.memory_space<vmem>>, vector<4x512xf32>
    %c3 = arith.constant 3 : index
    %c0_14 = arith.constant 0 : index
    %c0_15 = arith.constant 0 : index
    %19 = vector.load %arg1[%c3, %c0_14, %c0_15] : memref<9x1x512xf32, #tpu.memory_space<vmem>>, vector<1x1x512xf32>
    %20 = vector.shape_cast %19 : vector<1x1x512xf32> to vector<1x512xf32>
    %21 = vector.broadcast %20 : vector<1x512xf32> to vector<4x512xf32>
    %22 = arith.mulf %18, %21 : vector<4x512xf32>
    %c12 = arith.constant 12 : index
    %c0_16 = arith.constant 0 : index
    %23 = vector.load %arg22[%c12, %c0_16] : memref<36x512xf32, #tpu.memory_space<vmem>>, vector<4x512xf32>
    tpu.vector_store %arg22[%c12, %c0_16], %22 {strides = array<i32>} : memref<36x512xf32, #tpu.memory_space<vmem>>, vector<4x512xf32>,
    %c0_17 = arith.constant 0 : index
    %c128 = arith.constant 128 : index
    %24 = vector.load %arg0[%c0_17, %c128] : memref<4x672xf32, #tpu.memory_space<vmem>>, vector<4x512xf32>
    %c4_18 = arith.constant 4 : index
    %c0_19 = arith.constant 0 : index
    %c0_20 = arith.constant 0 : index
    %25 = vector.load %arg1[%c4_18, %c0_19, %c0_20] : memref<9x1x512xf32, #tpu.memory_space<vmem>>, vector<1x1x512xf32>
    %26 = vector.shape_cast %25 : vector<1x1x512xf32> to vector<1x512xf32>
    %27 = vector.broadcast %26 : vector<1x512xf32> to vector<4x512xf32>
    %28 = arith.mulf %24, %27 : vector<4x512xf32>
    %c16 = arith.constant 16 : index
    %c0_21 = arith.constant 0 : index
    %29 = vector.load %arg22[%c16, %c0_21] : memref<36x512xf32, #tpu.memory_space<vmem>>, vector<4x512xf32>
    tpu.vector_store %arg22[%c16, %c0_21], %28 {strides = array<i32>} : memref<36x512xf32, #tpu.memory_space<vmem>>, vector<4x512xf32>,
    %c0_22 = arith.constant 0 : index
    %c129 = arith.constant 129 : index
    %30 = vector.load %arg0[%c0_22, %c129] : memref<4x672xf32, #tpu.memory_space<vmem>>, vector<4x512xf32>
    %c5 = arith.constant 5 : index
    %c0_23 = arith.constant 0 : index
    %c0_24 = arith.constant 0 : index
    %31 = vector.load %arg1[%c5, %c0_23, %c0_24] : memref<9x1x512xf32, #tpu.memory_space<vmem>>, vector<1x1x512xf32>
    %32 = vector.shape_cast %31 : vector<1x1x512xf32> to vector<1x512xf32>
    %33 = vector.broadcast %32 : vector<1x512xf32> to vector<4x512xf32>
    %34 = arith.mulf %30, %33 : vector<4x512xf32>
    %c20 = arith.constant 20 : index
    %c0_25 = arith.constant 0 : index
    %35 = vector.load %arg22[%c20, %c0_25] : memref<36x512xf32, #tpu.memory_space<vmem>>, vector<4x512xf32>
    tpu.vector_store %arg22[%c20, %c0_25], %34 {strides = array<i32>} : memref<36x512xf32, #tpu.memory_space<vmem>>, vector<4x512xf32>,
    %c0_26 = arith.constant 0 : index
    %c143 = arith.constant 143 : index
    %36 = vector.load %arg0[%c0_26, %c143] : memref<4x672xf32, #tpu.memory_space<vmem>>, vector<4x512xf32>
    %c6 = arith.constant 6 : index
    %c0_27 = arith.constant 0 : index
    %c0_28 = arith.constant 0 : index
    %37 = vector.load %arg1[%c6, %c0_27, %c0_28] : memref<9x1x512xf32, #tpu.memory_space<vmem>>, vector<1x1x512xf32>
    %38 = vector.shape_cast %37 : vector<1x1x512xf32> to vector<1x512xf32>
    %39 = vector.broadcast %38 : vector<1x512xf32> to vector<4x512xf32>
    %40 = arith.mulf %36, %39 : vector<4x512xf32>
    %c24 = arith.constant 24 : index
    %c0_29 = arith.constant 0 : index
    %41 = vector.load %arg22[%c24, %c0_29] : memref<36x512xf32, #tpu.memory_space<vmem>>, vector<4x512xf32>
    tpu.vector_store %arg22[%c24, %c0_29], %40 {strides = array<i32>} : memref<36x512xf32, #tpu.memory_space<vmem>>, vector<4x512xf32>,
    %c0_30 = arith.constant 0 : index
    %c144 = arith.constant 144 : index
    %42 = vector.load %arg0[%c0_30, %c144] : memref<4x672xf32, #tpu.memory_space<vmem>>, vector<4x512xf32>
    %c7 = arith.constant 7 : index
    %c0_31 = arith.constant 0 : index
    %c0_32 = arith.constant 0 : index
    %43 = vector.load %arg1[%c7, %c0_31, %c0_32] : memref<9x1x512xf32, #tpu.memory_space<vmem>>, vector<1x1x512xf32>
    %44 = vector.shape_cast %43 : vector<1x1x512xf32> to vector<1x512xf32>
    %45 = vector.broadcast %44 : vector<1x512xf32> to vector<4x512xf32>
    %46 = arith.mulf %42, %45 : vector<4x512xf32>
    %c28 = arith.constant 28 : index
    %c0_33 = arith.constant 0 : index
    %47 = vector.load %arg22[%c28, %c0_33] : memref<36x512xf32, #tpu.memory_space<vmem>>, vector<4x512xf32>
    tpu.vector_store %arg22[%c28, %c0_33], %46 {strides = array<i32>} : memref<36x512xf32, #tpu.memory_space<vmem>>, vector<4x512xf32>,
    %c0_34 = arith.constant 0 : index
    %c145 = arith.constant 145 : index
    %48 = vector.load %arg0[%c0_34, %c145] : memref<4x672xf32, #tpu.memory_space<vmem>>, vector<4x512xf32>
    %c8_35 = arith.constant 8 : index
    %c0_36 = arith.constant 0 : index
    %c0_37 = arith.constant 0 : index
    %49 = vector.load %arg1[%c8_35, %c0_36, %c0_37] : memref<9x1x512xf32, #tpu.memory_space<vmem>>, vector<1x1x512xf32>
    %50 = vector.shape_cast %49 : vector<1x1x512xf32> to vector<1x512xf32>
    %51 = vector.broadcast %50 : vector<1x512xf32> to vector<4x512xf32>
    %52 = arith.mulf %48, %51 : vector<4x512xf32>
    %c32 = arith.constant 32 : index
    %c0_38 = arith.constant 0 : index
    %53 = vector.load %arg22[%c32, %c0_38] : memref<36x512xf32, #tpu.memory_space<vmem>>, vector<4x512xf32>
    tpu.vector_store %arg22[%c32, %c0_38], %52 {strides = array<i32>} : memref<36x512xf32, #tpu.memory_space<vmem>>, vector<4x512xf32>,
    %c0_39 = arith.constant 0 : index
    %c0_40 = arith.constant 0 : index
    %54 = vector.load %arg2[%c0_39, %c0_40] : memref<32x36xf32, #tpu.memory_space<vmem>>, vector<32x36xf32>
    %c0_41 = arith.constant 0 : index
    %c0_42 = arith.constant 0 : index
    %55 = vector.load %arg22[%c0_41, %c0_42] : memref<36x512xf32, #tpu.memory_space<vmem>>, vector<36x512xf32>
    %cst = arith.constant dense<0.000000e+00> : vector<32x512xf32>
    %56 = tpu.matmul %54, %55, %cst {dimension_numbers = #tpu.dot_dimension_numbers<[1], [0], [0], [1], [0, 0, 1, 1], [], []>} : vector<32x36xf32>, vector<36x512xf32>, vector<32x512xf32> -> vector<32x512xf32>
    %c0_43 = arith.constant 0 : index
    %c0_44 = arith.constant 0 : index
    %57 = vector.load %arg3[%c0_43, %c0_44] : memref<32x1xf32, #tpu.memory_space<vmem>>, vector<32x1xf32>
    %58 = vector.broadcast %57 : vector<32x1xf32> to vector<32x512xf32>
    %59 = arith.addf %56, %58 : vector<32x512xf32>
    %cst_45 = arith.constant 0.000000e+00 : f32
    %60 = vector.broadcast %cst_45 : f32 to vector<32x512xf32>
    %61 = arith.maximumf %59, %60 : vector<32x512xf32>
    %cst_46 = arith.constant 0.000000e+00 : f32
    %62 = vector.broadcast %cst_46 : f32 to vector<32x128xf32>
    %c0_47 = arith.constant 0 : index
    %c0_48 = arith.constant 0 : index
    %63 = vector.load %arg21[%c0_47, %c0_48] : memref<32x672xf32, #tpu.memory_space<vmem>>, vector<32x128xf32>
    tpu.vector_store %arg21[%c0_47, %c0_48], %62 {strides = array<i32>} : memref<32x672xf32, #tpu.memory_space<vmem>>, vector<32x128xf32>,
    %cst_49 = arith.constant 0.000000e+00 : f32
    %64 = vector.broadcast %cst_49 : f32 to vector<32x32xf32>
    %c0_50 = arith.constant 0 : index
    %c640 = arith.constant 640 : index
    %65 = vector.load %arg21[%c0_50, %c640] : memref<32x672xf32, #tpu.memory_space<vmem>>, vector<32x32xf32>
    tpu.vector_store %arg21[%c0_50, %c640], %64 {strides = array<i32>} : memref<32x672xf32, #tpu.memory_space<vmem>>, vector<32x32xf32>,
    %c0_51 = arith.constant 0 : index
    %c128_52 = arith.constant 128 : index
    %66 = vector.load %arg21[%c0_51, %c128_52] : memref<32x672xf32, #tpu.memory_space<vmem>>, vector<32x512xf32>
    tpu.vector_store %arg21[%c0_51, %c128_52], %61 {strides = array<i32>} : memref<32x672xf32, #tpu.memory_space<vmem>>, vector<32x512xf32>,
    %c0_53 = arith.constant 0 : index
    %c111_54 = arith.constant 111 : index
    %67 = vector.load %arg21[%c0_53, %c111_54] : memref<32x672xf32, #tpu.memory_space<vmem>>, vector<32x512xf32>
    %c0_55 = arith.constant 0 : index
    %c0_56 = arith.constant 0 : index
    %c0_57 = arith.constant 0 : index
    %68 = vector.load %arg1[%c0_55, %c0_56, %c0_57] : memref<9x1x512xf32, #tpu.memory_space<vmem>>, vector<1x1x512xf32>
    %69 = vector.shape_cast %68 : vector<1x1x512xf32> to vector<1x512xf32>
    %70 = vector.broadcast %69 : vector<1x512xf32> to vector<32x512xf32>
    %71 = arith.mulf %67, %70 : vector<32x512xf32>
    %c0_58 = arith.constant 0 : index
    %c0_59 = arith.constant 0 : index
    %72 = vector.load %arg23[%c0_58, %c0_59] : memref<288x512xf32, #tpu.memory_space<vmem>>, vector<32x512xf32>
    tpu.vector_store %arg23[%c0_58, %c0_59], %71 {strides = array<i32>} : memref<288x512xf32, #tpu.memory_space<vmem>>, vector<32x512xf32>,
    %c0_60 = arith.constant 0 : index
    %c112_61 = arith.constant 112 : index
    %73 = vector.load %arg21[%c0_60, %c112_61] : memref<32x672xf32, #tpu.memory_space<vmem>>, vector<32x512xf32>
    %c1_62 = arith.constant 1 : index
    %c0_63 = arith.constant 0 : index
    %c0_64 = arith.constant 0 : index
    %74 = vector.load %arg1[%c1_62, %c0_63, %c0_64] : memref<9x1x512xf32, #tpu.memory_space<vmem>>, vector<1x1x512xf32>
    %75 = vector.shape_cast %74 : vector<1x1x512xf32> to vector<1x512xf32>
    %76 = vector.broadcast %75 : vector<1x512xf32> to vector<32x512xf32>
    %77 = arith.mulf %73, %76 : vector<32x512xf32>
    %c32_65 = arith.constant 32 : index
    %c0_66 = arith.constant 0 : index
    %78 = vector.load %arg23[%c32_65, %c0_66] : memref<288x512xf32, #tpu.memory_space<vmem>>, vector<32x512xf32>
    tpu.vector_store %arg23[%c32_65, %c0_66], %77 {strides = array<i32>} : memref<288x512xf32, #tpu.memory_space<vmem>>, vector<32x512xf32>,
    %c0_67 = arith.constant 0 : index
    %c113_68 = arith.constant 113 : index
    %79 = vector.load %arg21[%c0_67, %c113_68] : memref<32x672xf32, #tpu.memory_space<vmem>>, vector<32x512xf32>
    %c2_69 = arith.constant 2 : index
    %c0_70 = arith.constant 0 : index
    %c0_71 = arith.constant 0 : index
    %80 = vector.load %arg1[%c2_69, %c0_70, %c0_71] : memref<9x1x512xf32, #tpu.memory_space<vmem>>, vector<1x1x512xf32>
    %81 = vector.shape_cast %80 : vector<1x1x512xf32> to vector<1x512xf32>
    %82 = vector.broadcast %81 : vector<1x512xf32> to vector<32x512xf32>
    %83 = arith.mulf %79, %82 : vector<32x512xf32>
    %c64 = arith.constant 64 : index
    %c0_72 = arith.constant 0 : index
    %84 = vector.load %arg23[%c64, %c0_72] : memref<288x512xf32, #tpu.memory_space<vmem>>, vector<32x512xf32>
    tpu.vector_store %arg23[%c64, %c0_72], %83 {strides = array<i32>} : memref<288x512xf32, #tpu.memory_space<vmem>>, vector<32x512xf32>,
    %c0_73 = arith.constant 0 : index
    %c127_74 = arith.constant 127 : index
    %85 = vector.load %arg21[%c0_73, %c127_74] : memref<32x672xf32, #tpu.memory_space<vmem>>, vector<32x512xf32>
    %c3_75 = arith.constant 3 : index
    %c0_76 = arith.constant 0 : index
    %c0_77 = arith.constant 0 : index
    %86 = vector.load %arg1[%c3_75, %c0_76, %c0_77] : memref<9x1x512xf32, #tpu.memory_space<vmem>>, vector<1x1x512xf32>
    %87 = vector.shape_cast %86 : vector<1x1x512xf32> to vector<1x512xf32>
    %88 = vector.broadcast %87 : vector<1x512xf32> to vector<32x512xf32>
    %89 = arith.mulf %85, %88 : vector<32x512xf32>
    %c96 = arith.constant 96 : index
    %c0_78 = arith.constant 0 : index
    %90 = vector.load %arg23[%c96, %c0_78] : memref<288x512xf32, #tpu.memory_space<vmem>>, vector<32x512xf32>
    tpu.vector_store %arg23[%c96, %c0_78], %89 {strides = array<i32>} : memref<288x512xf32, #tpu.memory_space<vmem>>, vector<32x512xf32>,
    %c0_79 = arith.constant 0 : index
    %c128_80 = arith.constant 128 : index
    %91 = vector.load %arg21[%c0_79, %c128_80] : memref<32x672xf32, #tpu.memory_space<vmem>>, vector<32x512xf32>
    %c4_81 = arith.constant 4 : index
    %c0_82 = arith.constant 0 : index
    %c0_83 = arith.constant 0 : index
    %92 = vector.load %arg1[%c4_81, %c0_82, %c0_83] : memref<9x1x512xf32, #tpu.memory_space<vmem>>, vector<1x1x512xf32>
    %93 = vector.shape_cast %92 : vector<1x1x512xf32> to vector<1x512xf32>
    %94 = vector.broadcast %93 : vector<1x512xf32> to vector<32x512xf32>
    %95 = arith.mulf %91, %94 : vector<32x512xf32>
    %c128_84 = arith.constant 128 : index
    %c0_85 = arith.constant 0 : index
    %96 = vector.load %arg23[%c128_84, %c0_85] : memref<288x512xf32, #tpu.memory_space<vmem>>, vector<32x512xf32>
    tpu.vector_store %arg23[%c128_84, %c0_85], %95 {strides = array<i32>} : memref<288x512xf32, #tpu.memory_space<vmem>>, vector<32x512xf32>,
    %c0_86 = arith.constant 0 : index
    %c129_87 = arith.constant 129 : index
    %97 = vector.load %arg21[%c0_86, %c129_87] : memref<32x672xf32, #tpu.memory_space<vmem>>, vector<32x512xf32>
    %c5_88 = arith.constant 5 : index
    %c0_89 = arith.constant 0 : index
    %c0_90 = arith.constant 0 : index
    %98 = vector.load %arg1[%c5_88, %c0_89, %c0_90] : memref<9x1x512xf32, #tpu.memory_space<vmem>>, vector<1x1x512xf32>
    %99 = vector.shape_cast %98 : vector<1x1x512xf32> to vector<1x512xf32>
    %100 = vector.broadcast %99 : vector<1x512xf32> to vector<32x512xf32>
    %101 = arith.mulf %97, %100 : vector<32x512xf32>
    %c160 = arith.constant 160 : index
    %c0_91 = arith.constant 0 : index
    %102 = vector.load %arg23[%c160, %c0_91] : memref<288x512xf32, #tpu.memory_space<vmem>>, vector<32x512xf32>
    tpu.vector_store %arg23[%c160, %c0_91], %101 {strides = array<i32>} : memref<288x512xf32, #tpu.memory_space<vmem>>, vector<32x512xf32>,
    %c0_92 = arith.constant 0 : index
    %c143_93 = arith.constant 143 : index
    %103 = vector.load %arg21[%c0_92, %c143_93] : memref<32x672xf32, #tpu.memory_space<vmem>>, vector<32x512xf32>
    %c6_94 = arith.constant 6 : index
    %c0_95 = arith.constant 0 : index
    %c0_96 = arith.constant 0 : index
    %104 = vector.load %arg1[%c6_94, %c0_95, %c0_96] : memref<9x1x512xf32, #tpu.memory_space<vmem>>, vector<1x1x512xf32>
    %105 = vector.shape_cast %104 : vector<1x1x512xf32> to vector<1x512xf32>
    %106 = vector.broadcast %105 : vector<1x512xf32> to vector<32x512xf32>
    %107 = arith.mulf %103, %106 : vector<32x512xf32>
    %c192 = arith.constant 192 : index
    %c0_97 = arith.constant 0 : index
    %108 = vector.load %arg23[%c192, %c0_97] : memref<288x512xf32, #tpu.memory_space<vmem>>, vector<32x512xf32>
    tpu.vector_store %arg23[%c192, %c0_97], %107 {strides = array<i32>} : memref<288x512xf32, #tpu.memory_space<vmem>>, vector<32x512xf32>,
    %c0_98 = arith.constant 0 : index
    %c144_99 = arith.constant 144 : index
    %109 = vector.load %arg21[%c0_98, %c144_99] : memref<32x672xf32, #tpu.memory_space<vmem>>, vector<32x512xf32>
    %c7_100 = arith.constant 7 : index
    %c0_101 = arith.constant 0 : index
    %c0_102 = arith.constant 0 : index
    %110 = vector.load %arg1[%c7_100, %c0_101, %c0_102] : memref<9x1x512xf32, #tpu.memory_space<vmem>>, vector<1x1x512xf32>
    %111 = vector.shape_cast %110 : vector<1x1x512xf32> to vector<1x512xf32>
    %112 = vector.broadcast %111 : vector<1x512xf32> to vector<32x512xf32>
    %113 = arith.mulf %109, %112 : vector<32x512xf32>
    %c224 = arith.constant 224 : index
    %c0_103 = arith.constant 0 : index
    %114 = vector.load %arg23[%c224, %c0_103] : memref<288x512xf32, #tpu.memory_space<vmem>>, vector<32x512xf32>
    tpu.vector_store %arg23[%c224, %c0_103], %113 {strides = array<i32>} : memref<288x512xf32, #tpu.memory_space<vmem>>, vector<32x512xf32>,
    %c0_104 = arith.constant 0 : index
    %c145_105 = arith.constant 145 : index
    %115 = vector.load %arg21[%c0_104, %c145_105] : memref<32x672xf32, #tpu.memory_space<vmem>>, vector<32x512xf32>
    %c8_106 = arith.constant 8 : index
    %c0_107 = arith.constant 0 : index
    %c0_108 = arith.constant 0 : index
    %116 = vector.load %arg1[%c8_106, %c0_107, %c0_108] : memref<9x1x512xf32, #tpu.memory_space<vmem>>, vector<1x1x512xf32>
    %117 = vector.shape_cast %116 : vector<1x1x512xf32> to vector<1x512xf32>
    %118 = vector.broadcast %117 : vector<1x512xf32> to vector<32x512xf32>
    %119 = arith.mulf %115, %118 : vector<32x512xf32>
    %c256 = arith.constant 256 : index
    %c0_109 = arith.constant 0 : index
    %120 = vector.load %arg23[%c256, %c0_109] : memref<288x512xf32, #tpu.memory_space<vmem>>, vector<32x512xf32>
    tpu.vector_store %arg23[%c256, %c0_109], %119 {strides = array<i32>} : memref<288x512xf32, #tpu.memory_space<vmem>>, vector<32x512xf32>,
    %c0_110 = arith.constant 0 : index
    %c0_111 = arith.constant 0 : index
    %121 = vector.load %arg4[%c0_110, %c0_111] : memref<32x288xf32, #tpu.memory_space<vmem>>, vector<32x288xf32>
    %c0_112 = arith.constant 0 : index
    %c0_113 = arith.constant 0 : index
    %122 = vector.load %arg23[%c0_112, %c0_113] : memref<288x512xf32, #tpu.memory_space<vmem>>, vector<288x512xf32>
    %cst_114 = arith.constant dense<0.000000e+00> : vector<32x512xf32>
    %123 = tpu.matmul %121, %122, %cst_114 {dimension_numbers = #tpu.dot_dimension_numbers<[1], [0], [0], [1], [0, 0, 1, 1], [], []>} : vector<32x288xf32>, vector<288x512xf32>, vector<32x512xf32> -> vector<32x512xf32>
    %c0_115 = arith.constant 0 : index
    %c0_116 = arith.constant 0 : index
    %124 = vector.load %arg5[%c0_115, %c0_116] : memref<32x1xf32, #tpu.memory_space<vmem>>, vector<32x1xf32>
    %125 = vector.broadcast %124 : vector<32x1xf32> to vector<32x512xf32>
    %126 = arith.addf %123, %125 : vector<32x512xf32>
    %cst_117 = arith.constant 0.000000e+00 : f32
    %127 = vector.broadcast %cst_117 : f32 to vector<32x512xf32>
    %128 = arith.maximumf %126, %127 : vector<32x512xf32>
    %129 = vector.shape_cast %128 : vector<32x512xf32> to vector<32x2x256xf32>
    %cst_118 = arith.constant dense<0.000000e+00> : vector<32x2xf32>
    %130 = vector.multi_reduction <add>, %129, %cst_118 [2] : vector<32x2x256xf32> to vector<32x2xf32>
    %cst_119 = arith.constant 2.560000e+02 : f32
    %131 = vector.broadcast %cst_119 : f32 to vector<32x2xf32>
    %132 = arith.divf %130, %131 : vector<32x2xf32>
    %133 = tpu.transpose %132, [1, 0] : vector<32x2xf32> -> vector<2x32xf32>
    %134 = vector.shape_cast %133 : vector<2x32xf32> to vector<2x32x1xf32>
    %c0_120 = arith.constant 0 : index
    %c0_121 = arith.constant 0 : index
    %135 = vector.load %arg6[%c0_120, %c0_121] : memref<1x4xf32, #tpu.memory_space<vmem>>, vector<1x4xf32>
    %136 = vector.shape_cast %135 : vector<1x4xf32> to vector<1x1x4xf32>
    %137 = vector.broadcast %134 : vector<2x32x1xf32> to vector<2x32x4xf32>
    %138 = vector.broadcast %136 : vector<1x1x4xf32> to vector<2x32x4xf32>
    %139 = arith.mulf %137, %138 : vector<2x32x4xf32>
    %c0_122 = arith.constant 0 : index
    %c0_123 = arith.constant 0 : index
    %140 = vector.load %arg7[%c0_122, %c0_123] : memref<1x4xf32, #tpu.memory_space<vmem>>, vector<1x4xf32>
    %141 = vector.shape_cast %140 : vector<1x4xf32> to vector<1x1x4xf32>
    %142 = vector.broadcast %141 : vector<1x1x4xf32> to vector<2x32x4xf32>
    %143 = arith.addf %139, %142 : vector<2x32x4xf32>
    %144 = vector.shape_cast %133 : vector<2x32xf32> to vector<2x32x1xf32>
    %c0_124 = arith.constant 0 : index
    %c0_125 = arith.constant 0 : index
    %145 = vector.load %arg8[%c0_124, %c0_125] : memref<1x4xf32, #tpu.memory_space<vmem>>, vector<1x4xf32>
    %146 = vector.shape_cast %145 : vector<1x4xf32> to vector<1x1x4xf32>
    %147 = vector.broadcast %144 : vector<2x32x1xf32> to vector<2x32x4xf32>
    %148 = vector.broadcast %146 : vector<1x1x4xf32> to vector<2x32x4xf32>
    %149 = arith.mulf %147, %148 : vector<2x32x4xf32>
    %c0_126 = arith.constant 0 : index
    %c0_127 = arith.constant 0 : index
    %150 = vector.load %arg9[%c0_126, %c0_127] : memref<1x4xf32, #tpu.memory_space<vmem>>, vector<1x4xf32>
    %151 = vector.shape_cast %150 : vector<1x4xf32> to vector<1x1x4xf32>
    %152 = vector.broadcast %151 : vector<1x1x4xf32> to vector<2x32x4xf32>
    %153 = arith.addf %149, %152 : vector<2x32x4xf32>
    %154 = vector.shape_cast %133 : vector<2x32xf32> to vector<2x32x1xf32>
    %c0_128 = arith.constant 0 : index
    %c0_129 = arith.constant 0 : index
    %155 = vector.load %arg10[%c0_128, %c0_129] : memref<1x4xf32, #tpu.memory_space<vmem>>, vector<1x4xf32>
    %156 = vector.shape_cast %155 : vector<1x4xf32> to vector<1x1x4xf32>
    %157 = vector.broadcast %154 : vector<2x32x1xf32> to vector<2x32x4xf32>
    %158 = vector.broadcast %156 : vector<1x1x4xf32> to vector<2x32x4xf32>
    %159 = arith.mulf %157, %158 : vector<2x32x4xf32>
    %c0_130 = arith.constant 0 : index
    %c0_131 = arith.constant 0 : index
    %160 = vector.load %arg11[%c0_130, %c0_131] : memref<1x4xf32, #tpu.memory_space<vmem>>, vector<1x4xf32>
    %161 = vector.shape_cast %160 : vector<1x4xf32> to vector<1x1x4xf32>
    %162 = vector.broadcast %161 : vector<1x1x4xf32> to vector<2x32x4xf32>
    %163 = arith.addf %159, %162 : vector<2x32x4xf32>
    %164 = vector.extract_strided_slice %143 {offsets = [0, 0, 0], sizes = [2, 32, 1], strides = [1, 1, 1]} : vector<2x32x4xf32> to vector<2x32x1xf32>
    %165 = vector.shape_cast %164 : vector<2x32x1xf32> to vector<2x32xf32>
    %166 = vector.shape_cast %165 : vector<2x32xf32> to vector<2x32x1xf32>
    %167 = vector.extract_strided_slice %153 {offsets = [0, 0, 0], sizes = [2, 32, 1], strides = [1, 1, 1]} : vector<2x32x4xf32> to vector<2x32x1xf32>
    %168 = vector.shape_cast %167 : vector<2x32x1xf32> to vector<2x32xf32>
    %169 = vector.shape_cast %168 : vector<2x32xf32> to vector<2x1x32xf32>
    %170 = vector.broadcast %166 : vector<2x32x1xf32> to vector<2x32x32xf32>
    %171 = vector.broadcast %169 : vector<2x1x32xf32> to vector<2x32x32xf32>
    %172 = arith.mulf %170, %171 : vector<2x32x32xf32>
    %cst_132 = arith.constant dense<0xFF800000> : vector<2x32xf32>
    %173 = vector.multi_reduction <maximumf>, %172, %cst_132 [2] : vector<2x32x32xf32> to vector<2x32xf32>
    %174 = vector.shape_cast %173 : vector<2x32xf32> to vector<2x32x1xf32>
    %175 = vector.broadcast %174 : vector<2x32x1xf32> to vector<2x32x32xf32>
    %176 = arith.subf %172, %175 : vector<2x32x32xf32>
    %177 = math.exp %176 : vector<2x32x32xf32>
    %cst_133 = arith.constant dense<0.000000e+00> : vector<2x32xf32>
    %178 = vector.multi_reduction <add>, %177, %cst_133 [2] : vector<2x32x32xf32> to vector<2x32xf32>
    %179 = vector.shape_cast %178 : vector<2x32xf32> to vector<2x32x1xf32>
    %180 = vector.broadcast %179 : vector<2x32x1xf32> to vector<2x32x32xf32>
    %181 = arith.divf %177, %180 : vector<2x32x32xf32>
    %182 = vector.extract_strided_slice %163 {offsets = [0, 0, 0], sizes = [2, 32, 1], strides = [1, 1, 1]} : vector<2x32x4xf32> to vector<2x32x1xf32>
    %183 = vector.shape_cast %182 : vector<2x32x1xf32> to vector<2x32xf32>
    %184 = vector.shape_cast %183 : vector<2x32xf32> to vector<2x1x32xf32>
    %185 = vector.broadcast %184 : vector<2x1x32xf32> to vector<2x32x32xf32>
    %186 = arith.mulf %181, %185 : vector<2x32x32xf32>
    %cst_134 = arith.constant dense<0.000000e+00> : vector<2x32xf32>
    %187 = vector.multi_reduction <add>, %186, %cst_134 [2] : vector<2x32x32xf32> to vector<2x32xf32>
    %188 = vector.extract_strided_slice %143 {offsets = [0, 0, 1], sizes = [2, 32, 1], strides = [1, 1, 1]} : vector<2x32x4xf32> to vector<2x32x1xf32>
    %189 = vector.shape_cast %188 : vector<2x32x1xf32> to vector<2x32xf32>
    %190 = vector.shape_cast %189 : vector<2x32xf32> to vector<2x32x1xf32>
    %191 = vector.extract_strided_slice %153 {offsets = [0, 0, 1], sizes = [2, 32, 1], strides = [1, 1, 1]} : vector<2x32x4xf32> to vector<2x32x1xf32>
    %192 = vector.shape_cast %191 : vector<2x32x1xf32> to vector<2x32xf32>
    %193 = vector.shape_cast %192 : vector<2x32xf32> to vector<2x1x32xf32>
    %194 = vector.broadcast %190 : vector<2x32x1xf32> to vector<2x32x32xf32>
    %195 = vector.broadcast %193 : vector<2x1x32xf32> to vector<2x32x32xf32>
    %196 = arith.mulf %194, %195 : vector<2x32x32xf32>
    %cst_135 = arith.constant dense<0xFF800000> : vector<2x32xf32>
    %197 = vector.multi_reduction <maximumf>, %196, %cst_135 [2] : vector<2x32x32xf32> to vector<2x32xf32>
    %198 = vector.shape_cast %197 : vector<2x32xf32> to vector<2x32x1xf32>
    %199 = vector.broadcast %198 : vector<2x32x1xf32> to vector<2x32x32xf32>
    %200 = arith.subf %196, %199 : vector<2x32x32xf32>
    %201 = math.exp %200 : vector<2x32x32xf32>
    %cst_136 = arith.constant dense<0.000000e+00> : vector<2x32xf32>
    %202 = vector.multi_reduction <add>, %201, %cst_136 [2] : vector<2x32x32xf32> to vector<2x32xf32>
    %203 = vector.shape_cast %202 : vector<2x32xf32> to vector<2x32x1xf32>
    %204 = vector.broadcast %203 : vector<2x32x1xf32> to vector<2x32x32xf32>
    %205 = arith.divf %201, %204 : vector<2x32x32xf32>
    %206 = vector.extract_strided_slice %163 {offsets = [0, 0, 1], sizes = [2, 32, 1], strides = [1, 1, 1]} : vector<2x32x4xf32> to vector<2x32x1xf32>
    %207 = vector.shape_cast %206 : vector<2x32x1xf32> to vector<2x32xf32>
    %208 = vector.shape_cast %207 : vector<2x32xf32> to vector<2x1x32xf32>
    %209 = vector.broadcast %208 : vector<2x1x32xf32> to vector<2x32x32xf32>
    %210 = arith.mulf %205, %209 : vector<2x32x32xf32>
    %cst_137 = arith.constant dense<0.000000e+00> : vector<2x32xf32>
    %211 = vector.multi_reduction <add>, %210, %cst_137 [2] : vector<2x32x32xf32> to vector<2x32xf32>
    %212 = vector.extract_strided_slice %143 {offsets = [0, 0, 2], sizes = [2, 32, 1], strides = [1, 1, 1]} : vector<2x32x4xf32> to vector<2x32x1xf32>
    %213 = vector.shape_cast %212 : vector<2x32x1xf32> to vector<2x32xf32>
    %214 = vector.shape_cast %213 : vector<2x32xf32> to vector<2x32x1xf32>
    %215 = vector.extract_strided_slice %153 {offsets = [0, 0, 2], sizes = [2, 32, 1], strides = [1, 1, 1]} : vector<2x32x4xf32> to vector<2x32x1xf32>
    %216 = vector.shape_cast %215 : vector<2x32x1xf32> to vector<2x32xf32>
    %217 = vector.shape_cast %216 : vector<2x32xf32> to vector<2x1x32xf32>
    %218 = vector.broadcast %214 : vector<2x32x1xf32> to vector<2x32x32xf32>
    %219 = vector.broadcast %217 : vector<2x1x32xf32> to vector<2x32x32xf32>
    %220 = arith.mulf %218, %219 : vector<2x32x32xf32>
    %cst_138 = arith.constant dense<0xFF800000> : vector<2x32xf32>
    %221 = vector.multi_reduction <maximumf>, %220, %cst_138 [2] : vector<2x32x32xf32> to vector<2x32xf32>
    %222 = vector.shape_cast %221 : vector<2x32xf32> to vector<2x32x1xf32>
    %223 = vector.broadcast %222 : vector<2x32x1xf32> to vector<2x32x32xf32>
    %224 = arith.subf %220, %223 : vector<2x32x32xf32>
    %225 = math.exp %224 : vector<2x32x32xf32>
    %cst_139 = arith.constant dense<0.000000e+00> : vector<2x32xf32>
    %226 = vector.multi_reduction <add>, %225, %cst_139 [2] : vector<2x32x32xf32> to vector<2x32xf32>
    %227 = vector.shape_cast %226 : vector<2x32xf32> to vector<2x32x1xf32>
    %228 = vector.broadcast %227 : vector<2x32x1xf32> to vector<2x32x32xf32>
    %229 = arith.divf %225, %228 : vector<2x32x32xf32>
    %230 = vector.extract_strided_slice %163 {offsets = [0, 0, 2], sizes = [2, 32, 1], strides = [1, 1, 1]} : vector<2x32x4xf32> to vector<2x32x1xf32>
    %231 = vector.shape_cast %230 : vector<2x32x1xf32> to vector<2x32xf32>
    %232 = vector.shape_cast %231 : vector<2x32xf32> to vector<2x1x32xf32>
    %233 = vector.broadcast %232 : vector<2x1x32xf32> to vector<2x32x32xf32>
    %234 = arith.mulf %229, %233 : vector<2x32x32xf32>
    %cst_140 = arith.constant dense<0.000000e+00> : vector<2x32xf32>
    %235 = vector.multi_reduction <add>, %234, %cst_140 [2] : vector<2x32x32xf32> to vector<2x32xf32>
    %236 = vector.extract_strided_slice %143 {offsets = [0, 0, 3], sizes = [2, 32, 1], strides = [1, 1, 1]} : vector<2x32x4xf32> to vector<2x32x1xf32>
    %237 = vector.shape_cast %236 : vector<2x32x1xf32> to vector<2x32xf32>
    %238 = vector.shape_cast %237 : vector<2x32xf32> to vector<2x32x1xf32>
    %239 = vector.extract_strided_slice %153 {offsets = [0, 0, 3], sizes = [2, 32, 1], strides = [1, 1, 1]} : vector<2x32x4xf32> to vector<2x32x1xf32>
    %240 = vector.shape_cast %239 : vector<2x32x1xf32> to vector<2x32xf32>
    %241 = vector.shape_cast %240 : vector<2x32xf32> to vector<2x1x32xf32>
    %242 = vector.broadcast %238 : vector<2x32x1xf32> to vector<2x32x32xf32>
    %243 = vector.broadcast %241 : vector<2x1x32xf32> to vector<2x32x32xf32>
    %244 = arith.mulf %242, %243 : vector<2x32x32xf32>
    %cst_141 = arith.constant dense<0xFF800000> : vector<2x32xf32>
    %245 = vector.multi_reduction <maximumf>, %244, %cst_141 [2] : vector<2x32x32xf32> to vector<2x32xf32>
    %246 = vector.shape_cast %245 : vector<2x32xf32> to vector<2x32x1xf32>
    %247 = vector.broadcast %246 : vector<2x32x1xf32> to vector<2x32x32xf32>
    %248 = arith.subf %244, %247 : vector<2x32x32xf32>
    %249 = math.exp %248 : vector<2x32x32xf32>
    %cst_142 = arith.constant dense<0.000000e+00> : vector<2x32xf32>
    %250 = vector.multi_reduction <add>, %249, %cst_142 [2] : vector<2x32x32xf32> to vector<2x32xf32>
    %251 = vector.shape_cast %250 : vector<2x32xf32> to vector<2x32x1xf32>
    %252 = vector.broadcast %251 : vector<2x32x1xf32> to vector<2x32x32xf32>
    %253 = arith.divf %249, %252 : vector<2x32x32xf32>
    %254 = vector.extract_strided_slice %163 {offsets = [0, 0, 3], sizes = [2, 32, 1], strides = [1, 1, 1]} : vector<2x32x4xf32> to vector<2x32x1xf32>
    %255 = vector.shape_cast %254 : vector<2x32x1xf32> to vector<2x32xf32>
    %256 = vector.shape_cast %255 : vector<2x32xf32> to vector<2x1x32xf32>
    %257 = vector.broadcast %256 : vector<2x1x32xf32> to vector<2x32x32xf32>
    %258 = arith.mulf %253, %257 : vector<2x32x32xf32>
    %cst_143 = arith.constant dense<0.000000e+00> : vector<2x32xf32>
    %259 = vector.multi_reduction <add>, %258, %cst_143 [2] : vector<2x32x32xf32> to vector<2x32xf32>
    %260 = vector.shape_cast %187 : vector<2x32xf32> to vector<2x32x1xf32>
    %261 = vector.shape_cast %211 : vector<2x32xf32> to vector<2x32x1xf32>
    %262 = vector.shape_cast %235 : vector<2x32xf32> to vector<2x32x1xf32>
    %263 = vector.shape_cast %259 : vector<2x32xf32> to vector<2x32x1xf32>
    %264 = tpu.concatenate %260, %261, %262, %263 in 2 : vector<2x32x1xf32>, vector<2x32x1xf32>, vector<2x32x1xf32>, vector<2x32x1xf32> -> vector<2x32x4xf32>
    %265 = vector.shape_cast %264 : vector<2x32x4xf32> to vector<64x4xf32>
    %c0_144 = arith.constant 0 : index
    %c0_145 = arith.constant 0 : index
    %266 = vector.load %arg12[%c0_144, %c0_145] : memref<4x4xf32, #tpu.memory_space<vmem>>, vector<4x4xf32>
    %cst_146 = arith.constant dense<0.000000e+00> : vector<64x4xf32>
    %267 = tpu.matmul %265, %266, %cst_146 {dimension_numbers = #tpu.dot_dimension_numbers<[1], [0], [0], [1], [0, 0, 1, 1], [], []>} : vector<64x4xf32>, vector<4x4xf32>, vector<64x4xf32> -> vector<64x4xf32>
    %c0_147 = arith.constant 0 : index
    %c0_148 = arith.constant 0 : index
    %268 = vector.load %arg13[%c0_147, %c0_148] : memref<1x4xf32, #tpu.memory_space<vmem>>, vector<1x4xf32>
    %269 = vector.broadcast %268 : vector<1x4xf32> to vector<64x4xf32>
    %270 = arith.addf %267, %269 : vector<64x4xf32>
    %271 = vector.shape_cast %270 : vector<64x4xf32> to vector<2x32x4xf32>
    %272 = tpu.transpose %271, [1, 0, 2] : vector<2x32x4xf32> -> vector<32x2x4xf32>
    %273 = arith.truncf %129 : vector<32x2x256xf32> to vector<32x2x256xbf16>
    %274 = arith.truncf %272 : vector<32x2x4xf32> to vector<32x2x4xbf16>
    %275 = tpu.concatenate %273, %274 in 2 : vector<32x2x256xbf16>, vector<32x2x4xbf16> -> vector<32x2x260xbf16>
    tpu.wait_dma2 semaphore(%arg25 : memref<!tpu.dma_semaphore, #tpu.memory_space<semaphore_mem>>) src(%arg14 : memref<32x32x260xbf16, #tpu.memory_space<any>>) dst(%arg24 : memref<32x32x260xbf16, #tpu.memory_space<vmem>>)
    %c0_149 = arith.constant 0 : index
    %c0_150 = arith.constant 0 : index
    %c0_151 = arith.constant 0 : index
    %276 = vector.load %arg24[%c0_149, %c0_150, %c0_151] : memref<32x32x260xbf16, #tpu.memory_space<vmem>>, vector<32x32x260xbf16>
    "tpu.trace_start"() <{level = 10 : i32, message = "ebd,ekd->ebk"}> : () -> ()
    %cst_152 = arith.constant dense<0.000000e+00> : vector<32x2x32xf32>
    %277 = tpu.matmul %275, %276, %cst_152 {dimension_numbers = #tpu.dot_dimension_numbers<[2], [2], [1], [1], [0, 0, 0, 1, 1, 1], [0], [0]>} : vector<32x2x260xbf16>, vector<32x32x260xbf16>, vector<32x2x32xf32> -> vector<32x2x32xf32>
    "tpu.trace_stop"() : () -> ()
    %c0_153 = arith.constant 0 : index
    %c0_154 = arith.constant 0 : index
    %c0_155 = arith.constant 0 : index
    %278 = vector.load %arg15[%c0_153, %c0_154, %c0_155] : memref<32x1x32xf32, #tpu.memory_space<vmem>>, vector<32x1x32xf32>
    %279 = vector.broadcast %278 : vector<32x1x32xf32> to vector<32x2x32xf32>
    %280 = arith.addf %277, %279 : vector<32x2x32xf32>
    %cst_156 = arith.constant 0.000000e+00 : f32
    %281 = vector.broadcast %cst_156 : f32 to vector<32x2x32xf32>
    %282 = arith.maximumf %280, %281 : vector<32x2x32xf32>
    %c0_157 = arith.constant 0 : index
    %c0_158 = arith.constant 0 : index
    %c0_159 = arith.constant 0 : index
    %283 = vector.load %arg16[%c0_157, %c0_158, %c0_159] : memref<32x8x32xf32, #tpu.memory_space<vmem>>, vector<32x8x32xf32>
    "tpu.trace_start"() <{level = 10 : i32, message = "ebk,eok->ebo"}> : () -> ()
    %cst_160 = arith.constant dense<0.000000e+00> : vector<32x2x8xf32>
    %284 = tpu.matmul %282, %283, %cst_160 {dimension_numbers = #tpu.dot_dimension_numbers<[2], [2], [1], [1], [0, 0, 0, 1, 1, 1], [0], [0]>} : vector<32x2x32xf32>, vector<32x8x32xf32>, vector<32x2x8xf32> -> vector<32x2x8xf32>
    "tpu.trace_stop"() : () -> ()
    %c0_161 = arith.constant 0 : index
    %c0_162 = arith.constant 0 : index
    %c0_163 = arith.constant 0 : index
    %285 = vector.load %arg17[%c0_161, %c0_162, %c0_163] : memref<32x1x8xf32, #tpu.memory_space<vmem>>, vector<32x1x8xf32>
    %286 = vector.broadcast %285 : vector<32x1x8xf32> to vector<32x2x8xf32>
    %287 = arith.addf %284, %286 : vector<32x2x8xf32>
    %288 = tpu.transpose %287, [1, 0, 2] : vector<32x2x8xf32> -> vector<2x32x8xf32>
    %289 = vector.shape_cast %288 : vector<2x32x8xf32> to vector<2x256xf32>
    %c0_164 = arith.constant 0 : index
    %c0_165 = arith.constant 0 : index
    %290 = vector.load %arg18[%c0_164, %c0_165] : memref<256x16xf32, #tpu.memory_space<vmem>>, vector<256x16xf32>
    %cst_166 = arith.constant dense<0.000000e+00> : vector<2x16xf32>
    %291 = tpu.matmul %289, %290, %cst_166 {dimension_numbers = #tpu.dot_dimension_numbers<[1], [0], [0], [1], [0, 0, 1, 1], [], []>} : vector<2x256xf32>, vector<256x16xf32>, vector<2x16xf32> -> vector<2x16xf32>
    %c0_167 = arith.constant 0 : index
    %c0_168 = arith.constant 0 : index
    %292 = vector.load %arg19[%c0_167, %c0_168] : memref<1x16xf32, #tpu.memory_space<vmem>>, vector<1x16xf32>
    %293 = vector.broadcast %292 : vector<1x16xf32> to vector<2x16xf32>
    %294 = arith.addf %291, %293 : vector<2x16xf32>
    %c0_169 = arith.constant 0 : index
    %c0_170 = arith.constant 0 : index
    %295 = vector.load %arg20[%c0_169, %c0_170] : memref<2x16xf32, #tpu.memory_space<vmem>>, vector<2x16xf32>
    tpu.vector_store %arg20[%c0_169, %c0_170], %294 {strides = array<i32>} : memref<2x16xf32, #tpu.memory_space<vmem>>, vector<2x16xf32>,
    return
  }
}

</mosaic_0001>

<llo_original>
// kernel: prototype1_forward.1
$region0: #{prototype1_forward.1}
  #allocation0 [shape = 'u32[]', space=smem, size = 0x4, offset = 0x4, fixed_abs, tag = 'smem constant byte address 0x4 - core index']
  #allocation1 [shape = 'u32[72,128]{1,0:T(1,128)}', space=vmem, size = 0x9000, scoped, tag = 'internal scratch']
  #allocation2 [shape = 'f32[32,672]{1,0:T(8,128)}', space=vmem, size = 0x18000, scoped, tag = 'scratch operand']
  #allocation3 [shape = 'f32[36,512]{1,0:T(8,128)}', space=vmem, size = 0x14000, scoped, tag = 'scratch operand']
  #allocation4 [shape = 'f32[288,512]{1,0:T(8,128)}', space=vmem, size = 0x90000, scoped, tag = 'scratch operand']
  #allocation5 [shape = 'bf16[32,32,260]{2,1,0:T(8,128)(2,1)}', space=vmem, size = 0xc0000, scoped, tag = 'scratch operand']
  #allocation6 [shape = 's32[1]{0}', space=sflag, size = 0x4, scoped, tag = 'scratch operand']
  #allocation9 [shape = 's32[]', space=sflag, size = 0x4, offset = 0, fixed_abs, tag = 'sflag constant byte address 0x0 - dummy sync flag']
  #allocation10 [shape = 's32[]', space=sflag, size = 0x4, offset = 0, fixed_abs, tag = 'sflag constant byte address 0x0 - dummy sync flag']
  #allocation11 [shape = 'u32[]', space=smem, size = 0x4, offset = 0x44, fixed_abs, tag = 'smem constant byte address 0x44 - assertion arg 0']
  #allocation12 [shape = 'u32[]', space=smem, size = 0x4, offset = 0x48, fixed_abs, tag = 'smem constant byte address 0x48 - assertion arg 1']
  %s0 = inlined_call_operand.vmem [shape: f32[4,672], index: 0, kind: input, shape index: {}]
  %s1 = inlined_call_operand.vmem [shape: f32[9,1,512], index: 1, kind: input, shape index: {}]
  %s2 = inlined_call_operand.vmem [shape: f32[32,36], index: 2, kind: input, shape index: {}]
  %s3 = inlined_call_operand.vmem [shape: f32[32,1], index: 3, kind: input, shape index: {}]
  %s4 = inlined_call_operand.vmem [shape: f32[32,288], index: 4, kind: input, shape index: {}]
  %s5 = inlined_call_operand.vmem [shape: f32[32,1], index: 5, kind: input, shape index: {}]
  %s6 = inlined_call_operand.vmem [shape: f32[1,4], index: 6, kind: input, shape index: {}]
  %s7 = inlined_call_operand.vmem [shape: f32[1,4], index: 7, kind: input, shape index: {}]
  %s8 = inlined_call_operand.vmem [shape: f32[1,4], index: 8, kind: input, shape index: {}]
  %s9 = inlined_call_operand.vmem [shape: f32[1,4], index: 9, kind: input, shape index: {}]
  %s10 = inlined_call_operand.vmem [shape: f32[1,4], index: 10, kind: input, shape index: {}]
  %s11 = inlined_call_operand.vmem [shape: f32[1,4], index: 11, kind: input, shape index: {}]
  %s12 = inlined_call_operand.vmem [shape: f32[4,4], index: 12, kind: input, shape index: {}]
  %s13 = inlined_call_operand.vmem [shape: f32[1,4], index: 13, kind: input, shape index: {}]
  %s14 = inlined_call_operand.hbm [shape: bf16[32,32,260], index: 14, kind: input, shape index: {}]
  %s15 = inlined_call_operand.vmem [shape: f32[32,1,32], index: 15, kind: input, shape index: {}]
  %s16 = inlined_call_operand.vmem [shape: f32[32,8,32], index: 16, kind: input, shape index: {}]
  %s17 = inlined_call_operand.vmem [shape: f32[32,1,8], index: 17, kind: input, shape index: {}]
  %s18 = inlined_call_operand.vmem [shape: f32[256,16], index: 18, kind: input, shape index: {}]
  %s19 = inlined_call_operand.vmem [shape: f32[1,16], index: 19, kind: input, shape index: {}]
  %s20 = inlined_call_operand.hbm [shape: f32[2,16], index: 20, kind: output, shape index: {}]
  %s21 = sld [smem:[#allocation0]]
  $region90: #{prototype1_forward.1} parent=0
    _
  %s23 = ssub.s32 1, %s21
  %s24 = scalar_select 0, %s23, %s21
  $region1: #{prototype1_forward.1} parent=0
    #allocation7 [shape = 'u8[1024]{0}', space=vmem, size = 0x400, scoped, tag = 'output window, operand 0, single buffered']
    #allocation8 [shape = 's32[1]{0}', space=sflag, size = 0x4, scoped, tag = 'scoped memory for prototype1_forward.1']
    %25 = vsyncpa [#allocation8], 0
    // Predicated region
    $region2: #{prototype1_forward.1} parent=1 // pred_check
      _
    $region3: #{prototype1_forward.1} parent=1 // pred_check_branch
      %27 = sbr.rel (0) target = $region5
    $region4: #{prototype1_forward.1} parent=1 // pred_region
      _
    $region5: #{prototype1_forward.1} parent=1 // pred_fallthru
      _
    // Predicated region
    $region6: #{prototype1_forward.1} parent=1 // pred_check
      _
    $region7: #{prototype1_forward.1} parent=1 // pred_check_branch
      %29 = sbr.rel (0) target = $region9
    $region8: #{prototype1_forward.1} parent=1 // pred_region
      _
    $region9: #{prototype1_forward.1} parent=1 // pred_fallthru
      _
    // Predicated region
    $region10: #{prototype1_forward.1} parent=1 // pred_check
      _
    $region11: #{prototype1_forward.1} parent=1 // pred_check_branch
      %31 = sbr.rel (0) target = $region13
    $region12: #{prototype1_forward.1} parent=1 // pred_region
      _
    $region13: #{prototype1_forward.1} parent=1 // pred_fallthru
      _
    // Predicated region
    $region14: #{prototype1_forward.1} parent=1 // pred_check
      _
    $region15: #{prototype1_forward.1} parent=1 // pred_check_branch
      %33 = sbr.rel (0) target = $region17
    $region16: #{prototype1_forward.1} parent=1 // pred_region
      _
    $region17: #{prototype1_forward.1} parent=1 // pred_fallthru
      _
    // Predicated region
    $region18: #{prototype1_forward.1} parent=1 // pred_check
      _
    $region19: #{prototype1_forward.1} parent=1 // pred_check_branch
      %35 = sbr.rel (0) target = $region21
    $region20: #{prototype1_forward.1} parent=1 // pred_region
      _
    $region21: #{prototype1_forward.1} parent=1 // pred_fallthru
      _
    // Predicated region
    $region22: #{prototype1_forward.1} parent=1 // pred_check
      _
    $region23: #{prototype1_forward.1} parent=1 // pred_check_branch
      %37 = sbr.rel (0) target = $region25
    $region24: #{prototype1_forward.1} parent=1 // pred_region
      _
    $region25: #{prototype1_forward.1} parent=1 // pred_fallthru
      _
    // Predicated region
    $region26: #{prototype1_forward.1} parent=1 // pred_check
      _
    $region27: #{prototype1_forward.1} parent=1 // pred_check_branch
      %39 = sbr.rel (0) target = $region29
    $region28: #{prototype1_forward.1} parent=1 // pred_region
      _
    $region29: #{prototype1_forward.1} parent=1 // pred_fallthru
      _
    // Predicated region
    $region30: #{prototype1_forward.1} parent=1 // pred_check
      _
    $region31: #{prototype1_forward.1} parent=1 // pred_check_branch
      %41 = sbr.rel (0) target = $region33
    $region32: #{prototype1_forward.1} parent=1 // pred_region
      _
    $region33: #{prototype1_forward.1} parent=1 // pred_fallthru
      _
    // Predicated region
    $region34: #{prototype1_forward.1} parent=1 // pred_check
      _
    $region35: #{prototype1_forward.1} parent=1 // pred_check_branch
      %43 = sbr.rel (0) target = $region37
    $region36: #{prototype1_forward.1} parent=1 // pred_region
      _
    $region37: #{prototype1_forward.1} parent=1 // pred_fallthru
      _
    // Predicated region
    $region38: #{prototype1_forward.1} parent=1 // pred_check
      _
    $region39: #{prototype1_forward.1} parent=1 // pred_check_branch
      %45 = sbr.rel (0) target = $region41
    $region40: #{prototype1_forward.1} parent=1 // pred_region
      _
    $region41: #{prototype1_forward.1} parent=1 // pred_fallthru
      _
    // Predicated region
    $region42: #{prototype1_forward.1} parent=1 // pred_check
      _
    $region43: #{prototype1_forward.1} parent=1 // pred_check_branch
      %47 = sbr.rel (0) target = $region45
    $region44: #{prototype1_forward.1} parent=1 // pred_region
      _
    $region45: #{prototype1_forward.1} parent=1 // pred_fallthru
      _
    // Predicated region
    $region46: #{prototype1_forward.1} parent=1 // pred_check
      _
    $region47: #{prototype1_forward.1} parent=1 // pred_check_branch
      %49 = sbr.rel (0) target = $region49
    $region48: #{prototype1_forward.1} parent=1 // pred_region
      _
    $region49: #{prototype1_forward.1} parent=1 // pred_fallthru
      _
    // Predicated region
    $region50: #{prototype1_forward.1} parent=1 // pred_check
      _
    $region51: #{prototype1_forward.1} parent=1 // pred_check_branch
      %51 = sbr.rel (0) target = $region53
    $region52: #{prototype1_forward.1} parent=1 // pred_region
      _
    $region53: #{prototype1_forward.1} parent=1 // pred_fallthru
      _
    // Predicated region
    $region54: #{prototype1_forward.1} parent=1 // pred_check
      _
    $region55: #{prototype1_forward.1} parent=1 // pred_check_branch
      %53 = sbr.rel (0) target = $region57
    $region56: #{prototype1_forward.1} parent=1 // pred_region
      _
    $region57: #{prototype1_forward.1} parent=1 // pred_fallthru
      _
    // Predicated region
    $region58: #{prototype1_forward.1} parent=1 // pred_check
      _
    $region59: #{prototype1_forward.1} parent=1 // pred_check_branch
      %55 = sbr.rel (0) target = $region61
    $region60: #{prototype1_forward.1} parent=1 // pred_region
      _
    $region61: #{prototype1_forward.1} parent=1 // pred_fallthru
      _
    // Predicated region
    $region62: #{prototype1_forward.1} parent=1 // pred_check
      _
    $region63: #{prototype1_forward.1} parent=1 // pred_check_branch
      %57 = sbr.rel (0) target = $region65
    $region64: #{prototype1_forward.1} parent=1 // pred_region
      _
    $region65: #{prototype1_forward.1} parent=1 // pred_fallthru
      _
    // Predicated region
    $region66: #{prototype1_forward.1} parent=1 // pred_check
      _
    $region67: #{prototype1_forward.1} parent=1 // pred_check_branch
      %59 = sbr.rel (0) target = $region69
    $region68: #{prototype1_forward.1} parent=1 // pred_region
      _
    $region69: #{prototype1_forward.1} parent=1 // pred_fallthru
      _
    // Predicated region
    $region70: #{prototype1_forward.1} parent=1 // pred_check
      _
    $region71: #{prototype1_forward.1} parent=1 // pred_check_branch
      %61 = sbr.rel (0) target = $region73
    $region72: #{prototype1_forward.1} parent=1 // pred_region
      _
    $region73: #{prototype1_forward.1} parent=1 // pred_fallthru
      _
    // Predicated region
    $region74: #{prototype1_forward.1} parent=1 // pred_check
      _
    $region75: #{prototype1_forward.1} parent=1 // pred_check_branch
      %63 = sbr.rel (0) target = $region77
    $region76: #{prototype1_forward.1} parent=1 // pred_region
      _
    $region77: #{prototype1_forward.1} parent=1 // pred_fallthru
      _
    // Predicated region
    $region78: #{prototype1_forward.1} parent=1 // pred_check
      _
    $region79: #{prototype1_forward.1} parent=1 // pred_check_branch
      %66 = sbr.rel target = $region81
    $region80: #{prototype1_forward.1} parent=1 // pred_region
      %67 = sst [smem:[#allocation11]] [#allocation10]
      %68 = sst [smem:[#allocation12]] [#allocation9]
    $region81: #{prototype1_forward.1} parent=1 // pred_fallthru
      _
    %70 = shalt.err (0)
    %s72 = sshll.u32 %s14, 4
    %s73 = int_to_ptr.hbm [resolvable:$true] %s72
    %s74 = sshll.u32 [#allocation5], 4
    %s75 = int_to_ptr.vmem [resolvable:$true] %s74
    %77 = dma.hbm_to_vmem [thread:$0]  %s73, 24576, %s75, [#allocation6]
    %v78 = vld [vmem:[%s0] sm:$0xff]
    %v79 = vld [vmem:[%s0 + $0x8] sm:$0xff]
    %v80 = vld [vmem:[%s0 + $0x10] sm:$0xf]
    %v81 = vld [vmem:[%s1] sm:$0xf]
    %v83 = vperm.slane %v81, 0
    %v84 = vperm.slane %v81, 1
    %v85 = vperm.slane %v81, 2
    %v86 = vperm.slane %v81, 3
    %v87 = vrot.slane %v84, 4
    %v88 = vrot.slane %v86, 4
    %vm89 = vcmask 1043456
    %v90 = vsel %vm89, %v83, %v87
    %v91 = vsel %vm89, %v85, %v88
    %92 = vrot.lane.b32.xlu0 %v90, 111
    %v93 = vpop.permute.xlu0 %92
    %94 = vrot.lane.b32.xlu0 %v91, 111
    %v95 = vpop.permute.xlu0 %94
    %v96 = vrot.slane %v93, 4
    %v97 = vrot.slane %v95, 4
    %vm98 = vcmask 908288
    %v99 = vsel %vm98, %v96, %v93
    %v100 = vsel %vm89, %v96, %v97
    %v101 = vsel %vm98, %v100, %v95
    %v105 = vmul.f32 %v78, %v99
    %v106 = vmul.f32 %v79, %v101
    %v107 = vmul.f32 %v80, %v97
    %111 = vst [vmem:[#allocation1] ss:$2 sm:$0xff] %v105
    %s112 = scalar_lea.vmem [#allocation1], 16
    %113 = vst [vmem:[%s112] ss:$2 sm:$0xff] %v106
    %s114 = scalar_lea.vmem [#allocation1], 32
    %115 = vst [vmem:[%s114] ss:$2 sm:$0xff] %v107
    %v116 = vld.sshfl [vmem:[#allocation1] sm:$0xff pattern:$0x75316420]
    %v117 = vld.sshfl [vmem:[#allocation1 + $0x8] sm:$0xff pattern:$0x75316420]
    %v118 = vld.sshfl [vmem:[#allocation1 + $0x10] sm:$0xff pattern:$0x75316420]
    %v119 = vld.sshfl [vmem:[#allocation1 + $0x18] sm:$0xff pattern:$0x75316420]
    %v120 = vld.sshfl [vmem:[#allocation1 + $0x20] sm:$0xff pattern:$0x75316420]
    %121 = vrot.lane.b32.xlu0 %v116, 17
    %v122 = vpop.permute.xlu0 %121
    %123 = vrot.lane.b32.xlu0 %v117, 17
    %v124 = vpop.permute.xlu0 %123
    %125 = vrot.lane.b32.xlu0 %v118, 17
    %v126 = vpop.permute.xlu0 %125
    %127 = vrot.lane.b32.xlu0 %v119, 17
    %v128 = vpop.permute.xlu0 %127
    %129 = vrot.lane.b32.xlu0 %v120, 17
    %v130 = vpop.permute.xlu0 %129
    %vm131 = vcmask 138240
    %v132 = vsel %vm131, %v122, %v124
    %v133 = vsel %vm131, %v124, %v126
    %v134 = vsel %vm131, %v126, %v128
    %v135 = vsel %vm131, %v128, %v130
    %140 = vst [vmem:[#allocation3] sm:$0xf] %v132
    %141 = vst [vmem:[#allocation3 + $0x8] sm:$0xf] %v133
    %142 = vst [vmem:[#allocation3 + $0x10] sm:$0xf] %v134
    %143 = vst [vmem:[#allocation3 + $0x18] sm:$0xf] %v135
    %v144 = vld [vmem:[%s0] sm:$0xff]
    %v145 = vld [vmem:[%s0 + $0x8] sm:$0xff]
    %v146 = vld [vmem:[%s0 + $0x10] sm:$0xf]
    %s147 = scalar_lea.vmem %s1, 4
    %v148 = vld [vmem:[%s147] sm:$0xf]
    %v150 = vperm.slane %v148, 0
    %v151 = vperm.slane %v148, 1
    %v152 = vperm.slane %v148, 2
    %v153 = vperm.slane %v148, 3
    %v154 = vrot.slane %v151, 4
    %v155 = vrot.slane %v153, 4
    %v156 = vsel %vm89, %v150, %v154
    %v157 = vsel %vm89, %v152, %v155
    %158 = vrot.lane.b32.xlu0 %v156, 112
    %v159 = vpop.permute.xlu0 %158
    %160 = vrot.lane.b32.xlu0 %v157, 112
    %v161 = vpop.permute.xlu0 %160
    %v162 = vrot.slane %v159, 4
    %v163 = vrot.slane %v161, 4
    %vm164 = vcmask 916480
    %v165 = vsel %vm164, %v162, %v159
    %v166 = vsel %vm89, %v162, %v163
    %v167 = vsel %vm164, %v166, %v161
    %v171 = vmul.f32 %v144, %v165
    %v172 = vmul.f32 %v145, %v167
    %v173 = vmul.f32 %v146, %v163
    %s177 = scalar_lea.vmem [#allocation1], 1
    %178 = vst [vmem:[%s177] ss:$2 sm:$0xff] %v171
    %s179 = scalar_lea.vmem [#allocation1], 17
    %180 = vst [vmem:[%s179] ss:$2 sm:$0xff] %v172
    %s181 = scalar_lea.vmem [#allocation1], 33
    %182 = vst [vmem:[%s181] ss:$2 sm:$0xff] %v173
    %v183 = vld.sshfl [vmem:[#allocation1] sm:$0xff pattern:$0x75316420]
    %v184 = vld.sshfl [vmem:[#allocation1 + $0x8] sm:$0xff pattern:$0x75316420]
    %v185 = vld.sshfl [vmem:[#allocation1 + $0x10] sm:$0xff pattern:$0x75316420]
    %v186 = vld.sshfl [vmem:[#allocation1 + $0x18] sm:$0xff pattern:$0x75316420]
    %v187 = vld.sshfl [vmem:[#allocation1 + $0x20] sm:$0xff pattern:$0x75316420]
    %188 = vrot.lane.b32.xlu0 %v183, 16
    %v189 = vpop.permute.xlu0 %188
    %190 = vrot.lane.b32.xlu0 %v184, 16
    %v191 = vpop.permute.xlu0 %190
    %192 = vrot.lane.b32.xlu0 %v185, 16
    %v193 = vpop.permute.xlu0 %192
    %194 = vrot.lane.b32.xlu0 %v186, 16
    %v195 = vpop.permute.xlu0 %194
    %196 = vrot.lane.b32.xlu0 %v187, 16
    %v197 = vpop.permute.xlu0 %196
    %vm198 = vcmask 130048
    %v199 = vsel %vm198, %v189, %v191
    %v200 = vsel %vm198, %v191, %v193
    %v201 = vsel %vm198, %v193, %v195
    %v202 = vsel %vm198, %v195, %v197
    %207 = vst [vmem:[#allocation3] sm:$0xf0] %v199
    %208 = vst [vmem:[#allocation3 + $0x8] sm:$0xf0] %v200
    %209 = vst [vmem:[#allocation3 + $0x10] sm:$0xf0] %v201
    %210 = vst [vmem:[#allocation3 + $0x18] sm:$0xf0] %v202
    %v211 = vld [vmem:[%s0] sm:$0xff]
    %v212 = vld [vmem:[%s0 + $0x8] sm:$0xff]
    %v213 = vld [vmem:[%s0 + $0x10] sm:$0xf]
    %s214 = scalar_lea.vmem %s1, 8
    %v215 = vld [vmem:[%s214] sm:$0xf]
    %v217 = vperm.slane %v215, 0
    %v218 = vperm.slane %v215, 1
    %v219 = vperm.slane %v215, 2
    %v220 = vperm.slane %v215, 3
    %v221 = vrot.slane %v218, 4
    %v222 = vrot.slane %v220, 4
    %v223 = vsel %vm89, %v217, %v221
    %v224 = vsel %vm89, %v219, %v222
    %225 = vrot.lane.b32.xlu0 %v223, 113
    %v226 = vpop.permute.xlu0 %225
    %227 = vrot.lane.b32.xlu0 %v224, 113
    %v228 = vpop.permute.xlu0 %227
    %v229 = vrot.slane %v226, 4
    %v230 = vrot.slane %v228, 4
    %vm231 = vcmask 924672
    %v232 = vsel %vm231, %v229, %v226
    %v233 = vsel %vm89, %v229, %v230
    %v234 = vsel %vm231, %v233, %v228
    %v238 = vmul.f32 %v211, %v232
    %v239 = vmul.f32 %v212, %v234
    %v240 = vmul.f32 %v213, %v230
    %244 = vst [vmem:[#allocation1] ss:$2 sm:$0xff] %v238
    %s245 = scalar_lea.vmem [#allocation1], 16
    %246 = vst [vmem:[%s245] ss:$2 sm:$0xff] %v239
    %s247 = scalar_lea.vmem [#allocation1], 32
    %248 = vst [vmem:[%s247] ss:$2 sm:$0xff] %v240
    %v249 = vld.sshfl [vmem:[#allocation1] sm:$0xff pattern:$0x75316420]
    %v250 = vld.sshfl [vmem:[#allocation1 + $0x8] sm:$0xff pattern:$0x75316420]
    %v251 = vld.sshfl [vmem:[#allocation1 + $0x10] sm:$0xff pattern:$0x75316420]
    %v252 = vld.sshfl [vmem:[#allocation1 + $0x18] sm:$0xff pattern:$0x75316420]
    %v253 = vld.sshfl [vmem:[#allocation1 + $0x20] sm:$0xff pattern:$0x75316420]
    %254 = vrot.lane.b32.xlu0 %v249, 15
    %v255 = vpop.permute.xlu0 %254
    %256 = vrot.lane.b32.xlu0 %v250, 15
    %v257 = vpop.permute.xlu0 %256
    %258 = vrot.lane.b32.xlu0 %v251, 15
    %v259 = vpop.permute.xlu0 %258
    %260 = vrot.lane.b32.xlu0 %v252, 15
    %v261 = vpop.permute.xlu0 %260
    %262 = vrot.lane.b32.xlu0 %v253, 15
    %v263 = vpop.permute.xlu0 %262
    %vm264 = vcmask 121856
    %v265 = vsel %vm264, %v255, %v257
    %v266 = vsel %vm264, %v257, %v259
    %v267 = vsel %vm264, %v259, %v261
    %v268 = vsel %vm264, %v261, %v263
    %273 = vst [vmem:[#allocation3 + $0x20] sm:$0xf] %v265
    %274 = vst [vmem:[#allocation3 + $0x28] sm:$0xf] %v266
    %275 = vst [vmem:[#allocation3 + $0x30] sm:$0xf] %v267
    %276 = vst [vmem:[#allocation3 + $0x38] sm:$0xf] %v268
    %v277 = vld [vmem:[%s0] sm:$0xff]
    %v278 = vld [vmem:[%s0 + $0x8] sm:$0xff]
    %v279 = vld [vmem:[%s0 + $0x10] sm:$0xf]
    %s280 = scalar_lea.vmem %s1, 12
    %v281 = vld [vmem:[%s280] sm:$0xf]
    %v283 = vperm.slane %v281, 0
    %v284 = vperm.slane %v281, 1
    %v285 = vperm.slane %v281, 2
    %v286 = vperm.slane %v281, 3
    %v287 = vrot.slane %v284, 4
    %v288 = vrot.slane %v286, 4
    %v289 = vsel %vm89, %v283, %v287
    %v290 = vsel %vm89, %v285, %v288
    %291 = vrot.lane.b32.xlu0 %v289, 127
    %v292 = vpop.permute.xlu0 %291
    %293 = vrot.lane.b32.xlu0 %v290, 127
    %v294 = vpop.permute.xlu0 %293
    %v295 = vrot.slane %v292, 4
    %v296 = vrot.slane %v294, 4
    %vm297 = vcmask 1039360
    %v298 = vsel %vm297, %v295, %v292
    %v299 = vsel %vm89, %v295, %v296
    %v300 = vsel %vm297, %v299, %v294
    %v304 = vmul.f32 %v277, %v298
    %v305 = vmul.f32 %v278, %v300
    %v306 = vmul.f32 %v279, %v296
    %s310 = scalar_lea.vmem [#allocation1], 1
    %311 = vst [vmem:[%s310] ss:$2 sm:$0xff] %v304
    %s312 = scalar_lea.vmem [#allocation1], 17
    %313 = vst [vmem:[%s312] ss:$2 sm:$0xff] %v305
    %s314 = scalar_lea.vmem [#allocation1], 33
    %315 = vst [vmem:[%s314] ss:$2 sm:$0xff] %v306
    %v316 = vld.sshfl [vmem:[#allocation1] sm:$0xff pattern:$0x75316420]
    %v317 = vld.sshfl [vmem:[#allocation1 + $0x8] sm:$0xff pattern:$0x75316420]
    %v318 = vld.sshfl [vmem:[#allocation1 + $0x10] sm:$0xff pattern:$0x75316420]
    %v319 = vld.sshfl [vmem:[#allocation1 + $0x18] sm:$0xff pattern:$0x75316420]
    %v320 = vld.sshfl [vmem:[#allocation1 + $0x20] sm:$0xff pattern:$0x75316420]
    %321 = vrot.lane.b32.xlu0 %v316, 1
    %v322 = vpop.permute.xlu0 %321
    %323 = vrot.lane.b32.xlu0 %v317, 1
    %v324 = vpop.permute.xlu0 %323
    %325 = vrot.lane.b32.xlu0 %v318, 1
    %v326 = vpop.permute.xlu0 %325
    %327 = vrot.lane.b32.xlu0 %v319, 1
    %v328 = vpop.permute.xlu0 %327
    %329 = vrot.lane.b32.xlu0 %v320, 1
    %v330 = vpop.permute.xlu0 %329
    %vm331 = vcmask 7168
    %v332 = vsel %vm331, %v322, %v324
    %v333 = vsel %vm331, %v324, %v326
    %v334 = vsel %vm331, %v326, %v328
    %v335 = vsel %vm331, %v328, %v330
    %340 = vst [vmem:[#allocation3 + $0x20] sm:$0xf0] %v332
    %341 = vst [vmem:[#allocation3 + $0x28] sm:$0xf0] %v333
    %342 = vst [vmem:[#allocation3 + $0x30] sm:$0xf0] %v334
    %343 = vst [vmem:[#allocation3 + $0x38] sm:$0xf0] %v335
    %v344 = vld [vmem:[%s0 + $0x4] sm:$0xff]
    %v345 = vld [vmem:[%s0 + $0xc] sm:$0xff]
    %s346 = scalar_lea.vmem %s1, 16
    %v347 = vld [vmem:[%s346] sm:$0xf]
    %v349 = vperm.slane %v347, 0
    %v350 = vperm.slane %v347, 1
    %v351 = vperm.slane %v347, 2
    %v352 = vperm.slane %v347, 3
    %v353 = vrot.slane %v350, 4
    %v354 = vrot.slane %v352, 4
    %v355 = vsel %vm89, %v349, %v353
    %v356 = vsel %vm89, %v351, %v354
    %v359 = vmul.f32 %v344, %v355
    %v360 = vmul.f32 %v345, %v356
    %363 = vst [vmem:[#allocation1] ss:$2 sm:$0xff] %v359
    %s364 = scalar_lea.vmem [#allocation1], 16
    %365 = vst [vmem:[%s364] ss:$2 sm:$0xff] %v360
    %v366 = vld.sshfl [vmem:[#allocation1] sm:$0xff pattern:$0x75316420]
    %v367 = vld.sshfl [vmem:[#allocation1 + $0x8] sm:$0xff pattern:$0x75316420]
    %v368 = vld.sshfl [vmem:[#allocation1 + $0x10] sm:$0xff pattern:$0x75316420]
    %v369 = vld.sshfl [vmem:[#allocation1 + $0x18] sm:$0xff pattern:$0x75316420]
    %374 = vst [vmem:[#allocation3 + $0x40] sm:$0xf] %v366
    %375 = vst [vmem:[#allocation3 + $0x48] sm:$0xf] %v367
    %376 = vst [vmem:[#allocation3 + $0x50] sm:$0xf] %v368
    %377 = vst [vmem:[#allocation3 + $0x58] sm:$0xf] %v369
    %v378 = vld [vmem:[%s0 + $0x4] sm:$0xff]
    %v379 = vld [vmem:[%s0 + $0xc] sm:$0xff]
    %v380 = vld [vmem:[%s0 + $0x14] sm:$0xf]
    %s381 = scalar_lea.vmem %s1, 20
    %v382 = vld [vmem:[%s381] sm:$0xf]
    %v384 = vperm.slane %v382, 0
    %v385 = vperm.slane %v382, 1
    %v386 = vperm.slane %v382, 2
    %v387 = vperm.slane %v382, 3
    %v388 = vrot.slane %v385, 4
    %v389 = vrot.slane %v387, 4
    %v390 = vsel %vm89, %v384, %v388
    %v391 = vsel %vm89, %v386, %v389
    %392 = vrot.lane.b32.xlu0 %v390, 1
    %v393 = vpop.permute.xlu0 %392
    %394 = vrot.lane.b32.xlu0 %v391, 1
    %v395 = vpop.permute.xlu0 %394
    %v396 = vrot.slane %v393, 4
    %v397 = vrot.slane %v395, 4
    %v398 = vsel %vm331, %v396, %v393
    %v399 = vsel %vm89, %v396, %v397
    %v400 = vsel %vm331, %v399, %v395
    %v404 = vmul.f32 %v378, %v398
    %v405 = vmul.f32 %v379, %v400
    %v406 = vmul.f32 %v380, %v397
    %s410 = scalar_lea.vmem [#allocation1], 1
    %411 = vst [vmem:[%s410] ss:$2 sm:$0xff] %v404
    %s412 = scalar_lea.vmem [#allocation1], 17
    %413 = vst [vmem:[%s412] ss:$2 sm:$0xff] %v405
    %s414 = scalar_lea.vmem [#allocation1], 33
    %415 = vst [vmem:[%s414] ss:$2 sm:$0xff] %v406
    %v416 = vld.sshfl [vmem:[#allocation1] sm:$0xff pattern:$0x75316420]
    %v417 = vld.sshfl [vmem:[#allocation1 + $0x8] sm:$0xff pattern:$0x75316420]
    %v418 = vld.sshfl [vmem:[#allocation1 + $0x10] sm:$0xff pattern:$0x75316420]
    %v419 = vld.sshfl [vmem:[#allocation1 + $0x18] sm:$0xff pattern:$0x75316420]
    %v420 = vld.sshfl [vmem:[#allocation1 + $0x20] sm:$0xff pattern:$0x75316420]
    %421 = vrot.lane.b32.xlu0 %v416, 127
    %v422 = vpop.permute.xlu0 %421
    %423 = vrot.lane.b32.xlu0 %v417, 127
    %v424 = vpop.permute.xlu0 %423
    %425 = vrot.lane.b32.xlu0 %v418, 127
    %v426 = vpop.permute.xlu0 %425
    %427 = vrot.lane.b32.xlu0 %v419, 127
    %v428 = vpop.permute.xlu0 %427
    %429 = vrot.lane.b32.xlu0 %v420, 127
    %v430 = vpop.permute.xlu0 %429
    %v431 = vsel %vm297, %v422, %v424
    %v432 = vsel %vm297, %v424, %v426
    %v433 = vsel %vm297, %v426, %v428
    %v434 = vsel %vm297, %v428, %v430
    %439 = vst [vmem:[#allocation3 + $0x40] sm:$0xf0] %v431
    %440 = vst [vmem:[#allocation3 + $0x48] sm:$0xf0] %v432
    %441 = vst [vmem:[#allocation3 + $0x50] sm:$0xf0] %v433
    %442 = vst [vmem:[#allocation3 + $0x58] sm:$0xf0] %v434
    %v443 = vld [vmem:[%s0 + $0x4] sm:$0xff]
    %v444 = vld [vmem:[%s0 + $0xc] sm:$0xff]
    %v445 = vld [vmem:[%s0 + $0x14] sm:$0xf]
    %s446 = scalar_lea.vmem %s1, 24
    %v447 = vld [vmem:[%s446] sm:$0xf]
    %v449 = vperm.slane %v447, 0
    %v450 = vperm.slane %v447, 1
    %v451 = vperm.slane %v447, 2
    %v452 = vperm.slane %v447, 3
    %v453 = vrot.slane %v450, 4
    %v454 = vrot.slane %v452, 4
    %v455 = vsel %vm89, %v449, %v453
    %v456 = vsel %vm89, %v451, %v454
    %457 = vrot.lane.b32.xlu0 %v455, 15
    %v458 = vpop.permute.xlu0 %457
    %459 = vrot.lane.b32.xlu0 %v456, 15
    %v460 = vpop.permute.xlu0 %459
    %v461 = vrot.slane %v458, 4
    %v462 = vrot.slane %v460, 4
    %v463 = vsel %vm264, %v461, %v458
    %v464 = vsel %vm89, %v461, %v462
    %v465 = vsel %vm264, %v464, %v460
    %v469 = vmul.f32 %v443, %v463
    %v470 = vmul.f32 %v444, %v465
    %v471 = vmul.f32 %v445, %v462
    %475 = vst [vmem:[#allocation1] ss:$2 sm:$0xff] %v469
    %s476 = scalar_lea.vmem [#allocation1], 16
    %477 = vst [vmem:[%s476] ss:$2 sm:$0xff] %v470
    %s478 = scalar_lea.vmem [#allocation1], 32
    %479 = vst [vmem:[%s478] ss:$2 sm:$0xff] %v471
    %v480 = vld.sshfl [vmem:[#allocation1] sm:$0xff pattern:$0x75316420]
    %v481 = vld.sshfl [vmem:[#allocation1 + $0x8] sm:$0xff pattern:$0x75316420]
    %v482 = vld.sshfl [vmem:[#allocation1 + $0x10] sm:$0xff pattern:$0x75316420]
    %v483 = vld.sshfl [vmem:[#allocation1 + $0x18] sm:$0xff pattern:$0x75316420]
    %v484 = vld.sshfl [vmem:[#allocation1 + $0x20] sm:$0xff pattern:$0x75316420]
    %485 = vrot.lane.b32.xlu0 %v480, 113
    %v486 = vpop.permute.xlu0 %485
    %487 = vrot.lane.b32.xlu0 %v481, 113
    %v488 = vpop.permute.xlu0 %487
    %489 = vrot.lane.b32.xlu0 %v482, 113
    %v490 = vpop.permute.xlu0 %489
    %491 = vrot.lane.b32.xlu0 %v483, 113
    %v492 = vpop.permute.xlu0 %491
    %493 = vrot.lane.b32.xlu0 %v484, 113
    %v494 = vpop.permute.xlu0 %493
    %v495 = vsel %vm231, %v486, %v488
    %v496 = vsel %vm231, %v488, %v490
    %v497 = vsel %vm231, %v490, %v492
    %v498 = vsel %vm231, %v492, %v494
    %503 = vst [vmem:[#allocation3 + $0x60] sm:$0xf] %v495
    %504 = vst [vmem:[#allocation3 + $0x68] sm:$0xf] %v496
    %505 = vst [vmem:[#allocation3 + $0x70] sm:$0xf] %v497
    %506 = vst [vmem:[#allocation3 + $0x78] sm:$0xf] %v498
    %v507 = vld [vmem:[%s0 + $0x4] sm:$0xff]
    %v508 = vld [vmem:[%s0 + $0xc] sm:$0xff]
    %v509 = vld [vmem:[%s0 + $0x14] sm:$0xf]
    %s510 = scalar_lea.vmem %s1, 28
    %v511 = vld [vmem:[%s510] sm:$0xf]
    %v513 = vperm.slane %v511, 0
    %v514 = vperm.slane %v511, 1
    %v515 = vperm.slane %v511, 2
    %v516 = vperm.slane %v511, 3
    %v517 = vrot.slane %v514, 4
    %v518 = vrot.slane %v516, 4
    %v519 = vsel %vm89, %v513, %v517
    %v520 = vsel %vm89, %v515, %v518
    %521 = vrot.lane.b32.xlu0 %v519, 16
    %v522 = vpop.permute.xlu0 %521
    %523 = vrot.lane.b32.xlu0 %v520, 16
    %v524 = vpop.permute.xlu0 %523
    %v525 = vrot.slane %v522, 4
    %v526 = vrot.slane %v524, 4
    %v527 = vsel %vm198, %v525, %v522
    %v528 = vsel %vm89, %v525, %v526
    %v529 = vsel %vm198, %v528, %v524
    %v533 = vmul.f32 %v507, %v527
    %v534 = vmul.f32 %v508, %v529
    %v535 = vmul.f32 %v509, %v526
    %s539 = scalar_lea.vmem [#allocation1], 1
    %540 = vst [vmem:[%s539] ss:$2 sm:$0xff] %v533
    %s541 = scalar_lea.vmem [#allocation1], 17
    %542 = vst [vmem:[%s541] ss:$2 sm:$0xff] %v534
    %s543 = scalar_lea.vmem [#allocation1], 33
    %544 = vst [vmem:[%s543] ss:$2 sm:$0xff] %v535
    %v545 = vld.sshfl [vmem:[#allocation1] sm:$0xff pattern:$0x75316420]
    %v546 = vld.sshfl [vmem:[#allocation1 + $0x8] sm:$0xff pattern:$0x75316420]
    %v547 = vld.sshfl [vmem:[#allocation1 + $0x10] sm:$0xff pattern:$0x75316420]
    %v548 = vld.sshfl [vmem:[#allocation1 + $0x18] sm:$0xff pattern:$0x75316420]
    %v549 = vld.sshfl [vmem:[#allocation1 + $0x20] sm:$0xff pattern:$0x75316420]
    %550 = vrot.lane.b32.xlu0 %v545, 112
    %v551 = vpop.permute.xlu0 %550
    %552 = vrot.lane.b32.xlu0 %v546, 112
    %v553 = vpop.permute.xlu0 %552
    %554 = vrot.lane.b32.xlu0 %v547, 112
    %v555 = vpop.permute.xlu0 %554
    %556 = vrot.lane.b32.xlu0 %v548, 112
    %v557 = vpop.permute.xlu0 %556
    %558 = vrot.lane.b32.xlu0 %v549, 112
    %v559 = vpop.permute.xlu0 %558
    %v560 = vsel %vm164, %v551, %v553
    %v561 = vsel %vm164, %v553, %v555
    %v562 = vsel %vm164, %v555, %v557
    %v563 = vsel %vm164, %v557, %v559
    %568 = vst [vmem:[#allocation3 + $0x60] sm:$0xf0] %v560
    %569 = vst [vmem:[#allocation3 + $0x68] sm:$0xf0] %v561
    %570 = vst [vmem:[#allocation3 + $0x70] sm:$0xf0] %v562
    %571 = vst [vmem:[#allocation3 + $0x78] sm:$0xf0] %v563
    %v572 = vld [vmem:[%s0 + $0x4] sm:$0xff]
    %v573 = vld [vmem:[%s0 + $0xc] sm:$0xff]
    %v574 = vld [vmem:[%s0 + $0x14] sm:$0xf]
    %s575 = scalar_lea.vmem %s1, 32
    %v576 = vld [vmem:[%s575] sm:$0xf]
    %v578 = vperm.slane %v576, 0
    %v579 = vperm.slane %v576, 1
    %v580 = vperm.slane %v576, 2
    %v581 = vperm.slane %v576, 3
    %v582 = vrot.slane %v579, 4
    %v583 = vrot.slane %v581, 4
    %v584 = vsel %vm89, %v578, %v582
    %v585 = vsel %vm89, %v580, %v583
    %586 = vrot.lane.b32.xlu0 %v584, 17
    %v587 = vpop.permute.xlu0 %586
    %588 = vrot.lane.b32.xlu0 %v585, 17
    %v589 = vpop.permute.xlu0 %588
    %v590 = vrot.slane %v587, 4
    %v591 = vrot.slane %v589, 4
    %v592 = vsel %vm131, %v590, %v587
    %v593 = vsel %vm89, %v590, %v591
    %v594 = vsel %vm131, %v593, %v589
    %v598 = vmul.f32 %v572, %v592
    %v599 = vmul.f32 %v573, %v594
    %v600 = vmul.f32 %v574, %v591
    %604 = vst [vmem:[#allocation1] ss:$2 sm:$0xff] %v598
    %s605 = scalar_lea.vmem [#allocation1], 16
    %606 = vst [vmem:[%s605] ss:$2 sm:$0xff] %v599
    %s607 = scalar_lea.vmem [#allocation1], 32
    %608 = vst [vmem:[%s607] ss:$2 sm:$0xff] %v600
    %v609 = vld.sshfl [vmem:[#allocation1] sm:$0xff pattern:$0x75316420]
    %v610 = vld.sshfl [vmem:[#allocation1 + $0x8] sm:$0xff pattern:$0x75316420]
    %v611 = vld.sshfl [vmem:[#allocation1 + $0x10] sm:$0xff pattern:$0x75316420]
    %v612 = vld.sshfl [vmem:[#allocation1 + $0x18] sm:$0xff pattern:$0x75316420]
    %v613 = vld.sshfl [vmem:[#allocation1 + $0x20] sm:$0xff pattern:$0x75316420]
    %614 = vrot.lane.b32.xlu0 %v609, 111
    %v615 = vpop.permute.xlu0 %614
    %616 = vrot.lane.b32.xlu0 %v610, 111
    %v617 = vpop.permute.xlu0 %616
    %618 = vrot.lane.b32.xlu0 %v611, 111
    %v619 = vpop.permute.xlu0 %618
    %620 = vrot.lane.b32.xlu0 %v612, 111
    %v621 = vpop.permute.xlu0 %620
    %622 = vrot.lane.b32.xlu0 %v613, 111
    %v623 = vpop.permute.xlu0 %622
    %v624 = vsel %vm98, %v615, %v617
    %v625 = vsel %vm98, %v617, %v619
    %v626 = vsel %vm98, %v619, %v621
    %v627 = vsel %vm98, %v621, %v623
    %632 = vst [vmem:[#allocation3 + $0x80] sm:$0xf] %v624
    %633 = vst [vmem:[#allocation3 + $0x88] sm:$0xf] %v625
    %634 = vst [vmem:[#allocation3 + $0x90] sm:$0xf] %v626
    %635 = vst [vmem:[#allocation3 + $0x98] sm:$0xf] %v627
    %v636 = vld [vmem:[%s2] sm:$0xff]
    %v637 = vld [vmem:[%s2 + $0x8] sm:$0xff]
    %v638 = vld [vmem:[%s2 + $0x10] sm:$0xff]
    %v639 = vld [vmem:[%s2 + $0x18] sm:$0xff]
    %v640 = vld [vmem:[#allocation3] sm:$0xff]
    %v641 = vld [vmem:[#allocation3 + $0x8] sm:$0xff]
    %v642 = vld [vmem:[#allocation3 + $0x10] sm:$0xff]
    %v643 = vld [vmem:[#allocation3 + $0x18] sm:$0xff]
    %v644 = vld [vmem:[#allocation3 + $0x20] sm:$0xff]
    %v645 = vld [vmem:[#allocation3 + $0x28] sm:$0xff]
    %v646 = vld [vmem:[#allocation3 + $0x30] sm:$0xff]
    %v647 = vld [vmem:[#allocation3 + $0x38] sm:$0xff]
    %v648 = vld [vmem:[#allocation3 + $0x40] sm:$0xff]
    %v649 = vld [vmem:[#allocation3 + $0x48] sm:$0xff]
    %v650 = vld [vmem:[#allocation3 + $0x50] sm:$0xff]
    %v651 = vld [vmem:[#allocation3 + $0x58] sm:$0xff]
    %v652 = vld [vmem:[#allocation3 + $0x60] sm:$0xff]
    %v653 = vld [vmem:[#allocation3 + $0x68] sm:$0xff]
    %v654 = vld [vmem:[#allocation3 + $0x70] sm:$0xff]
    %v655 = vld [vmem:[#allocation3 + $0x78] sm:$0xff]
    %v656 = vld [vmem:[#allocation3 + $0x80] sm:$0xf]
    %v657 = vld [vmem:[#allocation3 + $0x88] sm:$0xf]
    %v658 = vld [vmem:[#allocation3 + $0x90] sm:$0xf]
    %v659 = vld [vmem:[#allocation3 + $0x98] sm:$0xf]
    %v660 = vld [vmem:[%s3] sm:$0xff]
    %v661 = vld [vmem:[%s3 + $0x8] sm:$0xff]
    %v662 = vld [vmem:[%s3 + $0x10] sm:$0xff]
    %v663 = vld [vmem:[%s3 + $0x18] sm:$0xff]
    %665 = vset.pattern.permute.xlu0 0
    %666 = vperm.xlu0 %665, %v660
    %v667 = vpop.permute.xlu0 %666
    %670 = vset.pattern.permute.xlu0 0
    %671 = vperm.xlu0 %670, %v661
    %v672 = vpop.permute.xlu0 %671
    %675 = vset.pattern.permute.xlu0 0
    %676 = vperm.xlu0 %675, %v662
    %v677 = vpop.permute.xlu0 %676
    %680 = vset.pattern.permute.xlu0 0
    %681 = vperm.xlu0 %680, %v663
    %v682 = vpop.permute.xlu0 %681
    %vm684 = vcmask 293888
    %v686 = vsel %vm684, %v636, 0
    %v689 = vsel %vm684, %v637, 0
    %v692 = vsel %vm684, %v638, 0
    %v695 = vsel %vm684, %v639, 0
    %v698 = vsel %vm89, %v656, 0
    %v701 = vsel %vm89, %v657, 0
    %v704 = vsel %vm89, %v658, 0
    %v707 = vsel %vm89, %v659, 0
    %709 = vmatpush.msra.mxu0 0.0
    %710 = vmatpush.msra.mxu0 0.0
    %711 = vmatpush.msra.mxu0 0.0
    %712 = vmatpush.msra.mxu0 0.0
    %713 = vmatpush.msra.mxu0 0.0
    %714 = vmatpush.msra.mxu0 0.0
    %715 = vmatpush.msra.mxu0 0.0
    %716 = vmatpush.msra.mxu0 0.0
    %717 = vmatpush.msra.mxu0 0.0
    %718 = vmatpush.msra.mxu0 0.0
    %719 = vmatpush.msra.mxu0 0.0
    %720 = vmatpush.msra.mxu0 %v698
    %721 = vmatpush.msra.mxu0 %v652
    %722 = vmatpush.msra.mxu0 %v648
    %723 = vmatpush.msra.mxu0 %v644
    %724 = vmatpush.msra.mxu0 %v640
    %725 = vmatmul.f32.gmra.mxu0 %v686
    %v726 = vpop.f32.mrf.mxu0
    %v727 = vadd.f32 %v667, %v726
    %728 = vmatmul.f32.gmra.mxu0 %v689
    %v729 = vpop.f32.mrf.mxu0
    %v730 = vadd.f32 %v672, %v729
    %731 = vmatmul.f32.gmra.mxu0 %v692
    %v732 = vpop.f32.mrf.mxu0
    %v733 = vadd.f32 %v677, %v732
    %734 = vmatmul.f32.gmra.mxu0 %v695
    %v735 = vpop.f32.mrf.mxu0
    %v736 = vadd.f32 %v682, %v735
    %737 = vdwg.mxu0
    %738 = vmatpush.msra.mxu0 0.0
    %739 = vmatpush.msra.mxu0 0.0
    %740 = vmatpush.msra.mxu0 0.0
    %741 = vmatpush.msra.mxu0 0.0
    %742 = vmatpush.msra.mxu0 0.0
    %743 = vmatpush.msra.mxu0 0.0
    %744 = vmatpush.msra.mxu0 0.0
    %745 = vmatpush.msra.mxu0 0.0
    %746 = vmatpush.msra.mxu0 0.0
    %747 = vmatpush.msra.mxu0 0.0
    %748 = vmatpush.msra.mxu0 0.0
    %749 = vmatpush.msra.mxu0 %v701
    %750 = vmatpush.msra.mxu0 %v653
    %751 = vmatpush.msra.mxu0 %v649
    %752 = vmatpush.msra.mxu0 %v645
    %753 = vmatpush.msra.mxu0 %v641
    %754 = vmatmul.f32.gmra.mxu0 %v686
    %v755 = vpop.f32.mrf.mxu0
    %v756 = vadd.f32 %v667, %v755
    %757 = vmatmul.f32.gmra.mxu0 %v689
    %v758 = vpop.f32.mrf.mxu0
    %v759 = vadd.f32 %v672, %v758
    %760 = vmatmul.f32.gmra.mxu0 %v692
    %v761 = vpop.f32.mrf.mxu0
    %v762 = vadd.f32 %v677, %v761
    %763 = vmatmul.f32.gmra.mxu0 %v695
    %v764 = vpop.f32.mrf.mxu0
    %v765 = vadd.f32 %v682, %v764
    %766 = vdwg.mxu0
    %767 = vmatpush.msra.mxu0 0.0
    %768 = vmatpush.msra.mxu0 0.0
    %769 = vmatpush.msra.mxu0 0.0
    %770 = vmatpush.msra.mxu0 0.0
    %771 = vmatpush.msra.mxu0 0.0
    %772 = vmatpush.msra.mxu0 0.0
    %773 = vmatpush.msra.mxu0 0.0
    %774 = vmatpush.msra.mxu0 0.0
    %775 = vmatpush.msra.mxu0 0.0
    %776 = vmatpush.msra.mxu0 0.0
    %777 = vmatpush.msra.mxu0 0.0
    %778 = vmatpush.msra.mxu0 %v704
    %779 = vmatpush.msra.mxu0 %v654
    %780 = vmatpush.msra.mxu0 %v650
    %781 = vmatpush.msra.mxu0 %v646
    %782 = vmatpush.msra.mxu0 %v642
    %783 = vmatmul.f32.gmra.mxu0 %v686
    %v784 = vpop.f32.mrf.mxu0
    %v785 = vadd.f32 %v667, %v784
    %786 = vmatmul.f32.gmra.mxu0 %v689
    %v787 = vpop.f32.mrf.mxu0
    %v788 = vadd.f32 %v672, %v787
    %789 = vmatmul.f32.gmra.mxu0 %v692
    %v790 = vpop.f32.mrf.mxu0
    %v791 = vadd.f32 %v677, %v790
    %792 = vmatmul.f32.gmra.mxu0 %v695
    %v793 = vpop.f32.mrf.mxu0
    %v794 = vadd.f32 %v682, %v793
    %795 = vdwg.mxu0
    %796 = vmatpush.msra.mxu0 0.0
    %797 = vmatpush.msra.mxu0 0.0
    %798 = vmatpush.msra.mxu0 0.0
    %799 = vmatpush.msra.mxu0 0.0
    %800 = vmatpush.msra.mxu0 0.0
    %801 = vmatpush.msra.mxu0 0.0
    %802 = vmatpush.msra.mxu0 0.0
    %803 = vmatpush.msra.mxu0 0.0
    %804 = vmatpush.msra.mxu0 0.0
    %805 = vmatpush.msra.mxu0 0.0
    %806 = vmatpush.msra.mxu0 0.0
    %807 = vmatpush.msra.mxu0 %v707
    %808 = vmatpush.msra.mxu0 %v655
    %809 = vmatpush.msra.mxu0 %v651
    %810 = vmatpush.msra.mxu0 %v647
    %811 = vmatpush.msra.mxu0 %v643
    %812 = vmatmul.f32.gmra.mxu0 %v686
    %v813 = vpop.f32.mrf.mxu0
    %v814 = vadd.f32 %v667, %v813
    %815 = vmatmul.f32.gmra.mxu0 %v689
    %v816 = vpop.f32.mrf.mxu0
    %v817 = vadd.f32 %v672, %v816
    %818 = vmatmul.f32.gmra.mxu0 %v692
    %v819 = vpop.f32.mrf.mxu0
    %v820 = vadd.f32 %v677, %v819
    %821 = vmatmul.f32.gmra.mxu0 %v695
    %v822 = vpop.f32.mrf.mxu0
    %v823 = vadd.f32 %v682, %v822
    %824 = vdwg.mxu0
    %v825 = vmax.f32 %v727, 0.0
    %v826 = vmax.f32 %v756, 0.0
    %v827 = vmax.f32 %v785, 0.0
    %v828 = vmax.f32 %v814, 0.0
    %v829 = vmax.f32 %v730, 0.0
    %v830 = vmax.f32 %v759, 0.0
    %v831 = vmax.f32 %v788, 0.0
    %v832 = vmax.f32 %v817, 0.0
    %v833 = vmax.f32 %v733, 0.0
    %v834 = vmax.f32 %v762, 0.0
    %v835 = vmax.f32 %v791, 0.0
    %v836 = vmax.f32 %v820, 0.0
    %v837 = vmax.f32 %v736, 0.0
    %v838 = vmax.f32 %v765, 0.0
    %v839 = vmax.f32 %v794, 0.0
    %v840 = vmax.f32 %v823, 0.0
    %841 = vst [vmem:[#allocation2] sm:$0xff] 0.0
    %842 = vst [vmem:[#allocation2 + $0x30] sm:$0xff] 0.0
    %843 = vst [vmem:[#allocation2 + $0x60] sm:$0xff] 0.0
    %844 = vst [vmem:[#allocation2 + $0x90] sm:$0xff] 0.0
    %vm845 = vcmask 261120
    %846 = vst.msk [vmem:[#allocation2 + $0x28] sm:$0xff] %vm845, 0.0
    %847 = vst.msk [vmem:[#allocation2 + $0x58] sm:$0xff] %vm845, 0.0
    %848 = vst.msk [vmem:[#allocation2 + $0x88] sm:$0xff] %vm845, 0.0
    %849 = vst.msk [vmem:[#allocation2 + $0xb8] sm:$0xff] %vm845, 0.0
    %850 = vst [vmem:[#allocation2 + $0x8] sm:$0xff] %v825
    %851 = vst [vmem:[#allocation2 + $0x10] sm:$0xff] %v826
    %852 = vst [vmem:[#allocation2 + $0x18] sm:$0xff] %v827
    %853 = vst [vmem:[#allocation2 + $0x20] sm:$0xff] %v828
    %854 = vst [vmem:[#allocation2 + $0x38] sm:$0xff] %v829
    %855 = vst [vmem:[#allocation2 + $0x40] sm:$0xff] %v830
    %856 = vst [vmem:[#allocation2 + $0x48] sm:$0xff] %v831
    %857 = vst [vmem:[#allocation2 + $0x50] sm:$0xff] %v832
    %858 = vst [vmem:[#allocation2 + $0x68] sm:$0xff] %v833
    %859 = vst [vmem:[#allocation2 + $0x70] sm:$0xff] %v834
    %860 = vst [vmem:[#allocation2 + $0x78] sm:$0xff] %v835
    %861 = vst [vmem:[#allocation2 + $0x80] sm:$0xff] %v836
    %862 = vst [vmem:[#allocation2 + $0x98] sm:$0xff] %v837
    %863 = vst [vmem:[#allocation2 + $0xa0] sm:$0xff] %v838
    %864 = vst [vmem:[#allocation2 + $0xa8] sm:$0xff] %v839
    %865 = vst [vmem:[#allocation2 + $0xb0] sm:$0xff] %v840
    %v866 = vld [vmem:[#allocation2] sm:$0xff]
    %v867 = vld [vmem:[#allocation2 + $0x8] sm:$0xff]
    %v868 = vld [vmem:[#allocation2 + $0x10] sm:$0xff]
    %v869 = vld [vmem:[#allocation2 + $0x18] sm:$0xff]
    %v870 = vld [vmem:[#allocation2 + $0x20] sm:$0xff]
    %v871 = vld [vmem:[#allocation2 + $0x30] sm:$0xff]
    %v872 = vld [vmem:[#allocation2 + $0x38] sm:$0xff]
    %v873 = vld [vmem:[#allocation2 + $0x40] sm:$0xff]
    %v874 = vld [vmem:[#allocation2 + $0x48] sm:$0xff]
    %v875 = vld [vmem:[#allocation2 + $0x50] sm:$0xff]
    %v876 = vld [vmem:[#allocation2 + $0x60] sm:$0xff]
    %v877 = vld [vmem:[#allocation2 + $0x68] sm:$0xff]
    %v878 = vld [vmem:[#allocation2 + $0x70] sm:$0xff]
    %v879 = vld [vmem:[#allocation2 + $0x78] sm:$0xff]
    %v880 = vld [vmem:[#allocation2 + $0x80] sm:$0xff]
    %v881 = vld [vmem:[#allocation2 + $0x90] sm:$0xff]
    %v882 = vld [vmem:[#allocation2 + $0x98] sm:$0xff]
    %v883 = vld [vmem:[#allocation2 + $0xa0] sm:$0xff]
    %v884 = vld [vmem:[#allocation2 + $0xa8] sm:$0xff]
    %v885 = vld [vmem:[#allocation2 + $0xb0] sm:$0xff]
    %v886 = vld [vmem:[%s1] sm:$0xf]
    %v888 = vperm.slane %v886, 0
    %v889 = vperm.slane %v886, 1
    %v890 = vperm.slane %v886, 2
    %v891 = vperm.slane %v886, 3
    %892 = vrot.lane.b32.xlu0 %v888, 111
    %v893 = vpop.permute.xlu0 %892
    %894 = vrot.lane.b32.xlu0 %v889, 111
    %v895 = vpop.permute.xlu0 %894
    %896 = vrot.lane.b32.xlu0 %v890, 111
    %v897 = vpop.permute.xlu0 %896
    %898 = vrot.lane.b32.xlu0 %v891, 111
    %v899 = vpop.permute.xlu0 %898
    %v900 = vsel %vm98, %v893, %v895
    %v901 = vsel %vm98, %v895, %v897
    %v902 = vsel %vm98, %v897, %v899
    %v908 = vmul.f32 %v866, %v893
    %v909 = vmul.f32 %v867, %v900
    %v910 = vmul.f32 %v868, %v901
    %v911 = vmul.f32 %v869, %v902
    %v912 = vmul.f32 %v870, %v899
    %v913 = vmul.f32 %v871, %v893
    %v914 = vmul.f32 %v872, %v900
    %v915 = vmul.f32 %v873, %v901
    %v916 = vmul.f32 %v874, %v902
    %v917 = vmul.f32 %v875, %v899
    %v918 = vmul.f32 %v876, %v893
    %v919 = vmul.f32 %v877, %v900
    %v920 = vmul.f32 %v878, %v901
    %v921 = vmul.f32 %v879, %v902
    %v922 = vmul.f32 %v880, %v899
    %v923 = vmul.f32 %v881, %v893
    %v924 = vmul.f32 %v882, %v900
    %v925 = vmul.f32 %v883, %v901
    %v926 = vmul.f32 %v884, %v902
    %v927 = vmul.f32 %v885, %v899
    %948 = vrot.lane.b32.xlu0 %v908, 17
    %v949 = vpop.permute.xlu0 %948
    %950 = vrot.lane.b32.xlu0 %v909, 17
    %v951 = vpop.permute.xlu0 %950
    %952 = vrot.lane.b32.xlu0 %v910, 17
    %v953 = vpop.permute.xlu0 %952
    %954 = vrot.lane.b32.xlu0 %v911, 17
    %v955 = vpop.permute.xlu0 %954
    %956 = vrot.lane.b32.xlu0 %v912, 17
    %v957 = vpop.permute.xlu0 %956
    %958 = vrot.lane.b32.xlu0 %v913, 17
    %v959 = vpop.permute.xlu0 %958
    %960 = vrot.lane.b32.xlu0 %v914, 17
    %v961 = vpop.permute.xlu0 %960
    %962 = vrot.lane.b32.xlu0 %v915, 17
    %v963 = vpop.permute.xlu0 %962
    %964 = vrot.lane.b32.xlu0 %v916, 17
    %v965 = vpop.permute.xlu0 %964
    %966 = vrot.lane.b32.xlu0 %v917, 17
    %v967 = vpop.permute.xlu0 %966
    %968 = vrot.lane.b32.xlu0 %v918, 17
    %v969 = vpop.permute.xlu0 %968
    %970 = vrot.lane.b32.xlu0 %v919, 17
    %v971 = vpop.permute.xlu0 %970
    %972 = vrot.lane.b32.xlu0 %v920, 17
    %v973 = vpop.permute.xlu0 %972
    %974 = vrot.lane.b32.xlu0 %v921, 17
    %v975 = vpop.permute.xlu0 %974
    %976 = vrot.lane.b32.xlu0 %v922, 17
    %v977 = vpop.permute.xlu0 %976
    %978 = vrot.lane.b32.xlu0 %v923, 17
    %v979 = vpop.permute.xlu0 %978
    %980 = vrot.lane.b32.xlu0 %v924, 17
    %v981 = vpop.permute.xlu0 %980
    %982 = vrot.lane.b32.xlu0 %v925, 17
    %v983 = vpop.permute.xlu0 %982
    %984 = vrot.lane.b32.xlu0 %v926, 17
    %v985 = vpop.permute.xlu0 %984
    %986 = vrot.lane.b32.xlu0 %v927, 17
    %v987 = vpop.permute.xlu0 %986
    %v988 = vsel %vm131, %v949, %v951
    %v989 = vsel %vm131, %v951, %v953
    %v990 = vsel %vm131, %v953, %v955
    %v991 = vsel %vm131, %v955, %v957
    %v992 = vsel %vm131, %v959, %v961
    %v993 = vsel %vm131, %v961, %v963
    %v994 = vsel %vm131, %v963, %v965
    %v995 = vsel %vm131, %v965, %v967
    %v996 = vsel %vm131, %v969, %v971
    %v997 = vsel %vm131, %v971, %v973
    %v998 = vsel %vm131, %v973, %v975
    %v999 = vsel %vm131, %v975, %v977
    %v1000 = vsel %vm131, %v979, %v981
    %v1001 = vsel %vm131, %v981, %v983
    %v1002 = vsel %vm131, %v983, %v985
    %v1003 = vsel %vm131, %v985, %v987
    %1020 = vst [vmem:[#allocation4] sm:$0xff] %v988
    %1021 = vst [vmem:[#allocation4 + $0x8] sm:$0xff] %v989
    %1022 = vst [vmem:[#allocation4 + $0x10] sm:$0xff] %v990
    %1023 = vst [vmem:[#allocation4 + $0x18] sm:$0xff] %v991
    %1024 = vst [vmem:[#allocation4 + $0x20] sm:$0xff] %v992
    %1025 = vst [vmem:[#allocation4 + $0x28] sm:$0xff] %v993
    %1026 = vst [vmem:[#allocation4 + $0x30] sm:$0xff] %v994
    %1027 = vst [vmem:[#allocation4 + $0x38] sm:$0xff] %v995
    %1028 = vst [vmem:[#allocation4 + $0x40] sm:$0xff] %v996
    %1029 = vst [vmem:[#allocation4 + $0x48] sm:$0xff] %v997
    %1030 = vst [vmem:[#allocation4 + $0x50] sm:$0xff] %v998
    %1031 = vst [vmem:[#allocation4 + $0x58] sm:$0xff] %v999
    %1032 = vst [vmem:[#allocation4 + $0x60] sm:$0xff] %v1000
    %1033 = vst [vmem:[#allocation4 + $0x68] sm:$0xff] %v1001
    %1034 = vst [vmem:[#allocation4 + $0x70] sm:$0xff] %v1002
    %1035 = vst [vmem:[#allocation4 + $0x78] sm:$0xff] %v1003
    %v1036 = vld [vmem:[#allocation2] sm:$0xff]
    %v1037 = vld [vmem:[#allocation2 + $0x8] sm:$0xff]
    %v1038 = vld [vmem:[#allocation2 + $0x10] sm:$0xff]
    %v1039 = vld [vmem:[#allocation2 + $0x18] sm:$0xff]
    %v1040 = vld [vmem:[#allocation2 + $0x20] sm:$0xff]
    %v1041 = vld [vmem:[#allocation2 + $0x30] sm:$0xff]
    %v1042 = vld [vmem:[#allocation2 + $0x38] sm:$0xff]
    %v1043 = vld [vmem:[#allocation2 + $0x40] sm:$0xff]
    %v1044 = vld [vmem:[#allocation2 + $0x48] sm:$0xff]
    %v1045 = vld [vmem:[#allocation2 + $0x50] sm:$0xff]
    %v1046 = vld [vmem:[#allocation2 + $0x60] sm:$0xff]
    %v1047 = vld [vmem:[#allocation2 + $0x68] sm:$0xff]
    %v1048 = vld [vmem:[#allocation2 + $0x70] sm:$0xff]
    %v1049 = vld [vmem:[#allocation2 + $0x78] sm:$0xff]
    %v1050 = vld [vmem:[#allocation2 + $0x80] sm:$0xff]
    %v1051 = vld [vmem:[#allocation2 + $0x90] sm:$0xff]
    %v1052 = vld [vmem:[#allocation2 + $0x98] sm:$0xff]
    %v1053 = vld [vmem:[#allocation2 + $0xa0] sm:$0xff]
    %v1054 = vld [vmem:[#allocation2 + $0xa8] sm:$0xff]
    %v1055 = vld [vmem:[#allocation2 + $0xb0] sm:$0xff]
    %v1056 = vld [vmem:[%s147] sm:$0xf]
    %v1058 = vperm.slane %v1056, 0
    %v1059 = vperm.slane %v1056, 1
    %v1060 = vperm.slane %v1056, 2
    %v1061 = vperm.slane %v1056, 3
    %1062 = vrot.lane.b32.xlu0 %v1058, 112
    %v1063 = vpop.permute.xlu0 %1062
    %1064 = vrot.lane.b32.xlu0 %v1059, 112
    %v1065 = vpop.permute.xlu0 %1064
    %1066 = vrot.lane.b32.xlu0 %v1060, 112
    %v1067 = vpop.permute.xlu0 %1066
    %1068 = vrot.lane.b32.xlu0 %v1061, 112
    %v1069 = vpop.permute.xlu0 %1068
    %v1070 = vsel %vm164, %v1063, %v1065
    %v1071 = vsel %vm164, %v1065, %v1067
    %v1072 = vsel %vm164, %v1067, %v1069
    %v1078 = vmul.f32 %v1036, %v1063
    %v1079 = vmul.f32 %v1037, %v1070
    %v1080 = vmul.f32 %v1038, %v1071
    %v1081 = vmul.f32 %v1039, %v1072
    %v1082 = vmul.f32 %v1040, %v1069
    %v1083 = vmul.f32 %v1041, %v1063
    %v1084 = vmul.f32 %v1042, %v1070
    %v1085 = vmul.f32 %v1043, %v1071
    %v1086 = vmul.f32 %v1044, %v1072
    %v1087 = vmul.f32 %v1045, %v1069
    %v1088 = vmul.f32 %v1046, %v1063
    %v1089 = vmul.f32 %v1047, %v1070
    %v1090 = vmul.f32 %v1048, %v1071
    %v1091 = vmul.f32 %v1049, %v1072
    %v1092 = vmul.f32 %v1050, %v1069
    %v1093 = vmul.f32 %v1051, %v1063
    %v1094 = vmul.f32 %v1052, %v1070
    %v1095 = vmul.f32 %v1053, %v1071
    %v1096 = vmul.f32 %v1054, %v1072
    %v1097 = vmul.f32 %v1055, %v1069
    %1118 = vrot.lane.b32.xlu0 %v1078, 16
    %v1119 = vpop.permute.xlu0 %1118
    %1120 = vrot.lane.b32.xlu0 %v1079, 16
    %v1121 = vpop.permute.xlu0 %1120
    %1122 = vrot.lane.b32.xlu0 %v1080, 16
    %v1123 = vpop.permute.xlu0 %1122
    %1124 = vrot.lane.b32.xlu0 %v1081, 16
    %v1125 = vpop.permute.xlu0 %1124
    %1126 = vrot.lane.b32.xlu0 %v1082, 16
    %v1127 = vpop.permute.xlu0 %1126
    %1128 = vrot.lane.b32.xlu0 %v1083, 16
    %v1129 = vpop.permute.xlu0 %1128
    %1130 = vrot.lane.b32.xlu0 %v1084, 16
    %v1131 = vpop.permute.xlu0 %1130
    %1132 = vrot.lane.b32.xlu0 %v1085, 16
    %v1133 = vpop.permute.xlu0 %1132
    %1134 = vrot.lane.b32.xlu0 %v1086, 16
    %v1135 = vpop.permute.xlu0 %1134
    %1136 = vrot.lane.b32.xlu0 %v1087, 16
    %v1137 = vpop.permute.xlu0 %1136
    %1138 = vrot.lane.b32.xlu0 %v1088, 16
    %v1139 = vpop.permute.xlu0 %1138
    %1140 = vrot.lane.b32.xlu0 %v1089, 16
    %v1141 = vpop.permute.xlu0 %1140
    %1142 = vrot.lane.b32.xlu0 %v1090, 16
    %v1143 = vpop.permute.xlu0 %1142
    %1144 = vrot.lane.b32.xlu0 %v1091, 16
    %v1145 = vpop.permute.xlu0 %1144
    %1146 = vrot.lane.b32.xlu0 %v1092, 16
    %v1147 = vpop.permute.xlu0 %1146
    %1148 = vrot.lane.b32.xlu0 %v1093, 16
    %v1149 = vpop.permute.xlu0 %1148
    %1150 = vrot.lane.b32.xlu0 %v1094, 16
    %v1151 = vpop.permute.xlu0 %1150
    %1152 = vrot.lane.b32.xlu0 %v1095, 16
    %v1153 = vpop.permute.xlu0 %1152
    %1154 = vrot.lane.b32.xlu0 %v1096, 16
    %v1155 = vpop.permute.xlu0 %1154
    %1156 = vrot.lane.b32.xlu0 %v1097, 16
    %v1157 = vpop.permute.xlu0 %1156
    %v1158 = vsel %vm198, %v1119, %v1121
    %v1159 = vsel %vm198, %v1121, %v1123
    %v1160 = vsel %vm198, %v1123, %v1125
    %v1161 = vsel %vm198, %v1125, %v1127
    %v1162 = vsel %vm198, %v1129, %v1131
    %v1163 = vsel %vm198, %v1131, %v1133
    %v1164 = vsel %vm198, %v1133, %v1135
    %v1165 = vsel %vm198, %v1135, %v1137
    %v1166 = vsel %vm198, %v1139, %v1141
    %v1167 = vsel %vm198, %v1141, %v1143
    %v1168 = vsel %vm198, %v1143, %v1145
    %v1169 = vsel %vm198, %v1145, %v1147
    %v1170 = vsel %vm198, %v1149, %v1151
    %v1171 = vsel %vm198, %v1151, %v1153
    %v1172 = vsel %vm198, %v1153, %v1155
    %v1173 = vsel %vm198, %v1155, %v1157
    %1190 = vst [vmem:[#allocation4 + $0x80] sm:$0xff] %v1158
    %1191 = vst [vmem:[#allocation4 + $0x88] sm:$0xff] %v1159
    %1192 = vst [vmem:[#allocation4 + $0x90] sm:$0xff] %v1160
    %1193 = vst [vmem:[#allocation4 + $0x98] sm:$0xff] %v1161
    %1194 = vst [vmem:[#allocation4 + $0xa0] sm:$0xff] %v1162
    %1195 = vst [vmem:[#allocation4 + $0xa8] sm:$0xff] %v1163
    %1196 = vst [vmem:[#allocation4 + $0xb0] sm:$0xff] %v1164
    %1197 = vst [vmem:[#allocation4 + $0xb8] sm:$0xff] %v1165
    %1198 = vst [vmem:[#allocation4 + $0xc0] sm:$0xff] %v1166
    %1199 = vst [vmem:[#allocation4 + $0xc8] sm:$0xff] %v1167
    %1200 = vst [vmem:[#allocation4 + $0xd0] sm:$0xff] %v1168
    %1201 = vst [vmem:[#allocation4 + $0xd8] sm:$0xff] %v1169
    %1202 = vst [vmem:[#allocation4 + $0xe0] sm:$0xff] %v1170
    %1203 = vst [vmem:[#allocation4 + $0xe8] sm:$0xff] %v1171
    %1204 = vst [vmem:[#allocation4 + $0xf0] sm:$0xff] %v1172
    %1205 = vst [vmem:[#allocation4 + $0xf8] sm:$0xff] %v1173
    %v1206 = vld [vmem:[#allocation2] sm:$0xff]
    %v1207 = vld [vmem:[#allocation2 + $0x8] sm:$0xff]
    %v1208 = vld [vmem:[#allocation2 + $0x10] sm:$0xff]
    %v1209 = vld [vmem:[#allocation2 + $0x18] sm:$0xff]
    %v1210 = vld [vmem:[#allocation2 + $0x20] sm:$0xff]
    %v1211 = vld [vmem:[#allocation2 + $0x30] sm:$0xff]
    %v1212 = vld [vmem:[#allocation2 + $0x38] sm:$0xff]
    %v1213 = vld [vmem:[#allocation2 + $0x40] sm:$0xff]
    %v1214 = vld [vmem:[#allocation2 + $0x48] sm:$0xff]
    %v1215 = vld [vmem:[#allocation2 + $0x50] sm:$0xff]
    %v1216 = vld [vmem:[#allocation2 + $0x60] sm:$0xff]
    %v1217 = vld [vmem:[#allocation2 + $0x68] sm:$0xff]
    %v1218 = vld [vmem:[#allocation2 + $0x70] sm:$0xff]
    %v1219 = vld [vmem:[#allocation2 + $0x78] sm:$0xff]
    %v1220 = vld [vmem:[#allocation2 + $0x80] sm:$0xff]
    %v1221 = vld [vmem:[#allocation2 + $0x90] sm:$0xff]
    %v1222 = vld [vmem:[#allocation2 + $0x98] sm:$0xff]
    %v1223 = vld [vmem:[#allocation2 + $0xa0] sm:$0xff]
    %v1224 = vld [vmem:[#allocation2 + $0xa8] sm:$0xff]
    %v1225 = vld [vmem:[#allocation2 + $0xb0] sm:$0xff]
    %v1226 = vld [vmem:[%s214] sm:$0xf]
    %v1228 = vperm.slane %v1226, 0
    %v1229 = vperm.slane %v1226, 1
    %v1230 = vperm.slane %v1226, 2
    %v1231 = vperm.slane %v1226, 3
    %1232 = vrot.lane.b32.xlu0 %v1228, 113
    %v1233 = vpop.permute.xlu0 %1232
    %1234 = vrot.lane.b32.xlu0 %v1229, 113
    %v1235 = vpop.permute.xlu0 %1234
    %1236 = vrot.lane.b32.xlu0 %v1230, 113
    %v1237 = vpop.permute.xlu0 %1236
    %1238 = vrot.lane.b32.xlu0 %v1231, 113
    %v1239 = vpop.permute.xlu0 %1238
    %v1240 = vsel %vm231, %v1233, %v1235
    %v1241 = vsel %vm231, %v1235, %v1237
    %v1242 = vsel %vm231, %v1237, %v1239
    %v1248 = vmul.f32 %v1206, %v1233
    %v1249 = vmul.f32 %v1207, %v1240
    %v1250 = vmul.f32 %v1208, %v1241
    %v1251 = vmul.f32 %v1209, %v1242
    %v1252 = vmul.f32 %v1210, %v1239
    %v1253 = vmul.f32 %v1211, %v1233
    %v1254 = vmul.f32 %v1212, %v1240
    %v1255 = vmul.f32 %v1213, %v1241
    %v1256 = vmul.f32 %v1214, %v1242
    %v1257 = vmul.f32 %v1215, %v1239
    %v1258 = vmul.f32 %v1216, %v1233
    %v1259 = vmul.f32 %v1217, %v1240
    %v1260 = vmul.f32 %v1218, %v1241
    %v1261 = vmul.f32 %v1219, %v1242
    %v1262 = vmul.f32 %v1220, %v1239
    %v1263 = vmul.f32 %v1221, %v1233
    %v1264 = vmul.f32 %v1222, %v1240
    %v1265 = vmul.f32 %v1223, %v1241
    %v1266 = vmul.f32 %v1224, %v1242
    %v1267 = vmul.f32 %v1225, %v1239
    %1288 = vrot.lane.b32.xlu0 %v1248, 15
    %v1289 = vpop.permute.xlu0 %1288
    %1290 = vrot.lane.b32.xlu0 %v1249, 15
    %v1291 = vpop.permute.xlu0 %1290
    %1292 = vrot.lane.b32.xlu0 %v1250, 15
    %v1293 = vpop.permute.xlu0 %1292
    %1294 = vrot.lane.b32.xlu0 %v1251, 15
    %v1295 = vpop.permute.xlu0 %1294
    %1296 = vrot.lane.b32.xlu0 %v1252, 15
    %v1297 = vpop.permute.xlu0 %1296
    %1298 = vrot.lane.b32.xlu0 %v1253, 15
    %v1299 = vpop.permute.xlu0 %1298
    %1300 = vrot.lane.b32.xlu0 %v1254, 15
    %v1301 = vpop.permute.xlu0 %1300
    %1302 = vrot.lane.b32.xlu0 %v1255, 15
    %v1303 = vpop.permute.xlu0 %1302
    %1304 = vrot.lane.b32.xlu0 %v1256, 15
    %v1305 = vpop.permute.xlu0 %1304
    %1306 = vrot.lane.b32.xlu0 %v1257, 15
    %v1307 = vpop.permute.xlu0 %1306
    %1308 = vrot.lane.b32.xlu0 %v1258, 15
    %v1309 = vpop.permute.xlu0 %1308
    %1310 = vrot.lane.b32.xlu0 %v1259, 15
    %v1311 = vpop.permute.xlu0 %1310
    %1312 = vrot.lane.b32.xlu0 %v1260, 15
    %v1313 = vpop.permute.xlu0 %1312
    %1314 = vrot.lane.b32.xlu0 %v1261, 15
    %v1315 = vpop.permute.xlu0 %1314
    %1316 = vrot.lane.b32.xlu0 %v1262, 15
    %v1317 = vpop.permute.xlu0 %1316
    %1318 = vrot.lane.b32.xlu0 %v1263, 15
    %v1319 = vpop.permute.xlu0 %1318
    %1320 = vrot.lane.b32.xlu0 %v1264, 15
    %v1321 = vpop.permute.xlu0 %1320
    %1322 = vrot.lane.b32.xlu0 %v1265, 15
    %v1323 = vpop.permute.xlu0 %1322
    %1324 = vrot.lane.b32.xlu0 %v1266, 15
    %v1325 = vpop.permute.xlu0 %1324
    %1326 = vrot.lane.b32.xlu0 %v1267, 15
    %v1327 = vpop.permute.xlu0 %1326
    %v1328 = vsel %vm264, %v1289, %v1291
    %v1329 = vsel %vm264, %v1291, %v1293
    %v1330 = vsel %vm264, %v1293, %v1295
    %v1331 = vsel %vm264, %v1295, %v1297
    %v1332 = vsel %vm264, %v1299, %v1301
    %v1333 = vsel %vm264, %v1301, %v1303
    %v1334 = vsel %vm264, %v1303, %v1305
    %v1335 = vsel %vm264, %v1305, %v1307
    %v1336 = vsel %vm264, %v1309, %v1311
    %v1337 = vsel %vm264, %v1311, %v1313
    %v1338 = vsel %vm264, %v1313, %v1315
    %v1339 = vsel %vm264, %v1315, %v1317
    %v1340 = vsel %vm264, %v1319, %v1321
    %v1341 = vsel %vm264, %v1321, %v1323
    %v1342 = vsel %vm264, %v1323, %v1325
    %v1343 = vsel %vm264, %v1325, %v1327
    %1360 = vst [vmem:[#allocation4 + $0x100] sm:$0xff] %v1328
    %1361 = vst [vmem:[#allocation4 + $0x108] sm:$0xff] %v1329
    %1362 = vst [vmem:[#allocation4 + $0x110] sm:$0xff] %v1330
    %1363 = vst [vmem:[#allocation4 + $0x118] sm:$0xff] %v1331
    %1364 = vst [vmem:[#allocation4 + $0x120] sm:$0xff] %v1332
    %1365 = vst [vmem:[#allocation4 + $0x128] sm:$0xff] %v1333
    %1366 = vst [vmem:[#allocation4 + $0x130] sm:$0xff] %v1334
    %1367 = vst [vmem:[#allocation4 + $0x138] sm:$0xff] %v1335
    %1368 = vst [vmem:[#allocation4 + $0x140] sm:$0xff] %v1336
    %1369 = vst [vmem:[#allocation4 + $0x148] sm:$0xff] %v1337
    %1370 = vst [vmem:[#allocation4 + $0x150] sm:$0xff] %v1338
    %1371 = vst [vmem:[#allocation4 + $0x158] sm:$0xff] %v1339
    %1372 = vst [vmem:[#allocation4 + $0x160] sm:$0xff] %v1340
    %1373 = vst [vmem:[#allocation4 + $0x168] sm:$0xff] %v1341
    %1374 = vst [vmem:[#allocation4 + $0x170] sm:$0xff] %v1342
    %1375 = vst [vmem:[#allocation4 + $0x178] sm:$0xff] %v1343
    %v1376 = vld [vmem:[#allocation2] sm:$0xff]
    %v1377 = vld [vmem:[#allocation2 + $0x8] sm:$0xff]
    %v1378 = vld [vmem:[#allocation2 + $0x10] sm:$0xff]
    %v1379 = vld [vmem:[#allocation2 + $0x18] sm:$0xff]
    %v1380 = vld [vmem:[#allocation2 + $0x20] sm:$0xff]
    %v1381 = vld [vmem:[#allocation2 + $0x30] sm:$0xff]
    %v1382 = vld [vmem:[#allocation2 + $0x38] sm:$0xff]
    %v1383 = vld [vmem:[#allocation2 + $0x40] sm:$0xff]
    %v1384 = vld [vmem:[#allocation2 + $0x48] sm:$0xff]
    %v1385 = vld [vmem:[#allocation2 + $0x50] sm:$0xff]
    %v1386 = vld [vmem:[#allocation2 + $0x60] sm:$0xff]
    %v1387 = vld [vmem:[#allocation2 + $0x68] sm:$0xff]
    %v1388 = vld [vmem:[#allocation2 + $0x70] sm:$0xff]
    %v1389 = vld [vmem:[#allocation2 + $0x78] sm:$0xff]
    %v1390 = vld [vmem:[#allocation2 + $0x80] sm:$0xff]
    %v1391 = vld [vmem:[#allocation2 + $0x90] sm:$0xff]
    %v1392 = vld [vmem:[#allocation2 + $0x98] sm:$0xff]
    %v1393 = vld [vmem:[#allocation2 + $0xa0] sm:$0xff]
    %v1394 = vld [vmem:[#allocation2 + $0xa8] sm:$0xff]
    %v1395 = vld [vmem:[#allocation2 + $0xb0] sm:$0xff]
    %v1396 = vld [vmem:[%s280] sm:$0xf]
    %v1398 = vperm.slane %v1396, 0
    %v1399 = vperm.slane %v1396, 1
    %v1400 = vperm.slane %v1396, 2
    %v1401 = vperm.slane %v1396, 3
    %1402 = vrot.lane.b32.xlu0 %v1398, 127
    %v1403 = vpop.permute.xlu0 %1402
    %1404 = vrot.lane.b32.xlu0 %v1399, 127
    %v1405 = vpop.permute.xlu0 %1404
    %1406 = vrot.lane.b32.xlu0 %v1400, 127
    %v1407 = vpop.permute.xlu0 %1406
    %1408 = vrot.lane.b32.xlu0 %v1401, 127
    %v1409 = vpop.permute.xlu0 %1408
    %v1410 = vsel %vm297, %v1403, %v1405
    %v1411 = vsel %vm297, %v1405, %v1407
    %v1412 = vsel %vm297, %v1407, %v1409
    %v1418 = vmul.f32 %v1376, %v1403
    %v1419 = vmul.f32 %v1377, %v1410
    %v1420 = vmul.f32 %v1378, %v1411
    %v1421 = vmul.f32 %v1379, %v1412
    %v1422 = vmul.f32 %v1380, %v1409
    %v1423 = vmul.f32 %v1381, %v1403
    %v1424 = vmul.f32 %v1382, %v1410
    %v1425 = vmul.f32 %v1383, %v1411
    %v1426 = vmul.f32 %v1384, %v1412
    %v1427 = vmul.f32 %v1385, %v1409
    %v1428 = vmul.f32 %v1386, %v1403
    %v1429 = vmul.f32 %v1387, %v1410
    %v1430 = vmul.f32 %v1388, %v1411
    %v1431 = vmul.f32 %v1389, %v1412
    %v1432 = vmul.f32 %v1390, %v1409
    %v1433 = vmul.f32 %v1391, %v1403
    %v1434 = vmul.f32 %v1392, %v1410
    %v1435 = vmul.f32 %v1393, %v1411
    %v1436 = vmul.f32 %v1394, %v1412
    %v1437 = vmul.f32 %v1395, %v1409
    %1458 = vrot.lane.b32.xlu0 %v1418, 1
    %v1459 = vpop.permute.xlu0 %1458
    %1460 = vrot.lane.b32.xlu0 %v1419, 1
    %v1461 = vpop.permute.xlu0 %1460
    %1462 = vrot.lane.b32.xlu0 %v1420, 1
    %v1463 = vpop.permute.xlu0 %1462
    %1464 = vrot.lane.b32.xlu0 %v1421, 1
    %v1465 = vpop.permute.xlu0 %1464
    %1466 = vrot.lane.b32.xlu0 %v1422, 1
    %v1467 = vpop.permute.xlu0 %1466
    %1468 = vrot.lane.b32.xlu0 %v1423, 1
    %v1469 = vpop.permute.xlu0 %1468
    %1470 = vrot.lane.b32.xlu0 %v1424, 1
    %v1471 = vpop.permute.xlu0 %1470
    %1472 = vrot.lane.b32.xlu0 %v1425, 1
    %v1473 = vpop.permute.xlu0 %1472
    %1474 = vrot.lane.b32.xlu0 %v1426, 1
    %v1475 = vpop.permute.xlu0 %1474
    %1476 = vrot.lane.b32.xlu0 %v1427, 1
    %v1477 = vpop.permute.xlu0 %1476
    %1478 = vrot.lane.b32.xlu0 %v1428, 1
    %v1479 = vpop.permute.xlu0 %1478
    %1480 = vrot.lane.b32.xlu0 %v1429, 1
    %v1481 = vpop.permute.xlu0 %1480
    %1482 = vrot.lane.b32.xlu0 %v1430, 1
    %v1483 = vpop.permute.xlu0 %1482
    %1484 = vrot.lane.b32.xlu0 %v1431, 1
    %v1485 = vpop.permute.xlu0 %1484
    %1486 = vrot.lane.b32.xlu0 %v1432, 1
    %v1487 = vpop.permute.xlu0 %1486
    %1488 = vrot.lane.b32.xlu0 %v1433, 1
    %v1489 = vpop.permute.xlu0 %1488
    %1490 = vrot.lane.b32.xlu0 %v1434, 1
    %v1491 = vpop.permute.xlu0 %1490
    %1492 = vrot.lane.b32.xlu0 %v1435, 1
    %v1493 = vpop.permute.xlu0 %1492
    %1494 = vrot.lane.b32.xlu0 %v1436, 1
    %v1495 = vpop.permute.xlu0 %1494
    %1496 = vrot.lane.b32.xlu0 %v1437, 1
    %v1497 = vpop.permute.xlu0 %1496
    %v1498 = vsel %vm331, %v1459, %v1461
    %v1499 = vsel %vm331, %v1461, %v1463
    %v1500 = vsel %vm331, %v1463, %v1465
    %v1501 = vsel %vm331, %v1465, %v1467
    %v1502 = vsel %vm331, %v1469, %v1471
    %v1503 = vsel %vm331, %v1471, %v1473
    %v1504 = vsel %vm331, %v1473, %v1475
    %v1505 = vsel %vm331, %v1475, %v1477
    %v1506 = vsel %vm331, %v1479, %v1481
    %v1507 = vsel %vm331, %v1481, %v1483
    %v1508 = vsel %vm331, %v1483, %v1485
    %v1509 = vsel %vm331, %v1485, %v1487
    %v1510 = vsel %vm331, %v1489, %v1491
    %v1511 = vsel %vm331, %v1491, %v1493
    %v1512 = vsel %vm331, %v1493, %v1495
    %v1513 = vsel %vm331, %v1495, %v1497
    %1530 = vst [vmem:[#allocation4 + $0x180] sm:$0xff] %v1498
    %1531 = vst [vmem:[#allocation4 + $0x188] sm:$0xff] %v1499
    %1532 = vst [vmem:[#allocation4 + $0x190] sm:$0xff] %v1500
    %1533 = vst [vmem:[#allocation4 + $0x198] sm:$0xff] %v1501
    %1534 = vst [vmem:[#allocation4 + $0x1a0] sm:$0xff] %v1502
    %1535 = vst [vmem:[#allocation4 + $0x1a8] sm:$0xff] %v1503
    %1536 = vst [vmem:[#allocation4 + $0x1b0] sm:$0xff] %v1504
    %1537 = vst [vmem:[#allocation4 + $0x1b8] sm:$0xff] %v1505
    %1538 = vst [vmem:[#allocation4 + $0x1c0] sm:$0xff] %v1506
    %1539 = vst [vmem:[#allocation4 + $0x1c8] sm:$0xff] %v1507
    %1540 = vst [vmem:[#allocation4 + $0x1d0] sm:$0xff] %v1508
    %1541 = vst [vmem:[#allocation4 + $0x1d8] sm:$0xff] %v1509
    %1542 = vst [vmem:[#allocation4 + $0x1e0] sm:$0xff] %v1510
    %1543 = vst [vmem:[#allocation4 + $0x1e8] sm:$0xff] %v1511
    %1544 = vst [vmem:[#allocation4 + $0x1f0] sm:$0xff] %v1512
    %1545 = vst [vmem:[#allocation4 + $0x1f8] sm:$0xff] %v1513
    %v1546 = vld [vmem:[#allocation2 + $0x8] sm:$0xff]
    %v1547 = vld [vmem:[#allocation2 + $0x10] sm:$0xff]
    %v1548 = vld [vmem:[#allocation2 + $0x18] sm:$0xff]
    %v1549 = vld [vmem:[#allocation2 + $0x20] sm:$0xff]
    %v1550 = vld [vmem:[#allocation2 + $0x38] sm:$0xff]
    %v1551 = vld [vmem:[#allocation2 + $0x40] sm:$0xff]
    %v1552 = vld [vmem:[#allocation2 + $0x48] sm:$0xff]
    %v1553 = vld [vmem:[#allocation2 + $0x50] sm:$0xff]
    %v1554 = vld [vmem:[#allocation2 + $0x68] sm:$0xff]
    %v1555 = vld [vmem:[#allocation2 + $0x70] sm:$0xff]
    %v1556 = vld [vmem:[#allocation2 + $0x78] sm:$0xff]
    %v1557 = vld [vmem:[#allocation2 + $0x80] sm:$0xff]
    %v1558 = vld [vmem:[#allocation2 + $0x98] sm:$0xff]
    %v1559 = vld [vmem:[#allocation2 + $0xa0] sm:$0xff]
    %v1560 = vld [vmem:[#allocation2 + $0xa8] sm:$0xff]
    %v1561 = vld [vmem:[#allocation2 + $0xb0] sm:$0xff]
    %v1562 = vld [vmem:[%s346] sm:$0xf]
    %v1564 = vperm.slane %v1562, 0
    %v1565 = vperm.slane %v1562, 1
    %v1566 = vperm.slane %v1562, 2
    %v1567 = vperm.slane %v1562, 3
    %v1572 = vmul.f32 %v1546, %v1564
    %v1573 = vmul.f32 %v1547, %v1565
    %v1574 = vmul.f32 %v1548, %v1566
    %v1575 = vmul.f32 %v1549, %v1567
    %v1576 = vmul.f32 %v1550, %v1564
    %v1577 = vmul.f32 %v1551, %v1565
    %v1578 = vmul.f32 %v1552, %v1566
    %v1579 = vmul.f32 %v1553, %v1567
    %v1580 = vmul.f32 %v1554, %v1564
    %v1581 = vmul.f32 %v1555, %v1565
    %v1582 = vmul.f32 %v1556, %v1566
    %v1583 = vmul.f32 %v1557, %v1567
    %v1584 = vmul.f32 %v1558, %v1564
    %v1585 = vmul.f32 %v1559, %v1565
    %v1586 = vmul.f32 %v1560, %v1566
    %v1587 = vmul.f32 %v1561, %v1567
    %1588 = vst [vmem:[#allocation4 + $0x200] sm:$0xff] %v1572
    %1589 = vst [vmem:[#allocation4 + $0x208] sm:$0xff] %v1573
    %1590 = vst [vmem:[#allocation4 + $0x210] sm:$0xff] %v1574
    %1591 = vst [vmem:[#allocation4 + $0x218] sm:$0xff] %v1575
    %1592 = vst [vmem:[#allocation4 + $0x220] sm:$0xff] %v1576
    %1593 = vst [vmem:[#allocation4 + $0x228] sm:$0xff] %v1577
    %1594 = vst [vmem:[#allocation4 + $0x230] sm:$0xff] %v1578
    %1595 = vst [vmem:[#allocation4 + $0x238] sm:$0xff] %v1579
    %1596 = vst [vmem:[#allocation4 + $0x240] sm:$0xff] %v1580
    %1597 = vst [vmem:[#allocation4 + $0x248] sm:$0xff] %v1581
    %1598 = vst [vmem:[#allocation4 + $0x250] sm:$0xff] %v1582
    %1599 = vst [vmem:[#allocation4 + $0x258] sm:$0xff] %v1583
    %1600 = vst [vmem:[#allocation4 + $0x260] sm:$0xff] %v1584
    %1601 = vst [vmem:[#allocation4 + $0x268] sm:$0xff] %v1585
    %1602 = vst [vmem:[#allocation4 + $0x270] sm:$0xff] %v1586
    %1603 = vst [vmem:[#allocation4 + $0x278] sm:$0xff] %v1587
    %v1604 = vld [vmem:[#allocation2 + $0x8] sm:$0xff]
    %v1605 = vld [vmem:[#allocation2 + $0x10] sm:$0xff]
    %v1606 = vld [vmem:[#allocation2 + $0x18] sm:$0xff]
    %v1607 = vld [vmem:[#allocation2 + $0x20] sm:$0xff]
    %v1608 = vld [vmem:[#allocation2 + $0x28] sm:$0xff]
    %v1609 = vld [vmem:[#allocation2 + $0x38] sm:$0xff]
    %v1610 = vld [vmem:[#allocation2 + $0x40] sm:$0xff]
    %v1611 = vld [vmem:[#allocation2 + $0x48] sm:$0xff]
    %v1612 = vld [vmem:[#allocation2 + $0x50] sm:$0xff]
    %v1613 = vld [vmem:[#allocation2 + $0x58] sm:$0xff]
    %v1614 = vld [vmem:[#allocation2 + $0x68] sm:$0xff]
    %v1615 = vld [vmem:[#allocation2 + $0x70] sm:$0xff]
    %v1616 = vld [vmem:[#allocation2 + $0x78] sm:$0xff]
    %v1617 = vld [vmem:[#allocation2 + $0x80] sm:$0xff]
    %v1618 = vld [vmem:[#allocation2 + $0x88] sm:$0xff]
    %v1619 = vld [vmem:[#allocation2 + $0x98] sm:$0xff]
    %v1620 = vld [vmem:[#allocation2 + $0xa0] sm:$0xff]
    %v1621 = vld [vmem:[#allocation2 + $0xa8] sm:$0xff]
    %v1622 = vld [vmem:[#allocation2 + $0xb0] sm:$0xff]
    %v1623 = vld [vmem:[#allocation2 + $0xb8] sm:$0xff]
    %v1624 = vld [vmem:[%s381] sm:$0xf]
    %v1626 = vperm.slane %v1624, 0
    %v1627 = vperm.slane %v1624, 1
    %v1628 = vperm.slane %v1624, 2
    %v1629 = vperm.slane %v1624, 3
    %1630 = vrot.lane.b32.xlu0 %v1626, 1
    %v1631 = vpop.permute.xlu0 %1630
    %1632 = vrot.lane.b32.xlu0 %v1627, 1
    %v1633 = vpop.permute.xlu0 %1632
    %1634 = vrot.lane.b32.xlu0 %v1628, 1
    %v1635 = vpop.permute.xlu0 %1634
    %1636 = vrot.lane.b32.xlu0 %v1629, 1
    %v1637 = vpop.permute.xlu0 %1636
    %v1638 = vsel %vm331, %v1631, %v1633
    %v1639 = vsel %vm331, %v1633, %v1635
    %v1640 = vsel %vm331, %v1635, %v1637
    %v1646 = vmul.f32 %v1604, %v1631
    %v1647 = vmul.f32 %v1605, %v1638
    %v1648 = vmul.f32 %v1606, %v1639
    %v1649 = vmul.f32 %v1607, %v1640
    %v1650 = vmul.f32 %v1608, %v1637
    %v1651 = vmul.f32 %v1609, %v1631
    %v1652 = vmul.f32 %v1610, %v1638
    %v1653 = vmul.f32 %v1611, %v1639
    %v1654 = vmul.f32 %v1612, %v1640
    %v1655 = vmul.f32 %v1613, %v1637
    %v1656 = vmul.f32 %v1614, %v1631
    %v1657 = vmul.f32 %v1615, %v1638
    %v1658 = vmul.f32 %v1616, %v1639
    %v1659 = vmul.f32 %v1617, %v1640
    %v1660 = vmul.f32 %v1618, %v1637
    %v1661 = vmul.f32 %v1619, %v1631
    %v1662 = vmul.f32 %v1620, %v1638
    %v1663 = vmul.f32 %v1621, %v1639
    %v1664 = vmul.f32 %v1622, %v1640
    %v1665 = vmul.f32 %v1623, %v1637
    %1686 = vrot.lane.b32.xlu0 %v1646, 127
    %v1687 = vpop.permute.xlu0 %1686
    %1688 = vrot.lane.b32.xlu0 %v1647, 127
    %v1689 = vpop.permute.xlu0 %1688
    %1690 = vrot.lane.b32.xlu0 %v1648, 127
    %v1691 = vpop.permute.xlu0 %1690
    %1692 = vrot.lane.b32.xlu0 %v1649, 127
    %v1693 = vpop.permute.xlu0 %1692
    %1694 = vrot.lane.b32.xlu0 %v1650, 127
    %v1695 = vpop.permute.xlu0 %1694
    %1696 = vrot.lane.b32.xlu0 %v1651, 127
    %v1697 = vpop.permute.xlu0 %1696
    %1698 = vrot.lane.b32.xlu0 %v1652, 127
    %v1699 = vpop.permute.xlu0 %1698
    %1700 = vrot.lane.b32.xlu0 %v1653, 127
    %v1701 = vpop.permute.xlu0 %1700
    %1702 = vrot.lane.b32.xlu0 %v1654, 127
    %v1703 = vpop.permute.xlu0 %1702
    %1704 = vrot.lane.b32.xlu0 %v1655, 127
    %v1705 = vpop.permute.xlu0 %1704
    %1706 = vrot.lane.b32.xlu0 %v1656, 127
    %v1707 = vpop.permute.xlu0 %1706
    %1708 = vrot.lane.b32.xlu0 %v1657, 127
    %v1709 = vpop.permute.xlu0 %1708
    %1710 = vrot.lane.b32.xlu0 %v1658, 127
    %v1711 = vpop.permute.xlu0 %1710
    %1712 = vrot.lane.b32.xlu0 %v1659, 127
    %v1713 = vpop.permute.xlu0 %1712
    %1714 = vrot.lane.b32.xlu0 %v1660, 127
    %v1715 = vpop.permute.xlu0 %1714
    %1716 = vrot.lane.b32.xlu0 %v1661, 127
    %v1717 = vpop.permute.xlu0 %1716
    %1718 = vrot.lane.b32.xlu0 %v1662, 127
    %v1719 = vpop.permute.xlu0 %1718
    %1720 = vrot.lane.b32.xlu0 %v1663, 127
    %v1721 = vpop.permute.xlu0 %1720
    %1722 = vrot.lane.b32.xlu0 %v1664, 127
    %v1723 = vpop.permute.xlu0 %1722
    %1724 = vrot.lane.b32.xlu0 %v1665, 127
    %v1725 = vpop.permute.xlu0 %1724
    %v1726 = vsel %vm297, %v1687, %v1689
    %v1727 = vsel %vm297, %v1689, %v1691
    %v1728 = vsel %vm297, %v1691, %v1693
    %v1729 = vsel %vm297, %v1693, %v1695
    %v1730 = vsel %vm297, %v1697, %v1699
    %v1731 = vsel %vm297, %v1699, %v1701
    %v1732 = vsel %vm297, %v1701, %v1703
    %v1733 = vsel %vm297, %v1703, %v1705
    %v1734 = vsel %vm297, %v1707, %v1709
    %v1735 = vsel %vm297, %v1709, %v1711
    %v1736 = vsel %vm297, %v1711, %v1713
    %v1737 = vsel %vm297, %v1713, %v1715
    %v1738 = vsel %vm297, %v1717, %v1719
    %v1739 = vsel %vm297, %v1719, %v1721
    %v1740 = vsel %vm297, %v1721, %v1723
    %v1741 = vsel %vm297, %v1723, %v1725
    %1758 = vst [vmem:[#allocation4 + $0x280] sm:$0xff] %v1726
    %1759 = vst [vmem:[#allocation4 + $0x288] sm:$0xff] %v1727
    %1760 = vst [vmem:[#allocation4 + $0x290] sm:$0xff] %v1728
    %1761 = vst [vmem:[#allocation4 + $0x298] sm:$0xff] %v1729
    %1762 = vst [vmem:[#allocation4 + $0x2a0] sm:$0xff] %v1730
    %1763 = vst [vmem:[#allocation4 + $0x2a8] sm:$0xff] %v1731
    %1764 = vst [vmem:[#allocation4 + $0x2b0] sm:$0xff] %v1732
    %1765 = vst [vmem:[#allocation4 + $0x2b8] sm:$0xff] %v1733
    %1766 = vst [vmem:[#allocation4 + $0x2c0] sm:$0xff] %v1734
    %1767 = vst [vmem:[#allocation4 + $0x2c8] sm:$0xff] %v1735
    %1768 = vst [vmem:[#allocation4 + $0x2d0] sm:$0xff] %v1736
    %1769 = vst [vmem:[#allocation4 + $0x2d8] sm:$0xff] %v1737
    %1770 = vst [vmem:[#allocation4 + $0x2e0] sm:$0xff] %v1738
    %1771 = vst [vmem:[#allocation4 + $0x2e8] sm:$0xff] %v1739
    %1772 = vst [vmem:[#allocation4 + $0x2f0] sm:$0xff] %v1740
    %1773 = vst [vmem:[#allocation4 + $0x2f8] sm:$0xff] %v1741
    %v1774 = vld [vmem:[#allocation2 + $0x8] sm:$0xff]
    %v1775 = vld [vmem:[#allocation2 + $0x10] sm:$0xff]
    %v1776 = vld [vmem:[#allocation2 + $0x18] sm:$0xff]
    %v1777 = vld [vmem:[#allocation2 + $0x20] sm:$0xff]
    %v1778 = vld [vmem:[#allocation2 + $0x28] sm:$0xff]
    %v1779 = vld [vmem:[#allocation2 + $0x38] sm:$0xff]
    %v1780 = vld [vmem:[#allocation2 + $0x40] sm:$0xff]
    %v1781 = vld [vmem:[#allocation2 + $0x48] sm:$0xff]
    %v1782 = vld [vmem:[#allocation2 + $0x50] sm:$0xff]
    %v1783 = vld [vmem:[#allocation2 + $0x58] sm:$0xff]
    %v1784 = vld [vmem:[#allocation2 + $0x68] sm:$0xff]
    %v1785 = vld [vmem:[#allocation2 + $0x70] sm:$0xff]
    %v1786 = vld [vmem:[#allocation2 + $0x78] sm:$0xff]
    %v1787 = vld [vmem:[#allocation2 + $0x80] sm:$0xff]
    %v1788 = vld [vmem:[#allocation2 + $0x88] sm:$0xff]
    %v1789 = vld [vmem:[#allocation2 + $0x98] sm:$0xff]
    %v1790 = vld [vmem:[#allocation2 + $0xa0] sm:$0xff]
    %v1791 = vld [vmem:[#allocation2 + $0xa8] sm:$0xff]
    %v1792 = vld [vmem:[#allocation2 + $0xb0] sm:$0xff]
    %v1793 = vld [vmem:[#allocation2 + $0xb8] sm:$0xff]
    %v1794 = vld [vmem:[%s446] sm:$0xf]
    %v1796 = vperm.slane %v1794, 0
    %v1797 = vperm.slane %v1794, 1
    %v1798 = vperm.slane %v1794, 2
    %v1799 = vperm.slane %v1794, 3
    %1800 = vrot.lane.b32.xlu0 %v1796, 15
    %v1801 = vpop.permute.xlu0 %1800
    %1802 = vrot.lane.b32.xlu0 %v1797, 15
    %v1803 = vpop.permute.xlu0 %1802
    %1804 = vrot.lane.b32.xlu0 %v1798, 15
    %v1805 = vpop.permute.xlu0 %1804
    %1806 = vrot.lane.b32.xlu0 %v1799, 15
    %v1807 = vpop.permute.xlu0 %1806
    %v1808 = vsel %vm264, %v1801, %v1803
    %v1809 = vsel %vm264, %v1803, %v1805
    %v1810 = vsel %vm264, %v1805, %v1807
    %v1816 = vmul.f32 %v1774, %v1801
    %v1817 = vmul.f32 %v1775, %v1808
    %v1818 = vmul.f32 %v1776, %v1809
    %v1819 = vmul.f32 %v1777, %v1810
    %v1820 = vmul.f32 %v1778, %v1807
    %v1821 = vmul.f32 %v1779, %v1801
    %v1822 = vmul.f32 %v1780, %v1808
    %v1823 = vmul.f32 %v1781, %v1809
    %v1824 = vmul.f32 %v1782, %v1810
    %v1825 = vmul.f32 %v1783, %v1807
    %v1826 = vmul.f32 %v1784, %v1801
    %v1827 = vmul.f32 %v1785, %v1808
    %v1828 = vmul.f32 %v1786, %v1809
    %v1829 = vmul.f32 %v1787, %v1810
    %v1830 = vmul.f32 %v1788, %v1807
    %v1831 = vmul.f32 %v1789, %v1801
    %v1832 = vmul.f32 %v1790, %v1808
    %v1833 = vmul.f32 %v1791, %v1809
    %v1834 = vmul.f32 %v1792, %v1810
    %v1835 = vmul.f32 %v1793, %v1807
    %1856 = vrot.lane.b32.xlu0 %v1816, 113
    %v1857 = vpop.permute.xlu0 %1856
    %1858 = vrot.lane.b32.xlu0 %v1817, 113
    %v1859 = vpop.permute.xlu0 %1858
    %1860 = vrot.lane.b32.xlu0 %v1818, 113
    %v1861 = vpop.permute.xlu0 %1860
    %1862 = vrot.lane.b32.xlu0 %v1819, 113
    %v1863 = vpop.permute.xlu0 %1862
    %1864 = vrot.lane.b32.xlu0 %v1820, 113
    %v1865 = vpop.permute.xlu0 %1864
    %1866 = vrot.lane.b32.xlu0 %v1821, 113
    %v1867 = vpop.permute.xlu0 %1866
    %1868 = vrot.lane.b32.xlu0 %v1822, 113
    %v1869 = vpop.permute.xlu0 %1868
    %1870 = vrot.lane.b32.xlu0 %v1823, 113
    %v1871 = vpop.permute.xlu0 %1870
    %1872 = vrot.lane.b32.xlu0 %v1824, 113
    %v1873 = vpop.permute.xlu0 %1872
    %1874 = vrot.lane.b32.xlu0 %v1825, 113
    %v1875 = vpop.permute.xlu0 %1874
    %1876 = vrot.lane.b32.xlu0 %v1826, 113
    %v1877 = vpop.permute.xlu0 %1876
    %1878 = vrot.lane.b32.xlu0 %v1827, 113
    %v1879 = vpop.permute.xlu0 %1878
    %1880 = vrot.lane.b32.xlu0 %v1828, 113
    %v1881 = vpop.permute.xlu0 %1880
    %1882 = vrot.lane.b32.xlu0 %v1829, 113
    %v1883 = vpop.permute.xlu0 %1882
    %1884 = vrot.lane.b32.xlu0 %v1830, 113
    %v1885 = vpop.permute.xlu0 %1884
    %1886 = vrot.lane.b32.xlu0 %v1831, 113
    %v1887 = vpop.permute.xlu0 %1886
    %1888 = vrot.lane.b32.xlu0 %v1832, 113
    %v1889 = vpop.permute.xlu0 %1888
    %1890 = vrot.lane.b32.xlu0 %v1833, 113
    %v1891 = vpop.permute.xlu0 %1890
    %1892 = vrot.lane.b32.xlu0 %v1834, 113
    %v1893 = vpop.permute.xlu0 %1892
    %1894 = vrot.lane.b32.xlu0 %v1835, 113
    %v1895 = vpop.permute.xlu0 %1894
    %v1896 = vsel %vm231, %v1857, %v1859
    %v1897 = vsel %vm231, %v1859, %v1861
    %v1898 = vsel %vm231, %v1861, %v1863
    %v1899 = vsel %vm231, %v1863, %v1865
    %v1900 = vsel %vm231, %v1867, %v1869
    %v1901 = vsel %vm231, %v1869, %v1871
    %v1902 = vsel %vm231, %v1871, %v1873
    %v1903 = vsel %vm231, %v1873, %v1875
    %v1904 = vsel %vm231, %v1877, %v1879
    %v1905 = vsel %vm231, %v1879, %v1881
    %v1906 = vsel %vm231, %v1881, %v1883
    %v1907 = vsel %vm231, %v1883, %v1885
    %v1908 = vsel %vm231, %v1887, %v1889
    %v1909 = vsel %vm231, %v1889, %v1891
    %v1910 = vsel %vm231, %v1891, %v1893
    %v1911 = vsel %vm231, %v1893, %v1895
    %1928 = vst [vmem:[#allocation4 + $0x300] sm:$0xff] %v1896
    %1929 = vst [vmem:[#allocation4 + $0x308] sm:$0xff] %v1897
    %1930 = vst [vmem:[#allocation4 + $0x310] sm:$0xff] %v1898
    %1931 = vst [vmem:[#allocation4 + $0x318] sm:$0xff] %v1899
    %1932 = vst [vmem:[#allocation4 + $0x320] sm:$0xff] %v1900
    %1933 = vst [vmem:[#allocation4 + $0x328] sm:$0xff] %v1901
    %1934 = vst [vmem:[#allocation4 + $0x330] sm:$0xff] %v1902
    %1935 = vst [vmem:[#allocation4 + $0x338] sm:$0xff] %v1903
    %1936 = vst [vmem:[#allocation4 + $0x340] sm:$0xff] %v1904
    %1937 = vst [vmem:[#allocation4 + $0x348] sm:$0xff] %v1905
    %1938 = vst [vmem:[#allocation4 + $0x350] sm:$0xff] %v1906
    %1939 = vst [vmem:[#allocation4 + $0x358] sm:$0xff] %v1907
    %1940 = vst [vmem:[#allocation4 + $0x360] sm:$0xff] %v1908
    %1941 = vst [vmem:[#allocation4 + $0x368] sm:$0xff] %v1909
    %1942 = vst [vmem:[#allocation4 + $0x370] sm:$0xff] %v1910
    %1943 = vst [vmem:[#allocation4 + $0x378] sm:$0xff] %v1911
    %v1944 = vld [vmem:[#allocation2 + $0x8] sm:$0xff]
    %v1945 = vld [vmem:[#allocation2 + $0x10] sm:$0xff]
    %v1946 = vld [vmem:[#allocation2 + $0x18] sm:$0xff]
    %v1947 = vld [vmem:[#allocation2 + $0x20] sm:$0xff]
    %v1948 = vld [vmem:[#allocation2 + $0x28] sm:$0xff]
    %v1949 = vld [vmem:[#allocation2 + $0x38] sm:$0xff]
    %v1950 = vld [vmem:[#allocation2 + $0x40] sm:$0xff]
    %v1951 = vld [vmem:[#allocation2 + $0x48] sm:$0xff]
    %v1952 = vld [vmem:[#allocation2 + $0x50] sm:$0xff]
    %v1953 = vld [vmem:[#allocation2 + $0x58] sm:$0xff]
    %v1954 = vld [vmem:[#allocation2 + $0x68] sm:$0xff]
    %v1955 = vld [vmem:[#allocation2 + $0x70] sm:$0xff]
    %v1956 = vld [vmem:[#allocation2 + $0x78] sm:$0xff]
    %v1957 = vld [vmem:[#allocation2 + $0x80] sm:$0xff]
    %v1958 = vld [vmem:[#allocation2 + $0x88] sm:$0xff]
    %v1959 = vld [vmem:[#allocation2 + $0x98] sm:$0xff]
    %v1960 = vld [vmem:[#allocation2 + $0xa0] sm:$0xff]
    %v1961 = vld [vmem:[#allocation2 + $0xa8] sm:$0xff]
    %v1962 = vld [vmem:[#allocation2 + $0xb0] sm:$0xff]
    %v1963 = vld [vmem:[#allocation2 + $0xb8] sm:$0xff]
    %v1964 = vld [vmem:[%s510] sm:$0xf]
    %v1966 = vperm.slane %v1964, 0
    %v1967 = vperm.slane %v1964, 1
    %v1968 = vperm.slane %v1964, 2
    %v1969 = vperm.slane %v1964, 3
    %1970 = vrot.lane.b32.xlu0 %v1966, 16
    %v1971 = vpop.permute.xlu0 %1970
    %1972 = vrot.lane.b32.xlu0 %v1967, 16
    %v1973 = vpop.permute.xlu0 %1972
    %1974 = vrot.lane.b32.xlu0 %v1968, 16
    %v1975 = vpop.permute.xlu0 %1974
    %1976 = vrot.lane.b32.xlu0 %v1969, 16
    %v1977 = vpop.permute.xlu0 %1976
    %v1978 = vsel %vm198, %v1971, %v1973
    %v1979 = vsel %vm198, %v1973, %v1975
    %v1980 = vsel %vm198, %v1975, %v1977
    %v1986 = vmul.f32 %v1944, %v1971
    %v1987 = vmul.f32 %v1945, %v1978
    %v1988 = vmul.f32 %v1946, %v1979
    %v1989 = vmul.f32 %v1947, %v1980
    %v1990 = vmul.f32 %v1948, %v1977
    %v1991 = vmul.f32 %v1949, %v1971
    %v1992 = vmul.f32 %v1950, %v1978
    %v1993 = vmul.f32 %v1951, %v1979
    %v1994 = vmul.f32 %v1952, %v1980
    %v1995 = vmul.f32 %v1953, %v1977
    %v1996 = vmul.f32 %v1954, %v1971
    %v1997 = vmul.f32 %v1955, %v1978
    %v1998 = vmul.f32 %v1956, %v1979
    %v1999 = vmul.f32 %v1957, %v1980
    %v2000 = vmul.f32 %v1958, %v1977
    %v2001 = vmul.f32 %v1959, %v1971
    %v2002 = vmul.f32 %v1960, %v1978
    %v2003 = vmul.f32 %v1961, %v1979
    %v2004 = vmul.f32 %v1962, %v1980
    %v2005 = vmul.f32 %v1963, %v1977
    %2026 = vrot.lane.b32.xlu0 %v1986, 112
    %v2027 = vpop.permute.xlu0 %2026
    %2028 = vrot.lane.b32.xlu0 %v1987, 112
    %v2029 = vpop.permute.xlu0 %2028
    %2030 = vrot.lane.b32.xlu0 %v1988, 112
    %v2031 = vpop.permute.xlu0 %2030
    %2032 = vrot.lane.b32.xlu0 %v1989, 112
    %v2033 = vpop.permute.xlu0 %2032
    %2034 = vrot.lane.b32.xlu0 %v1990, 112
    %v2035 = vpop.permute.xlu0 %2034
    %2036 = vrot.lane.b32.xlu0 %v1991, 112
    %v2037 = vpop.permute.xlu0 %2036
    %2038 = vrot.lane.b32.xlu0 %v1992, 112
    %v2039 = vpop.permute.xlu0 %2038
    %2040 = vrot.lane.b32.xlu0 %v1993, 112
    %v2041 = vpop.permute.xlu0 %2040
    %2042 = vrot.lane.b32.xlu0 %v1994, 112
    %v2043 = vpop.permute.xlu0 %2042
    %2044 = vrot.lane.b32.xlu0 %v1995, 112
    %v2045 = vpop.permute.xlu0 %2044
    %2046 = vrot.lane.b32.xlu0 %v1996, 112
    %v2047 = vpop.permute.xlu0 %2046
    %2048 = vrot.lane.b32.xlu0 %v1997, 112
    %v2049 = vpop.permute.xlu0 %2048
    %2050 = vrot.lane.b32.xlu0 %v1998, 112
    %v2051 = vpop.permute.xlu0 %2050
    %2052 = vrot.lane.b32.xlu0 %v1999, 112
    %v2053 = vpop.permute.xlu0 %2052
    %2054 = vrot.lane.b32.xlu0 %v2000, 112
    %v2055 = vpop.permute.xlu0 %2054
    %2056 = vrot.lane.b32.xlu0 %v2001, 112
    %v2057 = vpop.permute.xlu0 %2056
    %2058 = vrot.lane.b32.xlu0 %v2002, 112
    %v2059 = vpop.permute.xlu0 %2058
    %2060 = vrot.lane.b32.xlu0 %v2003, 112
    %v2061 = vpop.permute.xlu0 %2060
    %2062 = vrot.lane.b32.xlu0 %v2004, 112
    %v2063 = vpop.permute.xlu0 %2062
    %2064 = vrot.lane.b32.xlu0 %v2005, 112
    %v2065 = vpop.permute.xlu0 %2064
    %v2066 = vsel %vm164, %v2027, %v2029
    %v2067 = vsel %vm164, %v2029, %v2031
    %v2068 = vsel %vm164, %v2031, %v2033
    %v2069 = vsel %vm164, %v2033, %v2035
    %v2070 = vsel %vm164, %v2037, %v2039
    %v2071 = vsel %vm164, %v2039, %v2041
    %v2072 = vsel %vm164, %v2041, %v2043
    %v2073 = vsel %vm164, %v2043, %v2045
    %v2074 = vsel %vm164, %v2047, %v2049
    %v2075 = vsel %vm164, %v2049, %v2051
    %v2076 = vsel %vm164, %v2051, %v2053
    %v2077 = vsel %vm164, %v2053, %v2055
    %v2078 = vsel %vm164, %v2057, %v2059
    %v2079 = vsel %vm164, %v2059, %v2061
    %v2080 = vsel %vm164, %v2061, %v2063
    %v2081 = vsel %vm164, %v2063, %v2065
    %2098 = vst [vmem:[#allocation4 + $0x380] sm:$0xff] %v2066
    %2099 = vst [vmem:[#allocation4 + $0x388] sm:$0xff] %v2067
    %2100 = vst [vmem:[#allocation4 + $0x390] sm:$0xff] %v2068
    %2101 = vst [vmem:[#allocation4 + $0x398] sm:$0xff] %v2069
    %2102 = vst [vmem:[#allocation4 + $0x3a0] sm:$0xff] %v2070
    %2103 = vst [vmem:[#allocation4 + $0x3a8] sm:$0xff] %v2071
    %2104 = vst [vmem:[#allocation4 + $0x3b0] sm:$0xff] %v2072
    %2105 = vst [vmem:[#allocation4 + $0x3b8] sm:$0xff] %v2073
    %2106 = vst [vmem:[#allocation4 + $0x3c0] sm:$0xff] %v2074
    %2107 = vst [vmem:[#allocation4 + $0x3c8] sm:$0xff] %v2075
    %2108 = vst [vmem:[#allocation4 + $0x3d0] sm:$0xff] %v2076
    %2109 = vst [vmem:[#allocation4 + $0x3d8] sm:$0xff] %v2077
    %2110 = vst [vmem:[#allocation4 + $0x3e0] sm:$0xff] %v2078
    %2111 = vst [vmem:[#allocation4 + $0x3e8] sm:$0xff] %v2079
    %2112 = vst [vmem:[#allocation4 + $0x3f0] sm:$0xff] %v2080
    %2113 = vst [vmem:[#allocation4 + $0x3f8] sm:$0xff] %v2081
    %v2114 = vld [vmem:[#allocation2 + $0x8] sm:$0xff]
    %v2115 = vld [vmem:[#allocation2 + $0x10] sm:$0xff]
    %v2116 = vld [vmem:[#allocation2 + $0x18] sm:$0xff]
    %v2117 = vld [vmem:[#allocation2 + $0x20] sm:$0xff]
    %v2118 = vld [vmem:[#allocation2 + $0x28] sm:$0xff]
    %v2119 = vld [vmem:[#allocation2 + $0x38] sm:$0xff]
    %v2120 = vld [vmem:[#allocation2 + $0x40] sm:$0xff]
    %v2121 = vld [vmem:[#allocation2 + $0x48] sm:$0xff]
    %v2122 = vld [vmem:[#allocation2 + $0x50] sm:$0xff]
    %v2123 = vld [vmem:[#allocation2 + $0x58] sm:$0xff]
    %v2124 = vld [vmem:[#allocation2 + $0x68] sm:$0xff]
    %v2125 = vld [vmem:[#allocation2 + $0x70] sm:$0xff]
    %v2126 = vld [vmem:[#allocation2 + $0x78] sm:$0xff]
    %v2127 = vld [vmem:[#allocation2 + $0x80] sm:$0xff]
    %v2128 = vld [vmem:[#allocation2 + $0x88] sm:$0xff]
    %v2129 = vld [vmem:[#allocation2 + $0x98] sm:$0xff]
    %v2130 = vld [vmem:[#allocation2 + $0xa0] sm:$0xff]
    %v2131 = vld [vmem:[#allocation2 + $0xa8] sm:$0xff]
    %v2132 = vld [vmem:[#allocation2 + $0xb0] sm:$0xff]
    %v2133 = vld [vmem:[#allocation2 + $0xb8] sm:$0xff]
    %v2134 = vld [vmem:[%s575] sm:$0xf]
    %v2136 = vperm.slane %v2134, 0
    %v2137 = vperm.slane %v2134, 1
    %v2138 = vperm.slane %v2134, 2
    %v2139 = vperm.slane %v2134, 3
    %2140 = vrot.lane.b32.xlu0 %v2136, 17
    %v2141 = vpop.permute.xlu0 %2140
    %2142 = vrot.lane.b32.xlu0 %v2137, 17
    %v2143 = vpop.permute.xlu0 %2142
    %2144 = vrot.lane.b32.xlu0 %v2138, 17
    %v2145 = vpop.permute.xlu0 %2144
    %2146 = vrot.lane.b32.xlu0 %v2139, 17
    %v2147 = vpop.permute.xlu0 %2146
    %v2148 = vsel %vm131, %v2141, %v2143
    %v2149 = vsel %vm131, %v2143, %v2145
    %v2150 = vsel %vm131, %v2145, %v2147
    %v2156 = vmul.f32 %v2114, %v2141
    %v2157 = vmul.f32 %v2115, %v2148
    %v2158 = vmul.f32 %v2116, %v2149
    %v2159 = vmul.f32 %v2117, %v2150
    %v2160 = vmul.f32 %v2118, %v2147
    %v2161 = vmul.f32 %v2119, %v2141
    %v2162 = vmul.f32 %v2120, %v2148
    %v2163 = vmul.f32 %v2121, %v2149
    %v2164 = vmul.f32 %v2122, %v2150
    %v2165 = vmul.f32 %v2123, %v2147
    %v2166 = vmul.f32 %v2124, %v2141
    %v2167 = vmul.f32 %v2125, %v2148
    %v2168 = vmul.f32 %v2126, %v2149
    %v2169 = vmul.f32 %v2127, %v2150
    %v2170 = vmul.f32 %v2128, %v2147
    %v2171 = vmul.f32 %v2129, %v2141
    %v2172 = vmul.f32 %v2130, %v2148
    %v2173 = vmul.f32 %v2131, %v2149
    %v2174 = vmul.f32 %v2132, %v2150
    %v2175 = vmul.f32 %v2133, %v2147
    %2196 = vrot.lane.b32.xlu0 %v2156, 111
    %v2197 = vpop.permute.xlu0 %2196
    %2198 = vrot.lane.b32.xlu0 %v2157, 111
    %v2199 = vpop.permute.xlu0 %2198
    %2200 = vrot.lane.b32.xlu0 %v2158, 111
    %v2201 = vpop.permute.xlu0 %2200
    %2202 = vrot.lane.b32.xlu0 %v2159, 111
    %v2203 = vpop.permute.xlu0 %2202
    %2204 = vrot.lane.b32.xlu0 %v2160, 111
    %v2205 = vpop.permute.xlu0 %2204
    %2206 = vrot.lane.b32.xlu0 %v2161, 111
    %v2207 = vpop.permute.xlu0 %2206
    %2208 = vrot.lane.b32.xlu0 %v2162, 111
    %v2209 = vpop.permute.xlu0 %2208
    %2210 = vrot.lane.b32.xlu0 %v2163, 111
    %v2211 = vpop.permute.xlu0 %2210
    %2212 = vrot.lane.b32.xlu0 %v2164, 111
    %v2213 = vpop.permute.xlu0 %2212
    %2214 = vrot.lane.b32.xlu0 %v2165, 111
    %v2215 = vpop.permute.xlu0 %2214
    %2216 = vrot.lane.b32.xlu0 %v2166, 111
    %v2217 = vpop.permute.xlu0 %2216
    %2218 = vrot.lane.b32.xlu0 %v2167, 111
    %v2219 = vpop.permute.xlu0 %2218
    %2220 = vrot.lane.b32.xlu0 %v2168, 111
    %v2221 = vpop.permute.xlu0 %2220
    %2222 = vrot.lane.b32.xlu0 %v2169, 111
    %v2223 = vpop.permute.xlu0 %2222
    %2224 = vrot.lane.b32.xlu0 %v2170, 111
    %v2225 = vpop.permute.xlu0 %2224
    %2226 = vrot.lane.b32.xlu0 %v2171, 111
    %v2227 = vpop.permute.xlu0 %2226
    %2228 = vrot.lane.b32.xlu0 %v2172, 111
    %v2229 = vpop.permute.xlu0 %2228
    %2230 = vrot.lane.b32.xlu0 %v2173, 111
    %v2231 = vpop.permute.xlu0 %2230
    %2232 = vrot.lane.b32.xlu0 %v2174, 111
    %v2233 = vpop.permute.xlu0 %2232
    %2234 = vrot.lane.b32.xlu0 %v2175, 111
    %v2235 = vpop.permute.xlu0 %2234
    %v2236 = vsel %vm98, %v2197, %v2199
    %v2237 = vsel %vm98, %v2199, %v2201
    %v2238 = vsel %vm98, %v2201, %v2203
    %v2239 = vsel %vm98, %v2203, %v2205
    %v2240 = vsel %vm98, %v2207, %v2209
    %v2241 = vsel %vm98, %v2209, %v2211
    %v2242 = vsel %vm98, %v2211, %v2213
    %v2243 = vsel %vm98, %v2213, %v2215
    %v2244 = vsel %vm98, %v2217, %v2219
    %v2245 = vsel %vm98, %v2219, %v2221
    %v2246 = vsel %vm98, %v2221, %v2223
    %v2247 = vsel %vm98, %v2223, %v2225
    %v2248 = vsel %vm98, %v2227, %v2229
    %v2249 = vsel %vm98, %v2229, %v2231
    %v2250 = vsel %vm98, %v2231, %v2233
    %v2251 = vsel %vm98, %v2233, %v2235
    %2268 = vst [vmem:[#allocation4 + $0x400] sm:$0xff] %v2236
    %2269 = vst [vmem:[#allocation4 + $0x408] sm:$0xff] %v2237
    %2270 = vst [vmem:[#allocation4 + $0x410] sm:$0xff] %v2238
    %2271 = vst [vmem:[#allocation4 + $0x418] sm:$0xff] %v2239
    %2272 = vst [vmem:[#allocation4 + $0x420] sm:$0xff] %v2240
    %2273 = vst [vmem:[#allocation4 + $0x428] sm:$0xff] %v2241
    %2274 = vst [vmem:[#allocation4 + $0x430] sm:$0xff] %v2242
    %2275 = vst [vmem:[#allocation4 + $0x438] sm:$0xff] %v2243
    %2276 = vst [vmem:[#allocation4 + $0x440] sm:$0xff] %v2244
    %2277 = vst [vmem:[#allocation4 + $0x448] sm:$0xff] %v2245
    %2278 = vst [vmem:[#allocation4 + $0x450] sm:$0xff] %v2246
    %2279 = vst [vmem:[#allocation4 + $0x458] sm:$0xff] %v2247
    %2280 = vst [vmem:[#allocation4 + $0x460] sm:$0xff] %v2248
    %2281 = vst [vmem:[#allocation4 + $0x468] sm:$0xff] %v2249
    %2282 = vst [vmem:[#allocation4 + $0x470] sm:$0xff] %v2250
    %2283 = vst [vmem:[#allocation4 + $0x478] sm:$0xff] %v2251
    %v2284 = vld [vmem:[%s4] sm:$0xff]
    %v2285 = vld [vmem:[%s4 + $0x8] sm:$0xff]
    %v2286 = vld [vmem:[%s4 + $0x10] sm:$0xff]
    %v2287 = vld [vmem:[%s4 + $0x18] sm:$0xff]
    %v2288 = vld [vmem:[%s4 + $0x20] sm:$0xff]
    %v2289 = vld [vmem:[%s4 + $0x28] sm:$0xff]
    %v2290 = vld [vmem:[%s4 + $0x30] sm:$0xff]
    %v2291 = vld [vmem:[%s4 + $0x38] sm:$0xff]
    %v2292 = vld [vmem:[%s4 + $0x40] sm:$0xff]
    %v2293 = vld [vmem:[%s4 + $0x48] sm:$0xff]
    %v2294 = vld [vmem:[%s4 + $0x50] sm:$0xff]
    %v2295 = vld [vmem:[%s4 + $0x58] sm:$0xff]
    %v2296 = vld [vmem:[#allocation4] sm:$0xff]
    %v2297 = vld [vmem:[#allocation4 + $0x8] sm:$0xff]
    %v2298 = vld [vmem:[#allocation4 + $0x10] sm:$0xff]
    %v2299 = vld [vmem:[#allocation4 + $0x18] sm:$0xff]
    %v2300 = vld [vmem:[#allocation4 + $0x20] sm:$0xff]
    %v2301 = vld [vmem:[#allocation4 + $0x28] sm:$0xff]
    %v2302 = vld [vmem:[#allocation4 + $0x30] sm:$0xff]
    %v2303 = vld [vmem:[#allocation4 + $0x38] sm:$0xff]
    %v2304 = vld [vmem:[#allocation4 + $0x40] sm:$0xff]
    %v2305 = vld [vmem:[#allocation4 + $0x48] sm:$0xff]
    %v2306 = vld [vmem:[#allocation4 + $0x50] sm:$0xff]
    %v2307 = vld [vmem:[#allocation4 + $0x58] sm:$0xff]
    %v2308 = vld [vmem:[#allocation4 + $0x60] sm:$0xff]
    %v2309 = vld [vmem:[#allocation4 + $0x68] sm:$0xff]
    %v2310 = vld [vmem:[#allocation4 + $0x70] sm:$0xff]
    %v2311 = vld [vmem:[#allocation4 + $0x78] sm:$0xff]
    %v2312 = vld [vmem:[#allocation4 + $0x80] sm:$0xff]
    %v2313 = vld [vmem:[#allocation4 + $0x88] sm:$0xff]
    %v2314 = vld [vmem:[#allocation4 + $0x90] sm:$0xff]
    %v2315 = vld [vmem:[#allocation4 + $0x98] sm:$0xff]
    %v2316 = vld [vmem:[#allocation4 + $0xa0] sm:$0xff]
    %v2317 = vld [vmem:[#allocation4 + $0xa8] sm:$0xff]
    %v2318 = vld [vmem:[#allocation4 + $0xb0] sm:$0xff]
    %v2319 = vld [vmem:[#allocation4 + $0xb8] sm:$0xff]
    %v2320 = vld [vmem:[#allocation4 + $0xc0] sm:$0xff]
    %v2321 = vld [vmem:[#allocation4 + $0xc8] sm:$0xff]
    %v2322 = vld [vmem:[#allocation4 + $0xd0] sm:$0xff]
    %v2323 = vld [vmem:[#allocation4 + $0xd8] sm:$0xff]
    %v2324 = vld [vmem:[#allocation4 + $0xe0] sm:$0xff]
    %v2325 = vld [vmem:[#allocation4 + $0xe8] sm:$0xff]
    %v2326 = vld [vmem:[#allocation4 + $0xf0] sm:$0xff]
    %v2327 = vld [vmem:[#allocation4 + $0xf8] sm:$0xff]
    %v2328 = vld [vmem:[#allocation4 + $0x100] sm:$0xff]
    %v2329 = vld [vmem:[#allocation4 + $0x108] sm:$0xff]
    %v2330 = vld [vmem:[#allocation4 + $0x110] sm:$0xff]
    %v2331 = vld [vmem:[#allocation4 + $0x118] sm:$0xff]
    %v2332 = vld [vmem:[#allocation4 + $0x120] sm:$0xff]
    %v2333 = vld [vmem:[#allocation4 + $0x128] sm:$0xff]
    %v2334 = vld [vmem:[#allocation4 + $0x130] sm:$0xff]
    %v2335 = vld [vmem:[#allocation4 + $0x138] sm:$0xff]
    %v2336 = vld [vmem:[#allocation4 + $0x140] sm:$0xff]
    %v2337 = vld [vmem:[#allocation4 + $0x148] sm:$0xff]
    %v2338 = vld [vmem:[#allocation4 + $0x150] sm:$0xff]
    %v2339 = vld [vmem:[#allocation4 + $0x158] sm:$0xff]
    %v2340 = vld [vmem:[#allocation4 + $0x160] sm:$0xff]
    %v2341 = vld [vmem:[#allocation4 + $0x168] sm:$0xff]
    %v2342 = vld [vmem:[#allocation4 + $0x170] sm:$0xff]
    %v2343 = vld [vmem:[#allocation4 + $0x178] sm:$0xff]
    %v2344 = vld [vmem:[#allocation4 + $0x180] sm:$0xff]
    %v2345 = vld [vmem:[#allocation4 + $0x188] sm:$0xff]
    %v2346 = vld [vmem:[#allocation4 + $0x190] sm:$0xff]
    %v2347 = vld [vmem:[#allocation4 + $0x198] sm:$0xff]
    %v2348 = vld [vmem:[#allocation4 + $0x1a0] sm:$0xff]
    %v2349 = vld [vmem:[#allocation4 + $0x1a8] sm:$0xff]
    %v2350 = vld [vmem:[#allocation4 + $0x1b0] sm:$0xff]
    %v2351 = vld [vmem:[#allocation4 + $0x1b8] sm:$0xff]
    %v2352 = vld [vmem:[#allocation4 + $0x1c0] sm:$0xff]
    %v2353 = vld [vmem:[#allocation4 + $0x1c8] sm:$0xff]
    %v2354 = vld [vmem:[#allocation4 + $0x1d0] sm:$0xff]
    %v2355 = vld [vmem:[#allocation4 + $0x1d8] sm:$0xff]
    %v2356 = vld [vmem:[#allocation4 + $0x1e0] sm:$0xff]
    %v2357 = vld [vmem:[#allocation4 + $0x1e8] sm:$0xff]
    %v2358 = vld [vmem:[#allocation4 + $0x1f0] sm:$0xff]
    %v2359 = vld [vmem:[#allocation4 + $0x1f8] sm:$0xff]
    %v2360 = vld [vmem:[#allocation4 + $0x200] sm:$0xff]
    %v2361 = vld [vmem:[#allocation4 + $0x208] sm:$0xff]
    %v2362 = vld [vmem:[#allocation4 + $0x210] sm:$0xff]
    %v2363 = vld [vmem:[#allocation4 + $0x218] sm:$0xff]
    %v2364 = vld [vmem:[#allocation4 + $0x220] sm:$0xff]
    %v2365 = vld [vmem:[#allocation4 + $0x228] sm:$0xff]
    %v2366 = vld [vmem:[#allocation4 + $0x230] sm:$0xff]
    %v2367 = vld [vmem:[#allocation4 + $0x238] sm:$0xff]
    %v2368 = vld [vmem:[#allocation4 + $0x240] sm:$0xff]
    %v2369 = vld [vmem:[#allocation4 + $0x248] sm:$0xff]
    %v2370 = vld [vmem:[#allocation4 + $0x250] sm:$0xff]
    %v2371 = vld [vmem:[#allocation4 + $0x258] sm:$0xff]
    %v2372 = vld [vmem:[#allocation4 + $0x260] sm:$0xff]
    %v2373 = vld [vmem:[#allocation4 + $0x268] sm:$0xff]
    %v2374 = vld [vmem:[#allocation4 + $0x270] sm:$0xff]
    %v2375 = vld [vmem:[#allocation4 + $0x278] sm:$0xff]
    %v2376 = vld [vmem:[#allocation4 + $0x280] sm:$0xff]
    %v2377 = vld [vmem:[#allocation4 + $0x288] sm:$0xff]
    %v2378 = vld [vmem:[#allocation4 + $0x290] sm:$0xff]
    %v2379 = vld [vmem:[#allocation4 + $0x298] sm:$0xff]
    %v2380 = vld [vmem:[#allocation4 + $0x2a0] sm:$0xff]
    %v2381 = vld [vmem:[#allocation4 + $0x2a8] sm:$0xff]
    %v2382 = vld [vmem:[#allocation4 + $0x2b0] sm:$0xff]
    %v2383 = vld [vmem:[#allocation4 + $0x2b8] sm:$0xff]
    %v2384 = vld [vmem:[#allocation4 + $0x2c0] sm:$0xff]
    %v2385 = vld [vmem:[#allocation4 + $0x2c8] sm:$0xff]
    %v2386 = vld [vmem:[#allocation4 + $0x2d0] sm:$0xff]
    %v2387 = vld [vmem:[#allocation4 + $0x2d8] sm:$0xff]
    %v2388 = vld [vmem:[#allocation4 + $0x2e0] sm:$0xff]
    %v2389 = vld [vmem:[#allocation4 + $0x2e8] sm:$0xff]
    %v2390 = vld [vmem:[#allocation4 + $0x2f0] sm:$0xff]
    %v2391 = vld [vmem:[#allocation4 + $0x2f8] sm:$0xff]
    %v2392 = vld [vmem:[#allocation4 + $0x300] sm:$0xff]
    %v2393 = vld [vmem:[#allocation4 + $0x308] sm:$0xff]
    %v2394 = vld [vmem:[#allocation4 + $0x310] sm:$0xff]
    %v2395 = vld [vmem:[#allocation4 + $0x318] sm:$0xff]
    %v2396 = vld [vmem:[#allocation4 + $0x320] sm:$0xff]
    %v2397 = vld [vmem:[#allocation4 + $0x328] sm:$0xff]
    %v2398 = vld [vmem:[#allocation4 + $0x330] sm:$0xff]
    %v2399 = vld [vmem:[#allocation4 + $0x338] sm:$0xff]
    %v2400 = vld [vmem:[#allocation4 + $0x340] sm:$0xff]
    %v2401 = vld [vmem:[#allocation4 + $0x348] sm:$0xff]
    %v2402 = vld [vmem:[#allocation4 + $0x350] sm:$0xff]
    %v2403 = vld [vmem:[#allocation4 + $0x358] sm:$0xff]
    %v2404 = vld [vmem:[#allocation4 + $0x360] sm:$0xff]
    %v2405 = vld [vmem:[#allocation4 + $0x368] sm:$0xff]
    %v2406 = vld [vmem:[#allocation4 + $0x370] sm:$0xff]
    %v2407 = vld [vmem:[#allocation4 + $0x378] sm:$0xff]
    %v2408 = vld [vmem:[#allocation4 + $0x380] sm:$0xff]
    %v2409 = vld [vmem:[#allocation4 + $0x388] sm:$0xff]
    %v2410 = vld [vmem:[#allocation4 + $0x390] sm:$0xff]
    %v2411 = vld [vmem:[#allocation4 + $0x398] sm:$0xff]
    %v2412 = vld [vmem:[#allocation4 + $0x3a0] sm:$0xff]
    %v2413 = vld [vmem:[#allocation4 + $0x3a8] sm:$0xff]
    %v2414 = vld [vmem:[#allocation4 + $0x3b0] sm:$0xff]
    %v2415 = vld [vmem:[#allocation4 + $0x3b8] sm:$0xff]
    %v2416 = vld [vmem:[#allocation4 + $0x3c0] sm:$0xff]
    %v2417 = vld [vmem:[#allocation4 + $0x3c8] sm:$0xff]
    %v2418 = vld [vmem:[#allocation4 + $0x3d0] sm:$0xff]
    %v2419 = vld [vmem:[#allocation4 + $0x3d8] sm:$0xff]
    %v2420 = vld [vmem:[#allocation4 + $0x3e0] sm:$0xff]
    %v2421 = vld [vmem:[#allocation4 + $0x3e8] sm:$0xff]
    %v2422 = vld [vmem:[#allocation4 + $0x3f0] sm:$0xff]
    %v2423 = vld [vmem:[#allocation4 + $0x3f8] sm:$0xff]
    %v2424 = vld [vmem:[#allocation4 + $0x400] sm:$0xff]
    %v2425 = vld [vmem:[#allocation4 + $0x408] sm:$0xff]
    %v2426 = vld [vmem:[#allocation4 + $0x410] sm:$0xff]
    %v2427 = vld [vmem:[#allocation4 + $0x418] sm:$0xff]
    %v2428 = vld [vmem:[#allocation4 + $0x420] sm:$0xff]
    %v2429 = vld [vmem:[#allocation4 + $0x428] sm:$0xff]
    %v2430 = vld [vmem:[#allocation4 + $0x430] sm:$0xff]
    %v2431 = vld [vmem:[#allocation4 + $0x438] sm:$0xff]
    %v2432 = vld [vmem:[#allocation4 + $0x440] sm:$0xff]
    %v2433 = vld [vmem:[#allocation4 + $0x448] sm:$0xff]
    %v2434 = vld [vmem:[#allocation4 + $0x450] sm:$0xff]
    %v2435 = vld [vmem:[#allocation4 + $0x458] sm:$0xff]
    %v2436 = vld [vmem:[#allocation4 + $0x460] sm:$0xff]
    %v2437 = vld [vmem:[#allocation4 + $0x468] sm:$0xff]
    %v2438 = vld [vmem:[#allocation4 + $0x470] sm:$0xff]
    %v2439 = vld [vmem:[#allocation4 + $0x478] sm:$0xff]
    %v2440 = vld [vmem:[%s5] sm:$0xff]
    %v2441 = vld [vmem:[%s5 + $0x8] sm:$0xff]
    %v2442 = vld [vmem:[%s5 + $0x10] sm:$0xff]
    %v2443 = vld [vmem:[%s5 + $0x18] sm:$0xff]
    %2445 = vset.pattern.permute.xlu0 0
    %2446 = vperm.xlu0 %2445, %v2440
    %v2447 = vpop.permute.xlu0 %2446
    %2450 = vset.pattern.permute.xlu0 0
    %2451 = vperm.xlu0 %2450, %v2441
    %v2452 = vpop.permute.xlu0 %2451
    %2455 = vset.pattern.permute.xlu0 0
    %2456 = vperm.xlu0 %2455, %v2442
    %v2457 = vpop.permute.xlu0 %2456
    %2460 = vset.pattern.permute.xlu0 0
    %2461 = vperm.xlu0 %2460, %v2443
    %v2462 = vpop.permute.xlu0 %2461
    %v2465 = vsel %vm845, %v2286, 0
    %v2468 = vsel %vm845, %v2289, 0
    %v2471 = vsel %vm845, %v2292, 0
    %v2474 = vsel %vm845, %v2295, 0
    %2476 = vmatpush.msra.mxu0 %v2356
    %2477 = vmatpush.msra.mxu0 %v2352
    %2478 = vmatpush.msra.mxu0 %v2348
    %2479 = vmatpush.msra.mxu0 %v2344
    %2480 = vmatpush.msra.mxu0 %v2340
    %2481 = vmatpush.msra.mxu0 %v2336
    %2482 = vmatpush.msra.mxu0 %v2332
    %2483 = vmatpush.msra.mxu0 %v2328
    %2484 = vmatpush.msra.mxu0 %v2324
    %2485 = vmatpush.msra.mxu0 %v2320
    %2486 = vmatpush.msra.mxu0 %v2316
    %2487 = vmatpush.msra.mxu0 %v2312
    %2488 = vmatpush.msra.mxu0 %v2308
    %2489 = vmatpush.msra.mxu0 %v2304
    %2490 = vmatpush.msra.mxu0 %v2300
    %2491 = vmatpush.msra.mxu0 %v2296
    %2492 = vmatmul.f32.gmra.mxu0 %v2284
    %v2493 = vpop.f32.mrf.mxu0
    %v2494 = vadd.f32 %v2447, %v2493
    %2495 = vmatmul.f32.gmra.mxu0 %v2287
    %v2496 = vpop.f32.mrf.mxu0
    %v2497 = vadd.f32 %v2452, %v2496
    %2498 = vmatmul.f32.gmra.mxu0 %v2290
    %v2499 = vpop.f32.mrf.mxu0
    %v2500 = vadd.f32 %v2457, %v2499
    %2501 = vmatmul.f32.gmra.mxu0 %v2293
    %v2502 = vpop.f32.mrf.mxu0
    %v2503 = vadd.f32 %v2462, %v2502
    %2504 = vdwg.mxu0
    %2505 = vmatpush.msra.mxu0 %v2420
    %2506 = vmatpush.msra.mxu0 %v2416
    %2507 = vmatpush.msra.mxu0 %v2412
    %2508 = vmatpush.msra.mxu0 %v2408
    %2509 = vmatpush.msra.mxu0 %v2404
    %2510 = vmatpush.msra.mxu0 %v2400
    %2511 = vmatpush.msra.mxu0 %v2396
    %2512 = vmatpush.msra.mxu0 %v2392
    %2513 = vmatpush.msra.mxu0 %v2388
    %2514 = vmatpush.msra.mxu0 %v2384
    %2515 = vmatpush.msra.mxu0 %v2380
    %2516 = vmatpush.msra.mxu0 %v2376
    %2517 = vmatpush.msra.mxu0 %v2372
    %2518 = vmatpush.msra.mxu0 %v2368
    %2519 = vmatpush.msra.mxu0 %v2364
    %2520 = vmatpush.msra.mxu0 %v2360
    %2521 = vmatmul.f32.gmra.mxu0 %v2285
    %v2522 = vpop.f32.mrf.mxu0
    %v2523 = vadd.f32 %v2494, %v2522
    %2524 = vmatmul.f32.gmra.mxu0 %v2288
    %v2525 = vpop.f32.mrf.mxu0
    %v2526 = vadd.f32 %v2497, %v2525
    %2527 = vmatmul.f32.gmra.mxu0 %v2291
    %v2528 = vpop.f32.mrf.mxu0
    %v2529 = vadd.f32 %v2500, %v2528
    %2530 = vmatmul.f32.gmra.mxu0 %v2294
    %v2531 = vpop.f32.mrf.mxu0
    %v2532 = vadd.f32 %v2503, %v2531
    %2533 = vdwg.mxu0
    %2534 = vmatpush.msra.mxu0 0.0
    %2535 = vmatpush.msra.mxu0 0.0
    %2536 = vmatpush.msra.mxu0 0.0
    %2537 = vmatpush.msra.mxu0 0.0
    %2538 = vmatpush.msra.mxu0 0.0
    %2539 = vmatpush.msra.mxu0 0.0
    %2540 = vmatpush.msra.mxu0 0.0
    %2541 = vmatpush.msra.mxu0 0.0
    %2542 = vmatpush.msra.mxu0 0.0
    %2543 = vmatpush.msra.mxu0 0.0
    %2544 = vmatpush.msra.mxu0 0.0
    %2545 = vmatpush.msra.mxu0 0.0
    %2546 = vmatpush.msra.mxu0 %v2436
    %2547 = vmatpush.msra.mxu0 %v2432
    %2548 = vmatpush.msra.mxu0 %v2428
    %2549 = vmatpush.msra.mxu0 %v2424
    %2550 = vmatmul.f32.gmra.mxu0 %v2465
    %v2551 = vpop.f32.mrf.mxu0
    %v2552 = vadd.f32 %v2523, %v2551
    %2553 = vmatmul.f32.gmra.mxu0 %v2468
    %v2554 = vpop.f32.mrf.mxu0
    %v2555 = vadd.f32 %v2526, %v2554
    %2556 = vmatmul.f32.gmra.mxu0 %v2471
    %v2557 = vpop.f32.mrf.mxu0
    %v2558 = vadd.f32 %v2529, %v2557
    %2559 = vmatmul.f32.gmra.mxu0 %v2474
    %v2560 = vpop.f32.mrf.mxu0
    %v2561 = vadd.f32 %v2532, %v2560
    %2562 = vdwg.mxu0
    %2563 = vmatpush.msra.mxu0 %v2357
    %2564 = vmatpush.msra.mxu0 %v2353
    %2565 = vmatpush.msra.mxu0 %v2349
    %2566 = vmatpush.msra.mxu0 %v2345
    %2567 = vmatpush.msra.mxu0 %v2341
    %2568 = vmatpush.msra.mxu0 %v2337
    %2569 = vmatpush.msra.mxu0 %v2333
    %2570 = vmatpush.msra.mxu0 %v2329
    %2571 = vmatpush.msra.mxu0 %v2325
    %2572 = vmatpush.msra.mxu0 %v2321
    %2573 = vmatpush.msra.mxu0 %v2317
    %2574 = vmatpush.msra.mxu0 %v2313
    %2575 = vmatpush.msra.mxu0 %v2309
    %2576 = vmatpush.msra.mxu0 %v2305
    %2577 = vmatpush.msra.mxu0 %v2301
    %2578 = vmatpush.msra.mxu0 %v2297
    %2579 = vmatmul.f32.gmra.mxu0 %v2284
    %v2580 = vpop.f32.mrf.mxu0
    %v2581 = vadd.f32 %v2447, %v2580
    %2582 = vmatmul.f32.gmra.mxu0 %v2287
    %v2583 = vpop.f32.mrf.mxu0
    %v2584 = vadd.f32 %v2452, %v2583
    %2585 = vmatmul.f32.gmra.mxu0 %v2290
    %v2586 = vpop.f32.mrf.mxu0
    %v2587 = vadd.f32 %v2457, %v2586
    %2588 = vmatmul.f32.gmra.mxu0 %v2293
    %v2589 = vpop.f32.mrf.mxu0
    %v2590 = vadd.f32 %v2462, %v2589
    %2591 = vdwg.mxu0
    %2592 = vmatpush.msra.mxu0 %v2421
    %2593 = vmatpush.msra.mxu0 %v2417
    %2594 = vmatpush.msra.mxu0 %v2413
    %2595 = vmatpush.msra.mxu0 %v2409
    %2596 = vmatpush.msra.mxu0 %v2405
    %2597 = vmatpush.msra.mxu0 %v2401
    %2598 = vmatpush.msra.mxu0 %v2397
    %2599 = vmatpush.msra.mxu0 %v2393
    %2600 = vmatpush.msra.mxu0 %v2389
    %2601 = vmatpush.msra.mxu0 %v2385
    %2602 = vmatpush.msra.mxu0 %v2381
    %2603 = vmatpush.msra.mxu0 %v2377
    %2604 = vmatpush.msra.mxu0 %v2373
    %2605 = vmatpush.msra.mxu0 %v2369
    %2606 = vmatpush.msra.mxu0 %v2365
    %2607 = vmatpush.msra.mxu0 %v2361
    %2608 = vmatmul.f32.gmra.mxu0 %v2285
    %v2609 = vpop.f32.mrf.mxu0
    %v2610 = vadd.f32 %v2581, %v2609
    %2611 = vmatmul.f32.gmra.mxu0 %v2288
    %v2612 = vpop.f32.mrf.mxu0
    %v2613 = vadd.f32 %v2584, %v2612
    %2614 = vmatmul.f32.gmra.mxu0 %v2291
    %v2615 = vpop.f32.mrf.mxu0
    %v2616 = vadd.f32 %v2587, %v2615
    %2617 = vmatmul.f32.gmra.mxu0 %v2294
    %v2618 = vpop.f32.mrf.mxu0
    %v2619 = vadd.f32 %v2590, %v2618
    %2620 = vdwg.mxu0
    %2621 = vmatpush.msra.mxu0 0.0
    %2622 = vmatpush.msra.mxu0 0.0
    %2623 = vmatpush.msra.mxu0 0.0
    %2624 = vmatpush.msra.mxu0 0.0
    %2625 = vmatpush.msra.mxu0 0.0
    %2626 = vmatpush.msra.mxu0 0.0
    %2627 = vmatpush.msra.mxu0 0.0
    %2628 = vmatpush.msra.mxu0 0.0
    %2629 = vmatpush.msra.mxu0 0.0
    %2630 = vmatpush.msra.mxu0 0.0
    %2631 = vmatpush.msra.mxu0 0.0
    %2632 = vmatpush.msra.mxu0 0.0
    %2633 = vmatpush.msra.mxu0 %v2437
    %2634 = vmatpush.msra.mxu0 %v2433
    %2635 = vmatpush.msra.mxu0 %v2429
    %2636 = vmatpush.msra.mxu0 %v2425
    %2637 = vmatmul.f32.gmra.mxu0 %v2465
    %v2638 = vpop.f32.mrf.mxu0
    %v2639 = vadd.f32 %v2610, %v2638
    %2640 = vmatmul.f32.gmra.mxu0 %v2468
    %v2641 = vpop.f32.mrf.mxu0
    %v2642 = vadd.f32 %v2613, %v2641
    %2643 = vmatmul.f32.gmra.mxu0 %v2471
    %v2644 = vpop.f32.mrf.mxu0
    %v2645 = vadd.f32 %v2616, %v2644
    %2646 = vmatmul.f32.gmra.mxu0 %v2474
    %v2647 = vpop.f32.mrf.mxu0
    %v2648 = vadd.f32 %v2619, %v2647
    %2649 = vdwg.mxu0
    %2650 = vmatpush.msra.mxu0 %v2358
    %2651 = vmatpush.msra.mxu0 %v2354
    %2652 = vmatpush.msra.mxu0 %v2350
    %2653 = vmatpush.msra.mxu0 %v2346
    %2654 = vmatpush.msra.mxu0 %v2342
    %2655 = vmatpush.msra.mxu0 %v2338
    %2656 = vmatpush.msra.mxu0 %v2334
    %2657 = vmatpush.msra.mxu0 %v2330
    %2658 = vmatpush.msra.mxu0 %v2326
    %2659 = vmatpush.msra.mxu0 %v2322
    %2660 = vmatpush.msra.mxu0 %v2318
    %2661 = vmatpush.msra.mxu0 %v2314
    %2662 = vmatpush.msra.mxu0 %v2310
    %2663 = vmatpush.msra.mxu0 %v2306
    %2664 = vmatpush.msra.mxu0 %v2302
    %2665 = vmatpush.msra.mxu0 %v2298
    %2666 = vmatmul.f32.gmra.mxu0 %v2284
    %v2667 = vpop.f32.mrf.mxu0
    %v2668 = vadd.f32 %v2447, %v2667
    %2669 = vmatmul.f32.gmra.mxu0 %v2287
    %v2670 = vpop.f32.mrf.mxu0
    %v2671 = vadd.f32 %v2452, %v2670
    %2672 = vmatmul.f32.gmra.mxu0 %v2290
    %v2673 = vpop.f32.mrf.mxu0
    %v2674 = vadd.f32 %v2457, %v2673
    %2675 = vmatmul.f32.gmra.mxu0 %v2293
    %v2676 = vpop.f32.mrf.mxu0
    %v2677 = vadd.f32 %v2462, %v2676
    %2678 = vdwg.mxu0
    %2679 = vmatpush.msra.mxu0 %v2422
    %2680 = vmatpush.msra.mxu0 %v2418
    %2681 = vmatpush.msra.mxu0 %v2414
    %2682 = vmatpush.msra.mxu0 %v2410
    %2683 = vmatpush.msra.mxu0 %v2406
    %2684 = vmatpush.msra.mxu0 %v2402
    %2685 = vmatpush.msra.mxu0 %v2398
    %2686 = vmatpush.msra.mxu0 %v2394
    %2687 = vmatpush.msra.mxu0 %v2390
    %2688 = vmatpush.msra.mxu0 %v2386
    %2689 = vmatpush.msra.mxu0 %v2382
    %2690 = vmatpush.msra.mxu0 %v2378
    %2691 = vmatpush.msra.mxu0 %v2374
    %2692 = vmatpush.msra.mxu0 %v2370
    %2693 = vmatpush.msra.mxu0 %v2366
    %2694 = vmatpush.msra.mxu0 %v2362
    %2695 = vmatmul.f32.gmra.mxu0 %v2285
    %v2696 = vpop.f32.mrf.mxu0
    %v2697 = vadd.f32 %v2668, %v2696
    %2698 = vmatmul.f32.gmra.mxu0 %v2288
    %v2699 = vpop.f32.mrf.mxu0
    %v2700 = vadd.f32 %v2671, %v2699
    %2701 = vmatmul.f32.gmra.mxu0 %v2291
    %v2702 = vpop.f32.mrf.mxu0
    %v2703 = vadd.f32 %v2674, %v2702
    %2704 = vmatmul.f32.gmra.mxu0 %v2294
    %v2705 = vpop.f32.mrf.mxu0
    %v2706 = vadd.f32 %v2677, %v2705
    %2707 = vdwg.mxu0
    %2708 = vmatpush.msra.mxu0 0.0
    %2709 = vmatpush.msra.mxu0 0.0
    %2710 = vmatpush.msra.mxu0 0.0
    %2711 = vmatpush.msra.mxu0 0.0
    %2712 = vmatpush.msra.mxu0 0.0
    %2713 = vmatpush.msra.mxu0 0.0
    %2714 = vmatpush.msra.mxu0 0.0
    %2715 = vmatpush.msra.mxu0 0.0
    %2716 = vmatpush.msra.mxu0 0.0
    %2717 = vmatpush.msra.mxu0 0.0
    %2718 = vmatpush.msra.mxu0 0.0
    %2719 = vmatpush.msra.mxu0 0.0
    %2720 = vmatpush.msra.mxu0 %v2438
    %2721 = vmatpush.msra.mxu0 %v2434
    %2722 = vmatpush.msra.mxu0 %v2430
    %2723 = vmatpush.msra.mxu0 %v2426
    %2724 = vmatmul.f32.gmra.mxu0 %v2465
    %v2725 = vpop.f32.mrf.mxu0
    %v2726 = vadd.f32 %v2697, %v2725
    %2727 = vmatmul.f32.gmra.mxu0 %v2468
    %v2728 = vpop.f32.mrf.mxu0
    %v2729 = vadd.f32 %v2700, %v2728
    %2730 = vmatmul.f32.gmra.mxu0 %v2471
    %v2731 = vpop.f32.mrf.mxu0
    %v2732 = vadd.f32 %v2703, %v2731
    %2733 = vmatmul.f32.gmra.mxu0 %v2474
    %v2734 = vpop.f32.mrf.mxu0
    %v2735 = vadd.f32 %v2706, %v2734
    %2736 = vdwg.mxu0
    %2737 = vmatpush.msra.mxu0 %v2359
    %2738 = vmatpush.msra.mxu0 %v2355
    %2739 = vmatpush.msra.mxu0 %v2351
    %2740 = vmatpush.msra.mxu0 %v2347
    %2741 = vmatpush.msra.mxu0 %v2343
    %2742 = vmatpush.msra.mxu0 %v2339
    %2743 = vmatpush.msra.mxu0 %v2335
    %2744 = vmatpush.msra.mxu0 %v2331
    %2745 = vmatpush.msra.mxu0 %v2327
    %2746 = vmatpush.msra.mxu0 %v2323
    %2747 = vmatpush.msra.mxu0 %v2319
    %2748 = vmatpush.msra.mxu0 %v2315
    %2749 = vmatpush.msra.mxu0 %v2311
    %2750 = vmatpush.msra.mxu0 %v2307
    %2751 = vmatpush.msra.mxu0 %v2303
    %2752 = vmatpush.msra.mxu0 %v2299
    %2753 = vmatmul.f32.gmra.mxu0 %v2284
    %v2754 = vpop.f32.mrf.mxu0
    %v2755 = vadd.f32 %v2447, %v2754
    %2756 = vmatmul.f32.gmra.mxu0 %v2287
    %v2757 = vpop.f32.mrf.mxu0
    %v2758 = vadd.f32 %v2452, %v2757
    %2759 = vmatmul.f32.gmra.mxu0 %v2290
    %v2760 = vpop.f32.mrf.mxu0
    %v2761 = vadd.f32 %v2457, %v2760
    %2762 = vmatmul.f32.gmra.mxu0 %v2293
    %v2763 = vpop.f32.mrf.mxu0
    %v2764 = vadd.f32 %v2462, %v2763
    %2765 = vdwg.mxu0
    %2766 = vmatpush.msra.mxu0 %v2423
    %2767 = vmatpush.msra.mxu0 %v2419
    %2768 = vmatpush.msra.mxu0 %v2415
    %2769 = vmatpush.msra.mxu0 %v2411
    %2770 = vmatpush.msra.mxu0 %v2407
    %2771 = vmatpush.msra.mxu0 %v2403
    %2772 = vmatpush.msra.mxu0 %v2399
    %2773 = vmatpush.msra.mxu0 %v2395
    %2774 = vmatpush.msra.mxu0 %v2391
    %2775 = vmatpush.msra.mxu0 %v2387
    %2776 = vmatpush.msra.mxu0 %v2383
    %2777 = vmatpush.msra.mxu0 %v2379
    %2778 = vmatpush.msra.mxu0 %v2375
    %2779 = vmatpush.msra.mxu0 %v2371
    %2780 = vmatpush.msra.mxu0 %v2367
    %2781 = vmatpush.msra.mxu0 %v2363
    %2782 = vmatmul.f32.gmra.mxu0 %v2285
    %v2783 = vpop.f32.mrf.mxu0
    %v2784 = vadd.f32 %v2755, %v2783
    %2785 = vmatmul.f32.gmra.mxu0 %v2288
    %v2786 = vpop.f32.mrf.mxu0
    %v2787 = vadd.f32 %v2758, %v2786
    %2788 = vmatmul.f32.gmra.mxu0 %v2291
    %v2789 = vpop.f32.mrf.mxu0
    %v2790 = vadd.f32 %v2761, %v2789
    %2791 = vmatmul.f32.gmra.mxu0 %v2294
    %v2792 = vpop.f32.mrf.mxu0
    %v2793 = vadd.f32 %v2764, %v2792
    %2794 = vdwg.mxu0
    %2795 = vmatpush.msra.mxu0 0.0
    %2796 = vmatpush.msra.mxu0 0.0
    %2797 = vmatpush.msra.mxu0 0.0
    %2798 = vmatpush.msra.mxu0 0.0
    %2799 = vmatpush.msra.mxu0 0.0
    %2800 = vmatpush.msra.mxu0 0.0
    %2801 = vmatpush.msra.mxu0 0.0
    %2802 = vmatpush.msra.mxu0 0.0
    %2803 = vmatpush.msra.mxu0 0.0
    %2804 = vmatpush.msra.mxu0 0.0
    %2805 = vmatpush.msra.mxu0 0.0
    %2806 = vmatpush.msra.mxu0 0.0
    %2807 = vmatpush.msra.mxu0 %v2439
    %2808 = vmatpush.msra.mxu0 %v2435
    %2809 = vmatpush.msra.mxu0 %v2431
    %2810 = vmatpush.msra.mxu0 %v2427
    %2811 = vmatmul.f32.gmra.mxu0 %v2465
    %v2812 = vpop.f32.mrf.mxu0
    %v2813 = vadd.f32 %v2784, %v2812
    %2814 = vmatmul.f32.gmra.mxu0 %v2468
    %v2815 = vpop.f32.mrf.mxu0
    %v2816 = vadd.f32 %v2787, %v2815
    %2817 = vmatmul.f32.gmra.mxu0 %v2471
    %v2818 = vpop.f32.mrf.mxu0
    %v2819 = vadd.f32 %v2790, %v2818
    %2820 = vmatmul.f32.gmra.mxu0 %v2474
    %v2821 = vpop.f32.mrf.mxu0
    %v2822 = vadd.f32 %v2793, %v2821
    %2823 = vdwg.mxu0
    %v2824 = vmax.f32 %v2552, 0.0
    %v2825 = vmax.f32 %v2639, 0.0
    %v2826 = vmax.f32 %v2726, 0.0
    %v2827 = vmax.f32 %v2813, 0.0
    %v2828 = vmax.f32 %v2555, 0.0
    %v2829 = vmax.f32 %v2642, 0.0
    %v2830 = vmax.f32 %v2729, 0.0
    %v2831 = vmax.f32 %v2816, 0.0
    %v2832 = vmax.f32 %v2558, 0.0
    %v2833 = vmax.f32 %v2645, 0.0
    %v2834 = vmax.f32 %v2732, 0.0
    %v2835 = vmax.f32 %v2819, 0.0
    %v2836 = vmax.f32 %v2561, 0.0
    %v2837 = vmax.f32 %v2648, 0.0
    %v2838 = vmax.f32 %v2735, 0.0
    %v2839 = vmax.f32 %v2822, 0.0
    %v2840 = vrot.slane %v2824, 4
    %vm2841 = vcmask 1047556
    %v2842 = vsel %vm2841, 0.0, %v2840
    %v2844 = vunpack.c.l.s4 1983009808
    %v2845 = vunpack.c.0.s8 %v2844
    %v2846 = vperm.slane %v2824, %v2845
    %v2848 = vunpack.c.l.s4 1983009808
    %v2849 = vunpack.c.0.s8 %v2848
    %v2850 = vperm.slane %v2842, %v2849
    %v2851 = vrot.slane %v2826, 4
    %v2852 = vsel %vm2841, 0.0, %v2851
    %v2854 = vunpack.c.l.s4 1983009808
    %v2855 = vunpack.c.0.s8 %v2854
    %v2856 = vperm.slane %v2826, %v2855
    %v2858 = vunpack.c.l.s4 1983009808
    %v2859 = vunpack.c.0.s8 %v2858
    %v2860 = vperm.slane %v2852, %v2859
    %v2861 = vrot.slane %v2856, 4
    %v2862 = vsel %vm2841, %v2861, %v2846
    %v2863 = vrot.slane %v2846, 4
    %v2864 = vsel %vm2841, %v2856, %v2863
    %v2866 = vunpack.c.l.s4 1934713408
    %v2867 = vunpack.c.0.s8 %v2866
    %v2868 = vperm.slane %v2862, %v2867
    %v2870 = vunpack.c.l.s4 1934713408
    %v2871 = vunpack.c.0.s8 %v2870
    %v2872 = vperm.slane %v2864, %v2871
    %v2873 = vrot.slane %v2860, 4
    %v2874 = vsel %vm2841, %v2873, %v2850
    %v2875 = vrot.slane %v2850, 4
    %v2876 = vsel %vm2841, %v2860, %v2875
    %v2878 = vunpack.c.l.s4 1934713408
    %v2879 = vunpack.c.0.s8 %v2878
    %v2880 = vperm.slane %v2874, %v2879
    %v2882 = vunpack.c.l.s4 1934713408
    %v2883 = vunpack.c.0.s8 %v2882
    %v2884 = vperm.slane %v2876, %v2883
    %v2885 = vrot.slane %v2868, 4
    %v2886 = vsel %vm2841, 0.0, %v2885
    %v2887 = vrot.slane %v2872, 4
    %v2888 = vsel %vm2841, 0.0, %v2887
    %v2889 = vrot.slane %v2880, 4
    %v2890 = vsel %vm2841, 0.0, %v2889
    %v2891 = vrot.slane %v2884, 4
    %v2892 = vsel %vm2841, 0.0, %v2891
    %v2893 = vrot.slane %v2828, 4
    %v2894 = vsel %vm2841, 0.0, %v2893
    %v2896 = vunpack.c.l.s4 1983009808
    %v2897 = vunpack.c.0.s8 %v2896
    %v2898 = vperm.slane %v2828, %v2897
    %v2900 = vunpack.c.l.s4 1983009808
    %v2901 = vunpack.c.0.s8 %v2900
    %v2902 = vperm.slane %v2894, %v2901
    %v2903 = vrot.slane %v2830, 4
    %v2904 = vsel %vm2841, 0.0, %v2903
    %v2906 = vunpack.c.l.s4 1983009808
    %v2907 = vunpack.c.0.s8 %v2906
    %v2908 = vperm.slane %v2830, %v2907
    %v2910 = vunpack.c.l.s4 1983009808
    %v2911 = vunpack.c.0.s8 %v2910
    %v2912 = vperm.slane %v2904, %v2911
    %v2913 = vrot.slane %v2908, 4
    %v2914 = vsel %vm2841, %v2913, %v2898
    %v2915 = vrot.slane %v2898, 4
    %v2916 = vsel %vm2841, %v2908, %v2915
    %v2918 = vunpack.c.l.s4 1934713408
    %v2919 = vunpack.c.0.s8 %v2918
    %v2920 = vperm.slane %v2914, %v2919
    %v2922 = vunpack.c.l.s4 1934713408
    %v2923 = vunpack.c.0.s8 %v2922
    %v2924 = vperm.slane %v2916, %v2923
    %v2925 = vrot.slane %v2912, 4
    %v2926 = vsel %vm2841, %v2925, %v2902
    %v2927 = vrot.slane %v2902, 4
    %v2928 = vsel %vm2841, %v2912, %v2927
    %v2930 = vunpack.c.l.s4 1934713408
    %v2931 = vunpack.c.0.s8 %v2930
    %v2932 = vperm.slane %v2926, %v2931
    %v2934 = vunpack.c.l.s4 1934713408
    %v2935 = vunpack.c.0.s8 %v2934
    %v2936 = vperm.slane %v2928, %v2935
    %v2937 = vrot.slane %v2920, 4
    %v2938 = vsel %vm2841, 0.0, %v2937
    %v2939 = vrot.slane %v2924, 4
    %v2940 = vsel %vm2841, 0.0, %v2939
    %v2941 = vrot.slane %v2932, 4
    %v2942 = vsel %vm2841, 0.0, %v2941
    %v2943 = vrot.slane %v2936, 4
    %v2944 = vsel %vm2841, 0.0, %v2943
    %v2945 = vrot.slane %v2832, 4
    %v2946 = vsel %vm2841, 0.0, %v2945
    %v2948 = vunpack.c.l.s4 1983009808
    %v2949 = vunpack.c.0.s8 %v2948
    %v2950 = vperm.slane %v2832, %v2949
    %v2952 = vunpack.c.l.s4 1983009808
    %v2953 = vunpack.c.0.s8 %v2952
    %v2954 = vperm.slane %v2946, %v2953
    %v2955 = vrot.slane %v2834, 4
    %v2956 = vsel %vm2841, 0.0, %v2955
    %v2958 = vunpack.c.l.s4 1983009808
    %v2959 = vunpack.c.0.s8 %v2958
    %v2960 = vperm.slane %v2834, %v2959
    %v2962 = vunpack.c.l.s4 1983009808
    %v2963 = vunpack.c.0.s8 %v2962
    %v2964 = vperm.slane %v2956, %v2963
    %v2965 = vrot.slane %v2960, 4
    %v2966 = vsel %vm2841, %v2965, %v2950
    %v2967 = vrot.slane %v2950, 4
    %v2968 = vsel %vm2841, %v2960, %v2967
    %v2970 = vunpack.c.l.s4 1934713408
    %v2971 = vunpack.c.0.s8 %v2970
    %v2972 = vperm.slane %v2966, %v2971
    %v2974 = vunpack.c.l.s4 1934713408
    %v2975 = vunpack.c.0.s8 %v2974
    %v2976 = vperm.slane %v2968, %v2975
    %v2977 = vrot.slane %v2964, 4
    %v2978 = vsel %vm2841, %v2977, %v2954
    %v2979 = vrot.slane %v2954, 4
    %v2980 = vsel %vm2841, %v2964, %v2979
    %v2982 = vunpack.c.l.s4 1934713408
    %v2983 = vunpack.c.0.s8 %v2982
    %v2984 = vperm.slane %v2978, %v2983
    %v2986 = vunpack.c.l.s4 1934713408
    %v2987 = vunpack.c.0.s8 %v2986
    %v2988 = vperm.slane %v2980, %v2987
    %v2989 = vrot.slane %v2972, 4
    %v2990 = vsel %vm2841, 0.0, %v2989
    %v2991 = vrot.slane %v2976, 4
    %v2992 = vsel %vm2841, 0.0, %v2991
    %v2993 = vrot.slane %v2984, 4
    %v2994 = vsel %vm2841, 0.0, %v2993
    %v2995 = vrot.slane %v2988, 4
    %v2996 = vsel %vm2841, 0.0, %v2995
    %v2997 = vrot.slane %v2836, 4
    %v2998 = vsel %vm2841, 0.0, %v2997
    %v3000 = vunpack.c.l.s4 1983009808
    %v3001 = vunpack.c.0.s8 %v3000
    %v3002 = vperm.slane %v2836, %v3001
    %v3004 = vunpack.c.l.s4 1983009808
    %v3005 = vunpack.c.0.s8 %v3004
    %v3006 = vperm.slane %v2998, %v3005
    %v3007 = vrot.slane %v2838, 4
    %v3008 = vsel %vm2841, 0.0, %v3007
    %v3010 = vunpack.c.l.s4 1983009808
    %v3011 = vunpack.c.0.s8 %v3010
    %v3012 = vperm.slane %v2838, %v3011
    %v3014 = vunpack.c.l.s4 1983009808
    %v3015 = vunpack.c.0.s8 %v3014
    %v3016 = vperm.slane %v3008, %v3015
    %v3017 = vrot.slane %v3012, 4
    %v3018 = vsel %vm2841, %v3017, %v3002
    %v3019 = vrot.slane %v3002, 4
    %v3020 = vsel %vm2841, %v3012, %v3019
    %v3022 = vunpack.c.l.s4 1934713408
    %v3023 = vunpack.c.0.s8 %v3022
    %v3024 = vperm.slane %v3018, %v3023
    %v3026 = vunpack.c.l.s4 1934713408
    %v3027 = vunpack.c.0.s8 %v3026
    %v3028 = vperm.slane %v3020, %v3027
    %v3029 = vrot.slane %v3016, 4
    %v3030 = vsel %vm2841, %v3029, %v3006
    %v3031 = vrot.slane %v3006, 4
    %v3032 = vsel %vm2841, %v3016, %v3031
    %v3034 = vunpack.c.l.s4 1934713408
    %v3035 = vunpack.c.0.s8 %v3034
    %v3036 = vperm.slane %v3030, %v3035
    %v3038 = vunpack.c.l.s4 1934713408
    %v3039 = vunpack.c.0.s8 %v3038
    %v3040 = vperm.slane %v3032, %v3039
    %v3041 = vrot.slane %v3024, 4
    %v3042 = vsel %vm2841, 0.0, %v3041
    %v3043 = vrot.slane %v3028, 4
    %v3044 = vsel %vm2841, 0.0, %v3043
    %v3045 = vrot.slane %v3036, 4
    %v3046 = vsel %vm2841, 0.0, %v3045
    %v3047 = vrot.slane %v3040, 4
    %v3048 = vsel %vm2841, 0.0, %v3047
    %v3049 = vrot.slane %v2825, 4
    %v3050 = vsel %vm2841, 0.0, %v3049
    %v3052 = vunpack.c.l.s4 1983009808
    %v3053 = vunpack.c.0.s8 %v3052
    %v3054 = vperm.slane %v2825, %v3053
    %v3056 = vunpack.c.l.s4 1983009808
    %v3057 = vunpack.c.0.s8 %v3056
    %v3058 = vperm.slane %v3050, %v3057
    %v3059 = vrot.slane %v2827, 4
    %v3060 = vsel %vm2841, 0.0, %v3059
    %v3062 = vunpack.c.l.s4 1983009808
    %v3063 = vunpack.c.0.s8 %v3062
    %v3064 = vperm.slane %v2827, %v3063
    %v3066 = vunpack.c.l.s4 1983009808
    %v3067 = vunpack.c.0.s8 %v3066
    %v3068 = vperm.slane %v3060, %v3067
    %v3069 = vrot.slane %v3064, 4
    %v3070 = vsel %vm2841, %v3069, %v3054
    %v3071 = vrot.slane %v3054, 4
    %v3072 = vsel %vm2841, %v3064, %v3071
    %v3074 = vunpack.c.l.s4 1934713408
    %v3075 = vunpack.c.0.s8 %v3074
    %v3076 = vperm.slane %v3070, %v3075
    %v3078 = vunpack.c.l.s4 1934713408
    %v3079 = vunpack.c.0.s8 %v3078
    %v3080 = vperm.slane %v3072, %v3079
    %v3081 = vrot.slane %v3068, 4
    %v3082 = vsel %vm2841, %v3081, %v3058
    %v3083 = vrot.slane %v3058, 4
    %v3084 = vsel %vm2841, %v3068, %v3083
    %v3086 = vunpack.c.l.s4 1934713408
    %v3087 = vunpack.c.0.s8 %v3086
    %v3088 = vperm.slane %v3082, %v3087
    %v3090 = vunpack.c.l.s4 1934713408
    %v3091 = vunpack.c.0.s8 %v3090
    %v3092 = vperm.slane %v3084, %v3091
    %v3093 = vrot.slane %v3076, 4
    %v3094 = vsel %vm2841, 0.0, %v3093
    %v3095 = vrot.slane %v3080, 4
    %v3096 = vsel %vm2841, 0.0, %v3095
    %v3097 = vrot.slane %v3088, 4
    %v3098 = vsel %vm2841, 0.0, %v3097
    %v3099 = vrot.slane %v3092, 4
    %v3100 = vsel %vm2841, 0.0, %v3099
    %v3101 = vrot.slane %v2829, 4
    %v3102 = vsel %vm2841, 0.0, %v3101
    %v3104 = vunpack.c.l.s4 1983009808
    %v3105 = vunpack.c.0.s8 %v3104
    %v3106 = vperm.slane %v2829, %v3105
    %v3108 = vunpack.c.l.s4 1983009808
    %v3109 = vunpack.c.0.s8 %v3108
    %v3110 = vperm.slane %v3102, %v3109
    %v3111 = vrot.slane %v2831, 4
    %v3112 = vsel %vm2841, 0.0, %v3111
    %v3114 = vunpack.c.l.s4 1983009808
    %v3115 = vunpack.c.0.s8 %v3114
    %v3116 = vperm.slane %v2831, %v3115
    %v3118 = vunpack.c.l.s4 1983009808
    %v3119 = vunpack.c.0.s8 %v3118
    %v3120 = vperm.slane %v3112, %v3119
    %v3121 = vrot.slane %v3116, 4
    %v3122 = vsel %vm2841, %v3121, %v3106
    %v3123 = vrot.slane %v3106, 4
    %v3124 = vsel %vm2841, %v3116, %v3123
    %v3126 = vunpack.c.l.s4 1934713408
    %v3127 = vunpack.c.0.s8 %v3126
    %v3128 = vperm.slane %v3122, %v3127
    %v3130 = vunpack.c.l.s4 1934713408
    %v3131 = vunpack.c.0.s8 %v3130
    %v3132 = vperm.slane %v3124, %v3131
    %v3133 = vrot.slane %v3120, 4
    %v3134 = vsel %vm2841, %v3133, %v3110
    %v3135 = vrot.slane %v3110, 4
    %v3136 = vsel %vm2841, %v3120, %v3135
    %v3138 = vunpack.c.l.s4 1934713408
    %v3139 = vunpack.c.0.s8 %v3138
    %v3140 = vperm.slane %v3134, %v3139
    %v3142 = vunpack.c.l.s4 1934713408
    %v3143 = vunpack.c.0.s8 %v3142
    %v3144 = vperm.slane %v3136, %v3143
    %v3145 = vrot.slane %v3128, 4
    %v3146 = vsel %vm2841, 0.0, %v3145
    %v3147 = vrot.slane %v3132, 4
    %v3148 = vsel %vm2841, 0.0, %v3147
    %v3149 = vrot.slane %v3140, 4
    %v3150 = vsel %vm2841, 0.0, %v3149
    %v3151 = vrot.slane %v3144, 4
    %v3152 = vsel %vm2841, 0.0, %v3151
    %v3153 = vrot.slane %v2833, 4
    %v3154 = vsel %vm2841, 0.0, %v3153
    %v3156 = vunpack.c.l.s4 1983009808
    %v3157 = vunpack.c.0.s8 %v3156
    %v3158 = vperm.slane %v2833, %v3157
    %v3160 = vunpack.c.l.s4 1983009808
    %v3161 = vunpack.c.0.s8 %v3160
    %v3162 = vperm.slane %v3154, %v3161
    %v3163 = vrot.slane %v2835, 4
    %v3164 = vsel %vm2841, 0.0, %v3163
    %v3166 = vunpack.c.l.s4 1983009808
    %v3167 = vunpack.c.0.s8 %v3166
    %v3168 = vperm.slane %v2835, %v3167
    %v3170 = vunpack.c.l.s4 1983009808
    %v3171 = vunpack.c.0.s8 %v3170
    %v3172 = vperm.slane %v3164, %v3171
    %v3173 = vrot.slane %v3168, 4
    %v3174 = vsel %vm2841, %v3173, %v3158
    %v3175 = vrot.slane %v3158, 4
    %v3176 = vsel %vm2841, %v3168, %v3175
    %v3178 = vunpack.c.l.s4 1934713408
    %v3179 = vunpack.c.0.s8 %v3178
    %v3180 = vperm.slane %v3174, %v3179
    %v3182 = vunpack.c.l.s4 1934713408
    %v3183 = vunpack.c.0.s8 %v3182
    %v3184 = vperm.slane %v3176, %v3183
    %v3185 = vrot.slane %v3172, 4
    %v3186 = vsel %vm2841, %v3185, %v3162
    %v3187 = vrot.slane %v3162, 4
    %v3188 = vsel %vm2841, %v3172, %v3187
    %v3190 = vunpack.c.l.s4 1934713408
    %v3191 = vunpack.c.0.s8 %v3190
    %v3192 = vperm.slane %v3186, %v3191
    %v3194 = vunpack.c.l.s4 1934713408
    %v3195 = vunpack.c.0.s8 %v3194
    %v3196 = vperm.slane %v3188, %v3195
    %v3197 = vrot.slane %v3180, 4
    %v3198 = vsel %vm2841, 0.0, %v3197
    %v3199 = vrot.slane %v3184, 4
    %v3200 = vsel %vm2841, 0.0, %v3199
    %v3201 = vrot.slane %v3192, 4
    %v3202 = vsel %vm2841, 0.0, %v3201
    %v3203 = vrot.slane %v3196, 4
    %v3204 = vsel %vm2841, 0.0, %v3203
    %v3205 = vrot.slane %v2837, 4
    %v3206 = vsel %vm2841, 0.0, %v3205
    %v3208 = vunpack.c.l.s4 1983009808
    %v3209 = vunpack.c.0.s8 %v3208
    %v3210 = vperm.slane %v2837, %v3209
    %v3212 = vunpack.c.l.s4 1983009808
    %v3213 = vunpack.c.0.s8 %v3212
    %v3214 = vperm.slane %v3206, %v3213
    %v3215 = vrot.slane %v2839, 4
    %v3216 = vsel %vm2841, 0.0, %v3215
    %v3218 = vunpack.c.l.s4 1983009808
    %v3219 = vunpack.c.0.s8 %v3218
    %v3220 = vperm.slane %v2839, %v3219
    %v3222 = vunpack.c.l.s4 1983009808
    %v3223 = vunpack.c.0.s8 %v3222
    %v3224 = vperm.slane %v3216, %v3223
    %v3225 = vrot.slane %v3220, 4
    %v3226 = vsel %vm2841, %v3225, %v3210
    %v3227 = vrot.slane %v3210, 4
    %v3228 = vsel %vm2841, %v3220, %v3227
    %v3230 = vunpack.c.l.s4 1934713408
    %v3231 = vunpack.c.0.s8 %v3230
    %v3232 = vperm.slane %v3226, %v3231
    %v3234 = vunpack.c.l.s4 1934713408
    %v3235 = vunpack.c.0.s8 %v3234
    %v3236 = vperm.slane %v3228, %v3235
    %v3237 = vrot.slane %v3224, 4
    %v3238 = vsel %vm2841, %v3237, %v3214
    %v3239 = vrot.slane %v3214, 4
    %v3240 = vsel %vm2841, %v3224, %v3239
    %v3242 = vunpack.c.l.s4 1934713408
    %v3243 = vunpack.c.0.s8 %v3242
    %v3244 = vperm.slane %v3238, %v3243
    %v3246 = vunpack.c.l.s4 1934713408
    %v3247 = vunpack.c.0.s8 %v3246
    %v3248 = vperm.slane %v3240, %v3247
    %v3249 = vrot.slane %v3232, 4
    %v3250 = vsel %vm2841, 0.0, %v3249
    %v3251 = vrot.slane %v3236, 4
    %v3252 = vsel %vm2841, 0.0, %v3251
    %v3253 = vrot.slane %v3244, 4
    %v3254 = vsel %vm2841, 0.0, %v3253
    %v3255 = vrot.slane %v3248, 4
    %v3256 = vsel %vm2841, 0.0, %v3255
    %vm3257 = vcmask 1041408
    %v3258 = vsel %vm3257, %v2868, 0.0
    %v3259 = vsel %vm3257, %v3076, 0.0
    %v3260 = vadd.f32 %v3258, %v3259
    %3261 = vadd.xlane.f32.xlu0 %v3260
    %v3262 = vpop.xlane.xlu0 %3261
    %v3263 = vsel %vm3257, %v2886, 0.0
    %v3264 = vsel %vm3257, %v3094, 0.0
    %v3265 = vadd.f32 %v3263, %v3264
    %3266 = vadd.xlane.f32.xlu0 %v3265
    %v3267 = vpop.xlane.xlu0 %3266
    %v3268 = vsel %vm3257, %v2872, 0.0
    %v3269 = vsel %vm3257, %v3080, 0.0
    %v3270 = vadd.f32 %v3268, %v3269
    %3271 = vadd.xlane.f32.xlu0 %v3270
    %v3272 = vpop.xlane.xlu0 %3271
    %v3273 = vsel %vm3257, %v2888, 0.0
    %v3274 = vsel %vm3257, %v3096, 0.0
    %v3275 = vadd.f32 %v3273, %v3274
    %3276 = vadd.xlane.f32.xlu0 %v3275
    %v3277 = vpop.xlane.xlu0 %3276
    %v3278 = vsel %vm3257, %v2880, 0.0
    %v3279 = vsel %vm3257, %v3088, 0.0
    %v3280 = vadd.f32 %v3278, %v3279
    %3281 = vadd.xlane.f32.xlu0 %v3280
    %v3282 = vpop.xlane.xlu0 %3281
    %v3283 = vsel %vm3257, %v2890, 0.0
    %v3284 = vsel %vm3257, %v3098, 0.0
    %v3285 = vadd.f32 %v3283, %v3284
    %3286 = vadd.xlane.f32.xlu0 %v3285
    %v3287 = vpop.xlane.xlu0 %3286
    %v3288 = vsel %vm3257, %v2884, 0.0
    %v3289 = vsel %vm3257, %v3092, 0.0
    %v3290 = vadd.f32 %v3288, %v3289
    %3291 = vadd.xlane.f32.xlu0 %v3290
    %v3292 = vpop.xlane.xlu0 %3291
    %v3293 = vsel %vm3257, %v2892, 0.0
    %v3294 = vsel %vm3257, %v3100, 0.0
    %v3295 = vadd.f32 %v3293, %v3294
    %3296 = vadd.xlane.f32.xlu0 %v3295
    %v3297 = vpop.xlane.xlu0 %3296
    %v3298 = vsel %vm3257, %v2920, 0.0
    %v3299 = vsel %vm3257, %v3128, 0.0
    %v3300 = vadd.f32 %v3298, %v3299
    %3301 = vadd.xlane.f32.xlu0 %v3300
    %v3302 = vpop.xlane.xlu0 %3301
    %v3303 = vsel %vm3257, %v2938, 0.0
    %v3304 = vsel %vm3257, %v3146, 0.0
    %v3305 = vadd.f32 %v3303, %v3304
    %3306 = vadd.xlane.f32.xlu0 %v3305
    %v3307 = vpop.xlane.xlu0 %3306
    %v3308 = vsel %vm3257, %v2924, 0.0
    %v3309 = vsel %vm3257, %v3132, 0.0
    %v3310 = vadd.f32 %v3308, %v3309
    %3311 = vadd.xlane.f32.xlu0 %v3310
    %v3312 = vpop.xlane.xlu0 %3311
    %v3313 = vsel %vm3257, %v2940, 0.0
    %v3314 = vsel %vm3257, %v3148, 0.0
    %v3315 = vadd.f32 %v3313, %v3314
    %3316 = vadd.xlane.f32.xlu0 %v3315
    %v3317 = vpop.xlane.xlu0 %3316
    %v3318 = vsel %vm3257, %v2932, 0.0
    %v3319 = vsel %vm3257, %v3140, 0.0
    %v3320 = vadd.f32 %v3318, %v3319
    %3321 = vadd.xlane.f32.xlu0 %v3320
    %v3322 = vpop.xlane.xlu0 %3321
    %v3323 = vsel %vm3257, %v2942, 0.0
    %v3324 = vsel %vm3257, %v3150, 0.0
    %v3325 = vadd.f32 %v3323, %v3324
    %3326 = vadd.xlane.f32.xlu0 %v3325
    %v3327 = vpop.xlane.xlu0 %3326
    %v3328 = vsel %vm3257, %v2936, 0.0
    %v3329 = vsel %vm3257, %v3144, 0.0
    %v3330 = vadd.f32 %v3328, %v3329
    %3331 = vadd.xlane.f32.xlu0 %v3330
    %v3332 = vpop.xlane.xlu0 %3331
    %v3333 = vsel %vm3257, %v2944, 0.0
    %v3334 = vsel %vm3257, %v3152, 0.0
    %v3335 = vadd.f32 %v3333, %v3334
    %3336 = vadd.xlane.f32.xlu0 %v3335
    %v3337 = vpop.xlane.xlu0 %3336
    %v3338 = vsel %vm3257, %v2972, 0.0
    %v3339 = vsel %vm3257, %v3180, 0.0
    %v3340 = vadd.f32 %v3338, %v3339
    %3341 = vadd.xlane.f32.xlu0 %v3340
    %v3342 = vpop.xlane.xlu0 %3341
    %v3343 = vsel %vm3257, %v2990, 0.0
    %v3344 = vsel %vm3257, %v3198, 0.0
    %v3345 = vadd.f32 %v3343, %v3344
    %3346 = vadd.xlane.f32.xlu0 %v3345
    %v3347 = vpop.xlane.xlu0 %3346
    %v3348 = vsel %vm3257, %v2976, 0.0
    %v3349 = vsel %vm3257, %v3184, 0.0
    %v3350 = vadd.f32 %v3348, %v3349
    %3351 = vadd.xlane.f32.xlu0 %v3350
    %v3352 = vpop.xlane.xlu0 %3351
    %v3353 = vsel %vm3257, %v2992, 0.0
    %v3354 = vsel %vm3257, %v3200, 0.0
    %v3355 = vadd.f32 %v3353, %v3354
    %3356 = vadd.xlane.f32.xlu0 %v3355
    %v3357 = vpop.xlane.xlu0 %3356
    %v3358 = vsel %vm3257, %v2984, 0.0
    %v3359 = vsel %vm3257, %v3192, 0.0
    %v3360 = vadd.f32 %v3358, %v3359
    %3361 = vadd.xlane.f32.xlu0 %v3360
    %v3362 = vpop.xlane.xlu0 %3361
    %v3363 = vsel %vm3257, %v2994, 0.0
    %v3364 = vsel %vm3257, %v3202, 0.0
    %v3365 = vadd.f32 %v3363, %v3364
    %3366 = vadd.xlane.f32.xlu0 %v3365
    %v3367 = vpop.xlane.xlu0 %3366
    %v3368 = vsel %vm3257, %v2988, 0.0
    %v3369 = vsel %vm3257, %v3196, 0.0
    %v3370 = vadd.f32 %v3368, %v3369
    %3371 = vadd.xlane.f32.xlu0 %v3370
    %v3372 = vpop.xlane.xlu0 %3371
    %v3373 = vsel %vm3257, %v2996, 0.0
    %v3374 = vsel %vm3257, %v3204, 0.0
    %v3375 = vadd.f32 %v3373, %v3374
    %3376 = vadd.xlane.f32.xlu0 %v3375
    %v3377 = vpop.xlane.xlu0 %3376
    %v3378 = vsel %vm3257, %v3024, 0.0
    %v3379 = vsel %vm3257, %v3232, 0.0
    %v3380 = vadd.f32 %v3378, %v3379
    %3381 = vadd.xlane.f32.xlu0 %v3380
    %v3382 = vpop.xlane.xlu0 %3381
    %v3383 = vsel %vm3257, %v3042, 0.0
    %v3384 = vsel %vm3257, %v3250, 0.0
    %v3385 = vadd.f32 %v3383, %v3384
    %3386 = vadd.xlane.f32.xlu0 %v3385
    %v3387 = vpop.xlane.xlu0 %3386
    %v3388 = vsel %vm3257, %v3028, 0.0
    %v3389 = vsel %vm3257, %v3236, 0.0
    %v3390 = vadd.f32 %v3388, %v3389
    %3391 = vadd.xlane.f32.xlu0 %v3390
    %v3392 = vpop.xlane.xlu0 %3391
    %v3393 = vsel %vm3257, %v3044, 0.0
    %v3394 = vsel %vm3257, %v3252, 0.0
    %v3395 = vadd.f32 %v3393, %v3394
    %3396 = vadd.xlane.f32.xlu0 %v3395
    %v3397 = vpop.xlane.xlu0 %3396
    %v3398 = vsel %vm3257, %v3036, 0.0
    %v3399 = vsel %vm3257, %v3244, 0.0
    %v3400 = vadd.f32 %v3398, %v3399
    %3401 = vadd.xlane.f32.xlu0 %v3400
    %v3402 = vpop.xlane.xlu0 %3401
    %v3403 = vsel %vm3257, %v3046, 0.0
    %v3404 = vsel %vm3257, %v3254, 0.0
    %v3405 = vadd.f32 %v3403, %v3404
    %3406 = vadd.xlane.f32.xlu0 %v3405
    %v3407 = vpop.xlane.xlu0 %3406
    %v3408 = vsel %vm3257, %v3040, 0.0
    %v3409 = vsel %vm3257, %v3248, 0.0
    %v3410 = vadd.f32 %v3408, %v3409
    %3411 = vadd.xlane.f32.xlu0 %v3410
    %v3412 = vpop.xlane.xlu0 %3411
    %v3413 = vsel %vm3257, %v3048, 0.0
    %v3414 = vsel %vm3257, %v3256, 0.0
    %v3415 = vadd.f32 %v3413, %v3414
    %3416 = vadd.xlane.f32.xlu0 %v3415
    %v3417 = vpop.xlane.xlu0 %3416
    %v3418 = vrcp.pop 256.0
    %v3419 = vmul.f32 256.0, %v3418
    %v3420 = vsub.f32 1.0, %v3419
    %v3421 = vmul.f32 %v3418, %v3420
    %v3422 = vadd.f32 %v3418, %v3421
    %vm3423 = vweird.f32 %v3418
    %v3424 = vsel %vm3423, %v3418, %v3422
    %v3425 = vmul.f32 %v3262, %v3424
    %v3426 = vmul.f32 %v3267, %v3424
    %v3427 = vmul.f32 %v3272, %v3424
    %v3428 = vmul.f32 %v3277, %v3424
    %v3429 = vmul.f32 %v3282, %v3424
    %v3430 = vmul.f32 %v3287, %v3424
    %v3431 = vmul.f32 %v3292, %v3424
    %v3432 = vmul.f32 %v3297, %v3424
    %v3433 = vmul.f32 %v3302, %v3424
    %v3434 = vmul.f32 %v3307, %v3424
    %v3435 = vmul.f32 %v3312, %v3424
    %v3436 = vmul.f32 %v3317, %v3424
    %v3437 = vmul.f32 %v3322, %v3424
    %v3438 = vmul.f32 %v3327, %v3424
    %v3439 = vmul.f32 %v3332, %v3424
    %v3440 = vmul.f32 %v3337, %v3424
    %v3441 = vmul.f32 %v3342, %v3424
    %v3442 = vmul.f32 %v3347, %v3424
    %v3443 = vmul.f32 %v3352, %v3424
    %v3444 = vmul.f32 %v3357, %v3424
    %v3445 = vmul.f32 %v3362, %v3424
    %v3446 = vmul.f32 %v3367, %v3424
    %v3447 = vmul.f32 %v3372, %v3424
    %v3448 = vmul.f32 %v3377, %v3424
    %v3449 = vmul.f32 %v3382, %v3424
    %v3450 = vmul.f32 %v3387, %v3424
    %v3451 = vmul.f32 %v3392, %v3424
    %v3452 = vmul.f32 %v3397, %v3424
    %v3453 = vmul.f32 %v3402, %v3424
    %v3454 = vmul.f32 %v3407, %v3424
    %v3455 = vmul.f32 %v3412, %v3424
    %v3456 = vmul.f32 %v3417, %v3424
    %v3489 = vlaneseq
    %v3490 = vand.u32 %v3489, 127
    %v3491 = vperm.slane %v3425, %v3490
    %v3492 = vperm.slane %v3426, %v3490
    %v3493 = vperm.slane %v3427, %v3490
    %v3494 = vperm.slane %v3428, %v3490
    %v3495 = vperm.slane %v3429, %v3490
    %v3496 = vperm.slane %v3430, %v3490
    %v3497 = vperm.slane %v3431, %v3490
    %v3498 = vperm.slane %v3432, %v3490
    %v3499 = vperm.slane %v3433, %v3490
    %v3500 = vperm.slane %v3434, %v3490
    %v3501 = vperm.slane %v3435, %v3490
    %v3502 = vperm.slane %v3436, %v3490
    %v3503 = vperm.slane %v3437, %v3490
    %v3504 = vperm.slane %v3438, %v3490
    %v3505 = vperm.slane %v3439, %v3490
    %v3506 = vperm.slane %v3440, %v3490
    %v3507 = vperm.slane %v3441, %v3490
    %v3508 = vperm.slane %v3442, %v3490
    %v3509 = vperm.slane %v3443, %v3490
    %v3510 = vperm.slane %v3444, %v3490
    %v3511 = vperm.slane %v3445, %v3490
    %v3512 = vperm.slane %v3446, %v3490
    %v3513 = vperm.slane %v3447, %v3490
    %v3514 = vperm.slane %v3448, %v3490
    %v3515 = vperm.slane %v3449, %v3490
    %v3516 = vperm.slane %v3450, %v3490
    %v3517 = vperm.slane %v3451, %v3490
    %v3518 = vperm.slane %v3452, %v3490
    %v3519 = vperm.slane %v3453, %v3490
    %v3520 = vperm.slane %v3454, %v3490
    %v3521 = vperm.slane %v3455, %v3490
    %v3522 = vperm.slane %v3456, %v3490
    %vm3523 = vcmask 1041409
    %v3524 = vsel %vm3523, %v3492, %v3491
    %vm3525 = vcmask 1042434
    %v3526 = vsel %vm3525, %v3493, %v3524
    %vm3527 = vcmask 1043459
    %v3528 = vsel %vm3527, %v3494, %v3526
    %vm3529 = vcmask 1044484
    %v3530 = vsel %vm3529, %v3495, %v3528
    %vm3531 = vcmask 1045509
    %v3532 = vsel %vm3531, %v3496, %v3530
    %vm3533 = vcmask 1046534
    %v3534 = vsel %vm3533, %v3497, %v3532
    %vm3535 = vcmask 1047559
    %v3536 = vsel %vm3535, %v3498, %v3534
    %v3537 = vsel %vm3523, %v3500, %v3499
    %v3538 = vsel %vm3525, %v3501, %v3537
    %v3539 = vsel %vm3527, %v3502, %v3538
    %v3540 = vsel %vm3529, %v3503, %v3539
    %v3541 = vsel %vm3531, %v3504, %v3540
    %v3542 = vsel %vm3533, %v3505, %v3541
    %v3543 = vsel %vm3535, %v3506, %v3542
    %v3544 = vsel %vm3523, %v3508, %v3507
    %v3545 = vsel %vm3525, %v3509, %v3544
    %v3546 = vsel %vm3527, %v3510, %v3545
    %v3547 = vsel %vm3529, %v3511, %v3546
    %v3548 = vsel %vm3531, %v3512, %v3547
    %v3549 = vsel %vm3533, %v3513, %v3548
    %v3550 = vsel %vm3535, %v3514, %v3549
    %v3551 = vsel %vm3523, %v3516, %v3515
    %v3552 = vsel %vm3525, %v3517, %v3551
    %v3553 = vsel %vm3527, %v3518, %v3552
    %v3554 = vsel %vm3529, %v3519, %v3553
    %v3555 = vsel %vm3531, %v3520, %v3554
    %v3556 = vsel %vm3533, %v3521, %v3555
    %v3557 = vsel %vm3535, %v3522, %v3556
    %3562 = vxpose.xlu0.b32.start [1/16] %v3536, 128
    %3563 = vxpose.xlu0.b32.cont [2/16] %v3543, 128
    %3564 = vxpose.xlu0.b32.cont [3/16] %v3550, 128
    %3565 = vxpose.xlu0.b32.cont [4/16] %v3557, 128
    %3566 = vxpose.xlu0.b32.cont [5/16] 0.0, 128
    %3567 = vxpose.xlu0.b32.cont [6/16] 0.0, 128
    %3568 = vxpose.xlu0.b32.cont [7/16] 0.0, 128
    %3569 = vxpose.xlu0.b32.cont [8/16] 0.0, 128
    %3570 = vxpose.xlu0.b32.cont [9/16] 0.0, 128
    %3571 = vxpose.xlu0.b32.cont [10/16] 0.0, 128
    %3572 = vxpose.xlu0.b32.cont [11/16] 0.0, 128
    %3573 = vxpose.xlu0.b32.cont [12/16] 0.0, 128
    %3574 = vxpose.xlu0.b32.cont [13/16] 0.0, 128
    %3575 = vxpose.xlu0.b32.cont [14/16] 0.0, 128
    %3576 = vxpose.xlu0.b32.cont [15/16] 0.0, 128
    %3577 = vxpose.xlu0.b32.end [16/16] 0.0, 128
    %v3578 = vpop.trf.xlu0
    %v3579 = vpop.trf.xlu0
    %v3580 = vpop.trf.xlu0
    %v3581 = vpop.trf.xlu0
    %v3582 = vpop.trf.xlu0
    %v3583 = vpop.trf.xlu0
    %v3584 = vpop.trf.xlu0
    %v3585 = vpop.trf.xlu0
    %v3586 = vpop.trf.xlu0
    %v3587 = vpop.trf.xlu0
    %v3588 = vpop.trf.xlu0
    %v3589 = vpop.trf.xlu0
    %v3590 = vpop.trf.xlu0
    %v3591 = vpop.trf.xlu0
    %v3592 = vpop.trf.xlu0
    %v3593 = vpop.trf.xlu0
    %v3594 = vperm.slane %v3578, 0
    %v3595 = vlaneseq
    %v3596 = vshrl.u32 %v3595, 7
    %3598 = vset.pattern.permute.xlu0 %v3596
    %3599 = vperm.xlu0 %3598, %v3594
    %v3600 = vpop.permute.xlu0 %3599
    %v3601 = vlaneseq
    %v3602 = vshrl.u32 %v3601, 7
    %v3603 = vadd.s32 %v3602, 8
    %3604 = vset.pattern.permute.xlu0 %v3603
    %3605 = vperm.xlu0 %3604, %v3594
    %v3606 = vpop.permute.xlu0 %3605
    %v3607 = vlaneseq
    %v3608 = vshrl.u32 %v3607, 7
    %v3609 = vadd.s32 %v3608, 16
    %3610 = vset.pattern.permute.xlu0 %v3609
    %3611 = vperm.xlu0 %3610, %v3594
    %v3612 = vpop.permute.xlu0 %3611
    %v3613 = vlaneseq
    %v3614 = vshrl.u32 %v3613, 7
    %v3615 = vadd.s32 %v3614, 24
    %3616 = vset.pattern.permute.xlu0 %v3615
    %3617 = vperm.xlu0 %3616, %v3594
    %v3618 = vpop.permute.xlu0 %3617
    %v3619 = vperm.slane %v3578, 1
    %v3620 = vlaneseq
    %v3621 = vshrl.u32 %v3620, 7
    %3623 = vset.pattern.permute.xlu0 %v3621
    %3624 = vperm.xlu0 %3623, %v3619
    %v3625 = vpop.permute.xlu0 %3624
    %v3626 = vlaneseq
    %v3627 = vshrl.u32 %v3626, 7
    %v3628 = vadd.s32 %v3627, 8
    %3629 = vset.pattern.permute.xlu0 %v3628
    %3630 = vperm.xlu0 %3629, %v3619
    %v3631 = vpop.permute.xlu0 %3630
    %v3632 = vlaneseq
    %v3633 = vshrl.u32 %v3632, 7
    %v3634 = vadd.s32 %v3633, 16
    %3635 = vset.pattern.permute.xlu0 %v3634
    %3636 = vperm.xlu0 %3635, %v3619
    %v3637 = vpop.permute.xlu0 %3636
    %v3638 = vlaneseq
    %v3639 = vshrl.u32 %v3638, 7
    %v3640 = vadd.s32 %v3639, 24
    %3641 = vset.pattern.permute.xlu0 %v3640
    %3642 = vperm.xlu0 %3641, %v3619
    %v3643 = vpop.permute.xlu0 %3642
    %v3644 = vld [vmem:[%s6] sm:$0x1]
    %v3646 = vperm.slane %v3644, 0
    %v3648 = vmul.f32 %v3600, %v3646
    %v3649 = vmul.f32 %v3606, %v3646
    %v3650 = vmul.f32 %v3612, %v3646
    %v3651 = vmul.f32 %v3618, %v3646
    %v3652 = vmul.f32 %v3625, %v3646
    %v3653 = vmul.f32 %v3631, %v3646
    %v3654 = vmul.f32 %v3637, %v3646
    %v3655 = vmul.f32 %v3643, %v3646
    %v3656 = vld [vmem:[%s7] sm:$0x1]
    %v3658 = vperm.slane %v3656, 0
    %v3660 = vadd.f32 %v3648, %v3658
    %v3661 = vadd.f32 %v3649, %v3658
    %v3662 = vadd.f32 %v3650, %v3658
    %v3663 = vadd.f32 %v3651, %v3658
    %v3664 = vadd.f32 %v3652, %v3658
    %v3665 = vadd.f32 %v3653, %v3658
    %v3666 = vadd.f32 %v3654, %v3658
    %v3667 = vadd.f32 %v3655, %v3658
    %v3668 = vld [vmem:[%s8] sm:$0x1]
    %v3670 = vperm.slane %v3668, 0
    %v3672 = vmul.f32 %v3600, %v3670
    %v3673 = vmul.f32 %v3606, %v3670
    %v3674 = vmul.f32 %v3612, %v3670
    %v3675 = vmul.f32 %v3618, %v3670
    %v3676 = vmul.f32 %v3625, %v3670
    %v3677 = vmul.f32 %v3631, %v3670
    %v3678 = vmul.f32 %v3637, %v3670
    %v3679 = vmul.f32 %v3643, %v3670
    %v3680 = vld [vmem:[%s9] sm:$0x1]
    %v3682 = vperm.slane %v3680, 0
    %v3684 = vadd.f32 %v3672, %v3682
    %v3685 = vadd.f32 %v3673, %v3682
    %v3686 = vadd.f32 %v3674, %v3682
    %v3687 = vadd.f32 %v3675, %v3682
    %v3688 = vadd.f32 %v3676, %v3682
    %v3689 = vadd.f32 %v3677, %v3682
    %v3690 = vadd.f32 %v3678, %v3682
    %v3691 = vadd.f32 %v3679, %v3682
    %v3692 = vld [vmem:[%s10] sm:$0x1]
    %v3694 = vperm.slane %v3692, 0
    %v3696 = vmul.f32 %v3600, %v3694
    %v3697 = vmul.f32 %v3606, %v3694
    %v3698 = vmul.f32 %v3612, %v3694
    %v3699 = vmul.f32 %v3618, %v3694
    %v3700 = vmul.f32 %v3625, %v3694
    %v3701 = vmul.f32 %v3631, %v3694
    %v3702 = vmul.f32 %v3637, %v3694
    %v3703 = vmul.f32 %v3643, %v3694
    %v3704 = vld [vmem:[%s11] sm:$0x1]
    %v3706 = vperm.slane %v3704, 0
    %v3708 = vadd.f32 %v3696, %v3706
    %v3709 = vadd.f32 %v3697, %v3706
    %v3710 = vadd.f32 %v3698, %v3706
    %v3711 = vadd.f32 %v3699, %v3706
    %v3712 = vadd.f32 %v3700, %v3706
    %v3713 = vadd.f32 %v3701, %v3706
    %v3714 = vadd.f32 %v3702, %v3706
    %v3715 = vadd.f32 %v3703, %v3706
    %3717 = vset.pattern.permute.xlu0 0
    %3718 = vperm.xlu0 %3717, %v3660
    %v3719 = vpop.permute.xlu0 %3718
    %3722 = vset.pattern.permute.xlu0 0
    %3723 = vperm.xlu0 %3722, %v3661
    %v3724 = vpop.permute.xlu0 %3723
    %3727 = vset.pattern.permute.xlu0 0
    %3728 = vperm.xlu0 %3727, %v3662
    %v3729 = vpop.permute.xlu0 %3728
    %3732 = vset.pattern.permute.xlu0 0
    %3733 = vperm.xlu0 %3732, %v3663
    %v3734 = vpop.permute.xlu0 %3733
    %3737 = vset.pattern.permute.xlu0 0
    %3738 = vperm.xlu0 %3737, %v3664
    %v3739 = vpop.permute.xlu0 %3738
    %3742 = vset.pattern.permute.xlu0 0
    %3743 = vperm.xlu0 %3742, %v3665
    %v3744 = vpop.permute.xlu0 %3743
    %3747 = vset.pattern.permute.xlu0 0
    %3748 = vperm.xlu0 %3747, %v3666
    %v3749 = vpop.permute.xlu0 %3748
    %3752 = vset.pattern.permute.xlu0 0
    %3753 = vperm.xlu0 %3752, %v3667
    %v3754 = vpop.permute.xlu0 %3753
    %3764 = vset.pattern.permute.xlu0 0
    %3765 = vperm.xlu0 %3764, %v3684
    %v3766 = vpop.permute.xlu0 %3765
    %3767 = vset.pattern.permute.xlu0 0
    %3768 = vperm.xlu0 %3767, %v3685
    %v3769 = vpop.permute.xlu0 %3768
    %3770 = vset.pattern.permute.xlu0 0
    %3771 = vperm.xlu0 %3770, %v3686
    %v3772 = vpop.permute.xlu0 %3771
    %3773 = vset.pattern.permute.xlu0 0
    %3774 = vperm.xlu0 %3773, %v3687
    %v3775 = vpop.permute.xlu0 %3774
    %3776 = vset.pattern.permute.xlu0 0
    %3777 = vperm.xlu0 %3776, %v3688
    %v3778 = vpop.permute.xlu0 %3777
    %3779 = vset.pattern.permute.xlu0 0
    %3780 = vperm.xlu0 %3779, %v3689
    %v3781 = vpop.permute.xlu0 %3780
    %3782 = vset.pattern.permute.xlu0 0
    %3783 = vperm.xlu0 %3782, %v3690
    %v3784 = vpop.permute.xlu0 %3783
    %3785 = vset.pattern.permute.xlu0 0
    %3786 = vperm.xlu0 %3785, %v3691
    %v3787 = vpop.permute.xlu0 %3786
    %v3788 = vperm.slane %v3766, %v3490
    %v3789 = vadd.s32 %v3490, 4294967288
    %v3790 = vperm.slane %v3769, %v3789
    %vm3791 = vcmask 130112
    %v3792 = vsel %vm3791, %v3790, %v3788
    %v3793 = vadd.s32 %v3490, 4294967280
    %v3794 = vperm.slane %v3772, %v3793
    %vm3795 = vcmask 195712
    %v3796 = vsel %vm3795, %v3794, %v3792
    %v3797 = vadd.s32 %v3490, 4294967272
    %v3798 = vperm.slane %v3775, %v3797
    %vm3799 = vcmask 261312
    %v3800 = vsel %vm3799, %v3798, %v3796
    %v3801 = vperm.slane %v3778, %v3490
    %v3802 = vperm.slane %v3781, %v3789
    %v3803 = vsel %vm3791, %v3802, %v3801
    %v3804 = vperm.slane %v3784, %v3793
    %v3805 = vsel %vm3795, %v3804, %v3803
    %v3806 = vperm.slane %v3787, %v3797
    %v3807 = vsel %vm3799, %v3806, %v3805
    %v3808 = vsel %vm3525, %v3800, %v3800
    %v3809 = vsel %vm3527, %v3800, %v3808
    %v3810 = vsel %vm3529, %v3800, %v3809
    %v3811 = vsel %vm3531, %v3800, %v3810
    %v3812 = vsel %vm3533, %v3800, %v3811
    %v3813 = vsel %vm3535, %v3800, %v3812
    %v3814 = vsel %vm3525, %v3807, %v3807
    %v3815 = vsel %vm3527, %v3807, %v3814
    %v3816 = vsel %vm3529, %v3807, %v3815
    %v3817 = vsel %vm3531, %v3807, %v3816
    %v3818 = vsel %vm3533, %v3807, %v3817
    %v3819 = vsel %vm3535, %v3807, %v3818
    %v3822 = vmul.f32 %v3719, %v3813
    %v3823 = vmul.f32 %v3724, %v3813
    %v3824 = vmul.f32 %v3729, %v3813
    %v3825 = vmul.f32 %v3734, %v3813
    %v3826 = vmul.f32 %v3739, %v3819
    %v3827 = vmul.f32 %v3744, %v3819
    %v3828 = vmul.f32 %v3749, %v3819
    %v3829 = vmul.f32 %v3754, %v3819
    %v3830 = vsel %vm845, %v3822, -inf
    %3831 = vmax.xlane.f32.xlu0 %v3830
    %v3832 = vpop.xlane.xlu0 %3831
    %v3833 = vsel %vm845, %v3823, -inf
    %3834 = vmax.xlane.f32.xlu0 %v3833
    %v3835 = vpop.xlane.xlu0 %3834
    %v3836 = vsel %vm845, %v3824, -inf
    %3837 = vmax.xlane.f32.xlu0 %v3836
    %v3838 = vpop.xlane.xlu0 %3837
    %v3839 = vsel %vm845, %v3825, -inf
    %3840 = vmax.xlane.f32.xlu0 %v3839
    %v3841 = vpop.xlane.xlu0 %3840
    %v3842 = vsel %vm845, %v3826, -inf
    %3843 = vmax.xlane.f32.xlu0 %v3842
    %v3844 = vpop.xlane.xlu0 %3843
    %v3845 = vsel %vm845, %v3827, -inf
    %3846 = vmax.xlane.f32.xlu0 %v3845
    %v3847 = vpop.xlane.xlu0 %3846
    %v3848 = vsel %vm845, %v3828, -inf
    %3849 = vmax.xlane.f32.xlu0 %v3848
    %v3850 = vpop.xlane.xlu0 %3849
    %v3851 = vsel %vm845, %v3829, -inf
    %3852 = vmax.xlane.f32.xlu0 %v3851
    %v3853 = vpop.xlane.xlu0 %3852
    %v3854 = vsub.f32 %v3822, %v3832
    %v3855 = vsub.f32 %v3823, %v3835
    %v3856 = vsub.f32 %v3824, %v3838
    %v3857 = vsub.f32 %v3825, %v3841
    %v3858 = vsub.f32 %v3826, %v3844
    %v3859 = vsub.f32 %v3827, %v3847
    %v3860 = vsub.f32 %v3828, %v3850
    %v3861 = vsub.f32 %v3829, %v3853
    %v3862 = vmul.f32 %v3854, 1.442695
    %v3863 = vpow.pop %v3862
    %v3864 = vmul.f32 %v3855, 1.442695
    %v3865 = vpow.pop %v3864
    %v3866 = vmul.f32 %v3856, 1.442695
    %v3867 = vpow.pop %v3866
    %v3868 = vmul.f32 %v3857, 1.442695
    %v3869 = vpow.pop %v3868
    %v3870 = vmul.f32 %v3858, 1.442695
    %v3871 = vpow.pop %v3870
    %v3872 = vmul.f32 %v3859, 1.442695
    %v3873 = vpow.pop %v3872
    %v3874 = vmul.f32 %v3860, 1.442695
    %v3875 = vpow.pop %v3874
    %v3876 = vmul.f32 %v3861, 1.442695
    %v3877 = vpow.pop %v3876
    %v3878 = vsel %vm845, %v3863, 0.0
    %3879 = vadd.xlane.f32.xlu0 %v3878
    %v3880 = vpop.xlane.xlu0 %3879
    %v3881 = vsel %vm845, %v3865, 0.0
    %3882 = vadd.xlane.f32.xlu0 %v3881
    %v3883 = vpop.xlane.xlu0 %3882
    %v3884 = vsel %vm845, %v3867, 0.0
    %3885 = vadd.xlane.f32.xlu0 %v3884
    %v3886 = vpop.xlane.xlu0 %3885
    %v3887 = vsel %vm845, %v3869, 0.0
    %3888 = vadd.xlane.f32.xlu0 %v3887
    %v3889 = vpop.xlane.xlu0 %3888
    %v3890 = vsel %vm845, %v3871, 0.0
    %3891 = vadd.xlane.f32.xlu0 %v3890
    %v3892 = vpop.xlane.xlu0 %3891
    %v3893 = vsel %vm845, %v3873, 0.0
    %3894 = vadd.xlane.f32.xlu0 %v3893
    %v3895 = vpop.xlane.xlu0 %3894
    %v3896 = vsel %vm845, %v3875, 0.0
    %3897 = vadd.xlane.f32.xlu0 %v3896
    %v3898 = vpop.xlane.xlu0 %3897
    %v3899 = vsel %vm845, %v3877, 0.0
    %3900 = vadd.xlane.f32.xlu0 %v3899
    %v3901 = vpop.xlane.xlu0 %3900
    %v3902 = vrcp.pop %v3880
    %v3903 = vmul.f32 %v3880, %v3902
    %v3904 = vsub.f32 1.0, %v3903
    %v3905 = vmul.f32 %v3902, %v3904
    %v3906 = vadd.f32 %v3902, %v3905
    %vm3907 = vweird.f32 %v3880
    %vm3908 = vweird.f32 %v3902
    %vm3909 = vmor %vm3907, %vm3908
    %v3910 = vsel %vm3909, %v3902, %v3906
    %v3911 = vand.u32 2147483647, %v3880
    %vm3912 = vcmp.eq.f32.partialorder %v3911, 8.507059e+37
    %v3913 = vand.u32 %v3880, 2147483648
    %v3914 = vor.u32 1.1754944e-38, %v3913
    %v3915 = vsel %vm3912, %v3914, %v3910
    %v3916 = vmul.f32 %v3863, %v3915
    %v3917 = vrcp.pop %v3883
    %v3918 = vmul.f32 %v3883, %v3917
    %v3919 = vsub.f32 1.0, %v3918
    %v3920 = vmul.f32 %v3917, %v3919
    %v3921 = vadd.f32 %v3917, %v3920
    %vm3922 = vweird.f32 %v3883
    %vm3923 = vweird.f32 %v3917
    %vm3924 = vmor %vm3922, %vm3923
    %v3925 = vsel %vm3924, %v3917, %v3921
    %v3926 = vand.u32 2147483647, %v3883
    %vm3927 = vcmp.eq.f32.partialorder %v3926, 8.507059e+37
    %v3928 = vand.u32 %v3883, 2147483648
    %v3929 = vor.u32 1.1754944e-38, %v3928
    %v3930 = vsel %vm3927, %v3929, %v3925
    %v3931 = vmul.f32 %v3865, %v3930
    %v3932 = vrcp.pop %v3886
    %v3933 = vmul.f32 %v3886, %v3932
    %v3934 = vsub.f32 1.0, %v3933
    %v3935 = vmul.f32 %v3932, %v3934
    %v3936 = vadd.f32 %v3932, %v3935
    %vm3937 = vweird.f32 %v3886
    %vm3938 = vweird.f32 %v3932
    %vm3939 = vmor %vm3937, %vm3938
    %v3940 = vsel %vm3939, %v3932, %v3936
    %v3941 = vand.u32 2147483647, %v3886
    %vm3942 = vcmp.eq.f32.partialorder %v3941, 8.507059e+37
    %v3943 = vand.u32 %v3886, 2147483648
    %v3944 = vor.u32 1.1754944e-38, %v3943
    %v3945 = vsel %vm3942, %v3944, %v3940
    %v3946 = vmul.f32 %v3867, %v3945
    %v3947 = vrcp.pop %v3889
    %v3948 = vmul.f32 %v3889, %v3947
    %v3949 = vsub.f32 1.0, %v3948
    %v3950 = vmul.f32 %v3947, %v3949
    %v3951 = vadd.f32 %v3947, %v3950
    %vm3952 = vweird.f32 %v3889
    %vm3953 = vweird.f32 %v3947
    %vm3954 = vmor %vm3952, %vm3953
    %v3955 = vsel %vm3954, %v3947, %v3951
    %v3956 = vand.u32 2147483647, %v3889
    %vm3957 = vcmp.eq.f32.partialorder %v3956, 8.507059e+37
    %v3958 = vand.u32 %v3889, 2147483648
    %v3959 = vor.u32 1.1754944e-38, %v3958
    %v3960 = vsel %vm3957, %v3959, %v3955
    %v3961 = vmul.f32 %v3869, %v3960
    %v3962 = vrcp.pop %v3892
    %v3963 = vmul.f32 %v3892, %v3962
    %v3964 = vsub.f32 1.0, %v3963
    %v3965 = vmul.f32 %v3962, %v3964
    %v3966 = vadd.f32 %v3962, %v3965
    %vm3967 = vweird.f32 %v3892
    %vm3968 = vweird.f32 %v3962
    %vm3969 = vmor %vm3967, %vm3968
    %v3970 = vsel %vm3969, %v3962, %v3966
    %v3971 = vand.u32 2147483647, %v3892
    %vm3972 = vcmp.eq.f32.partialorder %v3971, 8.507059e+37
    %v3973 = vand.u32 %v3892, 2147483648
    %v3974 = vor.u32 1.1754944e-38, %v3973
    %v3975 = vsel %vm3972, %v3974, %v3970
    %v3976 = vmul.f32 %v3871, %v3975
    %v3977 = vrcp.pop %v3895
    %v3978 = vmul.f32 %v3895, %v3977
    %v3979 = vsub.f32 1.0, %v3978
    %v3980 = vmul.f32 %v3977, %v3979
    %v3981 = vadd.f32 %v3977, %v3980
    %vm3982 = vweird.f32 %v3895
    %vm3983 = vweird.f32 %v3977
    %vm3984 = vmor %vm3982, %vm3983
    %v3985 = vsel %vm3984, %v3977, %v3981
    %v3986 = vand.u32 2147483647, %v3895
    %vm3987 = vcmp.eq.f32.partialorder %v3986, 8.507059e+37
    %v3988 = vand.u32 %v3895, 2147483648
    %v3989 = vor.u32 1.1754944e-38, %v3988
    %v3990 = vsel %vm3987, %v3989, %v3985
    %v3991 = vmul.f32 %v3873, %v3990
    %v3992 = vrcp.pop %v3898
    %v3993 = vmul.f32 %v3898, %v3992
    %v3994 = vsub.f32 1.0, %v3993
    %v3995 = vmul.f32 %v3992, %v3994
    %v3996 = vadd.f32 %v3992, %v3995
    %vm3997 = vweird.f32 %v3898
    %vm3998 = vweird.f32 %v3992
    %vm3999 = vmor %vm3997, %vm3998
    %v4000 = vsel %vm3999, %v3992, %v3996
    %v4001 = vand.u32 2147483647, %v3898
    %vm4002 = vcmp.eq.f32.partialorder %v4001, 8.507059e+37
    %v4003 = vand.u32 %v3898, 2147483648
    %v4004 = vor.u32 1.1754944e-38, %v4003
    %v4005 = vsel %vm4002, %v4004, %v4000
    %v4006 = vmul.f32 %v3875, %v4005
    %v4007 = vrcp.pop %v3901
    %v4008 = vmul.f32 %v3901, %v4007
    %v4009 = vsub.f32 1.0, %v4008
    %v4010 = vmul.f32 %v4007, %v4009
    %v4011 = vadd.f32 %v4007, %v4010
    %vm4012 = vweird.f32 %v3901
    %vm4013 = vweird.f32 %v4007
    %vm4014 = vmor %vm4012, %vm4013
    %v4015 = vsel %vm4014, %v4007, %v4011
    %v4016 = vand.u32 2147483647, %v3901
    %vm4017 = vcmp.eq.f32.partialorder %v4016, 8.507059e+37
    %v4018 = vand.u32 %v3901, 2147483648
    %v4019 = vor.u32 1.1754944e-38, %v4018
    %v4020 = vsel %vm4017, %v4019, %v4015
    %v4021 = vmul.f32 %v3877, %v4020
    %4030 = vset.pattern.permute.xlu0 0
    %4031 = vperm.xlu0 %4030, %v3708
    %v4032 = vpop.permute.xlu0 %4031
    %4033 = vset.pattern.permute.xlu0 0
    %4034 = vperm.xlu0 %4033, %v3709
    %v4035 = vpop.permute.xlu0 %4034
    %4036 = vset.pattern.permute.xlu0 0
    %4037 = vperm.xlu0 %4036, %v3710
    %v4038 = vpop.permute.xlu0 %4037
    %4039 = vset.pattern.permute.xlu0 0
    %4040 = vperm.xlu0 %4039, %v3711
    %v4041 = vpop.permute.xlu0 %4040
    %4042 = vset.pattern.permute.xlu0 0
    %4043 = vperm.xlu0 %4042, %v3712
    %v4044 = vpop.permute.xlu0 %4043
    %4045 = vset.pattern.permute.xlu0 0
    %4046 = vperm.xlu0 %4045, %v3713
    %v4047 = vpop.permute.xlu0 %4046
    %4048 = vset.pattern.permute.xlu0 0
    %4049 = vperm.xlu0 %4048, %v3714
    %v4050 = vpop.permute.xlu0 %4049
    %4051 = vset.pattern.permute.xlu0 0
    %4052 = vperm.xlu0 %4051, %v3715
    %v4053 = vpop.permute.xlu0 %4052
    %v4054 = vperm.slane %v4032, %v3490
    %v4055 = vperm.slane %v4035, %v3789
    %v4056 = vsel %vm3791, %v4055, %v4054
    %v4057 = vperm.slane %v4038, %v3793
    %v4058 = vsel %vm3795, %v4057, %v4056
    %v4059 = vperm.slane %v4041, %v3797
    %v4060 = vsel %vm3799, %v4059, %v4058
    %v4061 = vperm.slane %v4044, %v3490
    %v4062 = vperm.slane %v4047, %v3789
    %v4063 = vsel %vm3791, %v4062, %v4061
    %v4064 = vperm.slane %v4050, %v3793
    %v4065 = vsel %vm3795, %v4064, %v4063
    %v4066 = vperm.slane %v4053, %v3797
    %v4067 = vsel %vm3799, %v4066, %v4065
    %v4068 = vsel %vm3525, %v4060, %v4060
    %v4069 = vsel %vm3527, %v4060, %v4068
    %v4070 = vsel %vm3529, %v4060, %v4069
    %v4071 = vsel %vm3531, %v4060, %v4070
    %v4072 = vsel %vm3533, %v4060, %v4071
    %v4073 = vsel %vm3535, %v4060, %v4072
    %v4074 = vsel %vm3525, %v4067, %v4067
    %v4075 = vsel %vm3527, %v4067, %v4074
    %v4076 = vsel %vm3529, %v4067, %v4075
    %v4077 = vsel %vm3531, %v4067, %v4076
    %v4078 = vsel %vm3533, %v4067, %v4077
    %v4079 = vsel %vm3535, %v4067, %v4078
    %v4082 = vmul.f32 %v3916, %v4073
    %v4083 = vmul.f32 %v3931, %v4073
    %v4084 = vmul.f32 %v3946, %v4073
    %v4085 = vmul.f32 %v3961, %v4073
    %v4086 = vmul.f32 %v3976, %v4079
    %v4087 = vmul.f32 %v3991, %v4079
    %v4088 = vmul.f32 %v4006, %v4079
    %v4089 = vmul.f32 %v4021, %v4079
    %v4090 = vsel %vm845, %v4082, 0.0
    %4091 = vadd.xlane.f32.xlu0 %v4090
    %v4092 = vpop.xlane.xlu0 %4091
    %v4093 = vsel %vm845, %v4083, 0.0
    %4094 = vadd.xlane.f32.xlu0 %v4093
    %v4095 = vpop.xlane.xlu0 %4094
    %v4096 = vsel %vm845, %v4084, 0.0
    %4097 = vadd.xlane.f32.xlu0 %v4096
    %v4098 = vpop.xlane.xlu0 %4097
    %v4099 = vsel %vm845, %v4085, 0.0
    %4100 = vadd.xlane.f32.xlu0 %v4099
    %v4101 = vpop.xlane.xlu0 %4100
    %v4102 = vsel %vm845, %v4086, 0.0
    %4103 = vadd.xlane.f32.xlu0 %v4102
    %v4104 = vpop.xlane.xlu0 %4103
    %v4105 = vsel %vm845, %v4087, 0.0
    %4106 = vadd.xlane.f32.xlu0 %v4105
    %v4107 = vpop.xlane.xlu0 %4106
    %v4108 = vsel %vm845, %v4088, 0.0
    %4109 = vadd.xlane.f32.xlu0 %v4108
    %v4110 = vpop.xlane.xlu0 %4109
    %v4111 = vsel %vm845, %v4089, 0.0
    %4112 = vadd.xlane.f32.xlu0 %v4111
    %v4113 = vpop.xlane.xlu0 %4112
    %4114 = vset.pattern.permute.xlu0 1
    %4115 = vperm.xlu0 %4114, %v3660
    %v4116 = vpop.permute.xlu0 %4115
    %4118 = vset.pattern.permute.xlu0 1
    %4119 = vperm.xlu0 %4118, %v3661
    %v4120 = vpop.permute.xlu0 %4119
    %4122 = vset.pattern.permute.xlu0 1
    %4123 = vperm.xlu0 %4122, %v3662
    %v4124 = vpop.permute.xlu0 %4123
    %4126 = vset.pattern.permute.xlu0 1
    %4127 = vperm.xlu0 %4126, %v3663
    %v4128 = vpop.permute.xlu0 %4127
    %4130 = vset.pattern.permute.xlu0 1
    %4131 = vperm.xlu0 %4130, %v3664
    %v4132 = vpop.permute.xlu0 %4131
    %4134 = vset.pattern.permute.xlu0 1
    %4135 = vperm.xlu0 %4134, %v3665
    %v4136 = vpop.permute.xlu0 %4135
    %4138 = vset.pattern.permute.xlu0 1
    %4139 = vperm.xlu0 %4138, %v3666
    %v4140 = vpop.permute.xlu0 %4139
    %4142 = vset.pattern.permute.xlu0 1
    %4143 = vperm.xlu0 %4142, %v3667
    %v4144 = vpop.permute.xlu0 %4143
    %4146 = vset.pattern.permute.xlu0 1
    %4147 = vperm.xlu0 %4146, %v3684
    %v4148 = vpop.permute.xlu0 %4147
    %4149 = vset.pattern.permute.xlu0 1
    %4150 = vperm.xlu0 %4149, %v3685
    %v4151 = vpop.permute.xlu0 %4150
    %4152 = vset.pattern.permute.xlu0 1
    %4153 = vperm.xlu0 %4152, %v3686
    %v4154 = vpop.permute.xlu0 %4153
    %4155 = vset.pattern.permute.xlu0 1
    %4156 = vperm.xlu0 %4155, %v3687
    %v4157 = vpop.permute.xlu0 %4156
    %4158 = vset.pattern.permute.xlu0 1
    %4159 = vperm.xlu0 %4158, %v3688
    %v4160 = vpop.permute.xlu0 %4159
    %4161 = vset.pattern.permute.xlu0 1
    %4162 = vperm.xlu0 %4161, %v3689
    %v4163 = vpop.permute.xlu0 %4162
    %4164 = vset.pattern.permute.xlu0 1
    %4165 = vperm.xlu0 %4164, %v3690
    %v4166 = vpop.permute.xlu0 %4165
    %4167 = vset.pattern.permute.xlu0 1
    %4168 = vperm.xlu0 %4167, %v3691
    %v4169 = vpop.permute.xlu0 %4168
    %v4170 = vperm.slane %v4148, %v3490
    %v4171 = vperm.slane %v4151, %v3789
    %v4172 = vsel %vm3791, %v4171, %v4170
    %v4173 = vperm.slane %v4154, %v3793
    %v4174 = vsel %vm3795, %v4173, %v4172
    %v4175 = vperm.slane %v4157, %v3797
    %v4176 = vsel %vm3799, %v4175, %v4174
    %v4177 = vperm.slane %v4160, %v3490
    %v4178 = vperm.slane %v4163, %v3789
    %v4179 = vsel %vm3791, %v4178, %v4177
    %v4180 = vperm.slane %v4166, %v3793
    %v4181 = vsel %vm3795, %v4180, %v4179
    %v4182 = vperm.slane %v4169, %v3797
    %v4183 = vsel %vm3799, %v4182, %v4181
    %v4184 = vsel %vm3525, %v4176, %v4176
    %v4185 = vsel %vm3527, %v4176, %v4184
    %v4186 = vsel %vm3529, %v4176, %v4185
    %v4187 = vsel %vm3531, %v4176, %v4186
    %v4188 = vsel %vm3533, %v4176, %v4187
    %v4189 = vsel %vm3535, %v4176, %v4188
    %v4190 = vsel %vm3525, %v4183, %v4183
    %v4191 = vsel %vm3527, %v4183, %v4190
    %v4192 = vsel %vm3529, %v4183, %v4191
    %v4193 = vsel %vm3531, %v4183, %v4192
    %v4194 = vsel %vm3533, %v4183, %v4193
    %v4195 = vsel %vm3535, %v4183, %v4194
    %v4198 = vmul.f32 %v4116, %v4189
    %v4199 = vmul.f32 %v4120, %v4189
    %v4200 = vmul.f32 %v4124, %v4189
    %v4201 = vmul.f32 %v4128, %v4189
    %v4202 = vmul.f32 %v4132, %v4195
    %v4203 = vmul.f32 %v4136, %v4195
    %v4204 = vmul.f32 %v4140, %v4195
    %v4205 = vmul.f32 %v4144, %v4195
    %v4206 = vsel %vm845, %v4198, -inf
    %4207 = vmax.xlane.f32.xlu0 %v4206
    %v4208 = vpop.xlane.xlu0 %4207
    %v4209 = vsel %vm845, %v4199, -inf
    %4210 = vmax.xlane.f32.xlu0 %v4209
    %v4211 = vpop.xlane.xlu0 %4210
    %v4212 = vsel %vm845, %v4200, -inf
    %4213 = vmax.xlane.f32.xlu0 %v4212
    %v4214 = vpop.xlane.xlu0 %4213
    %v4215 = vsel %vm845, %v4201, -inf
    %4216 = vmax.xlane.f32.xlu0 %v4215
    %v4217 = vpop.xlane.xlu0 %4216
    %v4218 = vsel %vm845, %v4202, -inf
    %4219 = vmax.xlane.f32.xlu0 %v4218
    %v4220 = vpop.xlane.xlu0 %4219
    %v4221 = vsel %vm845, %v4203, -inf
    %4222 = vmax.xlane.f32.xlu0 %v4221
    %v4223 = vpop.xlane.xlu0 %4222
    %v4224 = vsel %vm845, %v4204, -inf
    %4225 = vmax.xlane.f32.xlu0 %v4224
    %v4226 = vpop.xlane.xlu0 %4225
    %v4227 = vsel %vm845, %v4205, -inf
    %4228 = vmax.xlane.f32.xlu0 %v4227
    %v4229 = vpop.xlane.xlu0 %4228
    %v4230 = vsub.f32 %v4198, %v4208
    %v4231 = vsub.f32 %v4199, %v4211
    %v4232 = vsub.f32 %v4200, %v4214
    %v4233 = vsub.f32 %v4201, %v4217
    %v4234 = vsub.f32 %v4202, %v4220
    %v4235 = vsub.f32 %v4203, %v4223
    %v4236 = vsub.f32 %v4204, %v4226
    %v4237 = vsub.f32 %v4205, %v4229
    %v4238 = vmul.f32 %v4230, 1.442695
    %v4239 = vpow.pop %v4238
    %v4240 = vmul.f32 %v4231, 1.442695
    %v4241 = vpow.pop %v4240
    %v4242 = vmul.f32 %v4232, 1.442695
    %v4243 = vpow.pop %v4242
    %v4244 = vmul.f32 %v4233, 1.442695
    %v4245 = vpow.pop %v4244
    %v4246 = vmul.f32 %v4234, 1.442695
    %v4247 = vpow.pop %v4246
    %v4248 = vmul.f32 %v4235, 1.442695
    %v4249 = vpow.pop %v4248
    %v4250 = vmul.f32 %v4236, 1.442695
    %v4251 = vpow.pop %v4250
    %v4252 = vmul.f32 %v4237, 1.442695
    %v4253 = vpow.pop %v4252
    %v4254 = vsel %vm845, %v4239, 0.0
    %4255 = vadd.xlane.f32.xlu0 %v4254
    %v4256 = vpop.xlane.xlu0 %4255
    %v4257 = vsel %vm845, %v4241, 0.0
    %4258 = vadd.xlane.f32.xlu0 %v4257
    %v4259 = vpop.xlane.xlu0 %4258
    %v4260 = vsel %vm845, %v4243, 0.0
    %4261 = vadd.xlane.f32.xlu0 %v4260
    %v4262 = vpop.xlane.xlu0 %4261
    %v4263 = vsel %vm845, %v4245, 0.0
    %4264 = vadd.xlane.f32.xlu0 %v4263
    %v4265 = vpop.xlane.xlu0 %4264
    %v4266 = vsel %vm845, %v4247, 0.0
    %4267 = vadd.xlane.f32.xlu0 %v4266
    %v4268 = vpop.xlane.xlu0 %4267
    %v4269 = vsel %vm845, %v4249, 0.0
    %4270 = vadd.xlane.f32.xlu0 %v4269
    %v4271 = vpop.xlane.xlu0 %4270
    %v4272 = vsel %vm845, %v4251, 0.0
    %4273 = vadd.xlane.f32.xlu0 %v4272
    %v4274 = vpop.xlane.xlu0 %4273
    %v4275 = vsel %vm845, %v4253, 0.0
    %4276 = vadd.xlane.f32.xlu0 %v4275
    %v4277 = vpop.xlane.xlu0 %4276
    %v4278 = vrcp.pop %v4256
    %v4279 = vmul.f32 %v4256, %v4278
    %v4280 = vsub.f32 1.0, %v4279
    %v4281 = vmul.f32 %v4278, %v4280
    %v4282 = vadd.f32 %v4278, %v4281
    %vm4283 = vweird.f32 %v4256
    %vm4284 = vweird.f32 %v4278
    %vm4285 = vmor %vm4283, %vm4284
    %v4286 = vsel %vm4285, %v4278, %v4282
    %v4287 = vand.u32 2147483647, %v4256
    %vm4288 = vcmp.eq.f32.partialorder %v4287, 8.507059e+37
    %v4289 = vand.u32 %v4256, 2147483648
    %v4290 = vor.u32 1.1754944e-38, %v4289
    %v4291 = vsel %vm4288, %v4290, %v4286
    %v4292 = vmul.f32 %v4239, %v4291
    %v4293 = vrcp.pop %v4259
    %v4294 = vmul.f32 %v4259, %v4293
    %v4295 = vsub.f32 1.0, %v4294
    %v4296 = vmul.f32 %v4293, %v4295
    %v4297 = vadd.f32 %v4293, %v4296
    %vm4298 = vweird.f32 %v4259
    %vm4299 = vweird.f32 %v4293
    %vm4300 = vmor %vm4298, %vm4299
    %v4301 = vsel %vm4300, %v4293, %v4297
    %v4302 = vand.u32 2147483647, %v4259
    %vm4303 = vcmp.eq.f32.partialorder %v4302, 8.507059e+37
    %v4304 = vand.u32 %v4259, 2147483648
    %v4305 = vor.u32 1.1754944e-38, %v4304
    %v4306 = vsel %vm4303, %v4305, %v4301
    %v4307 = vmul.f32 %v4241, %v4306
    %v4308 = vrcp.pop %v4262
    %v4309 = vmul.f32 %v4262, %v4308
    %v4310 = vsub.f32 1.0, %v4309
    %v4311 = vmul.f32 %v4308, %v4310
    %v4312 = vadd.f32 %v4308, %v4311
    %vm4313 = vweird.f32 %v4262
    %vm4314 = vweird.f32 %v4308
    %vm4315 = vmor %vm4313, %vm4314
    %v4316 = vsel %vm4315, %v4308, %v4312
    %v4317 = vand.u32 2147483647, %v4262
    %vm4318 = vcmp.eq.f32.partialorder %v4317, 8.507059e+37
    %v4319 = vand.u32 %v4262, 2147483648
    %v4320 = vor.u32 1.1754944e-38, %v4319
    %v4321 = vsel %vm4318, %v4320, %v4316
    %v4322 = vmul.f32 %v4243, %v4321
    %v4323 = vrcp.pop %v4265
    %v4324 = vmul.f32 %v4265, %v4323
    %v4325 = vsub.f32 1.0, %v4324
    %v4326 = vmul.f32 %v4323, %v4325
    %v4327 = vadd.f32 %v4323, %v4326
    %vm4328 = vweird.f32 %v4265
    %vm4329 = vweird.f32 %v4323
    %vm4330 = vmor %vm4328, %vm4329
    %v4331 = vsel %vm4330, %v4323, %v4327
    %v4332 = vand.u32 2147483647, %v4265
    %vm4333 = vcmp.eq.f32.partialorder %v4332, 8.507059e+37
    %v4334 = vand.u32 %v4265, 2147483648
    %v4335 = vor.u32 1.1754944e-38, %v4334
    %v4336 = vsel %vm4333, %v4335, %v4331
    %v4337 = vmul.f32 %v4245, %v4336
    %v4338 = vrcp.pop %v4268
    %v4339 = vmul.f32 %v4268, %v4338
    %v4340 = vsub.f32 1.0, %v4339
    %v4341 = vmul.f32 %v4338, %v4340
    %v4342 = vadd.f32 %v4338, %v4341
    %vm4343 = vweird.f32 %v4268
    %vm4344 = vweird.f32 %v4338
    %vm4345 = vmor %vm4343, %vm4344
    %v4346 = vsel %vm4345, %v4338, %v4342
    %v4347 = vand.u32 2147483647, %v4268
    %vm4348 = vcmp.eq.f32.partialorder %v4347, 8.507059e+37
    %v4349 = vand.u32 %v4268, 2147483648
    %v4350 = vor.u32 1.1754944e-38, %v4349
    %v4351 = vsel %vm4348, %v4350, %v4346
    %v4352 = vmul.f32 %v4247, %v4351
    %v4353 = vrcp.pop %v4271
    %v4354 = vmul.f32 %v4271, %v4353
    %v4355 = vsub.f32 1.0, %v4354
    %v4356 = vmul.f32 %v4353, %v4355
    %v4357 = vadd.f32 %v4353, %v4356
    %vm4358 = vweird.f32 %v4271
    %vm4359 = vweird.f32 %v4353
    %vm4360 = vmor %vm4358, %vm4359
    %v4361 = vsel %vm4360, %v4353, %v4357
    %v4362 = vand.u32 2147483647, %v4271
    %vm4363 = vcmp.eq.f32.partialorder %v4362, 8.507059e+37
    %v4364 = vand.u32 %v4271, 2147483648
    %v4365 = vor.u32 1.1754944e-38, %v4364
    %v4366 = vsel %vm4363, %v4365, %v4361
    %v4367 = vmul.f32 %v4249, %v4366
    %v4368 = vrcp.pop %v4274
    %v4369 = vmul.f32 %v4274, %v4368
    %v4370 = vsub.f32 1.0, %v4369
    %v4371 = vmul.f32 %v4368, %v4370
    %v4372 = vadd.f32 %v4368, %v4371
    %vm4373 = vweird.f32 %v4274
    %vm4374 = vweird.f32 %v4368
    %vm4375 = vmor %vm4373, %vm4374
    %v4376 = vsel %vm4375, %v4368, %v4372
    %v4377 = vand.u32 2147483647, %v4274
    %vm4378 = vcmp.eq.f32.partialorder %v4377, 8.507059e+37
    %v4379 = vand.u32 %v4274, 2147483648
    %v4380 = vor.u32 1.1754944e-38, %v4379
    %v4381 = vsel %vm4378, %v4380, %v4376
    %v4382 = vmul.f32 %v4251, %v4381
    %v4383 = vrcp.pop %v4277
    %v4384 = vmul.f32 %v4277, %v4383
    %v4385 = vsub.f32 1.0, %v4384
    %v4386 = vmul.f32 %v4383, %v4385
    %v4387 = vadd.f32 %v4383, %v4386
    %vm4388 = vweird.f32 %v4277
    %vm4389 = vweird.f32 %v4383
    %vm4390 = vmor %vm4388, %vm4389
    %v4391 = vsel %vm4390, %v4383, %v4387
    %v4392 = vand.u32 2147483647, %v4277
    %vm4393 = vcmp.eq.f32.partialorder %v4392, 8.507059e+37
    %v4394 = vand.u32 %v4277, 2147483648
    %v4395 = vor.u32 1.1754944e-38, %v4394
    %v4396 = vsel %vm4393, %v4395, %v4391
    %v4397 = vmul.f32 %v4253, %v4396
    %4398 = vset.pattern.permute.xlu0 1
    %4399 = vperm.xlu0 %4398, %v3708
    %v4400 = vpop.permute.xlu0 %4399
    %4401 = vset.pattern.permute.xlu0 1
    %4402 = vperm.xlu0 %4401, %v3709
    %v4403 = vpop.permute.xlu0 %4402
    %4404 = vset.pattern.permute.xlu0 1
    %4405 = vperm.xlu0 %4404, %v3710
    %v4406 = vpop.permute.xlu0 %4405
    %4407 = vset.pattern.permute.xlu0 1
    %4408 = vperm.xlu0 %4407, %v3711
    %v4409 = vpop.permute.xlu0 %4408
    %4410 = vset.pattern.permute.xlu0 1
    %4411 = vperm.xlu0 %4410, %v3712
    %v4412 = vpop.permute.xlu0 %4411
    %4413 = vset.pattern.permute.xlu0 1
    %4414 = vperm.xlu0 %4413, %v3713
    %v4415 = vpop.permute.xlu0 %4414
    %4416 = vset.pattern.permute.xlu0 1
    %4417 = vperm.xlu0 %4416, %v3714
    %v4418 = vpop.permute.xlu0 %4417
    %4419 = vset.pattern.permute.xlu0 1
    %4420 = vperm.xlu0 %4419, %v3715
    %v4421 = vpop.permute.xlu0 %4420
    %v4422 = vperm.slane %v4400, %v3490
    %v4423 = vperm.slane %v4403, %v3789
    %v4424 = vsel %vm3791, %v4423, %v4422
    %v4425 = vperm.slane %v4406, %v3793
    %v4426 = vsel %vm3795, %v4425, %v4424
    %v4427 = vperm.slane %v4409, %v3797
    %v4428 = vsel %vm3799, %v4427, %v4426
    %v4429 = vperm.slane %v4412, %v3490
    %v4430 = vperm.slane %v4415, %v3789
    %v4431 = vsel %vm3791, %v4430, %v4429
    %v4432 = vperm.slane %v4418, %v3793
    %v4433 = vsel %vm3795, %v4432, %v4431
    %v4434 = vperm.slane %v4421, %v3797
    %v4435 = vsel %vm3799, %v4434, %v4433
    %v4436 = vsel %vm3525, %v4428, %v4428
    %v4437 = vsel %vm3527, %v4428, %v4436
    %v4438 = vsel %vm3529, %v4428, %v4437
    %v4439 = vsel %vm3531, %v4428, %v4438
    %v4440 = vsel %vm3533, %v4428, %v4439
    %v4441 = vsel %vm3535, %v4428, %v4440
    %v4442 = vsel %vm3525, %v4435, %v4435
    %v4443 = vsel %vm3527, %v4435, %v4442
    %v4444 = vsel %vm3529, %v4435, %v4443
    %v4445 = vsel %vm3531, %v4435, %v4444
    %v4446 = vsel %vm3533, %v4435, %v4445
    %v4447 = vsel %vm3535, %v4435, %v4446
    %v4450 = vmul.f32 %v4292, %v4441
    %v4451 = vmul.f32 %v4307, %v4441
    %v4452 = vmul.f32 %v4322, %v4441
    %v4453 = vmul.f32 %v4337, %v4441
    %v4454 = vmul.f32 %v4352, %v4447
    %v4455 = vmul.f32 %v4367, %v4447
    %v4456 = vmul.f32 %v4382, %v4447
    %v4457 = vmul.f32 %v4397, %v4447
    %v4458 = vsel %vm845, %v4450, 0.0
    %4459 = vadd.xlane.f32.xlu0 %v4458
    %v4460 = vpop.xlane.xlu0 %4459
    %v4461 = vsel %vm845, %v4451, 0.0
    %4462 = vadd.xlane.f32.xlu0 %v4461
    %v4463 = vpop.xlane.xlu0 %4462
    %v4464 = vsel %vm845, %v4452, 0.0
    %4465 = vadd.xlane.f32.xlu0 %v4464
    %v4466 = vpop.xlane.xlu0 %4465
    %v4467 = vsel %vm845, %v4453, 0.0
    %4468 = vadd.xlane.f32.xlu0 %v4467
    %v4469 = vpop.xlane.xlu0 %4468
    %v4470 = vsel %vm845, %v4454, 0.0
    %4471 = vadd.xlane.f32.xlu0 %v4470
    %v4472 = vpop.xlane.xlu0 %4471
    %v4473 = vsel %vm845, %v4455, 0.0
    %4474 = vadd.xlane.f32.xlu0 %v4473
    %v4475 = vpop.xlane.xlu0 %4474
    %v4476 = vsel %vm845, %v4456, 0.0
    %4477 = vadd.xlane.f32.xlu0 %v4476
    %v4478 = vpop.xlane.xlu0 %4477
    %v4479 = vsel %vm845, %v4457, 0.0
    %4480 = vadd.xlane.f32.xlu0 %v4479
    %v4481 = vpop.xlane.xlu0 %4480
    %4482 = vset.pattern.permute.xlu0 2
    %4483 = vperm.xlu0 %4482, %v3660
    %v4484 = vpop.permute.xlu0 %4483
    %4486 = vset.pattern.permute.xlu0 2
    %4487 = vperm.xlu0 %4486, %v3661
    %v4488 = vpop.permute.xlu0 %4487
    %4490 = vset.pattern.permute.xlu0 2
    %4491 = vperm.xlu0 %4490, %v3662
    %v4492 = vpop.permute.xlu0 %4491
    %4494 = vset.pattern.permute.xlu0 2
    %4495 = vperm.xlu0 %4494, %v3663
    %v4496 = vpop.permute.xlu0 %4495
    %4498 = vset.pattern.permute.xlu0 2
    %4499 = vperm.xlu0 %4498, %v3664
    %v4500 = vpop.permute.xlu0 %4499
    %4502 = vset.pattern.permute.xlu0 2
    %4503 = vperm.xlu0 %4502, %v3665
    %v4504 = vpop.permute.xlu0 %4503
    %4506 = vset.pattern.permute.xlu0 2
    %4507 = vperm.xlu0 %4506, %v3666
    %v4508 = vpop.permute.xlu0 %4507
    %4510 = vset.pattern.permute.xlu0 2
    %4511 = vperm.xlu0 %4510, %v3667
    %v4512 = vpop.permute.xlu0 %4511
    %4514 = vset.pattern.permute.xlu0 2
    %4515 = vperm.xlu0 %4514, %v3684
    %v4516 = vpop.permute.xlu0 %4515
    %4517 = vset.pattern.permute.xlu0 2
    %4518 = vperm.xlu0 %4517, %v3685
    %v4519 = vpop.permute.xlu0 %4518
    %4520 = vset.pattern.permute.xlu0 2
    %4521 = vperm.xlu0 %4520, %v3686
    %v4522 = vpop.permute.xlu0 %4521
    %4523 = vset.pattern.permute.xlu0 2
    %4524 = vperm.xlu0 %4523, %v3687
    %v4525 = vpop.permute.xlu0 %4524
    %4526 = vset.pattern.permute.xlu0 2
    %4527 = vperm.xlu0 %4526, %v3688
    %v4528 = vpop.permute.xlu0 %4527
    %4529 = vset.pattern.permute.xlu0 2
    %4530 = vperm.xlu0 %4529, %v3689
    %v4531 = vpop.permute.xlu0 %4530
    %4532 = vset.pattern.permute.xlu0 2
    %4533 = vperm.xlu0 %4532, %v3690
    %v4534 = vpop.permute.xlu0 %4533
    %4535 = vset.pattern.permute.xlu0 2
    %4536 = vperm.xlu0 %4535, %v3691
    %v4537 = vpop.permute.xlu0 %4536
    %v4538 = vperm.slane %v4516, %v3490
    %v4539 = vperm.slane %v4519, %v3789
    %v4540 = vsel %vm3791, %v4539, %v4538
    %v4541 = vperm.slane %v4522, %v3793
    %v4542 = vsel %vm3795, %v4541, %v4540
    %v4543 = vperm.slane %v4525, %v3797
    %v4544 = vsel %vm3799, %v4543, %v4542
    %v4545 = vperm.slane %v4528, %v3490
    %v4546 = vperm.slane %v4531, %v3789
    %v4547 = vsel %vm3791, %v4546, %v4545
    %v4548 = vperm.slane %v4534, %v3793
    %v4549 = vsel %vm3795, %v4548, %v4547
    %v4550 = vperm.slane %v4537, %v3797
    %v4551 = vsel %vm3799, %v4550, %v4549
    %v4552 = vsel %vm3525, %v4544, %v4544
    %v4553 = vsel %vm3527, %v4544, %v4552
    %v4554 = vsel %vm3529, %v4544, %v4553
    %v4555 = vsel %vm3531, %v4544, %v4554
    %v4556 = vsel %vm3533, %v4544, %v4555
    %v4557 = vsel %vm3535, %v4544, %v4556
    %v4558 = vsel %vm3525, %v4551, %v4551
    %v4559 = vsel %vm3527, %v4551, %v4558
    %v4560 = vsel %vm3529, %v4551, %v4559
    %v4561 = vsel %vm3531, %v4551, %v4560
    %v4562 = vsel %vm3533, %v4551, %v4561
    %v4563 = vsel %vm3535, %v4551, %v4562
    %v4566 = vmul.f32 %v4484, %v4557
    %v4567 = vmul.f32 %v4488, %v4557
    %v4568 = vmul.f32 %v4492, %v4557
    %v4569 = vmul.f32 %v4496, %v4557
    %v4570 = vmul.f32 %v4500, %v4563
    %v4571 = vmul.f32 %v4504, %v4563
    %v4572 = vmul.f32 %v4508, %v4563
    %v4573 = vmul.f32 %v4512, %v4563
    %v4574 = vsel %vm845, %v4566, -inf
    %4575 = vmax.xlane.f32.xlu0 %v4574
    %v4576 = vpop.xlane.xlu0 %4575
    %v4577 = vsel %vm845, %v4567, -inf
    %4578 = vmax.xlane.f32.xlu0 %v4577
    %v4579 = vpop.xlane.xlu0 %4578
    %v4580 = vsel %vm845, %v4568, -inf
    %4581 = vmax.xlane.f32.xlu0 %v4580
    %v4582 = vpop.xlane.xlu0 %4581
    %v4583 = vsel %vm845, %v4569, -inf
    %4584 = vmax.xlane.f32.xlu0 %v4583
    %v4585 = vpop.xlane.xlu0 %4584
    %v4586 = vsel %vm845, %v4570, -inf
    %4587 = vmax.xlane.f32.xlu0 %v4586
    %v4588 = vpop.xlane.xlu0 %4587
    %v4589 = vsel %vm845, %v4571, -inf
    %4590 = vmax.xlane.f32.xlu0 %v4589
    %v4591 = vpop.xlane.xlu0 %4590
    %v4592 = vsel %vm845, %v4572, -inf
    %4593 = vmax.xlane.f32.xlu0 %v4592
    %v4594 = vpop.xlane.xlu0 %4593
    %v4595 = vsel %vm845, %v4573, -inf
    %4596 = vmax.xlane.f32.xlu0 %v4595
    %v4597 = vpop.xlane.xlu0 %4596
    %v4598 = vsub.f32 %v4566, %v4576
    %v4599 = vsub.f32 %v4567, %v4579
    %v4600 = vsub.f32 %v4568, %v4582
    %v4601 = vsub.f32 %v4569, %v4585
    %v4602 = vsub.f32 %v4570, %v4588
    %v4603 = vsub.f32 %v4571, %v4591
    %v4604 = vsub.f32 %v4572, %v4594
    %v4605 = vsub.f32 %v4573, %v4597
    %v4606 = vmul.f32 %v4598, 1.442695
    %v4607 = vpow.pop %v4606
    %v4608 = vmul.f32 %v4599, 1.442695
    %v4609 = vpow.pop %v4608
    %v4610 = vmul.f32 %v4600, 1.442695
    %v4611 = vpow.pop %v4610
    %v4612 = vmul.f32 %v4601, 1.442695
    %v4613 = vpow.pop %v4612
    %v4614 = vmul.f32 %v4602, 1.442695
    %v4615 = vpow.pop %v4614
    %v4616 = vmul.f32 %v4603, 1.442695
    %v4617 = vpow.pop %v4616
    %v4618 = vmul.f32 %v4604, 1.442695
    %v4619 = vpow.pop %v4618
    %v4620 = vmul.f32 %v4605, 1.442695
    %v4621 = vpow.pop %v4620
    %v4622 = vsel %vm845, %v4607, 0.0
    %4623 = vadd.xlane.f32.xlu0 %v4622
    %v4624 = vpop.xlane.xlu0 %4623
    %v4625 = vsel %vm845, %v4609, 0.0
    %4626 = vadd.xlane.f32.xlu0 %v4625
    %v4627 = vpop.xlane.xlu0 %4626
    %v4628 = vsel %vm845, %v4611, 0.0
    %4629 = vadd.xlane.f32.xlu0 %v4628
    %v4630 = vpop.xlane.xlu0 %4629
    %v4631 = vsel %vm845, %v4613, 0.0
    %4632 = vadd.xlane.f32.xlu0 %v4631
    %v4633 = vpop.xlane.xlu0 %4632
    %v4634 = vsel %vm845, %v4615, 0.0
    %4635 = vadd.xlane.f32.xlu0 %v4634
    %v4636 = vpop.xlane.xlu0 %4635
    %v4637 = vsel %vm845, %v4617, 0.0
    %4638 = vadd.xlane.f32.xlu0 %v4637
    %v4639 = vpop.xlane.xlu0 %4638
    %v4640 = vsel %vm845, %v4619, 0.0
    %4641 = vadd.xlane.f32.xlu0 %v4640
    %v4642 = vpop.xlane.xlu0 %4641
    %v4643 = vsel %vm845, %v4621, 0.0
    %4644 = vadd.xlane.f32.xlu0 %v4643
    %v4645 = vpop.xlane.xlu0 %4644
    %v4646 = vrcp.pop %v4624
    %v4647 = vmul.f32 %v4624, %v4646
    %v4648 = vsub.f32 1.0, %v4647
    %v4649 = vmul.f32 %v4646, %v4648
    %v4650 = vadd.f32 %v4646, %v4649
    %vm4651 = vweird.f32 %v4624
    %vm4652 = vweird.f32 %v4646
    %vm4653 = vmor %vm4651, %vm4652
    %v4654 = vsel %vm4653, %v4646, %v4650
    %v4655 = vand.u32 2147483647, %v4624
    %vm4656 = vcmp.eq.f32.partialorder %v4655, 8.507059e+37
    %v4657 = vand.u32 %v4624, 2147483648
    %v4658 = vor.u32 1.1754944e-38, %v4657
    %v4659 = vsel %vm4656, %v4658, %v4654
    %v4660 = vmul.f32 %v4607, %v4659
    %v4661 = vrcp.pop %v4627
    %v4662 = vmul.f32 %v4627, %v4661
    %v4663 = vsub.f32 1.0, %v4662
    %v4664 = vmul.f32 %v4661, %v4663
    %v4665 = vadd.f32 %v4661, %v4664
    %vm4666 = vweird.f32 %v4627
    %vm4667 = vweird.f32 %v4661
    %vm4668 = vmor %vm4666, %vm4667
    %v4669 = vsel %vm4668, %v4661, %v4665
    %v4670 = vand.u32 2147483647, %v4627
    %vm4671 = vcmp.eq.f32.partialorder %v4670, 8.507059e+37
    %v4672 = vand.u32 %v4627, 2147483648
    %v4673 = vor.u32 1.1754944e-38, %v4672
    %v4674 = vsel %vm4671, %v4673, %v4669
    %v4675 = vmul.f32 %v4609, %v4674
    %v4676 = vrcp.pop %v4630
    %v4677 = vmul.f32 %v4630, %v4676
    %v4678 = vsub.f32 1.0, %v4677
    %v4679 = vmul.f32 %v4676, %v4678
    %v4680 = vadd.f32 %v4676, %v4679
    %vm4681 = vweird.f32 %v4630
    %vm4682 = vweird.f32 %v4676
    %vm4683 = vmor %vm4681, %vm4682
    %v4684 = vsel %vm4683, %v4676, %v4680
    %v4685 = vand.u32 2147483647, %v4630
    %vm4686 = vcmp.eq.f32.partialorder %v4685, 8.507059e+37
    %v4687 = vand.u32 %v4630, 2147483648
    %v4688 = vor.u32 1.1754944e-38, %v4687
    %v4689 = vsel %vm4686, %v4688, %v4684
    %v4690 = vmul.f32 %v4611, %v4689
    %v4691 = vrcp.pop %v4633
    %v4692 = vmul.f32 %v4633, %v4691
    %v4693 = vsub.f32 1.0, %v4692
    %v4694 = vmul.f32 %v4691, %v4693
    %v4695 = vadd.f32 %v4691, %v4694
    %vm4696 = vweird.f32 %v4633
    %vm4697 = vweird.f32 %v4691
    %vm4698 = vmor %vm4696, %vm4697
    %v4699 = vsel %vm4698, %v4691, %v4695
    %v4700 = vand.u32 2147483647, %v4633
    %vm4701 = vcmp.eq.f32.partialorder %v4700, 8.507059e+37
    %v4702 = vand.u32 %v4633, 2147483648
    %v4703 = vor.u32 1.1754944e-38, %v4702
    %v4704 = vsel %vm4701, %v4703, %v4699
    %v4705 = vmul.f32 %v4613, %v4704
    %v4706 = vrcp.pop %v4636
    %v4707 = vmul.f32 %v4636, %v4706
    %v4708 = vsub.f32 1.0, %v4707
    %v4709 = vmul.f32 %v4706, %v4708
    %v4710 = vadd.f32 %v4706, %v4709
    %vm4711 = vweird.f32 %v4636
    %vm4712 = vweird.f32 %v4706
    %vm4713 = vmor %vm4711, %vm4712
    %v4714 = vsel %vm4713, %v4706, %v4710
    %v4715 = vand.u32 2147483647, %v4636
    %vm4716 = vcmp.eq.f32.partialorder %v4715, 8.507059e+37
    %v4717 = vand.u32 %v4636, 2147483648
    %v4718 = vor.u32 1.1754944e-38, %v4717
    %v4719 = vsel %vm4716, %v4718, %v4714
    %v4720 = vmul.f32 %v4615, %v4719
    %v4721 = vrcp.pop %v4639
    %v4722 = vmul.f32 %v4639, %v4721
    %v4723 = vsub.f32 1.0, %v4722
    %v4724 = vmul.f32 %v4721, %v4723
    %v4725 = vadd.f32 %v4721, %v4724
    %vm4726 = vweird.f32 %v4639
    %vm4727 = vweird.f32 %v4721
    %vm4728 = vmor %vm4726, %vm4727
    %v4729 = vsel %vm4728, %v4721, %v4725
    %v4730 = vand.u32 2147483647, %v4639
    %vm4731 = vcmp.eq.f32.partialorder %v4730, 8.507059e+37
    %v4732 = vand.u32 %v4639, 2147483648
    %v4733 = vor.u32 1.1754944e-38, %v4732
    %v4734 = vsel %vm4731, %v4733, %v4729
    %v4735 = vmul.f32 %v4617, %v4734
    %v4736 = vrcp.pop %v4642
    %v4737 = vmul.f32 %v4642, %v4736
    %v4738 = vsub.f32 1.0, %v4737
    %v4739 = vmul.f32 %v4736, %v4738
    %v4740 = vadd.f32 %v4736, %v4739
    %vm4741 = vweird.f32 %v4642
    %vm4742 = vweird.f32 %v4736
    %vm4743 = vmor %vm4741, %vm4742
    %v4744 = vsel %vm4743, %v4736, %v4740
    %v4745 = vand.u32 2147483647, %v4642
    %vm4746 = vcmp.eq.f32.partialorder %v4745, 8.507059e+37
    %v4747 = vand.u32 %v4642, 2147483648
    %v4748 = vor.u32 1.1754944e-38, %v4747
    %v4749 = vsel %vm4746, %v4748, %v4744
    %v4750 = vmul.f32 %v4619, %v4749
    %v4751 = vrcp.pop %v4645
    %v4752 = vmul.f32 %v4645, %v4751
    %v4753 = vsub.f32 1.0, %v4752
    %v4754 = vmul.f32 %v4751, %v4753
    %v4755 = vadd.f32 %v4751, %v4754
    %vm4756 = vweird.f32 %v4645
    %vm4757 = vweird.f32 %v4751
    %vm4758 = vmor %vm4756, %vm4757
    %v4759 = vsel %vm4758, %v4751, %v4755
    %v4760 = vand.u32 2147483647, %v4645
    %vm4761 = vcmp.eq.f32.partialorder %v4760, 8.507059e+37
    %v4762 = vand.u32 %v4645, 2147483648
    %v4763 = vor.u32 1.1754944e-38, %v4762
    %v4764 = vsel %vm4761, %v4763, %v4759
    %v4765 = vmul.f32 %v4621, %v4764
    %4766 = vset.pattern.permute.xlu0 2
    %4767 = vperm.xlu0 %4766, %v3708
    %v4768 = vpop.permute.xlu0 %4767
    %4769 = vset.pattern.permute.xlu0 2
    %4770 = vperm.xlu0 %4769, %v3709
    %v4771 = vpop.permute.xlu0 %4770
    %4772 = vset.pattern.permute.xlu0 2
    %4773 = vperm.xlu0 %4772, %v3710
    %v4774 = vpop.permute.xlu0 %4773
    %4775 = vset.pattern.permute.xlu0 2
    %4776 = vperm.xlu0 %4775, %v3711
    %v4777 = vpop.permute.xlu0 %4776
    %4778 = vset.pattern.permute.xlu0 2
    %4779 = vperm.xlu0 %4778, %v3712
    %v4780 = vpop.permute.xlu0 %4779
    %4781 = vset.pattern.permute.xlu0 2
    %4782 = vperm.xlu0 %4781, %v3713
    %v4783 = vpop.permute.xlu0 %4782
    %4784 = vset.pattern.permute.xlu0 2
    %4785 = vperm.xlu0 %4784, %v3714
    %v4786 = vpop.permute.xlu0 %4785
    %4787 = vset.pattern.permute.xlu0 2
    %4788 = vperm.xlu0 %4787, %v3715
    %v4789 = vpop.permute.xlu0 %4788
    %v4790 = vperm.slane %v4768, %v3490
    %v4791 = vperm.slane %v4771, %v3789
    %v4792 = vsel %vm3791, %v4791, %v4790
    %v4793 = vperm.slane %v4774, %v3793
    %v4794 = vsel %vm3795, %v4793, %v4792
    %v4795 = vperm.slane %v4777, %v3797
    %v4796 = vsel %vm3799, %v4795, %v4794
    %v4797 = vperm.slane %v4780, %v3490
    %v4798 = vperm.slane %v4783, %v3789
    %v4799 = vsel %vm3791, %v4798, %v4797
    %v4800 = vperm.slane %v4786, %v3793
    %v4801 = vsel %vm3795, %v4800, %v4799
    %v4802 = vperm.slane %v4789, %v3797
    %v4803 = vsel %vm3799, %v4802, %v4801
    %v4804 = vsel %vm3525, %v4796, %v4796
    %v4805 = vsel %vm3527, %v4796, %v4804
    %v4806 = vsel %vm3529, %v4796, %v4805
    %v4807 = vsel %vm3531, %v4796, %v4806
    %v4808 = vsel %vm3533, %v4796, %v4807
    %v4809 = vsel %vm3535, %v4796, %v4808
    %v4810 = vsel %vm3525, %v4803, %v4803
    %v4811 = vsel %vm3527, %v4803, %v4810
    %v4812 = vsel %vm3529, %v4803, %v4811
    %v4813 = vsel %vm3531, %v4803, %v4812
    %v4814 = vsel %vm3533, %v4803, %v4813
    %v4815 = vsel %vm3535, %v4803, %v4814
    %v4818 = vmul.f32 %v4660, %v4809
    %v4819 = vmul.f32 %v4675, %v4809
    %v4820 = vmul.f32 %v4690, %v4809
    %v4821 = vmul.f32 %v4705, %v4809
    %v4822 = vmul.f32 %v4720, %v4815
    %v4823 = vmul.f32 %v4735, %v4815
    %v4824 = vmul.f32 %v4750, %v4815
    %v4825 = vmul.f32 %v4765, %v4815
    %v4826 = vsel %vm845, %v4818, 0.0
    %4827 = vadd.xlane.f32.xlu0 %v4826
    %v4828 = vpop.xlane.xlu0 %4827
    %v4829 = vsel %vm845, %v4819, 0.0
    %4830 = vadd.xlane.f32.xlu0 %v4829
    %v4831 = vpop.xlane.xlu0 %4830
    %v4832 = vsel %vm845, %v4820, 0.0
    %4833 = vadd.xlane.f32.xlu0 %v4832
    %v4834 = vpop.xlane.xlu0 %4833
    %v4835 = vsel %vm845, %v4821, 0.0
    %4836 = vadd.xlane.f32.xlu0 %v4835
    %v4837 = vpop.xlane.xlu0 %4836
    %v4838 = vsel %vm845, %v4822, 0.0
    %4839 = vadd.xlane.f32.xlu0 %v4838
    %v4840 = vpop.xlane.xlu0 %4839
    %v4841 = vsel %vm845, %v4823, 0.0
    %4842 = vadd.xlane.f32.xlu0 %v4841
    %v4843 = vpop.xlane.xlu0 %4842
    %v4844 = vsel %vm845, %v4824, 0.0
    %4845 = vadd.xlane.f32.xlu0 %v4844
    %v4846 = vpop.xlane.xlu0 %4845
    %v4847 = vsel %vm845, %v4825, 0.0
    %4848 = vadd.xlane.f32.xlu0 %v4847
    %v4849 = vpop.xlane.xlu0 %4848
    %4850 = vset.pattern.permute.xlu0 3
    %4851 = vperm.xlu0 %4850, %v3660
    %v4852 = vpop.permute.xlu0 %4851
    %4854 = vset.pattern.permute.xlu0 3
    %4855 = vperm.xlu0 %4854, %v3661
    %v4856 = vpop.permute.xlu0 %4855
    %4858 = vset.pattern.permute.xlu0 3
    %4859 = vperm.xlu0 %4858, %v3662
    %v4860 = vpop.permute.xlu0 %4859
    %4862 = vset.pattern.permute.xlu0 3
    %4863 = vperm.xlu0 %4862, %v3663
    %v4864 = vpop.permute.xlu0 %4863
    %4866 = vset.pattern.permute.xlu0 3
    %4867 = vperm.xlu0 %4866, %v3664
    %v4868 = vpop.permute.xlu0 %4867
    %4870 = vset.pattern.permute.xlu0 3
    %4871 = vperm.xlu0 %4870, %v3665
    %v4872 = vpop.permute.xlu0 %4871
    %4874 = vset.pattern.permute.xlu0 3
    %4875 = vperm.xlu0 %4874, %v3666
    %v4876 = vpop.permute.xlu0 %4875
    %4878 = vset.pattern.permute.xlu0 3
    %4879 = vperm.xlu0 %4878, %v3667
    %v4880 = vpop.permute.xlu0 %4879
    %4882 = vset.pattern.permute.xlu0 3
    %4883 = vperm.xlu0 %4882, %v3684
    %v4884 = vpop.permute.xlu0 %4883
    %4885 = vset.pattern.permute.xlu0 3
    %4886 = vperm.xlu0 %4885, %v3685
    %v4887 = vpop.permute.xlu0 %4886
    %4888 = vset.pattern.permute.xlu0 3
    %4889 = vperm.xlu0 %4888, %v3686
    %v4890 = vpop.permute.xlu0 %4889
    %4891 = vset.pattern.permute.xlu0 3
    %4892 = vperm.xlu0 %4891, %v3687
    %v4893 = vpop.permute.xlu0 %4892
    %4894 = vset.pattern.permute.xlu0 3
    %4895 = vperm.xlu0 %4894, %v3688
    %v4896 = vpop.permute.xlu0 %4895
    %4897 = vset.pattern.permute.xlu0 3
    %4898 = vperm.xlu0 %4897, %v3689
    %v4899 = vpop.permute.xlu0 %4898
    %4900 = vset.pattern.permute.xlu0 3
    %4901 = vperm.xlu0 %4900, %v3690
    %v4902 = vpop.permute.xlu0 %4901
    %4903 = vset.pattern.permute.xlu0 3
    %4904 = vperm.xlu0 %4903, %v3691
    %v4905 = vpop.permute.xlu0 %4904
    %v4906 = vperm.slane %v4884, %v3490
    %v4907 = vperm.slane %v4887, %v3789
    %v4908 = vsel %vm3791, %v4907, %v4906
    %v4909 = vperm.slane %v4890, %v3793
    %v4910 = vsel %vm3795, %v4909, %v4908
    %v4911 = vperm.slane %v4893, %v3797
    %v4912 = vsel %vm3799, %v4911, %v4910
    %v4913 = vperm.slane %v4896, %v3490
    %v4914 = vperm.slane %v4899, %v3789
    %v4915 = vsel %vm3791, %v4914, %v4913
    %v4916 = vperm.slane %v4902, %v3793
    %v4917 = vsel %vm3795, %v4916, %v4915
    %v4918 = vperm.slane %v4905, %v3797
    %v4919 = vsel %vm3799, %v4918, %v4917
    %v4920 = vsel %vm3525, %v4912, %v4912
    %v4921 = vsel %vm3527, %v4912, %v4920
    %v4922 = vsel %vm3529, %v4912, %v4921
    %v4923 = vsel %vm3531, %v4912, %v4922
    %v4924 = vsel %vm3533, %v4912, %v4923
    %v4925 = vsel %vm3535, %v4912, %v4924
    %v4926 = vsel %vm3525, %v4919, %v4919
    %v4927 = vsel %vm3527, %v4919, %v4926
    %v4928 = vsel %vm3529, %v4919, %v4927
    %v4929 = vsel %vm3531, %v4919, %v4928
    %v4930 = vsel %vm3533, %v4919, %v4929
    %v4931 = vsel %vm3535, %v4919, %v4930
    %v4934 = vmul.f32 %v4852, %v4925
    %v4935 = vmul.f32 %v4856, %v4925
    %v4936 = vmul.f32 %v4860, %v4925
    %v4937 = vmul.f32 %v4864, %v4925
    %v4938 = vmul.f32 %v4868, %v4931
    %v4939 = vmul.f32 %v4872, %v4931
    %v4940 = vmul.f32 %v4876, %v4931
    %v4941 = vmul.f32 %v4880, %v4931
    %v4942 = vsel %vm845, %v4934, -inf
    %4943 = vmax.xlane.f32.xlu0 %v4942
    %v4944 = vpop.xlane.xlu0 %4943
    %v4945 = vsel %vm845, %v4935, -inf
    %4946 = vmax.xlane.f32.xlu0 %v4945
    %v4947 = vpop.xlane.xlu0 %4946
    %v4948 = vsel %vm845, %v4936, -inf
    %4949 = vmax.xlane.f32.xlu0 %v4948
    %v4950 = vpop.xlane.xlu0 %4949
    %v4951 = vsel %vm845, %v4937, -inf
    %4952 = vmax.xlane.f32.xlu0 %v4951
    %v4953 = vpop.xlane.xlu0 %4952
    %v4954 = vsel %vm845, %v4938, -inf
    %4955 = vmax.xlane.f32.xlu0 %v4954
    %v4956 = vpop.xlane.xlu0 %4955
    %v4957 = vsel %vm845, %v4939, -inf
    %4958 = vmax.xlane.f32.xlu0 %v4957
    %v4959 = vpop.xlane.xlu0 %4958
    %v4960 = vsel %vm845, %v4940, -inf
    %4961 = vmax.xlane.f32.xlu0 %v4960
    %v4962 = vpop.xlane.xlu0 %4961
    %v4963 = vsel %vm845, %v4941, -inf
    %4964 = vmax.xlane.f32.xlu0 %v4963
    %v4965 = vpop.xlane.xlu0 %4964
    %v4966 = vsub.f32 %v4934, %v4944
    %v4967 = vsub.f32 %v4935, %v4947
    %v4968 = vsub.f32 %v4936, %v4950
    %v4969 = vsub.f32 %v4937, %v4953
    %v4970 = vsub.f32 %v4938, %v4956
    %v4971 = vsub.f32 %v4939, %v4959
    %v4972 = vsub.f32 %v4940, %v4962
    %v4973 = vsub.f32 %v4941, %v4965
    %v4974 = vmul.f32 %v4966, 1.442695
    %v4975 = vpow.pop %v4974
    %v4976 = vmul.f32 %v4967, 1.442695
    %v4977 = vpow.pop %v4976
    %v4978 = vmul.f32 %v4968, 1.442695
    %v4979 = vpow.pop %v4978
    %v4980 = vmul.f32 %v4969, 1.442695
    %v4981 = vpow.pop %v4980
    %v4982 = vmul.f32 %v4970, 1.442695
    %v4983 = vpow.pop %v4982
    %v4984 = vmul.f32 %v4971, 1.442695
    %v4985 = vpow.pop %v4984
    %v4986 = vmul.f32 %v4972, 1.442695
    %v4987 = vpow.pop %v4986
    %v4988 = vmul.f32 %v4973, 1.442695
    %v4989 = vpow.pop %v4988
    %v4990 = vsel %vm845, %v4975, 0.0
    %4991 = vadd.xlane.f32.xlu0 %v4990
    %v4992 = vpop.xlane.xlu0 %4991
    %v4993 = vsel %vm845, %v4977, 0.0
    %4994 = vadd.xlane.f32.xlu0 %v4993
    %v4995 = vpop.xlane.xlu0 %4994
    %v4996 = vsel %vm845, %v4979, 0.0
    %4997 = vadd.xlane.f32.xlu0 %v4996
    %v4998 = vpop.xlane.xlu0 %4997
    %v4999 = vsel %vm845, %v4981, 0.0
    %5000 = vadd.xlane.f32.xlu0 %v4999
    %v5001 = vpop.xlane.xlu0 %5000
    %v5002 = vsel %vm845, %v4983, 0.0
    %5003 = vadd.xlane.f32.xlu0 %v5002
    %v5004 = vpop.xlane.xlu0 %5003
    %v5005 = vsel %vm845, %v4985, 0.0
    %5006 = vadd.xlane.f32.xlu0 %v5005
    %v5007 = vpop.xlane.xlu0 %5006
    %v5008 = vsel %vm845, %v4987, 0.0
    %5009 = vadd.xlane.f32.xlu0 %v5008
    %v5010 = vpop.xlane.xlu0 %5009
    %v5011 = vsel %vm845, %v4989, 0.0
    %5012 = vadd.xlane.f32.xlu0 %v5011
    %v5013 = vpop.xlane.xlu0 %5012
    %v5014 = vrcp.pop %v4992
    %v5015 = vmul.f32 %v4992, %v5014
    %v5016 = vsub.f32 1.0, %v5015
    %v5017 = vmul.f32 %v5014, %v5016
    %v5018 = vadd.f32 %v5014, %v5017
    %vm5019 = vweird.f32 %v4992
    %vm5020 = vweird.f32 %v5014
    %vm5021 = vmor %vm5019, %vm5020
    %v5022 = vsel %vm5021, %v5014, %v5018
    %v5023 = vand.u32 2147483647, %v4992
    %vm5024 = vcmp.eq.f32.partialorder %v5023, 8.507059e+37
    %v5025 = vand.u32 %v4992, 2147483648
    %v5026 = vor.u32 1.1754944e-38, %v5025
    %v5027 = vsel %vm5024, %v5026, %v5022
    %v5028 = vmul.f32 %v4975, %v5027
    %v5029 = vrcp.pop %v4995
    %v5030 = vmul.f32 %v4995, %v5029
    %v5031 = vsub.f32 1.0, %v5030
    %v5032 = vmul.f32 %v5029, %v5031
    %v5033 = vadd.f32 %v5029, %v5032
    %vm5034 = vweird.f32 %v4995
    %vm5035 = vweird.f32 %v5029
    %vm5036 = vmor %vm5034, %vm5035
    %v5037 = vsel %vm5036, %v5029, %v5033
    %v5038 = vand.u32 2147483647, %v4995
    %vm5039 = vcmp.eq.f32.partialorder %v5038, 8.507059e+37
    %v5040 = vand.u32 %v4995, 2147483648
    %v5041 = vor.u32 1.1754944e-38, %v5040
    %v5042 = vsel %vm5039, %v5041, %v5037
    %v5043 = vmul.f32 %v4977, %v5042
    %v5044 = vrcp.pop %v4998
    %v5045 = vmul.f32 %v4998, %v5044
    %v5046 = vsub.f32 1.0, %v5045
    %v5047 = vmul.f32 %v5044, %v5046
    %v5048 = vadd.f32 %v5044, %v5047
    %vm5049 = vweird.f32 %v4998
    %vm5050 = vweird.f32 %v5044
    %vm5051 = vmor %vm5049, %vm5050
    %v5052 = vsel %vm5051, %v5044, %v5048
    %v5053 = vand.u32 2147483647, %v4998
    %vm5054 = vcmp.eq.f32.partialorder %v5053, 8.507059e+37
    %v5055 = vand.u32 %v4998, 2147483648
    %v5056 = vor.u32 1.1754944e-38, %v5055
    %v5057 = vsel %vm5054, %v5056, %v5052
    %v5058 = vmul.f32 %v4979, %v5057
    %v5059 = vrcp.pop %v5001
    %v5060 = vmul.f32 %v5001, %v5059
    %v5061 = vsub.f32 1.0, %v5060
    %v5062 = vmul.f32 %v5059, %v5061
    %v5063 = vadd.f32 %v5059, %v5062
    %vm5064 = vweird.f32 %v5001
    %vm5065 = vweird.f32 %v5059
    %vm5066 = vmor %vm5064, %vm5065
    %v5067 = vsel %vm5066, %v5059, %v5063
    %v5068 = vand.u32 2147483647, %v5001
    %vm5069 = vcmp.eq.f32.partialorder %v5068, 8.507059e+37
    %v5070 = vand.u32 %v5001, 2147483648
    %v5071 = vor.u32 1.1754944e-38, %v5070
    %v5072 = vsel %vm5069, %v5071, %v5067
    %v5073 = vmul.f32 %v4981, %v5072
    %v5074 = vrcp.pop %v5004
    %v5075 = vmul.f32 %v5004, %v5074
    %v5076 = vsub.f32 1.0, %v5075
    %v5077 = vmul.f32 %v5074, %v5076
    %v5078 = vadd.f32 %v5074, %v5077
    %vm5079 = vweird.f32 %v5004
    %vm5080 = vweird.f32 %v5074
    %vm5081 = vmor %vm5079, %vm5080
    %v5082 = vsel %vm5081, %v5074, %v5078
    %v5083 = vand.u32 2147483647, %v5004
    %vm5084 = vcmp.eq.f32.partialorder %v5083, 8.507059e+37
    %v5085 = vand.u32 %v5004, 2147483648
    %v5086 = vor.u32 1.1754944e-38, %v5085
    %v5087 = vsel %vm5084, %v5086, %v5082
    %v5088 = vmul.f32 %v4983, %v5087
    %v5089 = vrcp.pop %v5007
    %v5090 = vmul.f32 %v5007, %v5089
    %v5091 = vsub.f32 1.0, %v5090
    %v5092 = vmul.f32 %v5089, %v5091
    %v5093 = vadd.f32 %v5089, %v5092
    %vm5094 = vweird.f32 %v5007
    %vm5095 = vweird.f32 %v5089
    %vm5096 = vmor %vm5094, %vm5095
    %v5097 = vsel %vm5096, %v5089, %v5093
    %v5098 = vand.u32 2147483647, %v5007
    %vm5099 = vcmp.eq.f32.partialorder %v5098, 8.507059e+37
    %v5100 = vand.u32 %v5007, 2147483648
    %v5101 = vor.u32 1.1754944e-38, %v5100
    %v5102 = vsel %vm5099, %v5101, %v5097
    %v5103 = vmul.f32 %v4985, %v5102
    %v5104 = vrcp.pop %v5010
    %v5105 = vmul.f32 %v5010, %v5104
    %v5106 = vsub.f32 1.0, %v5105
    %v5107 = vmul.f32 %v5104, %v5106
    %v5108 = vadd.f32 %v5104, %v5107
    %vm5109 = vweird.f32 %v5010
    %vm5110 = vweird.f32 %v5104
    %vm5111 = vmor %vm5109, %vm5110
    %v5112 = vsel %vm5111, %v5104, %v5108
    %v5113 = vand.u32 2147483647, %v5010
    %vm5114 = vcmp.eq.f32.partialorder %v5113, 8.507059e+37
    %v5115 = vand.u32 %v5010, 2147483648
    %v5116 = vor.u32 1.1754944e-38, %v5115
    %v5117 = vsel %vm5114, %v5116, %v5112
    %v5118 = vmul.f32 %v4987, %v5117
    %v5119 = vrcp.pop %v5013
    %v5120 = vmul.f32 %v5013, %v5119
    %v5121 = vsub.f32 1.0, %v5120
    %v5122 = vmul.f32 %v5119, %v5121
    %v5123 = vadd.f32 %v5119, %v5122
    %vm5124 = vweird.f32 %v5013
    %vm5125 = vweird.f32 %v5119
    %vm5126 = vmor %vm5124, %vm5125
    %v5127 = vsel %vm5126, %v5119, %v5123
    %v5128 = vand.u32 2147483647, %v5013
    %vm5129 = vcmp.eq.f32.partialorder %v5128, 8.507059e+37
    %v5130 = vand.u32 %v5013, 2147483648
    %v5131 = vor.u32 1.1754944e-38, %v5130
    %v5132 = vsel %vm5129, %v5131, %v5127
    %v5133 = vmul.f32 %v4989, %v5132
    %5134 = vset.pattern.permute.xlu0 3
    %5135 = vperm.xlu0 %5134, %v3708
    %v5136 = vpop.permute.xlu0 %5135
    %5137 = vset.pattern.permute.xlu0 3
    %5138 = vperm.xlu0 %5137, %v3709
    %v5139 = vpop.permute.xlu0 %5138
    %5140 = vset.pattern.permute.xlu0 3
    %5141 = vperm.xlu0 %5140, %v3710
    %v5142 = vpop.permute.xlu0 %5141
    %5143 = vset.pattern.permute.xlu0 3
    %5144 = vperm.xlu0 %5143, %v3711
    %v5145 = vpop.permute.xlu0 %5144
    %5146 = vset.pattern.permute.xlu0 3
    %5147 = vperm.xlu0 %5146, %v3712
    %v5148 = vpop.permute.xlu0 %5147
    %5149 = vset.pattern.permute.xlu0 3
    %5150 = vperm.xlu0 %5149, %v3713
    %v5151 = vpop.permute.xlu0 %5150
    %5152 = vset.pattern.permute.xlu0 3
    %5153 = vperm.xlu0 %5152, %v3714
    %v5154 = vpop.permute.xlu0 %5153
    %5155 = vset.pattern.permute.xlu0 3
    %5156 = vperm.xlu0 %5155, %v3715
    %v5157 = vpop.permute.xlu0 %5156
    %v5158 = vperm.slane %v5136, %v3490
    %v5159 = vperm.slane %v5139, %v3789
    %v5160 = vsel %vm3791, %v5159, %v5158
    %v5161 = vperm.slane %v5142, %v3793
    %v5162 = vsel %vm3795, %v5161, %v5160
    %v5163 = vperm.slane %v5145, %v3797
    %v5164 = vsel %vm3799, %v5163, %v5162
    %v5165 = vperm.slane %v5148, %v3490
    %v5166 = vperm.slane %v5151, %v3789
    %v5167 = vsel %vm3791, %v5166, %v5165
    %v5168 = vperm.slane %v5154, %v3793
    %v5169 = vsel %vm3795, %v5168, %v5167
    %v5170 = vperm.slane %v5157, %v3797
    %v5171 = vsel %vm3799, %v5170, %v5169
    %v5172 = vsel %vm3525, %v5164, %v5164
    %v5173 = vsel %vm3527, %v5164, %v5172
    %v5174 = vsel %vm3529, %v5164, %v5173
    %v5175 = vsel %vm3531, %v5164, %v5174
    %v5176 = vsel %vm3533, %v5164, %v5175
    %v5177 = vsel %vm3535, %v5164, %v5176
    %v5178 = vsel %vm3525, %v5171, %v5171
    %v5179 = vsel %vm3527, %v5171, %v5178
    %v5180 = vsel %vm3529, %v5171, %v5179
    %v5181 = vsel %vm3531, %v5171, %v5180
    %v5182 = vsel %vm3533, %v5171, %v5181
    %v5183 = vsel %vm3535, %v5171, %v5182
    %v5186 = vmul.f32 %v5028, %v5177
    %v5187 = vmul.f32 %v5043, %v5177
    %v5188 = vmul.f32 %v5058, %v5177
    %v5189 = vmul.f32 %v5073, %v5177
    %v5190 = vmul.f32 %v5088, %v5183
    %v5191 = vmul.f32 %v5103, %v5183
    %v5192 = vmul.f32 %v5118, %v5183
    %v5193 = vmul.f32 %v5133, %v5183
    %v5194 = vsel %vm845, %v5186, 0.0
    %5195 = vadd.xlane.f32.xlu0 %v5194
    %v5196 = vpop.xlane.xlu0 %5195
    %v5197 = vsel %vm845, %v5187, 0.0
    %5198 = vadd.xlane.f32.xlu0 %v5197
    %v5199 = vpop.xlane.xlu0 %5198
    %v5200 = vsel %vm845, %v5188, 0.0
    %5201 = vadd.xlane.f32.xlu0 %v5200
    %v5202 = vpop.xlane.xlu0 %5201
    %v5203 = vsel %vm845, %v5189, 0.0
    %5204 = vadd.xlane.f32.xlu0 %v5203
    %v5205 = vpop.xlane.xlu0 %5204
    %v5206 = vsel %vm845, %v5190, 0.0
    %5207 = vadd.xlane.f32.xlu0 %v5206
    %v5208 = vpop.xlane.xlu0 %5207
    %v5209 = vsel %vm845, %v5191, 0.0
    %5210 = vadd.xlane.f32.xlu0 %v5209
    %v5211 = vpop.xlane.xlu0 %5210
    %v5212 = vsel %vm845, %v5192, 0.0
    %5213 = vadd.xlane.f32.xlu0 %v5212
    %v5214 = vpop.xlane.xlu0 %5213
    %v5215 = vsel %vm845, %v5193, 0.0
    %5216 = vadd.xlane.f32.xlu0 %v5215
    %v5217 = vpop.xlane.xlu0 %5216
    %v5218 = vsel %vm331, %v4092, %v4460
    %v5219 = vsel %vm331, %v4095, %v4463
    %v5220 = vsel %vm331, %v4098, %v4466
    %v5221 = vsel %vm331, %v4101, %v4469
    %v5222 = vsel %vm331, %v4104, %v4472
    %v5223 = vsel %vm331, %v4107, %v4475
    %v5224 = vsel %vm331, %v4110, %v4478
    %v5225 = vsel %vm331, %v4113, %v4481
    %vm5226 = vcmask 15360
    %v5227 = vsel %vm5226, %v5218, %v4828
    %v5228 = vsel %vm5226, %v5219, %v4831
    %v5229 = vsel %vm5226, %v5220, %v4834
    %v5230 = vsel %vm5226, %v5221, %v4837
    %v5231 = vsel %vm5226, %v5222, %v4840
    %v5232 = vsel %vm5226, %v5223, %v4843
    %v5233 = vsel %vm5226, %v5224, %v4846
    %v5234 = vsel %vm5226, %v5225, %v4849
    %vm5235 = vcmask 23552
    %v5236 = vsel %vm5235, %v5227, %v5196
    %v5237 = vsel %vm5235, %v5228, %v5199
    %v5238 = vsel %vm5235, %v5229, %v5202
    %v5239 = vsel %vm5235, %v5230, %v5205
    %v5240 = vsel %vm5235, %v5231, %v5208
    %v5241 = vsel %vm5235, %v5232, %v5211
    %v5242 = vsel %vm5235, %v5233, %v5214
    %v5243 = vsel %vm5235, %v5234, %v5217
    %v5244 = vld [vmem:[%s12] sm:$0xf]
    %v5245 = vld [vmem:[%s13] sm:$0x1]
    %v5247 = vperm.slane %v5245, 0
    %vm5249 = vcmask 31744
    %v5251 = vsel %vm5249, %v5236, 0
    %v5254 = vsel %vm5249, %v5237, 0
    %v5257 = vsel %vm5249, %v5238, 0
    %v5260 = vsel %vm5249, %v5239, 0
    %v5263 = vsel %vm5249, %v5240, 0
    %v5266 = vsel %vm5249, %v5241, 0
    %v5269 = vsel %vm5249, %v5242, 0
    %v5272 = vsel %vm5249, %v5243, 0
    %v5275 = vsel %vm89, %v5244, 0
    %5277 = vmatpush.msra.mxu0 0.0
    %5278 = vmatpush.msra.mxu0 0.0
    %5279 = vmatpush.msra.mxu0 0.0
    %5280 = vmatpush.msra.mxu0 0.0
    %5281 = vmatpush.msra.mxu0 0.0
    %5282 = vmatpush.msra.mxu0 0.0
    %5283 = vmatpush.msra.mxu0 0.0
    %5284 = vmatpush.msra.mxu0 0.0
    %5285 = vmatpush.msra.mxu0 0.0
    %5286 = vmatpush.msra.mxu0 0.0
    %5287 = vmatpush.msra.mxu0 0.0
    %5288 = vmatpush.msra.mxu0 0.0
    %5289 = vmatpush.msra.mxu0 0.0
    %5290 = vmatpush.msra.mxu0 0.0
    %5291 = vmatpush.msra.mxu0 0.0
    %5292 = vmatpush.msra.mxu0 %v5275
    %5293 = vmatmul.f32.gmra.mxu0 %v5251
    %v5294 = vpop.f32.mrf.mxu0
    %v5295 = vadd.f32 %v5247, %v5294
    %5296 = vmatmul.f32.gmra.mxu0 %v5254
    %v5297 = vpop.f32.mrf.mxu0
    %v5298 = vadd.f32 %v5247, %v5297
    %5299 = vmatmul.f32.gmra.mxu0 %v5257
    %v5300 = vpop.f32.mrf.mxu0
    %v5301 = vadd.f32 %v5247, %v5300
    %5302 = vmatmul.f32.gmra.mxu0 %v5260
    %v5303 = vpop.f32.mrf.mxu0
    %v5304 = vadd.f32 %v5247, %v5303
    %5305 = vmatmul.f32.gmra.mxu0 %v5263
    %v5306 = vpop.f32.mrf.mxu0
    %v5307 = vadd.f32 %v5247, %v5306
    %5308 = vmatmul.f32.gmra.mxu0 %v5266
    %v5309 = vpop.f32.mrf.mxu0
    %v5310 = vadd.f32 %v5247, %v5309
    %5311 = vmatmul.f32.gmra.mxu0 %v5269
    %v5312 = vpop.f32.mrf.mxu0
    %v5313 = vadd.f32 %v5247, %v5312
    %5314 = vmatmul.f32.gmra.mxu0 %v5272
    %v5315 = vpop.f32.mrf.mxu0
    %v5316 = vadd.f32 %v5247, %v5315
    %5317 = vdwg.mxu0
    %v5318 = vrot.slane %v5295, 4
    %v5319 = vsel %vm2841, 0.0, %v5318
    %v5321 = vunpack.c.l.s4 1983009808
    %v5322 = vunpack.c.0.s8 %v5321
    %v5323 = vperm.slane %v5295, %v5322
    %v5325 = vunpack.c.l.s4 1983009808
    %v5326 = vunpack.c.0.s8 %v5325
    %v5327 = vperm.slane %v5319, %v5326
    %v5328 = vrot.slane %v5307, 4
    %v5329 = vsel %vm2841, 0.0, %v5328
    %v5331 = vunpack.c.l.s4 1983009808
    %v5332 = vunpack.c.0.s8 %v5331
    %v5333 = vperm.slane %v5307, %v5332
    %v5335 = vunpack.c.l.s4 1983009808
    %v5336 = vunpack.c.0.s8 %v5335
    %v5337 = vperm.slane %v5329, %v5336
    %v5338 = vrot.slane %v5333, 4
    %v5339 = vsel %vm2841, %v5338, %v5323
    %v5340 = vrot.slane %v5323, 4
    %v5341 = vsel %vm2841, %v5333, %v5340
    %v5343 = vunpack.c.l.s4 1934713408
    %v5344 = vunpack.c.0.s8 %v5343
    %v5345 = vperm.slane %v5339, %v5344
    %v5347 = vunpack.c.l.s4 1934713408
    %v5348 = vunpack.c.0.s8 %v5347
    %v5349 = vperm.slane %v5341, %v5348
    %v5350 = vrot.slane %v5337, 4
    %v5351 = vsel %vm2841, %v5350, %v5327
    %v5352 = vrot.slane %v5327, 4
    %v5353 = vsel %vm2841, %v5337, %v5352
    %v5355 = vunpack.c.l.s4 1934713408
    %v5356 = vunpack.c.0.s8 %v5355
    %v5357 = vperm.slane %v5351, %v5356
    %v5359 = vunpack.c.l.s4 1934713408
    %v5360 = vunpack.c.0.s8 %v5359
    %v5361 = vperm.slane %v5353, %v5360
    %v5362 = vrot.slane %v5345, 4
    %v5363 = vsel %vm2841, 0.0, %v5362
    %v5364 = vrot.slane %v5349, 4
    %v5365 = vsel %vm2841, 0.0, %v5364
    %v5366 = vrot.slane %v5357, 4
    %v5367 = vsel %vm2841, 0.0, %v5366
    %v5368 = vrot.slane %v5361, 4
    %v5369 = vsel %vm2841, 0.0, %v5368
    %v5370 = vrot.slane %v5298, 4
    %v5371 = vsel %vm2841, 0.0, %v5370
    %v5373 = vunpack.c.l.s4 1983009808
    %v5374 = vunpack.c.0.s8 %v5373
    %v5375 = vperm.slane %v5298, %v5374
    %v5377 = vunpack.c.l.s4 1983009808
    %v5378 = vunpack.c.0.s8 %v5377
    %v5379 = vperm.slane %v5371, %v5378
    %v5380 = vrot.slane %v5310, 4
    %v5381 = vsel %vm2841, 0.0, %v5380
    %v5383 = vunpack.c.l.s4 1983009808
    %v5384 = vunpack.c.0.s8 %v5383
    %v5385 = vperm.slane %v5310, %v5384
    %v5387 = vunpack.c.l.s4 1983009808
    %v5388 = vunpack.c.0.s8 %v5387
    %v5389 = vperm.slane %v5381, %v5388
    %v5390 = vrot.slane %v5385, 4
    %v5391 = vsel %vm2841, %v5390, %v5375
    %v5392 = vrot.slane %v5375, 4
    %v5393 = vsel %vm2841, %v5385, %v5392
    %v5395 = vunpack.c.l.s4 1934713408
    %v5396 = vunpack.c.0.s8 %v5395
    %v5397 = vperm.slane %v5391, %v5396
    %v5399 = vunpack.c.l.s4 1934713408
    %v5400 = vunpack.c.0.s8 %v5399
    %v5401 = vperm.slane %v5393, %v5400
    %v5402 = vrot.slane %v5389, 4
    %v5403 = vsel %vm2841, %v5402, %v5379
    %v5404 = vrot.slane %v5379, 4
    %v5405 = vsel %vm2841, %v5389, %v5404
    %v5407 = vunpack.c.l.s4 1934713408
    %v5408 = vunpack.c.0.s8 %v5407
    %v5409 = vperm.slane %v5403, %v5408
    %v5411 = vunpack.c.l.s4 1934713408
    %v5412 = vunpack.c.0.s8 %v5411
    %v5413 = vperm.slane %v5405, %v5412
    %v5414 = vrot.slane %v5397, 4
    %v5415 = vsel %vm2841, 0.0, %v5414
    %v5416 = vrot.slane %v5401, 4
    %v5417 = vsel %vm2841, 0.0, %v5416
    %v5418 = vrot.slane %v5409, 4
    %v5419 = vsel %vm2841, 0.0, %v5418
    %v5420 = vrot.slane %v5413, 4
    %v5421 = vsel %vm2841, 0.0, %v5420
    %v5422 = vrot.slane %v5301, 4
    %v5423 = vsel %vm2841, 0.0, %v5422
    %v5425 = vunpack.c.l.s4 1983009808
    %v5426 = vunpack.c.0.s8 %v5425
    %v5427 = vperm.slane %v5301, %v5426
    %v5429 = vunpack.c.l.s4 1983009808
    %v5430 = vunpack.c.0.s8 %v5429
    %v5431 = vperm.slane %v5423, %v5430
    %v5432 = vrot.slane %v5313, 4
    %v5433 = vsel %vm2841, 0.0, %v5432
    %v5435 = vunpack.c.l.s4 1983009808
    %v5436 = vunpack.c.0.s8 %v5435
    %v5437 = vperm.slane %v5313, %v5436
    %v5439 = vunpack.c.l.s4 1983009808
    %v5440 = vunpack.c.0.s8 %v5439
    %v5441 = vperm.slane %v5433, %v5440
    %v5442 = vrot.slane %v5437, 4
    %v5443 = vsel %vm2841, %v5442, %v5427
    %v5444 = vrot.slane %v5427, 4
    %v5445 = vsel %vm2841, %v5437, %v5444
    %v5447 = vunpack.c.l.s4 1934713408
    %v5448 = vunpack.c.0.s8 %v5447
    %v5449 = vperm.slane %v5443, %v5448
    %v5451 = vunpack.c.l.s4 1934713408
    %v5452 = vunpack.c.0.s8 %v5451
    %v5453 = vperm.slane %v5445, %v5452
    %v5454 = vrot.slane %v5441, 4
    %v5455 = vsel %vm2841, %v5454, %v5431
    %v5456 = vrot.slane %v5431, 4
    %v5457 = vsel %vm2841, %v5441, %v5456
    %v5459 = vunpack.c.l.s4 1934713408
    %v5460 = vunpack.c.0.s8 %v5459
    %v5461 = vperm.slane %v5455, %v5460
    %v5463 = vunpack.c.l.s4 1934713408
    %v5464 = vunpack.c.0.s8 %v5463
    %v5465 = vperm.slane %v5457, %v5464
    %v5466 = vrot.slane %v5449, 4
    %v5467 = vsel %vm2841, 0.0, %v5466
    %v5468 = vrot.slane %v5453, 4
    %v5469 = vsel %vm2841, 0.0, %v5468
    %v5470 = vrot.slane %v5461, 4
    %v5471 = vsel %vm2841, 0.0, %v5470
    %v5472 = vrot.slane %v5465, 4
    %v5473 = vsel %vm2841, 0.0, %v5472
    %v5474 = vrot.slane %v5304, 4
    %v5475 = vsel %vm2841, 0.0, %v5474
    %v5477 = vunpack.c.l.s4 1983009808
    %v5478 = vunpack.c.0.s8 %v5477
    %v5479 = vperm.slane %v5304, %v5478
    %v5481 = vunpack.c.l.s4 1983009808
    %v5482 = vunpack.c.0.s8 %v5481
    %v5483 = vperm.slane %v5475, %v5482
    %v5484 = vrot.slane %v5316, 4
    %v5485 = vsel %vm2841, 0.0, %v5484
    %v5487 = vunpack.c.l.s4 1983009808
    %v5488 = vunpack.c.0.s8 %v5487
    %v5489 = vperm.slane %v5316, %v5488
    %v5491 = vunpack.c.l.s4 1983009808
    %v5492 = vunpack.c.0.s8 %v5491
    %v5493 = vperm.slane %v5485, %v5492
    %v5494 = vrot.slane %v5489, 4
    %v5495 = vsel %vm2841, %v5494, %v5479
    %v5496 = vrot.slane %v5479, 4
    %v5497 = vsel %vm2841, %v5489, %v5496
    %v5499 = vunpack.c.l.s4 1934713408
    %v5500 = vunpack.c.0.s8 %v5499
    %v5501 = vperm.slane %v5495, %v5500
    %v5503 = vunpack.c.l.s4 1934713408
    %v5504 = vunpack.c.0.s8 %v5503
    %v5505 = vperm.slane %v5497, %v5504
    %v5506 = vrot.slane %v5493, 4
    %v5507 = vsel %vm2841, %v5506, %v5483
    %v5508 = vrot.slane %v5483, 4
    %v5509 = vsel %vm2841, %v5493, %v5508
    %v5511 = vunpack.c.l.s4 1934713408
    %v5512 = vunpack.c.0.s8 %v5511
    %v5513 = vperm.slane %v5507, %v5512
    %v5515 = vunpack.c.l.s4 1934713408
    %v5516 = vunpack.c.0.s8 %v5515
    %v5517 = vperm.slane %v5509, %v5516
    %v5518 = vrot.slane %v5501, 4
    %v5519 = vsel %vm2841, 0.0, %v5518
    %v5520 = vrot.slane %v5505, 4
    %v5521 = vsel %vm2841, 0.0, %v5520
    %v5522 = vrot.slane %v5513, 4
    %v5523 = vsel %vm2841, 0.0, %v5522
    %v5524 = vrot.slane %v5517, 4
    %v5525 = vsel %vm2841, 0.0, %v5524
    %v5526 = vpack.c.bf16 %v3076, %v2868
    %v5527 = vpack.c.bf16 %v3094, %v2886
    %v5528 = vpack.c.bf16 %v3080, %v2872
    %v5529 = vpack.c.bf16 %v3096, %v2888
    %v5530 = vpack.c.bf16 %v3088, %v2880
    %v5531 = vpack.c.bf16 %v3098, %v2890
    %v5532 = vpack.c.bf16 %v3092, %v2884
    %v5533 = vpack.c.bf16 %v3100, %v2892
    %v5534 = vpack.c.bf16 %v3128, %v2920
    %v5535 = vpack.c.bf16 %v3146, %v2938
    %v5536 = vpack.c.bf16 %v3132, %v2924
    %v5537 = vpack.c.bf16 %v3148, %v2940
    %v5538 = vpack.c.bf16 %v3140, %v2932
    %v5539 = vpack.c.bf16 %v3150, %v2942
    %v5540 = vpack.c.bf16 %v3144, %v2936
    %v5541 = vpack.c.bf16 %v3152, %v2944
    %v5542 = vpack.c.bf16 %v3180, %v2972
    %v5543 = vpack.c.bf16 %v3198, %v2990
    %v5544 = vpack.c.bf16 %v3184, %v2976
    %v5545 = vpack.c.bf16 %v3200, %v2992
    %v5546 = vpack.c.bf16 %v3192, %v2984
    %v5547 = vpack.c.bf16 %v3202, %v2994
    %v5548 = vpack.c.bf16 %v3196, %v2988
    %v5549 = vpack.c.bf16 %v3204, %v2996
    %v5550 = vpack.c.bf16 %v3232, %v3024
    %v5551 = vpack.c.bf16 %v3250, %v3042
    %v5552 = vpack.c.bf16 %v3236, %v3028
    %v5553 = vpack.c.bf16 %v3252, %v3044
    %v5554 = vpack.c.bf16 %v3244, %v3036
    %v5555 = vpack.c.bf16 %v3254, %v3046
    %v5556 = vpack.c.bf16 %v3248, %v3040
    %v5557 = vpack.c.bf16 %v3256, %v3048
    %v5558 = vpack.c.bf16 %v5345, %v5345
    %v5559 = vpack.c.bf16 %v5363, %v5363
    %v5560 = vpack.c.bf16 %v5349, %v5349
    %v5561 = vpack.c.bf16 %v5365, %v5365
    %v5562 = vpack.c.bf16 %v5357, %v5357
    %v5563 = vpack.c.bf16 %v5367, %v5367
    %v5564 = vpack.c.bf16 %v5361, %v5361
    %v5565 = vpack.c.bf16 %v5369, %v5369
    %v5566 = vpack.c.bf16 %v5397, %v5397
    %v5567 = vpack.c.bf16 %v5415, %v5415
    %v5568 = vpack.c.bf16 %v5401, %v5401
    %v5569 = vpack.c.bf16 %v5417, %v5417
    %v5570 = vpack.c.bf16 %v5409, %v5409
    %v5571 = vpack.c.bf16 %v5419, %v5419
    %v5572 = vpack.c.bf16 %v5413, %v5413
    %v5573 = vpack.c.bf16 %v5421, %v5421
    %v5574 = vpack.c.bf16 %v5449, %v5449
    %v5575 = vpack.c.bf16 %v5467, %v5467
    %v5576 = vpack.c.bf16 %v5453, %v5453
    %v5577 = vpack.c.bf16 %v5469, %v5469
    %v5578 = vpack.c.bf16 %v5461, %v5461
    %v5579 = vpack.c.bf16 %v5471, %v5471
    %v5580 = vpack.c.bf16 %v5465, %v5465
    %v5581 = vpack.c.bf16 %v5473, %v5473
    %v5582 = vpack.c.bf16 %v5501, %v5501
    %v5583 = vpack.c.bf16 %v5519, %v5519
    %v5584 = vpack.c.bf16 %v5505, %v5505
    %v5585 = vpack.c.bf16 %v5521, %v5521
    %v5586 = vpack.c.bf16 %v5513, %v5513
    %v5587 = vpack.c.bf16 %v5523, %v5523
    %v5588 = vpack.c.bf16 %v5517, %v5517
    %v5589 = vpack.c.bf16 %v5525, %v5525
    %v5622 = vunpack.c.l.b16 %v5526
    %v5623 = vunpack.c.h.b16 %v5526
    %v5624 = vunpack.c.l.b16 %v5527
    %v5625 = vunpack.c.h.b16 %v5527
    %v5626 = vunpack.c.l.b16 %v5528
    %v5627 = vunpack.c.h.b16 %v5528
    %v5628 = vunpack.c.l.b16 %v5529
    %v5629 = vunpack.c.h.b16 %v5529
    %v5630 = vunpack.c.l.b16 %v5530
    %v5631 = vunpack.c.h.b16 %v5530
    %v5632 = vunpack.c.l.b16 %v5531
    %v5633 = vunpack.c.h.b16 %v5531
    %v5634 = vunpack.c.l.b16 %v5532
    %v5635 = vunpack.c.h.b16 %v5532
    %v5636 = vunpack.c.l.b16 %v5533
    %v5637 = vunpack.c.h.b16 %v5533
    %v5638 = vunpack.c.l.b16 %v5534
    %v5639 = vunpack.c.h.b16 %v5534
    %v5640 = vunpack.c.l.b16 %v5535
    %v5641 = vunpack.c.h.b16 %v5535
    %v5642 = vunpack.c.l.b16 %v5536
    %v5643 = vunpack.c.h.b16 %v5536
    %v5644 = vunpack.c.l.b16 %v5537
    %v5645 = vunpack.c.h.b16 %v5537
    %v5646 = vunpack.c.l.b16 %v5538
    %v5647 = vunpack.c.h.b16 %v5538
    %v5648 = vunpack.c.l.b16 %v5539
    %v5649 = vunpack.c.h.b16 %v5539
    %v5650 = vunpack.c.l.b16 %v5540
    %v5651 = vunpack.c.h.b16 %v5540
    %v5652 = vunpack.c.l.b16 %v5541
    %v5653 = vunpack.c.h.b16 %v5541
    %v5654 = vunpack.c.l.b16 %v5542
    %v5655 = vunpack.c.h.b16 %v5542
    %v5656 = vunpack.c.l.b16 %v5543
    %v5657 = vunpack.c.h.b16 %v5543
    %v5658 = vunpack.c.l.b16 %v5544
    %v5659 = vunpack.c.h.b16 %v5544
    %v5660 = vunpack.c.l.b16 %v5545
    %v5661 = vunpack.c.h.b16 %v5545
    %v5662 = vunpack.c.l.b16 %v5546
    %v5663 = vunpack.c.h.b16 %v5546
    %v5664 = vunpack.c.l.b16 %v5547
    %v5665 = vunpack.c.h.b16 %v5547
    %v5666 = vunpack.c.l.b16 %v5548
    %v5667 = vunpack.c.h.b16 %v5548
    %v5668 = vunpack.c.l.b16 %v5549
    %v5669 = vunpack.c.h.b16 %v5549
    %v5670 = vunpack.c.l.b16 %v5550
    %v5671 = vunpack.c.h.b16 %v5550
    %v5672 = vunpack.c.l.b16 %v5551
    %v5673 = vunpack.c.h.b16 %v5551
    %v5674 = vunpack.c.l.b16 %v5552
    %v5675 = vunpack.c.h.b16 %v5552
    %v5676 = vunpack.c.l.b16 %v5553
    %v5677 = vunpack.c.h.b16 %v5553
    %v5678 = vunpack.c.l.b16 %v5554
    %v5679 = vunpack.c.h.b16 %v5554
    %v5680 = vunpack.c.l.b16 %v5555
    %v5681 = vunpack.c.h.b16 %v5555
    %v5682 = vunpack.c.l.b16 %v5556
    %v5683 = vunpack.c.h.b16 %v5556
    %v5684 = vunpack.c.l.b16 %v5557
    %v5685 = vunpack.c.h.b16 %v5557
    %v5686 = vpack.c.b16 %v5622, %v5622
    %v5687 = vpack.c.b16 %v5623, %v5623
    %v5688 = vpack.c.b16 %v5624, %v5624
    %v5689 = vpack.c.b16 %v5625, %v5625
    %v5690 = vpack.c.b16 %v5626, %v5626
    %v5691 = vpack.c.b16 %v5627, %v5627
    %v5692 = vpack.c.b16 %v5628, %v5628
    %v5693 = vpack.c.b16 %v5629, %v5629
    %v5694 = vpack.c.b16 %v5630, %v5630
    %v5695 = vpack.c.b16 %v5631, %v5631
    %v5696 = vpack.c.b16 %v5632, %v5632
    %v5697 = vpack.c.b16 %v5633, %v5633
    %v5698 = vpack.c.b16 %v5634, %v5634
    %v5699 = vpack.c.b16 %v5635, %v5635
    %v5700 = vpack.c.b16 %v5636, %v5636
    %v5701 = vpack.c.b16 %v5637, %v5637
    %v5702 = vpack.c.b16 %v5638, %v5638
    %v5703 = vpack.c.b16 %v5639, %v5639
    %v5704 = vpack.c.b16 %v5640, %v5640
    %v5705 = vpack.c.b16 %v5641, %v5641
    %v5706 = vpack.c.b16 %v5642, %v5642
    %v5707 = vpack.c.b16 %v5643, %v5643
    %v5708 = vpack.c.b16 %v5644, %v5644
    %v5709 = vpack.c.b16 %v5645, %v5645
    %v5710 = vpack.c.b16 %v5646, %v5646
    %v5711 = vpack.c.b16 %v5647, %v5647
    %v5712 = vpack.c.b16 %v5648, %v5648
    %v5713 = vpack.c.b16 %v5649, %v5649
    %v5714 = vpack.c.b16 %v5650, %v5650
    %v5715 = vpack.c.b16 %v5651, %v5651
    %v5716 = vpack.c.b16 %v5652, %v5652
    %v5717 = vpack.c.b16 %v5653, %v5653
    %v5718 = vpack.c.b16 %v5654, %v5654
    %v5719 = vpack.c.b16 %v5655, %v5655
    %v5720 = vpack.c.b16 %v5656, %v5656
    %v5721 = vpack.c.b16 %v5657, %v5657
    %v5722 = vpack.c.b16 %v5658, %v5658
    %v5723 = vpack.c.b16 %v5659, %v5659
    %v5724 = vpack.c.b16 %v5660, %v5660
    %v5725 = vpack.c.b16 %v5661, %v5661
    %v5726 = vpack.c.b16 %v5662, %v5662
    %v5727 = vpack.c.b16 %v5663, %v5663
    %v5728 = vpack.c.b16 %v5664, %v5664
    %v5729 = vpack.c.b16 %v5665, %v5665
    %v5730 = vpack.c.b16 %v5666, %v5666
    %v5731 = vpack.c.b16 %v5667, %v5667
    %v5732 = vpack.c.b16 %v5668, %v5668
    %v5733 = vpack.c.b16 %v5669, %v5669
    %v5734 = vpack.c.b16 %v5670, %v5670
    %v5735 = vpack.c.b16 %v5671, %v5671
    %v5736 = vpack.c.b16 %v5672, %v5672
    %v5737 = vpack.c.b16 %v5673, %v5673
    %v5738 = vpack.c.b16 %v5674, %v5674
    %v5739 = vpack.c.b16 %v5675, %v5675
    %v5740 = vpack.c.b16 %v5676, %v5676
    %v5741 = vpack.c.b16 %v5677, %v5677
    %v5742 = vpack.c.b16 %v5678, %v5678
    %v5743 = vpack.c.b16 %v5679, %v5679
    %v5744 = vpack.c.b16 %v5680, %v5680
    %v5745 = vpack.c.b16 %v5681, %v5681
    %v5746 = vpack.c.b16 %v5682, %v5682
    %v5747 = vpack.c.b16 %v5683, %v5683
    %v5748 = vpack.c.b16 %v5684, %v5684
    %v5749 = vpack.c.b16 %v5685, %v5685
    %s5814 = smul.u32 4, 32
    %s5815 = smul.u32 %s5814, 4
    %s5816 = smul.u32 %s5815, 3
    %s5817 = sshll.u32 %s5816, 4
    %5818 = dma.done [#allocation6], %s5817
    %v5819 = vld [vmem:[#allocation5] sm:$0xff]
    %v5820 = vld [vmem:[#allocation5 + $0x8] sm:$0xf]
    %v5821 = vld [vmem:[#allocation5 + $0xc] sm:$0xff]
    %v5822 = vld [vmem:[#allocation5 + $0x14] sm:$0xf]
    %v5823 = vld [vmem:[#allocation5 + $0x18] sm:$0xff]
    %v5824 = vld [vmem:[#allocation5 + $0x20] sm:$0xf]
    %v5825 = vld [vmem:[#allocation5 + $0x24] sm:$0xff]
    %v5826 = vld [vmem:[#allocation5 + $0x2c] sm:$0xf]
    %v5827 = vld [vmem:[#allocation5 + $0x30] sm:$0xff]
    %v5828 = vld [vmem:[#allocation5 + $0x38] sm:$0xf]
    %v5829 = vld [vmem:[#allocation5 + $0x3c] sm:$0xff]
    %v5830 = vld [vmem:[#allocation5 + $0x44] sm:$0xf]
    %v5831 = vld [vmem:[#allocation5 + $0x48] sm:$0xff]
    %v5832 = vld [vmem:[#allocation5 + $0x50] sm:$0xf]
    %v5833 = vld [vmem:[#allocation5 + $0x54] sm:$0xff]
    %v5834 = vld [vmem:[#allocation5 + $0x5c] sm:$0xf]
    %v5835 = vld [vmem:[#allocation5 + $0x60] sm:$0xff]
    %v5836 = vld [vmem:[#allocation5 + $0x68] sm:$0xf]
    %v5837 = vld [vmem:[#allocation5 + $0x6c] sm:$0xff]
    %v5838 = vld [vmem:[#allocation5 + $0x74] sm:$0xf]
    %v5839 = vld [vmem:[#allocation5 + $0x78] sm:$0xff]
    %v5840 = vld [vmem:[#allocation5 + $0x80] sm:$0xf]
    %v5841 = vld [vmem:[#allocation5 + $0x84] sm:$0xff]
    %v5842 = vld [vmem:[#allocation5 + $0x8c] sm:$0xf]
    %v5843 = vld [vmem:[#allocation5 + $0x90] sm:$0xff]
    %v5844 = vld [vmem:[#allocation5 + $0x98] sm:$0xf]
    %v5845 = vld [vmem:[#allocation5 + $0x9c] sm:$0xff]
    %v5846 = vld [vmem:[#allocation5 + $0xa4] sm:$0xf]
    %v5847 = vld [vmem:[#allocation5 + $0xa8] sm:$0xff]
    %v5848 = vld [vmem:[#allocation5 + $0xb0] sm:$0xf]
    %v5849 = vld [vmem:[#allocation5 + $0xb4] sm:$0xff]
    %v5850 = vld [vmem:[#allocation5 + $0xbc] sm:$0xf]
    %v5851 = vld [vmem:[#allocation5 + $0xc0] sm:$0xff]
    %v5852 = vld [vmem:[#allocation5 + $0xc8] sm:$0xf]
    %v5853 = vld [vmem:[#allocation5 + $0xcc] sm:$0xff]
    %v5854 = vld [vmem:[#allocation5 + $0xd4] sm:$0xf]
    %v5855 = vld [vmem:[#allocation5 + $0xd8] sm:$0xff]
    %v5856 = vld [vmem:[#allocation5 + $0xe0] sm:$0xf]
    %v5857 = vld [vmem:[#allocation5 + $0xe4] sm:$0xff]
    %v5858 = vld [vmem:[#allocation5 + $0xec] sm:$0xf]
    %v5859 = vld [vmem:[#allocation5 + $0xf0] sm:$0xff]
    %v5860 = vld [vmem:[#allocation5 + $0xf8] sm:$0xf]
    %v5861 = vld [vmem:[#allocation5 + $0xfc] sm:$0xff]
    %v5862 = vld [vmem:[#allocation5 + $0x104] sm:$0xf]
    %v5863 = vld [vmem:[#allocation5 + $0x108] sm:$0xff]
    %v5864 = vld [vmem:[#allocation5 + $0x110] sm:$0xf]
    %v5865 = vld [vmem:[#allocation5 + $0x114] sm:$0xff]
    %v5866 = vld [vmem:[#allocation5 + $0x11c] sm:$0xf]
    %v5867 = vld [vmem:[#allocation5 + $0x120] sm:$0xff]
    %v5868 = vld [vmem:[#allocation5 + $0x128] sm:$0xf]
    %v5869 = vld [vmem:[#allocation5 + $0x12c] sm:$0xff]
    %v5870 = vld [vmem:[#allocation5 + $0x134] sm:$0xf]
    %v5871 = vld [vmem:[#allocation5 + $0x138] sm:$0xff]
    %v5872 = vld [vmem:[#allocation5 + $0x140] sm:$0xf]
    %v5873 = vld [vmem:[#allocation5 + $0x144] sm:$0xff]
    %v5874 = vld [vmem:[#allocation5 + $0x14c] sm:$0xf]
    %v5875 = vld [vmem:[#allocation5 + $0x150] sm:$0xff]
    %v5876 = vld [vmem:[#allocation5 + $0x158] sm:$0xf]
    %v5877 = vld [vmem:[#allocation5 + $0x15c] sm:$0xff]
    %v5878 = vld [vmem:[#allocation5 + $0x164] sm:$0xf]
    %v5879 = vld [vmem:[#allocation5 + $0x168] sm:$0xff]
    %v5880 = vld [vmem:[#allocation5 + $0x170] sm:$0xf]
    %v5881 = vld [vmem:[#allocation5 + $0x174] sm:$0xff]
    %v5882 = vld [vmem:[#allocation5 + $0x17c] sm:$0xf]
    %v5883 = vld [vmem:[#allocation5 + $0x180] sm:$0xff]
    %v5884 = vld [vmem:[#allocation5 + $0x188] sm:$0xf]
    %v5885 = vld [vmem:[#allocation5 + $0x18c] sm:$0xff]
    %v5886 = vld [vmem:[#allocation5 + $0x194] sm:$0xf]
    %v5887 = vld [vmem:[#allocation5 + $0x198] sm:$0xff]
    %v5888 = vld [vmem:[#allocation5 + $0x1a0] sm:$0xf]
    %v5889 = vld [vmem:[#allocation5 + $0x1a4] sm:$0xff]
    %v5890 = vld [vmem:[#allocation5 + $0x1ac] sm:$0xf]
    %v5891 = vld [vmem:[#allocation5 + $0x1b0] sm:$0xff]
    %v5892 = vld [vmem:[#allocation5 + $0x1b8] sm:$0xf]
    %v5893 = vld [vmem:[#allocation5 + $0x1bc] sm:$0xff]
    %v5894 = vld [vmem:[#allocation5 + $0x1c4] sm:$0xf]
    %v5895 = vld [vmem:[#allocation5 + $0x1c8] sm:$0xff]
    %v5896 = vld [vmem:[#allocation5 + $0x1d0] sm:$0xf]
    %v5897 = vld [vmem:[#allocation5 + $0x1d4] sm:$0xff]
    %v5898 = vld [vmem:[#allocation5 + $0x1dc] sm:$0xf]
    %v5899 = vld [vmem:[#allocation5 + $0x1e0] sm:$0xff]
    %v5900 = vld [vmem:[#allocation5 + $0x1e8] sm:$0xf]
    %v5901 = vld [vmem:[#allocation5 + $0x1ec] sm:$0xff]
    %v5902 = vld [vmem:[#allocation5 + $0x1f4] sm:$0xf]
    %v5903 = vld [vmem:[#allocation5 + $0x1f8] sm:$0xff]
    %v5904 = vld [vmem:[#allocation5 + $0x200] sm:$0xf]
    %v5905 = vld [vmem:[#allocation5 + $0x204] sm:$0xff]
    %v5906 = vld [vmem:[#allocation5 + $0x20c] sm:$0xf]
    %v5907 = vld [vmem:[#allocation5 + $0x210] sm:$0xff]
    %v5908 = vld [vmem:[#allocation5 + $0x218] sm:$0xf]
    %v5909 = vld [vmem:[#allocation5 + $0x21c] sm:$0xff]
    %v5910 = vld [vmem:[#allocation5 + $0x224] sm:$0xf]
    %v5911 = vld [vmem:[#allocation5 + $0x228] sm:$0xff]
    %v5912 = vld [vmem:[#allocation5 + $0x230] sm:$0xf]
    %v5913 = vld [vmem:[#allocation5 + $0x234] sm:$0xff]
    %v5914 = vld [vmem:[#allocation5 + $0x23c] sm:$0xf]
    %v5915 = vld [vmem:[#allocation5 + $0x240] sm:$0xff]
    %v5916 = vld [vmem:[#allocation5 + $0x248] sm:$0xf]
    %v5917 = vld [vmem:[#allocation5 + $0x24c] sm:$0xff]
    %v5918 = vld [vmem:[#allocation5 + $0x254] sm:$0xf]
    %v5919 = vld [vmem:[#allocation5 + $0x258] sm:$0xff]
    %v5920 = vld [vmem:[#allocation5 + $0x260] sm:$0xf]
    %v5921 = vld [vmem:[#allocation5 + $0x264] sm:$0xff]
    %v5922 = vld [vmem:[#allocation5 + $0x26c] sm:$0xf]
    %v5923 = vld [vmem:[#allocation5 + $0x270] sm:$0xff]
    %v5924 = vld [vmem:[#allocation5 + $0x278] sm:$0xf]
    %v5925 = vld [vmem:[#allocation5 + $0x27c] sm:$0xff]
    %v5926 = vld [vmem:[#allocation5 + $0x284] sm:$0xf]
    %v5927 = vld [vmem:[#allocation5 + $0x288] sm:$0xff]
    %v5928 = vld [vmem:[#allocation5 + $0x290] sm:$0xf]
    %v5929 = vld [vmem:[#allocation5 + $0x294] sm:$0xff]
    %v5930 = vld [vmem:[#allocation5 + $0x29c] sm:$0xf]
    %v5931 = vld [vmem:[#allocation5 + $0x2a0] sm:$0xff]
    %v5932 = vld [vmem:[#allocation5 + $0x2a8] sm:$0xf]
    %v5933 = vld [vmem:[#allocation5 + $0x2ac] sm:$0xff]
    %v5934 = vld [vmem:[#allocation5 + $0x2b4] sm:$0xf]
    %v5935 = vld [vmem:[#allocation5 + $0x2b8] sm:$0xff]
    %v5936 = vld [vmem:[#allocation5 + $0x2c0] sm:$0xf]
    %v5937 = vld [vmem:[#allocation5 + $0x2c4] sm:$0xff]
    %v5938 = vld [vmem:[#allocation5 + $0x2cc] sm:$0xf]
    %v5939 = vld [vmem:[#allocation5 + $0x2d0] sm:$0xff]
    %v5940 = vld [vmem:[#allocation5 + $0x2d8] sm:$0xf]
    %v5941 = vld [vmem:[#allocation5 + $0x2dc] sm:$0xff]
    %v5942 = vld [vmem:[#allocation5 + $0x2e4] sm:$0xf]
    %v5943 = vld [vmem:[#allocation5 + $0x2e8] sm:$0xff]
    %v5944 = vld [vmem:[#allocation5 + $0x2f0] sm:$0xf]
    %v5945 = vld [vmem:[#allocation5 + $0x2f4] sm:$0xff]
    %v5946 = vld [vmem:[#allocation5 + $0x2fc] sm:$0xf]
    %v5947 = vld [vmem:[#allocation5 + $0x300] sm:$0xff]
    %v5948 = vld [vmem:[#allocation5 + $0x308] sm:$0xf]
    %v5949 = vld [vmem:[#allocation5 + $0x30c] sm:$0xff]
    %v5950 = vld [vmem:[#allocation5 + $0x314] sm:$0xf]
    %v5951 = vld [vmem:[#allocation5 + $0x318] sm:$0xff]
    %v5952 = vld [vmem:[#allocation5 + $0x320] sm:$0xf]
    %v5953 = vld [vmem:[#allocation5 + $0x324] sm:$0xff]
    %v5954 = vld [vmem:[#allocation5 + $0x32c] sm:$0xf]
    %v5955 = vld [vmem:[#allocation5 + $0x330] sm:$0xff]
    %v5956 = vld [vmem:[#allocation5 + $0x338] sm:$0xf]
    %v5957 = vld [vmem:[#allocation5 + $0x33c] sm:$0xff]
    %v5958 = vld [vmem:[#allocation5 + $0x344] sm:$0xf]
    %v5959 = vld [vmem:[#allocation5 + $0x348] sm:$0xff]
    %v5960 = vld [vmem:[#allocation5 + $0x350] sm:$0xf]
    %v5961 = vld [vmem:[#allocation5 + $0x354] sm:$0xff]
    %v5962 = vld [vmem:[#allocation5 + $0x35c] sm:$0xf]
    %v5963 = vld [vmem:[#allocation5 + $0x360] sm:$0xff]
    %v5964 = vld [vmem:[#allocation5 + $0x368] sm:$0xf]
    %v5965 = vld [vmem:[#allocation5 + $0x36c] sm:$0xff]
    %v5966 = vld [vmem:[#allocation5 + $0x374] sm:$0xf]
    %v5967 = vld [vmem:[#allocation5 + $0x378] sm:$0xff]
    %v5968 = vld [vmem:[#allocation5 + $0x380] sm:$0xf]
    %v5969 = vld [vmem:[#allocation5 + $0x384] sm:$0xff]
    %v5970 = vld [vmem:[#allocation5 + $0x38c] sm:$0xf]
    %v5971 = vld [vmem:[#allocation5 + $0x390] sm:$0xff]
    %v5972 = vld [vmem:[#allocation5 + $0x398] sm:$0xf]
    %v5973 = vld [vmem:[#allocation5 + $0x39c] sm:$0xff]
    %v5974 = vld [vmem:[#allocation5 + $0x3a4] sm:$0xf]
    %v5975 = vld [vmem:[#allocation5 + $0x3a8] sm:$0xff]
    %v5976 = vld [vmem:[#allocation5 + $0x3b0] sm:$0xf]
    %v5977 = vld [vmem:[#allocation5 + $0x3b4] sm:$0xff]
    %v5978 = vld [vmem:[#allocation5 + $0x3bc] sm:$0xf]
    %v5979 = vld [vmem:[#allocation5 + $0x3c0] sm:$0xff]
    %v5980 = vld [vmem:[#allocation5 + $0x3c8] sm:$0xf]
    %v5981 = vld [vmem:[#allocation5 + $0x3cc] sm:$0xff]
    %v5982 = vld [vmem:[#allocation5 + $0x3d4] sm:$0xf]
    %v5983 = vld [vmem:[#allocation5 + $0x3d8] sm:$0xff]
    %v5984 = vld [vmem:[#allocation5 + $0x3e0] sm:$0xf]
    %v5985 = vld [vmem:[#allocation5 + $0x3e4] sm:$0xff]
    %v5986 = vld [vmem:[#allocation5 + $0x3ec] sm:$0xf]
    %v5987 = vld [vmem:[#allocation5 + $0x3f0] sm:$0xff]
    %v5988 = vld [vmem:[#allocation5 + $0x3f8] sm:$0xf]
    %v5989 = vld [vmem:[#allocation5 + $0x3fc] sm:$0xff]
    %v5990 = vld [vmem:[#allocation5 + $0x404] sm:$0xf]
    %v5991 = vld [vmem:[#allocation5 + $0x408] sm:$0xff]
    %v5992 = vld [vmem:[#allocation5 + $0x410] sm:$0xf]
    %v5993 = vld [vmem:[#allocation5 + $0x414] sm:$0xff]
    %v5994 = vld [vmem:[#allocation5 + $0x41c] sm:$0xf]
    %v5995 = vld [vmem:[#allocation5 + $0x420] sm:$0xff]
    %v5996 = vld [vmem:[#allocation5 + $0x428] sm:$0xf]
    %v5997 = vld [vmem:[#allocation5 + $0x42c] sm:$0xff]
    %v5998 = vld [vmem:[#allocation5 + $0x434] sm:$0xf]
    %v5999 = vld [vmem:[#allocation5 + $0x438] sm:$0xff]
    %v6000 = vld [vmem:[#allocation5 + $0x440] sm:$0xf]
    %v6001 = vld [vmem:[#allocation5 + $0x444] sm:$0xff]
    %v6002 = vld [vmem:[#allocation5 + $0x44c] sm:$0xf]
    %v6003 = vld [vmem:[#allocation5 + $0x450] sm:$0xff]
    %v6004 = vld [vmem:[#allocation5 + $0x458] sm:$0xf]
    %v6005 = vld [vmem:[#allocation5 + $0x45c] sm:$0xff]
    %v6006 = vld [vmem:[#allocation5 + $0x464] sm:$0xf]
    %v6007 = vld [vmem:[#allocation5 + $0x468] sm:$0xff]
    %v6008 = vld [vmem:[#allocation5 + $0x470] sm:$0xf]
    %v6009 = vld [vmem:[#allocation5 + $0x474] sm:$0xff]
    %v6010 = vld [vmem:[#allocation5 + $0x47c] sm:$0xf]
    %v6011 = vld [vmem:[#allocation5 + $0x480] sm:$0xff]
    %v6012 = vld [vmem:[#allocation5 + $0x488] sm:$0xf]
    %v6013 = vld [vmem:[#allocation5 + $0x48c] sm:$0xff]
    %v6014 = vld [vmem:[#allocation5 + $0x494] sm:$0xf]
    %v6015 = vld [vmem:[#allocation5 + $0x498] sm:$0xff]
    %v6016 = vld [vmem:[#allocation5 + $0x4a0] sm:$0xf]
    %v6017 = vld [vmem:[#allocation5 + $0x4a4] sm:$0xff]
    %v6018 = vld [vmem:[#allocation5 + $0x4ac] sm:$0xf]
    %v6019 = vld [vmem:[#allocation5 + $0x4b0] sm:$0xff]
    %v6020 = vld [vmem:[#allocation5 + $0x4b8] sm:$0xf]
    %v6021 = vld [vmem:[#allocation5 + $0x4bc] sm:$0xff]
    %v6022 = vld [vmem:[#allocation5 + $0x4c4] sm:$0xf]
    %v6023 = vld [vmem:[#allocation5 + $0x4c8] sm:$0xff]
    %v6024 = vld [vmem:[#allocation5 + $0x4d0] sm:$0xf]
    %v6025 = vld [vmem:[#allocation5 + $0x4d4] sm:$0xff]
    %v6026 = vld [vmem:[#allocation5 + $0x4dc] sm:$0xf]
    %v6027 = vld [vmem:[#allocation5 + $0x4e0] sm:$0xff]
    %v6028 = vld [vmem:[#allocation5 + $0x4e8] sm:$0xf]
    %v6029 = vld [vmem:[#allocation5 + $0x4ec] sm:$0xff]
    %v6030 = vld [vmem:[#allocation5 + $0x4f4] sm:$0xf]
    %v6031 = vld [vmem:[#allocation5 + $0x4f8] sm:$0xff]
    %v6032 = vld [vmem:[#allocation5 + $0x500] sm:$0xf]
    %v6033 = vld [vmem:[#allocation5 + $0x504] sm:$0xff]
    %v6034 = vld [vmem:[#allocation5 + $0x50c] sm:$0xf]
    %v6035 = vld [vmem:[#allocation5 + $0x510] sm:$0xff]
    %v6036 = vld [vmem:[#allocation5 + $0x518] sm:$0xf]
    %v6037 = vld [vmem:[#allocation5 + $0x51c] sm:$0xff]
    %v6038 = vld [vmem:[#allocation5 + $0x524] sm:$0xf]
    %v6039 = vld [vmem:[#allocation5 + $0x528] sm:$0xff]
    %v6040 = vld [vmem:[#allocation5 + $0x530] sm:$0xf]
    %v6041 = vld [vmem:[#allocation5 + $0x534] sm:$0xff]
    %v6042 = vld [vmem:[#allocation5 + $0x53c] sm:$0xf]
    %v6043 = vld [vmem:[#allocation5 + $0x540] sm:$0xff]
    %v6044 = vld [vmem:[#allocation5 + $0x548] sm:$0xf]
    %v6045 = vld [vmem:[#allocation5 + $0x54c] sm:$0xff]
    %v6046 = vld [vmem:[#allocation5 + $0x554] sm:$0xf]
    %v6047 = vld [vmem:[#allocation5 + $0x558] sm:$0xff]
    %v6048 = vld [vmem:[#allocation5 + $0x560] sm:$0xf]
    %v6049 = vld [vmem:[#allocation5 + $0x564] sm:$0xff]
    %v6050 = vld [vmem:[#allocation5 + $0x56c] sm:$0xf]
    %v6051 = vld [vmem:[#allocation5 + $0x570] sm:$0xff]
    %v6052 = vld [vmem:[#allocation5 + $0x578] sm:$0xf]
    %v6053 = vld [vmem:[#allocation5 + $0x57c] sm:$0xff]
    %v6054 = vld [vmem:[#allocation5 + $0x584] sm:$0xf]
    %v6055 = vld [vmem:[#allocation5 + $0x588] sm:$0xff]
    %v6056 = vld [vmem:[#allocation5 + $0x590] sm:$0xf]
    %v6057 = vld [vmem:[#allocation5 + $0x594] sm:$0xff]
    %v6058 = vld [vmem:[#allocation5 + $0x59c] sm:$0xf]
    %v6059 = vld [vmem:[#allocation5 + $0x5a0] sm:$0xff]
    %v6060 = vld [vmem:[#allocation5 + $0x5a8] sm:$0xf]
    %v6061 = vld [vmem:[#allocation5 + $0x5ac] sm:$0xff]
    %v6062 = vld [vmem:[#allocation5 + $0x5b4] sm:$0xf]
    %v6063 = vld [vmem:[#allocation5 + $0x5b8] sm:$0xff]
    %v6064 = vld [vmem:[#allocation5 + $0x5c0] sm:$0xf]
    %v6065 = vld [vmem:[#allocation5 + $0x5c4] sm:$0xff]
    %v6066 = vld [vmem:[#allocation5 + $0x5cc] sm:$0xf]
    %v6067 = vld [vmem:[#allocation5 + $0x5d0] sm:$0xff]
    %v6068 = vld [vmem:[#allocation5 + $0x5d8] sm:$0xf]
    %v6069 = vld [vmem:[#allocation5 + $0x5dc] sm:$0xff]
    %v6070 = vld [vmem:[#allocation5 + $0x5e4] sm:$0xf]
    %v6071 = vld [vmem:[#allocation5 + $0x5e8] sm:$0xff]
    %v6072 = vld [vmem:[#allocation5 + $0x5f0] sm:$0xf]
    %v6073 = vld [vmem:[#allocation5 + $0x5f4] sm:$0xff]
    %v6074 = vld [vmem:[#allocation5 + $0x5fc] sm:$0xf]
    %v6075 = vld [vmem:[%s15] sm:$0x1]
    %v6076 = vld [vmem:[%s15 + $0x1] sm:$0x1]
    %v6077 = vld [vmem:[%s15 + $0x2] sm:$0x1]
    %v6078 = vld [vmem:[%s15 + $0x3] sm:$0x1]
    %v6079 = vld [vmem:[%s15 + $0x4] sm:$0x1]
    %v6080 = vld [vmem:[%s15 + $0x5] sm:$0x1]
    %v6081 = vld [vmem:[%s15 + $0x6] sm:$0x1]
    %v6082 = vld [vmem:[%s15 + $0x7] sm:$0x1]
    %v6083 = vld [vmem:[%s15 + $0x8] sm:$0x1]
    %v6084 = vld [vmem:[%s15 + $0x9] sm:$0x1]
    %v6085 = vld [vmem:[%s15 + $0xa] sm:$0x1]
    %v6086 = vld [vmem:[%s15 + $0xb] sm:$0x1]
    %v6087 = vld [vmem:[%s15 + $0xc] sm:$0x1]
    %v6088 = vld [vmem:[%s15 + $0xd] sm:$0x1]
    %v6089 = vld [vmem:[%s15 + $0xe] sm:$0x1]
    %v6090 = vld [vmem:[%s15 + $0xf] sm:$0x1]
    %v6091 = vld [vmem:[%s15 + $0x10] sm:$0x1]
    %v6092 = vld [vmem:[%s15 + $0x11] sm:$0x1]
    %v6093 = vld [vmem:[%s15 + $0x12] sm:$0x1]
    %v6094 = vld [vmem:[%s15 + $0x13] sm:$0x1]
    %v6095 = vld [vmem:[%s15 + $0x14] sm:$0x1]
    %v6096 = vld [vmem:[%s15 + $0x15] sm:$0x1]
    %v6097 = vld [vmem:[%s15 + $0x16] sm:$0x1]
    %v6098 = vld [vmem:[%s15 + $0x17] sm:$0x1]
    %v6099 = vld [vmem:[%s15 + $0x18] sm:$0x1]
    %v6100 = vld [vmem:[%s15 + $0x19] sm:$0x1]
    %v6101 = vld [vmem:[%s15 + $0x1a] sm:$0x1]
    %v6102 = vld [vmem:[%s15 + $0x1b] sm:$0x1]
    %v6103 = vld [vmem:[%s15 + $0x1c] sm:$0x1]
    %v6104 = vld [vmem:[%s15 + $0x1d] sm:$0x1]
    %v6105 = vld [vmem:[%s15 + $0x1e] sm:$0x1]
    %v6106 = vld [vmem:[%s15 + $0x1f] sm:$0x1]
    %v6139 = vperm.slane %v6075, 0
    %v6140 = vperm.slane %v6076, 0
    %v6141 = vperm.slane %v6077, 0
    %v6142 = vperm.slane %v6078, 0
    %v6143 = vperm.slane %v6079, 0
    %v6144 = vperm.slane %v6080, 0
    %v6145 = vperm.slane %v6081, 0
    %v6146 = vperm.slane %v6082, 0
    %v6147 = vperm.slane %v6083, 0
    %v6148 = vperm.slane %v6084, 0
    %v6149 = vperm.slane %v6085, 0
    %v6150 = vperm.slane %v6086, 0
    %v6151 = vperm.slane %v6087, 0
    %v6152 = vperm.slane %v6088, 0
    %v6153 = vperm.slane %v6089, 0
    %v6154 = vperm.slane %v6090, 0
    %v6155 = vperm.slane %v6091, 0
    %v6156 = vperm.slane %v6092, 0
    %v6157 = vperm.slane %v6093, 0
    %v6158 = vperm.slane %v6094, 0
    %v6159 = vperm.slane %v6095, 0
    %v6160 = vperm.slane %v6096, 0
    %v6161 = vperm.slane %v6097, 0
    %v6162 = vperm.slane %v6098, 0
    %v6163 = vperm.slane %v6099, 0
    %v6164 = vperm.slane %v6100, 0
    %v6165 = vperm.slane %v6101, 0
    %v6166 = vperm.slane %v6102, 0
    %v6167 = vperm.slane %v6103, 0
    %v6168 = vperm.slane %v6104, 0
    %v6169 = vperm.slane %v6105, 0
    %v6170 = vperm.slane %v6106, 0
    %v6211 = vunpack.c.l.b16 %v5819
    %v6212 = vunpack.c.h.b16 %v5819
    %v6213 = vunpack.c.l.b16 %v5820
    %v6214 = vunpack.c.l.b16 %v5821
    %v6215 = vunpack.c.h.b16 %v5821
    %v6216 = vunpack.c.l.b16 %v5822
    %v6217 = vunpack.c.l.b16 %v5823
    %v6218 = vunpack.c.h.b16 %v5823
    %v6219 = vunpack.c.l.b16 %v5824
    %v6220 = vunpack.c.l.b16 %v5825
    %v6221 = vunpack.c.h.b16 %v5825
    %v6222 = vunpack.c.l.b16 %v5826
    %v6223 = vpack.c.b16 %v6214, %v6211
    %v6224 = vpack.c.b16 %v6215, %v6212
    %v6225 = vpack.c.b16 %v6216, %v6213
    %v6226 = vpack.c.b16 %v6220, %v6217
    %v6227 = vpack.c.b16 %v6221, %v6218
    %v6228 = vpack.c.b16 %v6222, %v6219
    %v6234 = vsel %vm5249, %v5558, 0
    %v6237 = vsel %vm5249, %v6225, 0
    %v6240 = vsel %vm5249, %v6228, 0
    %6242 = vmatpush.bf16.xpose.msra.mxu0 0
    %6243 = vmatpush.bf16.xpose.msra.mxu0 0
    %6244 = vmatpush.bf16.xpose.msra.mxu0 0
    %6245 = vmatpush.bf16.xpose.msra.mxu0 0
    %6246 = vmatpush.bf16.xpose.msra.mxu0 0
    %6247 = vmatpush.bf16.xpose.msra.mxu0 0
    %6248 = vmatpush.bf16.xpose.msra.mxu0 %v6226
    %6249 = vmatpush.bf16.xpose.msra.mxu0 %v6223
    %6250 = vmatmul.bf16.gmra.mxu0 %v5686
    %v6251 = vpop.f32.mrf.mxu0
    %v6252 = vadd.f32 %v6139, %v6251
    %v6253 = vpop.f32.mrf.mxu0
    %6254 = vdwg.mxu0
    %6255 = vmatpush.bf16.xpose.msra.mxu0 0
    %6256 = vmatpush.bf16.xpose.msra.mxu0 0
    %6257 = vmatpush.bf16.xpose.msra.mxu0 0
    %6258 = vmatpush.bf16.xpose.msra.mxu0 0
    %6259 = vmatpush.bf16.xpose.msra.mxu0 0
    %6260 = vmatpush.bf16.xpose.msra.mxu0 0
    %6261 = vmatpush.bf16.xpose.msra.mxu0 %v6227
    %6262 = vmatpush.bf16.xpose.msra.mxu0 %v6224
    %6263 = vmatmul.bf16.gmra.mxu0 %v5687
    %v6264 = vpop.f32.mrf.mxu0
    %v6265 = vadd.f32 %v6252, %v6264
    %v6266 = vpop.f32.mrf.mxu0
    %6267 = vdwg.mxu0
    %6268 = vmatpush.bf16.xpose.msra.mxu0 0
    %6269 = vmatpush.bf16.xpose.msra.mxu0 0
    %6270 = vmatpush.bf16.xpose.msra.mxu0 0
    %6271 = vmatpush.bf16.xpose.msra.mxu0 0
    %6272 = vmatpush.bf16.xpose.msra.mxu0 0
    %6273 = vmatpush.bf16.xpose.msra.mxu0 0
    %6274 = vmatpush.bf16.xpose.msra.mxu0 %v6240
    %6275 = vmatpush.bf16.xpose.msra.mxu0 %v6237
    %6276 = vmatmul.bf16.gmra.mxu0 %v6234
    %v6277 = vpop.f32.mrf.mxu0
    %v6278 = vadd.f32 %v6265, %v6277
    %v6279 = vpop.f32.mrf.mxu0
    %6280 = vdwg.mxu0
    %v6289 = vunpack.c.l.b16 %v5827
    %v6290 = vunpack.c.h.b16 %v5827
    %v6291 = vunpack.c.l.b16 %v5828
    %v6292 = vunpack.c.l.b16 %v5829
    %v6293 = vunpack.c.h.b16 %v5829
    %v6294 = vunpack.c.l.b16 %v5830
    %v6295 = vunpack.c.l.b16 %v5831
    %v6296 = vunpack.c.h.b16 %v5831
    %v6297 = vunpack.c.l.b16 %v5832
    %v6298 = vunpack.c.l.b16 %v5833
    %v6299 = vunpack.c.h.b16 %v5833
    %v6300 = vunpack.c.l.b16 %v5834
    %v6301 = vpack.c.b16 %v6292, %v6289
    %v6302 = vpack.c.b16 %v6293, %v6290
    %v6303 = vpack.c.b16 %v6294, %v6291
    %v6304 = vpack.c.b16 %v6298, %v6295
    %v6305 = vpack.c.b16 %v6299, %v6296
    %v6306 = vpack.c.b16 %v6300, %v6297
    %v6312 = vsel %vm5249, %v5559, 0
    %v6315 = vsel %vm5249, %v6303, 0
    %v6318 = vsel %vm5249, %v6306, 0
    %6320 = vmatpush.bf16.xpose.msra.mxu0 0
    %6321 = vmatpush.bf16.xpose.msra.mxu0 0
    %6322 = vmatpush.bf16.xpose.msra.mxu0 0
    %6323 = vmatpush.bf16.xpose.msra.mxu0 0
    %6324 = vmatpush.bf16.xpose.msra.mxu0 0
    %6325 = vmatpush.bf16.xpose.msra.mxu0 0
    %6326 = vmatpush.bf16.xpose.msra.mxu0 %v6304
    %6327 = vmatpush.bf16.xpose.msra.mxu0 %v6301
    %6328 = vmatmul.bf16.gmra.mxu0 %v5688
    %v6329 = vpop.f32.mrf.mxu0
    %v6330 = vadd.f32 %v6140, %v6329
    %v6331 = vpop.f32.mrf.mxu0
    %6332 = vdwg.mxu0
    %6333 = vmatpush.bf16.xpose.msra.mxu0 0
    %6334 = vmatpush.bf16.xpose.msra.mxu0 0
    %6335 = vmatpush.bf16.xpose.msra.mxu0 0
    %6336 = vmatpush.bf16.xpose.msra.mxu0 0
    %6337 = vmatpush.bf16.xpose.msra.mxu0 0
    %6338 = vmatpush.bf16.xpose.msra.mxu0 0
    %6339 = vmatpush.bf16.xpose.msra.mxu0 %v6305
    %6340 = vmatpush.bf16.xpose.msra.mxu0 %v6302
    %6341 = vmatmul.bf16.gmra.mxu0 %v5689
    %v6342 = vpop.f32.mrf.mxu0
    %v6343 = vadd.f32 %v6330, %v6342
    %v6344 = vpop.f32.mrf.mxu0
    %6345 = vdwg.mxu0
    %6346 = vmatpush.bf16.xpose.msra.mxu0 0
    %6347 = vmatpush.bf16.xpose.msra.mxu0 0
    %6348 = vmatpush.bf16.xpose.msra.mxu0 0
    %6349 = vmatpush.bf16.xpose.msra.mxu0 0
    %6350 = vmatpush.bf16.xpose.msra.mxu0 0
    %6351 = vmatpush.bf16.xpose.msra.mxu0 0
    %6352 = vmatpush.bf16.xpose.msra.mxu0 %v6318
    %6353 = vmatpush.bf16.xpose.msra.mxu0 %v6315
    %6354 = vmatmul.bf16.gmra.mxu0 %v6312
    %v6355 = vpop.f32.mrf.mxu0
    %v6356 = vadd.f32 %v6343, %v6355
    %v6357 = vpop.f32.mrf.mxu0
    %6358 = vdwg.mxu0
    %v6367 = vunpack.c.l.b16 %v5835
    %v6368 = vunpack.c.h.b16 %v5835
    %v6369 = vunpack.c.l.b16 %v5836
    %v6370 = vunpack.c.l.b16 %v5837
    %v6371 = vunpack.c.h.b16 %v5837
    %v6372 = vunpack.c.l.b16 %v5838
    %v6373 = vunpack.c.l.b16 %v5839
    %v6374 = vunpack.c.h.b16 %v5839
    %v6375 = vunpack.c.l.b16 %v5840
    %v6376 = vunpack.c.l.b16 %v5841
    %v6377 = vunpack.c.h.b16 %v5841
    %v6378 = vunpack.c.l.b16 %v5842
    %v6379 = vpack.c.b16 %v6370, %v6367
    %v6380 = vpack.c.b16 %v6371, %v6368
    %v6381 = vpack.c.b16 %v6372, %v6369
    %v6382 = vpack.c.b16 %v6376, %v6373
    %v6383 = vpack.c.b16 %v6377, %v6374
    %v6384 = vpack.c.b16 %v6378, %v6375
    %v6390 = vsel %vm5249, %v5560, 0
    %v6393 = vsel %vm5249, %v6381, 0
    %v6396 = vsel %vm5249, %v6384, 0
    %6398 = vmatpush.bf16.xpose.msra.mxu0 0
    %6399 = vmatpush.bf16.xpose.msra.mxu0 0
    %6400 = vmatpush.bf16.xpose.msra.mxu0 0
    %6401 = vmatpush.bf16.xpose.msra.mxu0 0
    %6402 = vmatpush.bf16.xpose.msra.mxu0 0
    %6403 = vmatpush.bf16.xpose.msra.mxu0 0
    %6404 = vmatpush.bf16.xpose.msra.mxu0 %v6382
    %6405 = vmatpush.bf16.xpose.msra.mxu0 %v6379
    %6406 = vmatmul.bf16.gmra.mxu0 %v5690
    %v6407 = vpop.f32.mrf.mxu0
    %v6408 = vadd.f32 %v6141, %v6407
    %v6409 = vpop.f32.mrf.mxu0
    %6410 = vdwg.mxu0
    %6411 = vmatpush.bf16.xpose.msra.mxu0 0
    %6412 = vmatpush.bf16.xpose.msra.mxu0 0
    %6413 = vmatpush.bf16.xpose.msra.mxu0 0
    %6414 = vmatpush.bf16.xpose.msra.mxu0 0
    %6415 = vmatpush.bf16.xpose.msra.mxu0 0
    %6416 = vmatpush.bf16.xpose.msra.mxu0 0
    %6417 = vmatpush.bf16.xpose.msra.mxu0 %v6383
    %6418 = vmatpush.bf16.xpose.msra.mxu0 %v6380
    %6419 = vmatmul.bf16.gmra.mxu0 %v5691
    %v6420 = vpop.f32.mrf.mxu0
    %v6421 = vadd.f32 %v6408, %v6420
    %v6422 = vpop.f32.mrf.mxu0
    %6423 = vdwg.mxu0
    %6424 = vmatpush.bf16.xpose.msra.mxu0 0
    %6425 = vmatpush.bf16.xpose.msra.mxu0 0
    %6426 = vmatpush.bf16.xpose.msra.mxu0 0
    %6427 = vmatpush.bf16.xpose.msra.mxu0 0
    %6428 = vmatpush.bf16.xpose.msra.mxu0 0
    %6429 = vmatpush.bf16.xpose.msra.mxu0 0
    %6430 = vmatpush.bf16.xpose.msra.mxu0 %v6396
    %6431 = vmatpush.bf16.xpose.msra.mxu0 %v6393
    %6432 = vmatmul.bf16.gmra.mxu0 %v6390
    %v6433 = vpop.f32.mrf.mxu0
    %v6434 = vadd.f32 %v6421, %v6433
    %v6435 = vpop.f32.mrf.mxu0
    %6436 = vdwg.mxu0
    %v6445 = vunpack.c.l.b16 %v5843
    %v6446 = vunpack.c.h.b16 %v5843
    %v6447 = vunpack.c.l.b16 %v5844
    %v6448 = vunpack.c.l.b16 %v5845
    %v6449 = vunpack.c.h.b16 %v5845
    %v6450 = vunpack.c.l.b16 %v5846
    %v6451 = vunpack.c.l.b16 %v5847
    %v6452 = vunpack.c.h.b16 %v5847
    %v6453 = vunpack.c.l.b16 %v5848
    %v6454 = vunpack.c.l.b16 %v5849
    %v6455 = vunpack.c.h.b16 %v5849
    %v6456 = vunpack.c.l.b16 %v5850
    %v6457 = vpack.c.b16 %v6448, %v6445
    %v6458 = vpack.c.b16 %v6449, %v6446
    %v6459 = vpack.c.b16 %v6450, %v6447
    %v6460 = vpack.c.b16 %v6454, %v6451
    %v6461 = vpack.c.b16 %v6455, %v6452
    %v6462 = vpack.c.b16 %v6456, %v6453
    %v6468 = vsel %vm5249, %v5561, 0
    %v6471 = vsel %vm5249, %v6459, 0
    %v6474 = vsel %vm5249, %v6462, 0
    %6476 = vmatpush.bf16.xpose.msra.mxu0 0
    %6477 = vmatpush.bf16.xpose.msra.mxu0 0
    %6478 = vmatpush.bf16.xpose.msra.mxu0 0
    %6479 = vmatpush.bf16.xpose.msra.mxu0 0
    %6480 = vmatpush.bf16.xpose.msra.mxu0 0
    %6481 = vmatpush.bf16.xpose.msra.mxu0 0
    %6482 = vmatpush.bf16.xpose.msra.mxu0 %v6460
    %6483 = vmatpush.bf16.xpose.msra.mxu0 %v6457
    %6484 = vmatmul.bf16.gmra.mxu0 %v5692
    %v6485 = vpop.f32.mrf.mxu0
    %v6486 = vadd.f32 %v6142, %v6485
    %v6487 = vpop.f32.mrf.mxu0
    %6488 = vdwg.mxu0
    %6489 = vmatpush.bf16.xpose.msra.mxu0 0
    %6490 = vmatpush.bf16.xpose.msra.mxu0 0
    %6491 = vmatpush.bf16.xpose.msra.mxu0 0
    %6492 = vmatpush.bf16.xpose.msra.mxu0 0
    %6493 = vmatpush.bf16.xpose.msra.mxu0 0
    %6494 = vmatpush.bf16.xpose.msra.mxu0 0
    %6495 = vmatpush.bf16.xpose.msra.mxu0 %v6461
    %6496 = vmatpush.bf16.xpose.msra.mxu0 %v6458
    %6497 = vmatmul.bf16.gmra.mxu0 %v5693
    %v6498 = vpop.f32.mrf.mxu0
    %v6499 = vadd.f32 %v6486, %v6498
    %v6500 = vpop.f32.mrf.mxu0
    %6501 = vdwg.mxu0
    %6502 = vmatpush.bf16.xpose.msra.mxu0 0
    %6503 = vmatpush.bf16.xpose.msra.mxu0 0
    %6504 = vmatpush.bf16.xpose.msra.mxu0 0
    %6505 = vmatpush.bf16.xpose.msra.mxu0 0
    %6506 = vmatpush.bf16.xpose.msra.mxu0 0
    %6507 = vmatpush.bf16.xpose.msra.mxu0 0
    %6508 = vmatpush.bf16.xpose.msra.mxu0 %v6474
    %6509 = vmatpush.bf16.xpose.msra.mxu0 %v6471
    %6510 = vmatmul.bf16.gmra.mxu0 %v6468
    %v6511 = vpop.f32.mrf.mxu0
    %v6512 = vadd.f32 %v6499, %v6511
    %v6513 = vpop.f32.mrf.mxu0
    %6514 = vdwg.mxu0
    %v6523 = vunpack.c.l.b16 %v5851
    %v6524 = vunpack.c.h.b16 %v5851
    %v6525 = vunpack.c.l.b16 %v5852
    %v6526 = vunpack.c.l.b16 %v5853
    %v6527 = vunpack.c.h.b16 %v5853
    %v6528 = vunpack.c.l.b16 %v5854
    %v6529 = vunpack.c.l.b16 %v5855
    %v6530 = vunpack.c.h.b16 %v5855
    %v6531 = vunpack.c.l.b16 %v5856
    %v6532 = vunpack.c.l.b16 %v5857
    %v6533 = vunpack.c.h.b16 %v5857
    %v6534 = vunpack.c.l.b16 %v5858
    %v6535 = vpack.c.b16 %v6526, %v6523
    %v6536 = vpack.c.b16 %v6527, %v6524
    %v6537 = vpack.c.b16 %v6528, %v6525
    %v6538 = vpack.c.b16 %v6532, %v6529
    %v6539 = vpack.c.b16 %v6533, %v6530
    %v6540 = vpack.c.b16 %v6534, %v6531
    %v6546 = vsel %vm5249, %v5562, 0
    %v6549 = vsel %vm5249, %v6537, 0
    %v6552 = vsel %vm5249, %v6540, 0
    %6554 = vmatpush.bf16.xpose.msra.mxu0 0
    %6555 = vmatpush.bf16.xpose.msra.mxu0 0
    %6556 = vmatpush.bf16.xpose.msra.mxu0 0
    %6557 = vmatpush.bf16.xpose.msra.mxu0 0
    %6558 = vmatpush.bf16.xpose.msra.mxu0 0
    %6559 = vmatpush.bf16.xpose.msra.mxu0 0
    %6560 = vmatpush.bf16.xpose.msra.mxu0 %v6538
    %6561 = vmatpush.bf16.xpose.msra.mxu0 %v6535
    %6562 = vmatmul.bf16.gmra.mxu0 %v5694
    %v6563 = vpop.f32.mrf.mxu0
    %v6564 = vadd.f32 %v6143, %v6563
    %v6565 = vpop.f32.mrf.mxu0
    %6566 = vdwg.mxu0
    %6567 = vmatpush.bf16.xpose.msra.mxu0 0
    %6568 = vmatpush.bf16.xpose.msra.mxu0 0
    %6569 = vmatpush.bf16.xpose.msra.mxu0 0
    %6570 = vmatpush.bf16.xpose.msra.mxu0 0
    %6571 = vmatpush.bf16.xpose.msra.mxu0 0
    %6572 = vmatpush.bf16.xpose.msra.mxu0 0
    %6573 = vmatpush.bf16.xpose.msra.mxu0 %v6539
    %6574 = vmatpush.bf16.xpose.msra.mxu0 %v6536
    %6575 = vmatmul.bf16.gmra.mxu0 %v5695
    %v6576 = vpop.f32.mrf.mxu0
    %v6577 = vadd.f32 %v6564, %v6576
    %v6578 = vpop.f32.mrf.mxu0
    %6579 = vdwg.mxu0
    %6580 = vmatpush.bf16.xpose.msra.mxu0 0
    %6581 = vmatpush.bf16.xpose.msra.mxu0 0
    %6582 = vmatpush.bf16.xpose.msra.mxu0 0
    %6583 = vmatpush.bf16.xpose.msra.mxu0 0
    %6584 = vmatpush.bf16.xpose.msra.mxu0 0
    %6585 = vmatpush.bf16.xpose.msra.mxu0 0
    %6586 = vmatpush.bf16.xpose.msra.mxu0 %v6552
    %6587 = vmatpush.bf16.xpose.msra.mxu0 %v6549
    %6588 = vmatmul.bf16.gmra.mxu0 %v6546
    %v6589 = vpop.f32.mrf.mxu0
    %v6590 = vadd.f32 %v6577, %v6589
    %v6591 = vpop.f32.mrf.mxu0
    %6592 = vdwg.mxu0
    %v6601 = vunpack.c.l.b16 %v5859
    %v6602 = vunpack.c.h.b16 %v5859
    %v6603 = vunpack.c.l.b16 %v5860
    %v6604 = vunpack.c.l.b16 %v5861
    %v6605 = vunpack.c.h.b16 %v5861
    %v6606 = vunpack.c.l.b16 %v5862
    %v6607 = vunpack.c.l.b16 %v5863
    %v6608 = vunpack.c.h.b16 %v5863
    %v6609 = vunpack.c.l.b16 %v5864
    %v6610 = vunpack.c.l.b16 %v5865
    %v6611 = vunpack.c.h.b16 %v5865
    %v6612 = vunpack.c.l.b16 %v5866
    %v6613 = vpack.c.b16 %v6604, %v6601
    %v6614 = vpack.c.b16 %v6605, %v6602
    %v6615 = vpack.c.b16 %v6606, %v6603
    %v6616 = vpack.c.b16 %v6610, %v6607
    %v6617 = vpack.c.b16 %v6611, %v6608
    %v6618 = vpack.c.b16 %v6612, %v6609
    %v6624 = vsel %vm5249, %v5563, 0
    %v6627 = vsel %vm5249, %v6615, 0
    %v6630 = vsel %vm5249, %v6618, 0
    %6632 = vmatpush.bf16.xpose.msra.mxu0 0
    %6633 = vmatpush.bf16.xpose.msra.mxu0 0
    %6634 = vmatpush.bf16.xpose.msra.mxu0 0
    %6635 = vmatpush.bf16.xpose.msra.mxu0 0
    %6636 = vmatpush.bf16.xpose.msra.mxu0 0
    %6637 = vmatpush.bf16.xpose.msra.mxu0 0
    %6638 = vmatpush.bf16.xpose.msra.mxu0 %v6616
    %6639 = vmatpush.bf16.xpose.msra.mxu0 %v6613
    %6640 = vmatmul.bf16.gmra.mxu0 %v5696
    %v6641 = vpop.f32.mrf.mxu0
    %v6642 = vadd.f32 %v6144, %v6641
    %v6643 = vpop.f32.mrf.mxu0
    %6644 = vdwg.mxu0
    %6645 = vmatpush.bf16.xpose.msra.mxu0 0
    %6646 = vmatpush.bf16.xpose.msra.mxu0 0
    %6647 = vmatpush.bf16.xpose.msra.mxu0 0
    %6648 = vmatpush.bf16.xpose.msra.mxu0 0
    %6649 = vmatpush.bf16.xpose.msra.mxu0 0
    %6650 = vmatpush.bf16.xpose.msra.mxu0 0
    %6651 = vmatpush.bf16.xpose.msra.mxu0 %v6617
    %6652 = vmatpush.bf16.xpose.msra.mxu0 %v6614
    %6653 = vmatmul.bf16.gmra.mxu0 %v5697
    %v6654 = vpop.f32.mrf.mxu0
    %v6655 = vadd.f32 %v6642, %v6654
    %v6656 = vpop.f32.mrf.mxu0
    %6657 = vdwg.mxu0
    %6658 = vmatpush.bf16.xpose.msra.mxu0 0
    %6659 = vmatpush.bf16.xpose.msra.mxu0 0
    %6660 = vmatpush.bf16.xpose.msra.mxu0 0
    %6661 = vmatpush.bf16.xpose.msra.mxu0 0
    %6662 = vmatpush.bf16.xpose.msra.mxu0 0
    %6663 = vmatpush.bf16.xpose.msra.mxu0 0
    %6664 = vmatpush.bf16.xpose.msra.mxu0 %v6630
    %6665 = vmatpush.bf16.xpose.msra.mxu0 %v6627
    %6666 = vmatmul.bf16.gmra.mxu0 %v6624
    %v6667 = vpop.f32.mrf.mxu0
    %v6668 = vadd.f32 %v6655, %v6667
    %v6669 = vpop.f32.mrf.mxu0
    %6670 = vdwg.mxu0
    %v6679 = vunpack.c.l.b16 %v5867
    %v6680 = vunpack.c.h.b16 %v5867
    %v6681 = vunpack.c.l.b16 %v5868
    %v6682 = vunpack.c.l.b16 %v5869
    %v6683 = vunpack.c.h.b16 %v5869
    %v6684 = vunpack.c.l.b16 %v5870
    %v6685 = vunpack.c.l.b16 %v5871
    %v6686 = vunpack.c.h.b16 %v5871
    %v6687 = vunpack.c.l.b16 %v5872
    %v6688 = vunpack.c.l.b16 %v5873
    %v6689 = vunpack.c.h.b16 %v5873
    %v6690 = vunpack.c.l.b16 %v5874
    %v6691 = vpack.c.b16 %v6682, %v6679
    %v6692 = vpack.c.b16 %v6683, %v6680
    %v6693 = vpack.c.b16 %v6684, %v6681
    %v6694 = vpack.c.b16 %v6688, %v6685
    %v6695 = vpack.c.b16 %v6689, %v6686
    %v6696 = vpack.c.b16 %v6690, %v6687
    %v6702 = vsel %vm5249, %v5564, 0
    %v6705 = vsel %vm5249, %v6693, 0
    %v6708 = vsel %vm5249, %v6696, 0
    %6710 = vmatpush.bf16.xpose.msra.mxu0 0
    %6711 = vmatpush.bf16.xpose.msra.mxu0 0
    %6712 = vmatpush.bf16.xpose.msra.mxu0 0
    %6713 = vmatpush.bf16.xpose.msra.mxu0 0
    %6714 = vmatpush.bf16.xpose.msra.mxu0 0
    %6715 = vmatpush.bf16.xpose.msra.mxu0 0
    %6716 = vmatpush.bf16.xpose.msra.mxu0 %v6694
    %6717 = vmatpush.bf16.xpose.msra.mxu0 %v6691
    %6718 = vmatmul.bf16.gmra.mxu0 %v5698
    %v6719 = vpop.f32.mrf.mxu0
    %v6720 = vadd.f32 %v6145, %v6719
    %v6721 = vpop.f32.mrf.mxu0
    %6722 = vdwg.mxu0
    %6723 = vmatpush.bf16.xpose.msra.mxu0 0
    %6724 = vmatpush.bf16.xpose.msra.mxu0 0
    %6725 = vmatpush.bf16.xpose.msra.mxu0 0
    %6726 = vmatpush.bf16.xpose.msra.mxu0 0
    %6727 = vmatpush.bf16.xpose.msra.mxu0 0
    %6728 = vmatpush.bf16.xpose.msra.mxu0 0
    %6729 = vmatpush.bf16.xpose.msra.mxu0 %v6695
    %6730 = vmatpush.bf16.xpose.msra.mxu0 %v6692
    %6731 = vmatmul.bf16.gmra.mxu0 %v5699
    %v6732 = vpop.f32.mrf.mxu0
    %v6733 = vadd.f32 %v6720, %v6732
    %v6734 = vpop.f32.mrf.mxu0
    %6735 = vdwg.mxu0
    %6736 = vmatpush.bf16.xpose.msra.mxu0 0
    %6737 = vmatpush.bf16.xpose.msra.mxu0 0
    %6738 = vmatpush.bf16.xpose.msra.mxu0 0
    %6739 = vmatpush.bf16.xpose.msra.mxu0 0
    %6740 = vmatpush.bf16.xpose.msra.mxu0 0
    %6741 = vmatpush.bf16.xpose.msra.mxu0 0
    %6742 = vmatpush.bf16.xpose.msra.mxu0 %v6708
    %6743 = vmatpush.bf16.xpose.msra.mxu0 %v6705
    %6744 = vmatmul.bf16.gmra.mxu0 %v6702
    %v6745 = vpop.f32.mrf.mxu0
    %v6746 = vadd.f32 %v6733, %v6745
    %v6747 = vpop.f32.mrf.mxu0
    %6748 = vdwg.mxu0
    %v6757 = vunpack.c.l.b16 %v5875
    %v6758 = vunpack.c.h.b16 %v5875
    %v6759 = vunpack.c.l.b16 %v5876
    %v6760 = vunpack.c.l.b16 %v5877
    %v6761 = vunpack.c.h.b16 %v5877
    %v6762 = vunpack.c.l.b16 %v5878
    %v6763 = vunpack.c.l.b16 %v5879
    %v6764 = vunpack.c.h.b16 %v5879
    %v6765 = vunpack.c.l.b16 %v5880
    %v6766 = vunpack.c.l.b16 %v5881
    %v6767 = vunpack.c.h.b16 %v5881
    %v6768 = vunpack.c.l.b16 %v5882
    %v6769 = vpack.c.b16 %v6760, %v6757
    %v6770 = vpack.c.b16 %v6761, %v6758
    %v6771 = vpack.c.b16 %v6762, %v6759
    %v6772 = vpack.c.b16 %v6766, %v6763
    %v6773 = vpack.c.b16 %v6767, %v6764
    %v6774 = vpack.c.b16 %v6768, %v6765
    %v6780 = vsel %vm5249, %v5565, 0
    %v6783 = vsel %vm5249, %v6771, 0
    %v6786 = vsel %vm5249, %v6774, 0
    %6788 = vmatpush.bf16.xpose.msra.mxu0 0
    %6789 = vmatpush.bf16.xpose.msra.mxu0 0
    %6790 = vmatpush.bf16.xpose.msra.mxu0 0
    %6791 = vmatpush.bf16.xpose.msra.mxu0 0
    %6792 = vmatpush.bf16.xpose.msra.mxu0 0
    %6793 = vmatpush.bf16.xpose.msra.mxu0 0
    %6794 = vmatpush.bf16.xpose.msra.mxu0 %v6772
    %6795 = vmatpush.bf16.xpose.msra.mxu0 %v6769
    %6796 = vmatmul.bf16.gmra.mxu0 %v5700
    %v6797 = vpop.f32.mrf.mxu0
    %v6798 = vadd.f32 %v6146, %v6797
    %v6799 = vpop.f32.mrf.mxu0
    %6800 = vdwg.mxu0
    %6801 = vmatpush.bf16.xpose.msra.mxu0 0
    %6802 = vmatpush.bf16.xpose.msra.mxu0 0
    %6803 = vmatpush.bf16.xpose.msra.mxu0 0
    %6804 = vmatpush.bf16.xpose.msra.mxu0 0
    %6805 = vmatpush.bf16.xpose.msra.mxu0 0
    %6806 = vmatpush.bf16.xpose.msra.mxu0 0
    %6807 = vmatpush.bf16.xpose.msra.mxu0 %v6773
    %6808 = vmatpush.bf16.xpose.msra.mxu0 %v6770
    %6809 = vmatmul.bf16.gmra.mxu0 %v5701
    %v6810 = vpop.f32.mrf.mxu0
    %v6811 = vadd.f32 %v6798, %v6810
    %v6812 = vpop.f32.mrf.mxu0
    %6813 = vdwg.mxu0
    %6814 = vmatpush.bf16.xpose.msra.mxu0 0
    %6815 = vmatpush.bf16.xpose.msra.mxu0 0
    %6816 = vmatpush.bf16.xpose.msra.mxu0 0
    %6817 = vmatpush.bf16.xpose.msra.mxu0 0
    %6818 = vmatpush.bf16.xpose.msra.mxu0 0
    %6819 = vmatpush.bf16.xpose.msra.mxu0 0
    %6820 = vmatpush.bf16.xpose.msra.mxu0 %v6786
    %6821 = vmatpush.bf16.xpose.msra.mxu0 %v6783
    %6822 = vmatmul.bf16.gmra.mxu0 %v6780
    %v6823 = vpop.f32.mrf.mxu0
    %v6824 = vadd.f32 %v6811, %v6823
    %v6825 = vpop.f32.mrf.mxu0
    %6826 = vdwg.mxu0
    %v6835 = vunpack.c.l.b16 %v5883
    %v6836 = vunpack.c.h.b16 %v5883
    %v6837 = vunpack.c.l.b16 %v5884
    %v6838 = vunpack.c.l.b16 %v5885
    %v6839 = vunpack.c.h.b16 %v5885
    %v6840 = vunpack.c.l.b16 %v5886
    %v6841 = vunpack.c.l.b16 %v5887
    %v6842 = vunpack.c.h.b16 %v5887
    %v6843 = vunpack.c.l.b16 %v5888
    %v6844 = vunpack.c.l.b16 %v5889
    %v6845 = vunpack.c.h.b16 %v5889
    %v6846 = vunpack.c.l.b16 %v5890
    %v6847 = vpack.c.b16 %v6838, %v6835
    %v6848 = vpack.c.b16 %v6839, %v6836
    %v6849 = vpack.c.b16 %v6840, %v6837
    %v6850 = vpack.c.b16 %v6844, %v6841
    %v6851 = vpack.c.b16 %v6845, %v6842
    %v6852 = vpack.c.b16 %v6846, %v6843
    %v6858 = vsel %vm5249, %v5566, 0
    %v6861 = vsel %vm5249, %v6849, 0
    %v6864 = vsel %vm5249, %v6852, 0
    %6866 = vmatpush.bf16.xpose.msra.mxu0 0
    %6867 = vmatpush.bf16.xpose.msra.mxu0 0
    %6868 = vmatpush.bf16.xpose.msra.mxu0 0
    %6869 = vmatpush.bf16.xpose.msra.mxu0 0
    %6870 = vmatpush.bf16.xpose.msra.mxu0 0
    %6871 = vmatpush.bf16.xpose.msra.mxu0 0
    %6872 = vmatpush.bf16.xpose.msra.mxu0 %v6850
    %6873 = vmatpush.bf16.xpose.msra.mxu0 %v6847
    %6874 = vmatmul.bf16.gmra.mxu0 %v5702
    %v6875 = vpop.f32.mrf.mxu0
    %v6876 = vadd.f32 %v6147, %v6875
    %v6877 = vpop.f32.mrf.mxu0
    %6878 = vdwg.mxu0
    %6879 = vmatpush.bf16.xpose.msra.mxu0 0
    %6880 = vmatpush.bf16.xpose.msra.mxu0 0
    %6881 = vmatpush.bf16.xpose.msra.mxu0 0
    %6882 = vmatpush.bf16.xpose.msra.mxu0 0
    %6883 = vmatpush.bf16.xpose.msra.mxu0 0
    %6884 = vmatpush.bf16.xpose.msra.mxu0 0
    %6885 = vmatpush.bf16.xpose.msra.mxu0 %v6851
    %6886 = vmatpush.bf16.xpose.msra.mxu0 %v6848
    %6887 = vmatmul.bf16.gmra.mxu0 %v5703
    %v6888 = vpop.f32.mrf.mxu0
    %v6889 = vadd.f32 %v6876, %v6888
    %v6890 = vpop.f32.mrf.mxu0
    %6891 = vdwg.mxu0
    %6892 = vmatpush.bf16.xpose.msra.mxu0 0
    %6893 = vmatpush.bf16.xpose.msra.mxu0 0
    %6894 = vmatpush.bf16.xpose.msra.mxu0 0
    %6895 = vmatpush.bf16.xpose.msra.mxu0 0
    %6896 = vmatpush.bf16.xpose.msra.mxu0 0
    %6897 = vmatpush.bf16.xpose.msra.mxu0 0
    %6898 = vmatpush.bf16.xpose.msra.mxu0 %v6864
    %6899 = vmatpush.bf16.xpose.msra.mxu0 %v6861
    %6900 = vmatmul.bf16.gmra.mxu0 %v6858
    %v6901 = vpop.f32.mrf.mxu0
    %v6902 = vadd.f32 %v6889, %v6901
    %v6903 = vpop.f32.mrf.mxu0
    %6904 = vdwg.mxu0
    %v6913 = vunpack.c.l.b16 %v5891
    %v6914 = vunpack.c.h.b16 %v5891
    %v6915 = vunpack.c.l.b16 %v5892
    %v6916 = vunpack.c.l.b16 %v5893
    %v6917 = vunpack.c.h.b16 %v5893
    %v6918 = vunpack.c.l.b16 %v5894
    %v6919 = vunpack.c.l.b16 %v5895
    %v6920 = vunpack.c.h.b16 %v5895
    %v6921 = vunpack.c.l.b16 %v5896
    %v6922 = vunpack.c.l.b16 %v5897
    %v6923 = vunpack.c.h.b16 %v5897
    %v6924 = vunpack.c.l.b16 %v5898
    %v6925 = vpack.c.b16 %v6916, %v6913
    %v6926 = vpack.c.b16 %v6917, %v6914
    %v6927 = vpack.c.b16 %v6918, %v6915
    %v6928 = vpack.c.b16 %v6922, %v6919
    %v6929 = vpack.c.b16 %v6923, %v6920
    %v6930 = vpack.c.b16 %v6924, %v6921
    %v6936 = vsel %vm5249, %v5567, 0
    %v6939 = vsel %vm5249, %v6927, 0
    %v6942 = vsel %vm5249, %v6930, 0
    %6944 = vmatpush.bf16.xpose.msra.mxu0 0
    %6945 = vmatpush.bf16.xpose.msra.mxu0 0
    %6946 = vmatpush.bf16.xpose.msra.mxu0 0
    %6947 = vmatpush.bf16.xpose.msra.mxu0 0
    %6948 = vmatpush.bf16.xpose.msra.mxu0 0
    %6949 = vmatpush.bf16.xpose.msra.mxu0 0
    %6950 = vmatpush.bf16.xpose.msra.mxu0 %v6928
    %6951 = vmatpush.bf16.xpose.msra.mxu0 %v6925
    %6952 = vmatmul.bf16.gmra.mxu0 %v5704
    %v6953 = vpop.f32.mrf.mxu0
    %v6954 = vadd.f32 %v6148, %v6953
    %v6955 = vpop.f32.mrf.mxu0
    %6956 = vdwg.mxu0
    %6957 = vmatpush.bf16.xpose.msra.mxu0 0
    %6958 = vmatpush.bf16.xpose.msra.mxu0 0
    %6959 = vmatpush.bf16.xpose.msra.mxu0 0
    %6960 = vmatpush.bf16.xpose.msra.mxu0 0
    %6961 = vmatpush.bf16.xpose.msra.mxu0 0
    %6962 = vmatpush.bf16.xpose.msra.mxu0 0
    %6963 = vmatpush.bf16.xpose.msra.mxu0 %v6929
    %6964 = vmatpush.bf16.xpose.msra.mxu0 %v6926
    %6965 = vmatmul.bf16.gmra.mxu0 %v5705
    %v6966 = vpop.f32.mrf.mxu0
    %v6967 = vadd.f32 %v6954, %v6966
    %v6968 = vpop.f32.mrf.mxu0
    %6969 = vdwg.mxu0
    %6970 = vmatpush.bf16.xpose.msra.mxu0 0
    %6971 = vmatpush.bf16.xpose.msra.mxu0 0
    %6972 = vmatpush.bf16.xpose.msra.mxu0 0
    %6973 = vmatpush.bf16.xpose.msra.mxu0 0
    %6974 = vmatpush.bf16.xpose.msra.mxu0 0
    %6975 = vmatpush.bf16.xpose.msra.mxu0 0
    %6976 = vmatpush.bf16.xpose.msra.mxu0 %v6942
    %6977 = vmatpush.bf16.xpose.msra.mxu0 %v6939
    %6978 = vmatmul.bf16.gmra.mxu0 %v6936
    %v6979 = vpop.f32.mrf.mxu0
    %v6980 = vadd.f32 %v6967, %v6979
    %v6981 = vpop.f32.mrf.mxu0
    %6982 = vdwg.mxu0
    %v6991 = vunpack.c.l.b16 %v5899
    %v6992 = vunpack.c.h.b16 %v5899
    %v6993 = vunpack.c.l.b16 %v5900
    %v6994 = vunpack.c.l.b16 %v5901
    %v6995 = vunpack.c.h.b16 %v5901
    %v6996 = vunpack.c.l.b16 %v5902
    %v6997 = vunpack.c.l.b16 %v5903
    %v6998 = vunpack.c.h.b16 %v5903
    %v6999 = vunpack.c.l.b16 %v5904
    %v7000 = vunpack.c.l.b16 %v5905
    %v7001 = vunpack.c.h.b16 %v5905
    %v7002 = vunpack.c.l.b16 %v5906
    %v7003 = vpack.c.b16 %v6994, %v6991
    %v7004 = vpack.c.b16 %v6995, %v6992
    %v7005 = vpack.c.b16 %v6996, %v6993
    %v7006 = vpack.c.b16 %v7000, %v6997
    %v7007 = vpack.c.b16 %v7001, %v6998
    %v7008 = vpack.c.b16 %v7002, %v6999
    %v7014 = vsel %vm5249, %v5568, 0
    %v7017 = vsel %vm5249, %v7005, 0
    %v7020 = vsel %vm5249, %v7008, 0
    %7022 = vmatpush.bf16.xpose.msra.mxu0 0
    %7023 = vmatpush.bf16.xpose.msra.mxu0 0
    %7024 = vmatpush.bf16.xpose.msra.mxu0 0
    %7025 = vmatpush.bf16.xpose.msra.mxu0 0
    %7026 = vmatpush.bf16.xpose.msra.mxu0 0
    %7027 = vmatpush.bf16.xpose.msra.mxu0 0
    %7028 = vmatpush.bf16.xpose.msra.mxu0 %v7006
    %7029 = vmatpush.bf16.xpose.msra.mxu0 %v7003
    %7030 = vmatmul.bf16.gmra.mxu0 %v5706
    %v7031 = vpop.f32.mrf.mxu0
    %v7032 = vadd.f32 %v6149, %v7031
    %v7033 = vpop.f32.mrf.mxu0
    %7034 = vdwg.mxu0
    %7035 = vmatpush.bf16.xpose.msra.mxu0 0
    %7036 = vmatpush.bf16.xpose.msra.mxu0 0
    %7037 = vmatpush.bf16.xpose.msra.mxu0 0
    %7038 = vmatpush.bf16.xpose.msra.mxu0 0
    %7039 = vmatpush.bf16.xpose.msra.mxu0 0
    %7040 = vmatpush.bf16.xpose.msra.mxu0 0
    %7041 = vmatpush.bf16.xpose.msra.mxu0 %v7007
    %7042 = vmatpush.bf16.xpose.msra.mxu0 %v7004
    %7043 = vmatmul.bf16.gmra.mxu0 %v5707
    %v7044 = vpop.f32.mrf.mxu0
    %v7045 = vadd.f32 %v7032, %v7044
    %v7046 = vpop.f32.mrf.mxu0
    %7047 = vdwg.mxu0
    %7048 = vmatpush.bf16.xpose.msra.mxu0 0
    %7049 = vmatpush.bf16.xpose.msra.mxu0 0
    %7050 = vmatpush.bf16.xpose.msra.mxu0 0
    %7051 = vmatpush.bf16.xpose.msra.mxu0 0
    %7052 = vmatpush.bf16.xpose.msra.mxu0 0
    %7053 = vmatpush.bf16.xpose.msra.mxu0 0
    %7054 = vmatpush.bf16.xpose.msra.mxu0 %v7020
    %7055 = vmatpush.bf16.xpose.msra.mxu0 %v7017
    %7056 = vmatmul.bf16.gmra.mxu0 %v7014
    %v7057 = vpop.f32.mrf.mxu0
    %v7058 = vadd.f32 %v7045, %v7057
    %v7059 = vpop.f32.mrf.mxu0
    %7060 = vdwg.mxu0
    %v7069 = vunpack.c.l.b16 %v5907
    %v7070 = vunpack.c.h.b16 %v5907
    %v7071 = vunpack.c.l.b16 %v5908
    %v7072 = vunpack.c.l.b16 %v5909
    %v7073 = vunpack.c.h.b16 %v5909
    %v7074 = vunpack.c.l.b16 %v5910
    %v7075 = vunpack.c.l.b16 %v5911
    %v7076 = vunpack.c.h.b16 %v5911
    %v7077 = vunpack.c.l.b16 %v5912
    %v7078 = vunpack.c.l.b16 %v5913
    %v7079 = vunpack.c.h.b16 %v5913
    %v7080 = vunpack.c.l.b16 %v5914
    %v7081 = vpack.c.b16 %v7072, %v7069
    %v7082 = vpack.c.b16 %v7073, %v7070
    %v7083 = vpack.c.b16 %v7074, %v7071
    %v7084 = vpack.c.b16 %v7078, %v7075
    %v7085 = vpack.c.b16 %v7079, %v7076
    %v7086 = vpack.c.b16 %v7080, %v7077
    %v7092 = vsel %vm5249, %v5569, 0
    %v7095 = vsel %vm5249, %v7083, 0
    %v7098 = vsel %vm5249, %v7086, 0
    %7100 = vmatpush.bf16.xpose.msra.mxu0 0
    %7101 = vmatpush.bf16.xpose.msra.mxu0 0
    %7102 = vmatpush.bf16.xpose.msra.mxu0 0
    %7103 = vmatpush.bf16.xpose.msra.mxu0 0
    %7104 = vmatpush.bf16.xpose.msra.mxu0 0
    %7105 = vmatpush.bf16.xpose.msra.mxu0 0
    %7106 = vmatpush.bf16.xpose.msra.mxu0 %v7084
    %7107 = vmatpush.bf16.xpose.msra.mxu0 %v7081
    %7108 = vmatmul.bf16.gmra.mxu0 %v5708
    %v7109 = vpop.f32.mrf.mxu0
    %v7110 = vadd.f32 %v6150, %v7109
    %v7111 = vpop.f32.mrf.mxu0
    %7112 = vdwg.mxu0
    %7113 = vmatpush.bf16.xpose.msra.mxu0 0
    %7114 = vmatpush.bf16.xpose.msra.mxu0 0
    %7115 = vmatpush.bf16.xpose.msra.mxu0 0
    %7116 = vmatpush.bf16.xpose.msra.mxu0 0
    %7117 = vmatpush.bf16.xpose.msra.mxu0 0
    %7118 = vmatpush.bf16.xpose.msra.mxu0 0
    %7119 = vmatpush.bf16.xpose.msra.mxu0 %v7085
    %7120 = vmatpush.bf16.xpose.msra.mxu0 %v7082
    %7121 = vmatmul.bf16.gmra.mxu0 %v5709
    %v7122 = vpop.f32.mrf.mxu0
    %v7123 = vadd.f32 %v7110, %v7122
    %v7124 = vpop.f32.mrf.mxu0
    %7125 = vdwg.mxu0
    %7126 = vmatpush.bf16.xpose.msra.mxu0 0
    %7127 = vmatpush.bf16.xpose.msra.mxu0 0
    %7128 = vmatpush.bf16.xpose.msra.mxu0 0
    %7129 = vmatpush.bf16.xpose.msra.mxu0 0
    %7130 = vmatpush.bf16.xpose.msra.mxu0 0
    %7131 = vmatpush.bf16.xpose.msra.mxu0 0
    %7132 = vmatpush.bf16.xpose.msra.mxu0 %v7098
    %7133 = vmatpush.bf16.xpose.msra.mxu0 %v7095
    %7134 = vmatmul.bf16.gmra.mxu0 %v7092
    %v7135 = vpop.f32.mrf.mxu0
    %v7136 = vadd.f32 %v7123, %v7135
    %v7137 = vpop.f32.mrf.mxu0
    %7138 = vdwg.mxu0
    %v7147 = vunpack.c.l.b16 %v5915
    %v7148 = vunpack.c.h.b16 %v5915
    %v7149 = vunpack.c.l.b16 %v5916
    %v7150 = vunpack.c.l.b16 %v5917
    %v7151 = vunpack.c.h.b16 %v5917
    %v7152 = vunpack.c.l.b16 %v5918
    %v7153 = vunpack.c.l.b16 %v5919
    %v7154 = vunpack.c.h.b16 %v5919
    %v7155 = vunpack.c.l.b16 %v5920
    %v7156 = vunpack.c.l.b16 %v5921
    %v7157 = vunpack.c.h.b16 %v5921
    %v7158 = vunpack.c.l.b16 %v5922
    %v7159 = vpack.c.b16 %v7150, %v7147
    %v7160 = vpack.c.b16 %v7151, %v7148
    %v7161 = vpack.c.b16 %v7152, %v7149
    %v7162 = vpack.c.b16 %v7156, %v7153
    %v7163 = vpack.c.b16 %v7157, %v7154
    %v7164 = vpack.c.b16 %v7158, %v7155
    %v7170 = vsel %vm5249, %v5570, 0
    %v7173 = vsel %vm5249, %v7161, 0
    %v7176 = vsel %vm5249, %v7164, 0
    %7178 = vmatpush.bf16.xpose.msra.mxu0 0
    %7179 = vmatpush.bf16.xpose.msra.mxu0 0
    %7180 = vmatpush.bf16.xpose.msra.mxu0 0
    %7181 = vmatpush.bf16.xpose.msra.mxu0 0
    %7182 = vmatpush.bf16.xpose.msra.mxu0 0
    %7183 = vmatpush.bf16.xpose.msra.mxu0 0
    %7184 = vmatpush.bf16.xpose.msra.mxu0 %v7162
    %7185 = vmatpush.bf16.xpose.msra.mxu0 %v7159
    %7186 = vmatmul.bf16.gmra.mxu0 %v5710
    %v7187 = vpop.f32.mrf.mxu0
    %v7188 = vadd.f32 %v6151, %v7187
    %v7189 = vpop.f32.mrf.mxu0
    %7190 = vdwg.mxu0
    %7191 = vmatpush.bf16.xpose.msra.mxu0 0
    %7192 = vmatpush.bf16.xpose.msra.mxu0 0
    %7193 = vmatpush.bf16.xpose.msra.mxu0 0
    %7194 = vmatpush.bf16.xpose.msra.mxu0 0
    %7195 = vmatpush.bf16.xpose.msra.mxu0 0
    %7196 = vmatpush.bf16.xpose.msra.mxu0 0
    %7197 = vmatpush.bf16.xpose.msra.mxu0 %v7163
    %7198 = vmatpush.bf16.xpose.msra.mxu0 %v7160
    %7199 = vmatmul.bf16.gmra.mxu0 %v5711
    %v7200 = vpop.f32.mrf.mxu0
    %v7201 = vadd.f32 %v7188, %v7200
    %v7202 = vpop.f32.mrf.mxu0
    %7203 = vdwg.mxu0
    %7204 = vmatpush.bf16.xpose.msra.mxu0 0
    %7205 = vmatpush.bf16.xpose.msra.mxu0 0
    %7206 = vmatpush.bf16.xpose.msra.mxu0 0
    %7207 = vmatpush.bf16.xpose.msra.mxu0 0
    %7208 = vmatpush.bf16.xpose.msra.mxu0 0
    %7209 = vmatpush.bf16.xpose.msra.mxu0 0
    %7210 = vmatpush.bf16.xpose.msra.mxu0 %v7176
    %7211 = vmatpush.bf16.xpose.msra.mxu0 %v7173
    %7212 = vmatmul.bf16.gmra.mxu0 %v7170
    %v7213 = vpop.f32.mrf.mxu0
    %v7214 = vadd.f32 %v7201, %v7213
    %v7215 = vpop.f32.mrf.mxu0
    %7216 = vdwg.mxu0
    %v7225 = vunpack.c.l.b16 %v5923
    %v7226 = vunpack.c.h.b16 %v5923
    %v7227 = vunpack.c.l.b16 %v5924
    %v7228 = vunpack.c.l.b16 %v5925
    %v7229 = vunpack.c.h.b16 %v5925
    %v7230 = vunpack.c.l.b16 %v5926
    %v7231 = vunpack.c.l.b16 %v5927
    %v7232 = vunpack.c.h.b16 %v5927
    %v7233 = vunpack.c.l.b16 %v5928
    %v7234 = vunpack.c.l.b16 %v5929
    %v7235 = vunpack.c.h.b16 %v5929
    %v7236 = vunpack.c.l.b16 %v5930
    %v7237 = vpack.c.b16 %v7228, %v7225
    %v7238 = vpack.c.b16 %v7229, %v7226
    %v7239 = vpack.c.b16 %v7230, %v7227
    %v7240 = vpack.c.b16 %v7234, %v7231
    %v7241 = vpack.c.b16 %v7235, %v7232
    %v7242 = vpack.c.b16 %v7236, %v7233
    %v7248 = vsel %vm5249, %v5571, 0
    %v7251 = vsel %vm5249, %v7239, 0
    %v7254 = vsel %vm5249, %v7242, 0
    %7256 = vmatpush.bf16.xpose.msra.mxu0 0
    %7257 = vmatpush.bf16.xpose.msra.mxu0 0
    %7258 = vmatpush.bf16.xpose.msra.mxu0 0
    %7259 = vmatpush.bf16.xpose.msra.mxu0 0
    %7260 = vmatpush.bf16.xpose.msra.mxu0 0
    %7261 = vmatpush.bf16.xpose.msra.mxu0 0
    %7262 = vmatpush.bf16.xpose.msra.mxu0 %v7240
    %7263 = vmatpush.bf16.xpose.msra.mxu0 %v7237
    %7264 = vmatmul.bf16.gmra.mxu0 %v5712
    %v7265 = vpop.f32.mrf.mxu0
    %v7266 = vadd.f32 %v6152, %v7265
    %v7267 = vpop.f32.mrf.mxu0
    %7268 = vdwg.mxu0
    %7269 = vmatpush.bf16.xpose.msra.mxu0 0
    %7270 = vmatpush.bf16.xpose.msra.mxu0 0
    %7271 = vmatpush.bf16.xpose.msra.mxu0 0
    %7272 = vmatpush.bf16.xpose.msra.mxu0 0
    %7273 = vmatpush.bf16.xpose.msra.mxu0 0
    %7274 = vmatpush.bf16.xpose.msra.mxu0 0
    %7275 = vmatpush.bf16.xpose.msra.mxu0 %v7241
    %7276 = vmatpush.bf16.xpose.msra.mxu0 %v7238
    %7277 = vmatmul.bf16.gmra.mxu0 %v5713
    %v7278 = vpop.f32.mrf.mxu0
    %v7279 = vadd.f32 %v7266, %v7278
    %v7280 = vpop.f32.mrf.mxu0
    %7281 = vdwg.mxu0
    %7282 = vmatpush.bf16.xpose.msra.mxu0 0
    %7283 = vmatpush.bf16.xpose.msra.mxu0 0
    %7284 = vmatpush.bf16.xpose.msra.mxu0 0
    %7285 = vmatpush.bf16.xpose.msra.mxu0 0
    %7286 = vmatpush.bf16.xpose.msra.mxu0 0
    %7287 = vmatpush.bf16.xpose.msra.mxu0 0
    %7288 = vmatpush.bf16.xpose.msra.mxu0 %v7254
    %7289 = vmatpush.bf16.xpose.msra.mxu0 %v7251
    %7290 = vmatmul.bf16.gmra.mxu0 %v7248
    %v7291 = vpop.f32.mrf.mxu0
    %v7292 = vadd.f32 %v7279, %v7291
    %v7293 = vpop.f32.mrf.mxu0
    %7294 = vdwg.mxu0
    %v7303 = vunpack.c.l.b16 %v5931
    %v7304 = vunpack.c.h.b16 %v5931
    %v7305 = vunpack.c.l.b16 %v5932
    %v7306 = vunpack.c.l.b16 %v5933
    %v7307 = vunpack.c.h.b16 %v5933
    %v7308 = vunpack.c.l.b16 %v5934
    %v7309 = vunpack.c.l.b16 %v5935
    %v7310 = vunpack.c.h.b16 %v5935
    %v7311 = vunpack.c.l.b16 %v5936
    %v7312 = vunpack.c.l.b16 %v5937
    %v7313 = vunpack.c.h.b16 %v5937
    %v7314 = vunpack.c.l.b16 %v5938
    %v7315 = vpack.c.b16 %v7306, %v7303
    %v7316 = vpack.c.b16 %v7307, %v7304
    %v7317 = vpack.c.b16 %v7308, %v7305
    %v7318 = vpack.c.b16 %v7312, %v7309
    %v7319 = vpack.c.b16 %v7313, %v7310
    %v7320 = vpack.c.b16 %v7314, %v7311
    %v7326 = vsel %vm5249, %v5572, 0
    %v7329 = vsel %vm5249, %v7317, 0
    %v7332 = vsel %vm5249, %v7320, 0
    %7334 = vmatpush.bf16.xpose.msra.mxu0 0
    %7335 = vmatpush.bf16.xpose.msra.mxu0 0
    %7336 = vmatpush.bf16.xpose.msra.mxu0 0
    %7337 = vmatpush.bf16.xpose.msra.mxu0 0
    %7338 = vmatpush.bf16.xpose.msra.mxu0 0
    %7339 = vmatpush.bf16.xpose.msra.mxu0 0
    %7340 = vmatpush.bf16.xpose.msra.mxu0 %v7318
    %7341 = vmatpush.bf16.xpose.msra.mxu0 %v7315
    %7342 = vmatmul.bf16.gmra.mxu0 %v5714
    %v7343 = vpop.f32.mrf.mxu0
    %v7344 = vadd.f32 %v6153, %v7343
    %v7345 = vpop.f32.mrf.mxu0
    %7346 = vdwg.mxu0
    %7347 = vmatpush.bf16.xpose.msra.mxu0 0
    %7348 = vmatpush.bf16.xpose.msra.mxu0 0
    %7349 = vmatpush.bf16.xpose.msra.mxu0 0
    %7350 = vmatpush.bf16.xpose.msra.mxu0 0
    %7351 = vmatpush.bf16.xpose.msra.mxu0 0
    %7352 = vmatpush.bf16.xpose.msra.mxu0 0
    %7353 = vmatpush.bf16.xpose.msra.mxu0 %v7319
    %7354 = vmatpush.bf16.xpose.msra.mxu0 %v7316
    %7355 = vmatmul.bf16.gmra.mxu0 %v5715
    %v7356 = vpop.f32.mrf.mxu0
    %v7357 = vadd.f32 %v7344, %v7356
    %v7358 = vpop.f32.mrf.mxu0
    %7359 = vdwg.mxu0
    %7360 = vmatpush.bf16.xpose.msra.mxu0 0
    %7361 = vmatpush.bf16.xpose.msra.mxu0 0
    %7362 = vmatpush.bf16.xpose.msra.mxu0 0
    %7363 = vmatpush.bf16.xpose.msra.mxu0 0
    %7364 = vmatpush.bf16.xpose.msra.mxu0 0
    %7365 = vmatpush.bf16.xpose.msra.mxu0 0
    %7366 = vmatpush.bf16.xpose.msra.mxu0 %v7332
    %7367 = vmatpush.bf16.xpose.msra.mxu0 %v7329
    %7368 = vmatmul.bf16.gmra.mxu0 %v7326
    %v7369 = vpop.f32.mrf.mxu0
    %v7370 = vadd.f32 %v7357, %v7369
    %v7371 = vpop.f32.mrf.mxu0
    %7372 = vdwg.mxu0
    %v7381 = vunpack.c.l.b16 %v5939
    %v7382 = vunpack.c.h.b16 %v5939
    %v7383 = vunpack.c.l.b16 %v5940
    %v7384 = vunpack.c.l.b16 %v5941
    %v7385 = vunpack.c.h.b16 %v5941
    %v7386 = vunpack.c.l.b16 %v5942
    %v7387 = vunpack.c.l.b16 %v5943
    %v7388 = vunpack.c.h.b16 %v5943
    %v7389 = vunpack.c.l.b16 %v5944
    %v7390 = vunpack.c.l.b16 %v5945
    %v7391 = vunpack.c.h.b16 %v5945
    %v7392 = vunpack.c.l.b16 %v5946
    %v7393 = vpack.c.b16 %v7384, %v7381
    %v7394 = vpack.c.b16 %v7385, %v7382
    %v7395 = vpack.c.b16 %v7386, %v7383
    %v7396 = vpack.c.b16 %v7390, %v7387
    %v7397 = vpack.c.b16 %v7391, %v7388
    %v7398 = vpack.c.b16 %v7392, %v7389
    %v7404 = vsel %vm5249, %v5573, 0
    %v7407 = vsel %vm5249, %v7395, 0
    %v7410 = vsel %vm5249, %v7398, 0
    %7412 = vmatpush.bf16.xpose.msra.mxu0 0
    %7413 = vmatpush.bf16.xpose.msra.mxu0 0
    %7414 = vmatpush.bf16.xpose.msra.mxu0 0
    %7415 = vmatpush.bf16.xpose.msra.mxu0 0
    %7416 = vmatpush.bf16.xpose.msra.mxu0 0
    %7417 = vmatpush.bf16.xpose.msra.mxu0 0
    %7418 = vmatpush.bf16.xpose.msra.mxu0 %v7396
    %7419 = vmatpush.bf16.xpose.msra.mxu0 %v7393
    %7420 = vmatmul.bf16.gmra.mxu0 %v5716
    %v7421 = vpop.f32.mrf.mxu0
    %v7422 = vadd.f32 %v6154, %v7421
    %v7423 = vpop.f32.mrf.mxu0
    %7424 = vdwg.mxu0
    %7425 = vmatpush.bf16.xpose.msra.mxu0 0
    %7426 = vmatpush.bf16.xpose.msra.mxu0 0
    %7427 = vmatpush.bf16.xpose.msra.mxu0 0
    %7428 = vmatpush.bf16.xpose.msra.mxu0 0
    %7429 = vmatpush.bf16.xpose.msra.mxu0 0
    %7430 = vmatpush.bf16.xpose.msra.mxu0 0
    %7431 = vmatpush.bf16.xpose.msra.mxu0 %v7397
    %7432 = vmatpush.bf16.xpose.msra.mxu0 %v7394
    %7433 = vmatmul.bf16.gmra.mxu0 %v5717
    %v7434 = vpop.f32.mrf.mxu0
    %v7435 = vadd.f32 %v7422, %v7434
    %v7436 = vpop.f32.mrf.mxu0
    %7437 = vdwg.mxu0
    %7438 = vmatpush.bf16.xpose.msra.mxu0 0
    %7439 = vmatpush.bf16.xpose.msra.mxu0 0
    %7440 = vmatpush.bf16.xpose.msra.mxu0 0
    %7441 = vmatpush.bf16.xpose.msra.mxu0 0
    %7442 = vmatpush.bf16.xpose.msra.mxu0 0
    %7443 = vmatpush.bf16.xpose.msra.mxu0 0
    %7444 = vmatpush.bf16.xpose.msra.mxu0 %v7410
    %7445 = vmatpush.bf16.xpose.msra.mxu0 %v7407
    %7446 = vmatmul.bf16.gmra.mxu0 %v7404
    %v7447 = vpop.f32.mrf.mxu0
    %v7448 = vadd.f32 %v7435, %v7447
    %v7449 = vpop.f32.mrf.mxu0
    %7450 = vdwg.mxu0
    %v7459 = vunpack.c.l.b16 %v5947
    %v7460 = vunpack.c.h.b16 %v5947
    %v7461 = vunpack.c.l.b16 %v5948
    %v7462 = vunpack.c.l.b16 %v5949
    %v7463 = vunpack.c.h.b16 %v5949
    %v7464 = vunpack.c.l.b16 %v5950
    %v7465 = vunpack.c.l.b16 %v5951
    %v7466 = vunpack.c.h.b16 %v5951
    %v7467 = vunpack.c.l.b16 %v5952
    %v7468 = vunpack.c.l.b16 %v5953
    %v7469 = vunpack.c.h.b16 %v5953
    %v7470 = vunpack.c.l.b16 %v5954
    %v7471 = vpack.c.b16 %v7462, %v7459
    %v7472 = vpack.c.b16 %v7463, %v7460
    %v7473 = vpack.c.b16 %v7464, %v7461
    %v7474 = vpack.c.b16 %v7468, %v7465
    %v7475 = vpack.c.b16 %v7469, %v7466
    %v7476 = vpack.c.b16 %v7470, %v7467
    %v7482 = vsel %vm5249, %v5574, 0
    %v7485 = vsel %vm5249, %v7473, 0
    %v7488 = vsel %vm5249, %v7476, 0
    %7490 = vmatpush.bf16.xpose.msra.mxu0 0
    %7491 = vmatpush.bf16.xpose.msra.mxu0 0
    %7492 = vmatpush.bf16.xpose.msra.mxu0 0
    %7493 = vmatpush.bf16.xpose.msra.mxu0 0
    %7494 = vmatpush.bf16.xpose.msra.mxu0 0
    %7495 = vmatpush.bf16.xpose.msra.mxu0 0
    %7496 = vmatpush.bf16.xpose.msra.mxu0 %v7474
    %7497 = vmatpush.bf16.xpose.msra.mxu0 %v7471
    %7498 = vmatmul.bf16.gmra.mxu0 %v5718
    %v7499 = vpop.f32.mrf.mxu0
    %v7500 = vadd.f32 %v6155, %v7499
    %v7501 = vpop.f32.mrf.mxu0
    %7502 = vdwg.mxu0
    %7503 = vmatpush.bf16.xpose.msra.mxu0 0
    %7504 = vmatpush.bf16.xpose.msra.mxu0 0
    %7505 = vmatpush.bf16.xpose.msra.mxu0 0
    %7506 = vmatpush.bf16.xpose.msra.mxu0 0
    %7507 = vmatpush.bf16.xpose.msra.mxu0 0
    %7508 = vmatpush.bf16.xpose.msra.mxu0 0
    %7509 = vmatpush.bf16.xpose.msra.mxu0 %v7475
    %7510 = vmatpush.bf16.xpose.msra.mxu0 %v7472
    %7511 = vmatmul.bf16.gmra.mxu0 %v5719
    %v7512 = vpop.f32.mrf.mxu0
    %v7513 = vadd.f32 %v7500, %v7512
    %v7514 = vpop.f32.mrf.mxu0
    %7515 = vdwg.mxu0
    %7516 = vmatpush.bf16.xpose.msra.mxu0 0
    %7517 = vmatpush.bf16.xpose.msra.mxu0 0
    %7518 = vmatpush.bf16.xpose.msra.mxu0 0
    %7519 = vmatpush.bf16.xpose.msra.mxu0 0
    %7520 = vmatpush.bf16.xpose.msra.mxu0 0
    %7521 = vmatpush.bf16.xpose.msra.mxu0 0
    %7522 = vmatpush.bf16.xpose.msra.mxu0 %v7488
    %7523 = vmatpush.bf16.xpose.msra.mxu0 %v7485
    %7524 = vmatmul.bf16.gmra.mxu0 %v7482
    %v7525 = vpop.f32.mrf.mxu0
    %v7526 = vadd.f32 %v7513, %v7525
    %v7527 = vpop.f32.mrf.mxu0
    %7528 = vdwg.mxu0
    %v7537 = vunpack.c.l.b16 %v5955
    %v7538 = vunpack.c.h.b16 %v5955
    %v7539 = vunpack.c.l.b16 %v5956
    %v7540 = vunpack.c.l.b16 %v5957
    %v7541 = vunpack.c.h.b16 %v5957
    %v7542 = vunpack.c.l.b16 %v5958
    %v7543 = vunpack.c.l.b16 %v5959
    %v7544 = vunpack.c.h.b16 %v5959
    %v7545 = vunpack.c.l.b16 %v5960
    %v7546 = vunpack.c.l.b16 %v5961
    %v7547 = vunpack.c.h.b16 %v5961
    %v7548 = vunpack.c.l.b16 %v5962
    %v7549 = vpack.c.b16 %v7540, %v7537
    %v7550 = vpack.c.b16 %v7541, %v7538
    %v7551 = vpack.c.b16 %v7542, %v7539
    %v7552 = vpack.c.b16 %v7546, %v7543
    %v7553 = vpack.c.b16 %v7547, %v7544
    %v7554 = vpack.c.b16 %v7548, %v7545
    %v7560 = vsel %vm5249, %v5575, 0
    %v7563 = vsel %vm5249, %v7551, 0
    %v7566 = vsel %vm5249, %v7554, 0
    %7568 = vmatpush.bf16.xpose.msra.mxu0 0
    %7569 = vmatpush.bf16.xpose.msra.mxu0 0
    %7570 = vmatpush.bf16.xpose.msra.mxu0 0
    %7571 = vmatpush.bf16.xpose.msra.mxu0 0
    %7572 = vmatpush.bf16.xpose.msra.mxu0 0
    %7573 = vmatpush.bf16.xpose.msra.mxu0 0
    %7574 = vmatpush.bf16.xpose.msra.mxu0 %v7552
    %7575 = vmatpush.bf16.xpose.msra.mxu0 %v7549
    %7576 = vmatmul.bf16.gmra.mxu0 %v5720
    %v7577 = vpop.f32.mrf.mxu0
    %v7578 = vadd.f32 %v6156, %v7577
    %v7579 = vpop.f32.mrf.mxu0
    %7580 = vdwg.mxu0
    %7581 = vmatpush.bf16.xpose.msra.mxu0 0
    %7582 = vmatpush.bf16.xpose.msra.mxu0 0
    %7583 = vmatpush.bf16.xpose.msra.mxu0 0
    %7584 = vmatpush.bf16.xpose.msra.mxu0 0
    %7585 = vmatpush.bf16.xpose.msra.mxu0 0
    %7586 = vmatpush.bf16.xpose.msra.mxu0 0
    %7587 = vmatpush.bf16.xpose.msra.mxu0 %v7553
    %7588 = vmatpush.bf16.xpose.msra.mxu0 %v7550
    %7589 = vmatmul.bf16.gmra.mxu0 %v5721
    %v7590 = vpop.f32.mrf.mxu0
    %v7591 = vadd.f32 %v7578, %v7590
    %v7592 = vpop.f32.mrf.mxu0
    %7593 = vdwg.mxu0
    %7594 = vmatpush.bf16.xpose.msra.mxu0 0
    %7595 = vmatpush.bf16.xpose.msra.mxu0 0
    %7596 = vmatpush.bf16.xpose.msra.mxu0 0
    %7597 = vmatpush.bf16.xpose.msra.mxu0 0
    %7598 = vmatpush.bf16.xpose.msra.mxu0 0
    %7599 = vmatpush.bf16.xpose.msra.mxu0 0
    %7600 = vmatpush.bf16.xpose.msra.mxu0 %v7566
    %7601 = vmatpush.bf16.xpose.msra.mxu0 %v7563
    %7602 = vmatmul.bf16.gmra.mxu0 %v7560
    %v7603 = vpop.f32.mrf.mxu0
    %v7604 = vadd.f32 %v7591, %v7603
    %v7605 = vpop.f32.mrf.mxu0
    %7606 = vdwg.mxu0
    %v7615 = vunpack.c.l.b16 %v5963
    %v7616 = vunpack.c.h.b16 %v5963
    %v7617 = vunpack.c.l.b16 %v5964
    %v7618 = vunpack.c.l.b16 %v5965
    %v7619 = vunpack.c.h.b16 %v5965
    %v7620 = vunpack.c.l.b16 %v5966
    %v7621 = vunpack.c.l.b16 %v5967
    %v7622 = vunpack.c.h.b16 %v5967
    %v7623 = vunpack.c.l.b16 %v5968
    %v7624 = vunpack.c.l.b16 %v5969
    %v7625 = vunpack.c.h.b16 %v5969
    %v7626 = vunpack.c.l.b16 %v5970
    %v7627 = vpack.c.b16 %v7618, %v7615
    %v7628 = vpack.c.b16 %v7619, %v7616
    %v7629 = vpack.c.b16 %v7620, %v7617
    %v7630 = vpack.c.b16 %v7624, %v7621
    %v7631 = vpack.c.b16 %v7625, %v7622
    %v7632 = vpack.c.b16 %v7626, %v7623
    %v7638 = vsel %vm5249, %v5576, 0
    %v7641 = vsel %vm5249, %v7629, 0
    %v7644 = vsel %vm5249, %v7632, 0
    %7646 = vmatpush.bf16.xpose.msra.mxu0 0
    %7647 = vmatpush.bf16.xpose.msra.mxu0 0
    %7648 = vmatpush.bf16.xpose.msra.mxu0 0
    %7649 = vmatpush.bf16.xpose.msra.mxu0 0
    %7650 = vmatpush.bf16.xpose.msra.mxu0 0
    %7651 = vmatpush.bf16.xpose.msra.mxu0 0
    %7652 = vmatpush.bf16.xpose.msra.mxu0 %v7630
    %7653 = vmatpush.bf16.xpose.msra.mxu0 %v7627
    %7654 = vmatmul.bf16.gmra.mxu0 %v5722
    %v7655 = vpop.f32.mrf.mxu0
    %v7656 = vadd.f32 %v6157, %v7655
    %v7657 = vpop.f32.mrf.mxu0
    %7658 = vdwg.mxu0
    %7659 = vmatpush.bf16.xpose.msra.mxu0 0
    %7660 = vmatpush.bf16.xpose.msra.mxu0 0
    %7661 = vmatpush.bf16.xpose.msra.mxu0 0
    %7662 = vmatpush.bf16.xpose.msra.mxu0 0
    %7663 = vmatpush.bf16.xpose.msra.mxu0 0
    %7664 = vmatpush.bf16.xpose.msra.mxu0 0
    %7665 = vmatpush.bf16.xpose.msra.mxu0 %v7631
    %7666 = vmatpush.bf16.xpose.msra.mxu0 %v7628
    %7667 = vmatmul.bf16.gmra.mxu0 %v5723
    %v7668 = vpop.f32.mrf.mxu0
    %v7669 = vadd.f32 %v7656, %v7668
    %v7670 = vpop.f32.mrf.mxu0
    %7671 = vdwg.mxu0
    %7672 = vmatpush.bf16.xpose.msra.mxu0 0
    %7673 = vmatpush.bf16.xpose.msra.mxu0 0
    %7674 = vmatpush.bf16.xpose.msra.mxu0 0
    %7675 = vmatpush.bf16.xpose.msra.mxu0 0
    %7676 = vmatpush.bf16.xpose.msra.mxu0 0
    %7677 = vmatpush.bf16.xpose.msra.mxu0 0
    %7678 = vmatpush.bf16.xpose.msra.mxu0 %v7644
    %7679 = vmatpush.bf16.xpose.msra.mxu0 %v7641
    %7680 = vmatmul.bf16.gmra.mxu0 %v7638
    %v7681 = vpop.f32.mrf.mxu0
    %v7682 = vadd.f32 %v7669, %v7681
    %v7683 = vpop.f32.mrf.mxu0
    %7684 = vdwg.mxu0
    %v7693 = vunpack.c.l.b16 %v5971
    %v7694 = vunpack.c.h.b16 %v5971
    %v7695 = vunpack.c.l.b16 %v5972
    %v7696 = vunpack.c.l.b16 %v5973
    %v7697 = vunpack.c.h.b16 %v5973
    %v7698 = vunpack.c.l.b16 %v5974
    %v7699 = vunpack.c.l.b16 %v5975
    %v7700 = vunpack.c.h.b16 %v5975
    %v7701 = vunpack.c.l.b16 %v5976
    %v7702 = vunpack.c.l.b16 %v5977
    %v7703 = vunpack.c.h.b16 %v5977
    %v7704 = vunpack.c.l.b16 %v5978
    %v7705 = vpack.c.b16 %v7696, %v7693
    %v7706 = vpack.c.b16 %v7697, %v7694
    %v7707 = vpack.c.b16 %v7698, %v7695
    %v7708 = vpack.c.b16 %v7702, %v7699
    %v7709 = vpack.c.b16 %v7703, %v7700
    %v7710 = vpack.c.b16 %v7704, %v7701
    %v7716 = vsel %vm5249, %v5577, 0
    %v7719 = vsel %vm5249, %v7707, 0
    %v7722 = vsel %vm5249, %v7710, 0
    %7724 = vmatpush.bf16.xpose.msra.mxu0 0
    %7725 = vmatpush.bf16.xpose.msra.mxu0 0
    %7726 = vmatpush.bf16.xpose.msra.mxu0 0
    %7727 = vmatpush.bf16.xpose.msra.mxu0 0
    %7728 = vmatpush.bf16.xpose.msra.mxu0 0
    %7729 = vmatpush.bf16.xpose.msra.mxu0 0
    %7730 = vmatpush.bf16.xpose.msra.mxu0 %v7708
    %7731 = vmatpush.bf16.xpose.msra.mxu0 %v7705
    %7732 = vmatmul.bf16.gmra.mxu0 %v5724
    %v7733 = vpop.f32.mrf.mxu0
    %v7734 = vadd.f32 %v6158, %v7733
    %v7735 = vpop.f32.mrf.mxu0
    %7736 = vdwg.mxu0
    %7737 = vmatpush.bf16.xpose.msra.mxu0 0
    %7738 = vmatpush.bf16.xpose.msra.mxu0 0
    %7739 = vmatpush.bf16.xpose.msra.mxu0 0
    %7740 = vmatpush.bf16.xpose.msra.mxu0 0
    %7741 = vmatpush.bf16.xpose.msra.mxu0 0
    %7742 = vmatpush.bf16.xpose.msra.mxu0 0
    %7743 = vmatpush.bf16.xpose.msra.mxu0 %v7709
    %7744 = vmatpush.bf16.xpose.msra.mxu0 %v7706
    %7745 = vmatmul.bf16.gmra.mxu0 %v5725
    %v7746 = vpop.f32.mrf.mxu0
    %v7747 = vadd.f32 %v7734, %v7746
    %v7748 = vpop.f32.mrf.mxu0
    %7749 = vdwg.mxu0
    %7750 = vmatpush.bf16.xpose.msra.mxu0 0
    %7751 = vmatpush.bf16.xpose.msra.mxu0 0
    %7752 = vmatpush.bf16.xpose.msra.mxu0 0
    %7753 = vmatpush.bf16.xpose.msra.mxu0 0
    %7754 = vmatpush.bf16.xpose.msra.mxu0 0
    %7755 = vmatpush.bf16.xpose.msra.mxu0 0
    %7756 = vmatpush.bf16.xpose.msra.mxu0 %v7722
    %7757 = vmatpush.bf16.xpose.msra.mxu0 %v7719
    %7758 = vmatmul.bf16.gmra.mxu0 %v7716
    %v7759 = vpop.f32.mrf.mxu0
    %v7760 = vadd.f32 %v7747, %v7759
    %v7761 = vpop.f32.mrf.mxu0
    %7762 = vdwg.mxu0
    %v7771 = vunpack.c.l.b16 %v5979
    %v7772 = vunpack.c.h.b16 %v5979
    %v7773 = vunpack.c.l.b16 %v5980
    %v7774 = vunpack.c.l.b16 %v5981
    %v7775 = vunpack.c.h.b16 %v5981
    %v7776 = vunpack.c.l.b16 %v5982
    %v7777 = vunpack.c.l.b16 %v5983
    %v7778 = vunpack.c.h.b16 %v5983
    %v7779 = vunpack.c.l.b16 %v5984
    %v7780 = vunpack.c.l.b16 %v5985
    %v7781 = vunpack.c.h.b16 %v5985
    %v7782 = vunpack.c.l.b16 %v5986
    %v7783 = vpack.c.b16 %v7774, %v7771
    %v7784 = vpack.c.b16 %v7775, %v7772
    %v7785 = vpack.c.b16 %v7776, %v7773
    %v7786 = vpack.c.b16 %v7780, %v7777
    %v7787 = vpack.c.b16 %v7781, %v7778
    %v7788 = vpack.c.b16 %v7782, %v7779
    %v7794 = vsel %vm5249, %v5578, 0
    %v7797 = vsel %vm5249, %v7785, 0
    %v7800 = vsel %vm5249, %v7788, 0
    %7802 = vmatpush.bf16.xpose.msra.mxu0 0
    %7803 = vmatpush.bf16.xpose.msra.mxu0 0
    %7804 = vmatpush.bf16.xpose.msra.mxu0 0
    %7805 = vmatpush.bf16.xpose.msra.mxu0 0
    %7806 = vmatpush.bf16.xpose.msra.mxu0 0
    %7807 = vmatpush.bf16.xpose.msra.mxu0 0
    %7808 = vmatpush.bf16.xpose.msra.mxu0 %v7786
    %7809 = vmatpush.bf16.xpose.msra.mxu0 %v7783
    %7810 = vmatmul.bf16.gmra.mxu0 %v5726
    %v7811 = vpop.f32.mrf.mxu0
    %v7812 = vadd.f32 %v6159, %v7811
    %v7813 = vpop.f32.mrf.mxu0
    %7814 = vdwg.mxu0
    %7815 = vmatpush.bf16.xpose.msra.mxu0 0
    %7816 = vmatpush.bf16.xpose.msra.mxu0 0
    %7817 = vmatpush.bf16.xpose.msra.mxu0 0
    %7818 = vmatpush.bf16.xpose.msra.mxu0 0
    %7819 = vmatpush.bf16.xpose.msra.mxu0 0
    %7820 = vmatpush.bf16.xpose.msra.mxu0 0
    %7821 = vmatpush.bf16.xpose.msra.mxu0 %v7787
    %7822 = vmatpush.bf16.xpose.msra.mxu0 %v7784
    %7823 = vmatmul.bf16.gmra.mxu0 %v5727
    %v7824 = vpop.f32.mrf.mxu0
    %v7825 = vadd.f32 %v7812, %v7824
    %v7826 = vpop.f32.mrf.mxu0
    %7827 = vdwg.mxu0
    %7828 = vmatpush.bf16.xpose.msra.mxu0 0
    %7829 = vmatpush.bf16.xpose.msra.mxu0 0
    %7830 = vmatpush.bf16.xpose.msra.mxu0 0
    %7831 = vmatpush.bf16.xpose.msra.mxu0 0
    %7832 = vmatpush.bf16.xpose.msra.mxu0 0
    %7833 = vmatpush.bf16.xpose.msra.mxu0 0
    %7834 = vmatpush.bf16.xpose.msra.mxu0 %v7800
    %7835 = vmatpush.bf16.xpose.msra.mxu0 %v7797
    %7836 = vmatmul.bf16.gmra.mxu0 %v7794
    %v7837 = vpop.f32.mrf.mxu0
    %v7838 = vadd.f32 %v7825, %v7837
    %v7839 = vpop.f32.mrf.mxu0
    %7840 = vdwg.mxu0
    %v7849 = vunpack.c.l.b16 %v5987
    %v7850 = vunpack.c.h.b16 %v5987
    %v7851 = vunpack.c.l.b16 %v5988
    %v7852 = vunpack.c.l.b16 %v5989
    %v7853 = vunpack.c.h.b16 %v5989
    %v7854 = vunpack.c.l.b16 %v5990
    %v7855 = vunpack.c.l.b16 %v5991
    %v7856 = vunpack.c.h.b16 %v5991
    %v7857 = vunpack.c.l.b16 %v5992
    %v7858 = vunpack.c.l.b16 %v5993
    %v7859 = vunpack.c.h.b16 %v5993
    %v7860 = vunpack.c.l.b16 %v5994
    %v7861 = vpack.c.b16 %v7852, %v7849
    %v7862 = vpack.c.b16 %v7853, %v7850
    %v7863 = vpack.c.b16 %v7854, %v7851
    %v7864 = vpack.c.b16 %v7858, %v7855
    %v7865 = vpack.c.b16 %v7859, %v7856
    %v7866 = vpack.c.b16 %v7860, %v7857
    %v7872 = vsel %vm5249, %v5579, 0
    %v7875 = vsel %vm5249, %v7863, 0
    %v7878 = vsel %vm5249, %v7866, 0
    %7880 = vmatpush.bf16.xpose.msra.mxu0 0
    %7881 = vmatpush.bf16.xpose.msra.mxu0 0
    %7882 = vmatpush.bf16.xpose.msra.mxu0 0
    %7883 = vmatpush.bf16.xpose.msra.mxu0 0
    %7884 = vmatpush.bf16.xpose.msra.mxu0 0
    %7885 = vmatpush.bf16.xpose.msra.mxu0 0
    %7886 = vmatpush.bf16.xpose.msra.mxu0 %v7864
    %7887 = vmatpush.bf16.xpose.msra.mxu0 %v7861
    %7888 = vmatmul.bf16.gmra.mxu0 %v5728
    %v7889 = vpop.f32.mrf.mxu0
    %v7890 = vadd.f32 %v6160, %v7889
    %v7891 = vpop.f32.mrf.mxu0
    %7892 = vdwg.mxu0
    %7893 = vmatpush.bf16.xpose.msra.mxu0 0
    %7894 = vmatpush.bf16.xpose.msra.mxu0 0
    %7895 = vmatpush.bf16.xpose.msra.mxu0 0
    %7896 = vmatpush.bf16.xpose.msra.mxu0 0
    %7897 = vmatpush.bf16.xpose.msra.mxu0 0
    %7898 = vmatpush.bf16.xpose.msra.mxu0 0
    %7899 = vmatpush.bf16.xpose.msra.mxu0 %v7865
    %7900 = vmatpush.bf16.xpose.msra.mxu0 %v7862
    %7901 = vmatmul.bf16.gmra.mxu0 %v5729
    %v7902 = vpop.f32.mrf.mxu0
    %v7903 = vadd.f32 %v7890, %v7902
    %v7904 = vpop.f32.mrf.mxu0
    %7905 = vdwg.mxu0
    %7906 = vmatpush.bf16.xpose.msra.mxu0 0
    %7907 = vmatpush.bf16.xpose.msra.mxu0 0
    %7908 = vmatpush.bf16.xpose.msra.mxu0 0
    %7909 = vmatpush.bf16.xpose.msra.mxu0 0
    %7910 = vmatpush.bf16.xpose.msra.mxu0 0
    %7911 = vmatpush.bf16.xpose.msra.mxu0 0
    %7912 = vmatpush.bf16.xpose.msra.mxu0 %v7878
    %7913 = vmatpush.bf16.xpose.msra.mxu0 %v7875
    %7914 = vmatmul.bf16.gmra.mxu0 %v7872
    %v7915 = vpop.f32.mrf.mxu0
    %v7916 = vadd.f32 %v7903, %v7915
    %v7917 = vpop.f32.mrf.mxu0
    %7918 = vdwg.mxu0
    %v7927 = vunpack.c.l.b16 %v5995
    %v7928 = vunpack.c.h.b16 %v5995
    %v7929 = vunpack.c.l.b16 %v5996
    %v7930 = vunpack.c.l.b16 %v5997
    %v7931 = vunpack.c.h.b16 %v5997
    %v7932 = vunpack.c.l.b16 %v5998
    %v7933 = vunpack.c.l.b16 %v5999
    %v7934 = vunpack.c.h.b16 %v5999
    %v7935 = vunpack.c.l.b16 %v6000
    %v7936 = vunpack.c.l.b16 %v6001
    %v7937 = vunpack.c.h.b16 %v6001
    %v7938 = vunpack.c.l.b16 %v6002
    %v7939 = vpack.c.b16 %v7930, %v7927
    %v7940 = vpack.c.b16 %v7931, %v7928
    %v7941 = vpack.c.b16 %v7932, %v7929
    %v7942 = vpack.c.b16 %v7936, %v7933
    %v7943 = vpack.c.b16 %v7937, %v7934
    %v7944 = vpack.c.b16 %v7938, %v7935
    %v7950 = vsel %vm5249, %v5580, 0
    %v7953 = vsel %vm5249, %v7941, 0
    %v7956 = vsel %vm5249, %v7944, 0
    %7958 = vmatpush.bf16.xpose.msra.mxu0 0
    %7959 = vmatpush.bf16.xpose.msra.mxu0 0
    %7960 = vmatpush.bf16.xpose.msra.mxu0 0
    %7961 = vmatpush.bf16.xpose.msra.mxu0 0
    %7962 = vmatpush.bf16.xpose.msra.mxu0 0
    %7963 = vmatpush.bf16.xpose.msra.mxu0 0
    %7964 = vmatpush.bf16.xpose.msra.mxu0 %v7942
    %7965 = vmatpush.bf16.xpose.msra.mxu0 %v7939
    %7966 = vmatmul.bf16.gmra.mxu0 %v5730
    %v7967 = vpop.f32.mrf.mxu0
    %v7968 = vadd.f32 %v6161, %v7967
    %v7969 = vpop.f32.mrf.mxu0
    %7970 = vdwg.mxu0
    %7971 = vmatpush.bf16.xpose.msra.mxu0 0
    %7972 = vmatpush.bf16.xpose.msra.mxu0 0
    %7973 = vmatpush.bf16.xpose.msra.mxu0 0
    %7974 = vmatpush.bf16.xpose.msra.mxu0 0
    %7975 = vmatpush.bf16.xpose.msra.mxu0 0
    %7976 = vmatpush.bf16.xpose.msra.mxu0 0
    %7977 = vmatpush.bf16.xpose.msra.mxu0 %v7943
    %7978 = vmatpush.bf16.xpose.msra.mxu0 %v7940
    %7979 = vmatmul.bf16.gmra.mxu0 %v5731
    %v7980 = vpop.f32.mrf.mxu0
    %v7981 = vadd.f32 %v7968, %v7980
    %v7982 = vpop.f32.mrf.mxu0
    %7983 = vdwg.mxu0
    %7984 = vmatpush.bf16.xpose.msra.mxu0 0
    %7985 = vmatpush.bf16.xpose.msra.mxu0 0
    %7986 = vmatpush.bf16.xpose.msra.mxu0 0
    %7987 = vmatpush.bf16.xpose.msra.mxu0 0
    %7988 = vmatpush.bf16.xpose.msra.mxu0 0
    %7989 = vmatpush.bf16.xpose.msra.mxu0 0
    %7990 = vmatpush.bf16.xpose.msra.mxu0 %v7956
    %7991 = vmatpush.bf16.xpose.msra.mxu0 %v7953
    %7992 = vmatmul.bf16.gmra.mxu0 %v7950
    %v7993 = vpop.f32.mrf.mxu0
    %v7994 = vadd.f32 %v7981, %v7993
    %v7995 = vpop.f32.mrf.mxu0
    %7996 = vdwg.mxu0
    %v8005 = vunpack.c.l.b16 %v6003
    %v8006 = vunpack.c.h.b16 %v6003
    %v8007 = vunpack.c.l.b16 %v6004
    %v8008 = vunpack.c.l.b16 %v6005
    %v8009 = vunpack.c.h.b16 %v6005
    %v8010 = vunpack.c.l.b16 %v6006
    %v8011 = vunpack.c.l.b16 %v6007
    %v8012 = vunpack.c.h.b16 %v6007
    %v8013 = vunpack.c.l.b16 %v6008
    %v8014 = vunpack.c.l.b16 %v6009
    %v8015 = vunpack.c.h.b16 %v6009
    %v8016 = vunpack.c.l.b16 %v6010
    %v8017 = vpack.c.b16 %v8008, %v8005
    %v8018 = vpack.c.b16 %v8009, %v8006
    %v8019 = vpack.c.b16 %v8010, %v8007
    %v8020 = vpack.c.b16 %v8014, %v8011
    %v8021 = vpack.c.b16 %v8015, %v8012
    %v8022 = vpack.c.b16 %v8016, %v8013
    %v8028 = vsel %vm5249, %v5581, 0
    %v8031 = vsel %vm5249, %v8019, 0
    %v8034 = vsel %vm5249, %v8022, 0
    %8036 = vmatpush.bf16.xpose.msra.mxu0 0
    %8037 = vmatpush.bf16.xpose.msra.mxu0 0
    %8038 = vmatpush.bf16.xpose.msra.mxu0 0
    %8039 = vmatpush.bf16.xpose.msra.mxu0 0
    %8040 = vmatpush.bf16.xpose.msra.mxu0 0
    %8041 = vmatpush.bf16.xpose.msra.mxu0 0
    %8042 = vmatpush.bf16.xpose.msra.mxu0 %v8020
    %8043 = vmatpush.bf16.xpose.msra.mxu0 %v8017
    %8044 = vmatmul.bf16.gmra.mxu0 %v5732
    %v8045 = vpop.f32.mrf.mxu0
    %v8046 = vadd.f32 %v6162, %v8045
    %v8047 = vpop.f32.mrf.mxu0
    %8048 = vdwg.mxu0
    %8049 = vmatpush.bf16.xpose.msra.mxu0 0
    %8050 = vmatpush.bf16.xpose.msra.mxu0 0
    %8051 = vmatpush.bf16.xpose.msra.mxu0 0
    %8052 = vmatpush.bf16.xpose.msra.mxu0 0
    %8053 = vmatpush.bf16.xpose.msra.mxu0 0
    %8054 = vmatpush.bf16.xpose.msra.mxu0 0
    %8055 = vmatpush.bf16.xpose.msra.mxu0 %v8021
    %8056 = vmatpush.bf16.xpose.msra.mxu0 %v8018
    %8057 = vmatmul.bf16.gmra.mxu0 %v5733
    %v8058 = vpop.f32.mrf.mxu0
    %v8059 = vadd.f32 %v8046, %v8058
    %v8060 = vpop.f32.mrf.mxu0
    %8061 = vdwg.mxu0
    %8062 = vmatpush.bf16.xpose.msra.mxu0 0
    %8063 = vmatpush.bf16.xpose.msra.mxu0 0
    %8064 = vmatpush.bf16.xpose.msra.mxu0 0
    %8065 = vmatpush.bf16.xpose.msra.mxu0 0
    %8066 = vmatpush.bf16.xpose.msra.mxu0 0
    %8067 = vmatpush.bf16.xpose.msra.mxu0 0
    %8068 = vmatpush.bf16.xpose.msra.mxu0 %v8034
    %8069 = vmatpush.bf16.xpose.msra.mxu0 %v8031
    %8070 = vmatmul.bf16.gmra.mxu0 %v8028
    %v8071 = vpop.f32.mrf.mxu0
    %v8072 = vadd.f32 %v8059, %v8071
    %v8073 = vpop.f32.mrf.mxu0
    %8074 = vdwg.mxu0
    %v8083 = vunpack.c.l.b16 %v6011
    %v8084 = vunpack.c.h.b16 %v6011
    %v8085 = vunpack.c.l.b16 %v6012
    %v8086 = vunpack.c.l.b16 %v6013
    %v8087 = vunpack.c.h.b16 %v6013
    %v8088 = vunpack.c.l.b16 %v6014
    %v8089 = vunpack.c.l.b16 %v6015
    %v8090 = vunpack.c.h.b16 %v6015
    %v8091 = vunpack.c.l.b16 %v6016
    %v8092 = vunpack.c.l.b16 %v6017
    %v8093 = vunpack.c.h.b16 %v6017
    %v8094 = vunpack.c.l.b16 %v6018
    %v8095 = vpack.c.b16 %v8086, %v8083
    %v8096 = vpack.c.b16 %v8087, %v8084
    %v8097 = vpack.c.b16 %v8088, %v8085
    %v8098 = vpack.c.b16 %v8092, %v8089
    %v8099 = vpack.c.b16 %v8093, %v8090
    %v8100 = vpack.c.b16 %v8094, %v8091
    %v8106 = vsel %vm5249, %v5582, 0
    %v8109 = vsel %vm5249, %v8097, 0
    %v8112 = vsel %vm5249, %v8100, 0
    %8114 = vmatpush.bf16.xpose.msra.mxu0 0
    %8115 = vmatpush.bf16.xpose.msra.mxu0 0
    %8116 = vmatpush.bf16.xpose.msra.mxu0 0
    %8117 = vmatpush.bf16.xpose.msra.mxu0 0
    %8118 = vmatpush.bf16.xpose.msra.mxu0 0
    %8119 = vmatpush.bf16.xpose.msra.mxu0 0
    %8120 = vmatpush.bf16.xpose.msra.mxu0 %v8098
    %8121 = vmatpush.bf16.xpose.msra.mxu0 %v8095
    %8122 = vmatmul.bf16.gmra.mxu0 %v5734
    %v8123 = vpop.f32.mrf.mxu0
    %v8124 = vadd.f32 %v6163, %v8123
    %v8125 = vpop.f32.mrf.mxu0
    %8126 = vdwg.mxu0
    %8127 = vmatpush.bf16.xpose.msra.mxu0 0
    %8128 = vmatpush.bf16.xpose.msra.mxu0 0
    %8129 = vmatpush.bf16.xpose.msra.mxu0 0
    %8130 = vmatpush.bf16.xpose.msra.mxu0 0
    %8131 = vmatpush.bf16.xpose.msra.mxu0 0
    %8132 = vmatpush.bf16.xpose.msra.mxu0 0
    %8133 = vmatpush.bf16.xpose.msra.mxu0 %v8099
    %8134 = vmatpush.bf16.xpose.msra.mxu0 %v8096
    %8135 = vmatmul.bf16.gmra.mxu0 %v5735
    %v8136 = vpop.f32.mrf.mxu0
    %v8137 = vadd.f32 %v8124, %v8136
    %v8138 = vpop.f32.mrf.mxu0
    %8139 = vdwg.mxu0
    %8140 = vmatpush.bf16.xpose.msra.mxu0 0
    %8141 = vmatpush.bf16.xpose.msra.mxu0 0
    %8142 = vmatpush.bf16.xpose.msra.mxu0 0
    %8143 = vmatpush.bf16.xpose.msra.mxu0 0
    %8144 = vmatpush.bf16.xpose.msra.mxu0 0
    %8145 = vmatpush.bf16.xpose.msra.mxu0 0
    %8146 = vmatpush.bf16.xpose.msra.mxu0 %v8112
    %8147 = vmatpush.bf16.xpose.msra.mxu0 %v8109
    %8148 = vmatmul.bf16.gmra.mxu0 %v8106
    %v8149 = vpop.f32.mrf.mxu0
    %v8150 = vadd.f32 %v8137, %v8149
    %v8151 = vpop.f32.mrf.mxu0
    %8152 = vdwg.mxu0
    %v8161 = vunpack.c.l.b16 %v6019
    %v8162 = vunpack.c.h.b16 %v6019
    %v8163 = vunpack.c.l.b16 %v6020
    %v8164 = vunpack.c.l.b16 %v6021
    %v8165 = vunpack.c.h.b16 %v6021
    %v8166 = vunpack.c.l.b16 %v6022
    %v8167 = vunpack.c.l.b16 %v6023
    %v8168 = vunpack.c.h.b16 %v6023
    %v8169 = vunpack.c.l.b16 %v6024
    %v8170 = vunpack.c.l.b16 %v6025
    %v8171 = vunpack.c.h.b16 %v6025
    %v8172 = vunpack.c.l.b16 %v6026
    %v8173 = vpack.c.b16 %v8164, %v8161
    %v8174 = vpack.c.b16 %v8165, %v8162
    %v8175 = vpack.c.b16 %v8166, %v8163
    %v8176 = vpack.c.b16 %v8170, %v8167
    %v8177 = vpack.c.b16 %v8171, %v8168
    %v8178 = vpack.c.b16 %v8172, %v8169
    %v8184 = vsel %vm5249, %v5583, 0
    %v8187 = vsel %vm5249, %v8175, 0
    %v8190 = vsel %vm5249, %v8178, 0
    %8192 = vmatpush.bf16.xpose.msra.mxu0 0
    %8193 = vmatpush.bf16.xpose.msra.mxu0 0
    %8194 = vmatpush.bf16.xpose.msra.mxu0 0
    %8195 = vmatpush.bf16.xpose.msra.mxu0 0
    %8196 = vmatpush.bf16.xpose.msra.mxu0 0
    %8197 = vmatpush.bf16.xpose.msra.mxu0 0
    %8198 = vmatpush.bf16.xpose.msra.mxu0 %v8176
    %8199 = vmatpush.bf16.xpose.msra.mxu0 %v8173
    %8200 = vmatmul.bf16.gmra.mxu0 %v5736
    %v8201 = vpop.f32.mrf.mxu0
    %v8202 = vadd.f32 %v6164, %v8201
    %v8203 = vpop.f32.mrf.mxu0
    %8204 = vdwg.mxu0
    %8205 = vmatpush.bf16.xpose.msra.mxu0 0
    %8206 = vmatpush.bf16.xpose.msra.mxu0 0
    %8207 = vmatpush.bf16.xpose.msra.mxu0 0
    %8208 = vmatpush.bf16.xpose.msra.mxu0 0
    %8209 = vmatpush.bf16.xpose.msra.mxu0 0
    %8210 = vmatpush.bf16.xpose.msra.mxu0 0
    %8211 = vmatpush.bf16.xpose.msra.mxu0 %v8177
    %8212 = vmatpush.bf16.xpose.msra.mxu0 %v8174
    %8213 = vmatmul.bf16.gmra.mxu0 %v5737
    %v8214 = vpop.f32.mrf.mxu0
    %v8215 = vadd.f32 %v8202, %v8214
    %v8216 = vpop.f32.mrf.mxu0
    %8217 = vdwg.mxu0
    %8218 = vmatpush.bf16.xpose.msra.mxu0 0
    %8219 = vmatpush.bf16.xpose.msra.mxu0 0
    %8220 = vmatpush.bf16.xpose.msra.mxu0 0
    %8221 = vmatpush.bf16.xpose.msra.mxu0 0
    %8222 = vmatpush.bf16.xpose.msra.mxu0 0
    %8223 = vmatpush.bf16.xpose.msra.mxu0 0
    %8224 = vmatpush.bf16.xpose.msra.mxu0 %v8190
    %8225 = vmatpush.bf16.xpose.msra.mxu0 %v8187
    %8226 = vmatmul.bf16.gmra.mxu0 %v8184
    %v8227 = vpop.f32.mrf.mxu0
    %v8228 = vadd.f32 %v8215, %v8227
    %v8229 = vpop.f32.mrf.mxu0
    %8230 = vdwg.mxu0
    %v8239 = vunpack.c.l.b16 %v6027
    %v8240 = vunpack.c.h.b16 %v6027
    %v8241 = vunpack.c.l.b16 %v6028
    %v8242 = vunpack.c.l.b16 %v6029
    %v8243 = vunpack.c.h.b16 %v6029
    %v8244 = vunpack.c.l.b16 %v6030
    %v8245 = vunpack.c.l.b16 %v6031
    %v8246 = vunpack.c.h.b16 %v6031
    %v8247 = vunpack.c.l.b16 %v6032
    %v8248 = vunpack.c.l.b16 %v6033
    %v8249 = vunpack.c.h.b16 %v6033
    %v8250 = vunpack.c.l.b16 %v6034
    %v8251 = vpack.c.b16 %v8242, %v8239
    %v8252 = vpack.c.b16 %v8243, %v8240
    %v8253 = vpack.c.b16 %v8244, %v8241
    %v8254 = vpack.c.b16 %v8248, %v8245
    %v8255 = vpack.c.b16 %v8249, %v8246
    %v8256 = vpack.c.b16 %v8250, %v8247
    %v8262 = vsel %vm5249, %v5584, 0
    %v8265 = vsel %vm5249, %v8253, 0
    %v8268 = vsel %vm5249, %v8256, 0
    %8270 = vmatpush.bf16.xpose.msra.mxu0 0
    %8271 = vmatpush.bf16.xpose.msra.mxu0 0
    %8272 = vmatpush.bf16.xpose.msra.mxu0 0
    %8273 = vmatpush.bf16.xpose.msra.mxu0 0
    %8274 = vmatpush.bf16.xpose.msra.mxu0 0
    %8275 = vmatpush.bf16.xpose.msra.mxu0 0
    %8276 = vmatpush.bf16.xpose.msra.mxu0 %v8254
    %8277 = vmatpush.bf16.xpose.msra.mxu0 %v8251
    %8278 = vmatmul.bf16.gmra.mxu0 %v5738
    %v8279 = vpop.f32.mrf.mxu0
    %v8280 = vadd.f32 %v6165, %v8279
    %v8281 = vpop.f32.mrf.mxu0
    %8282 = vdwg.mxu0
    %8283 = vmatpush.bf16.xpose.msra.mxu0 0
    %8284 = vmatpush.bf16.xpose.msra.mxu0 0
    %8285 = vmatpush.bf16.xpose.msra.mxu0 0
    %8286 = vmatpush.bf16.xpose.msra.mxu0 0
    %8287 = vmatpush.bf16.xpose.msra.mxu0 0
    %8288 = vmatpush.bf16.xpose.msra.mxu0 0
    %8289 = vmatpush.bf16.xpose.msra.mxu0 %v8255
    %8290 = vmatpush.bf16.xpose.msra.mxu0 %v8252
    %8291 = vmatmul.bf16.gmra.mxu0 %v5739
    %v8292 = vpop.f32.mrf.mxu0
    %v8293 = vadd.f32 %v8280, %v8292
    %v8294 = vpop.f32.mrf.mxu0
    %8295 = vdwg.mxu0
    %8296 = vmatpush.bf16.xpose.msra.mxu0 0
    %8297 = vmatpush.bf16.xpose.msra.mxu0 0
    %8298 = vmatpush.bf16.xpose.msra.mxu0 0
    %8299 = vmatpush.bf16.xpose.msra.mxu0 0
    %8300 = vmatpush.bf16.xpose.msra.mxu0 0
    %8301 = vmatpush.bf16.xpose.msra.mxu0 0
    %8302 = vmatpush.bf16.xpose.msra.mxu0 %v8268
    %8303 = vmatpush.bf16.xpose.msra.mxu0 %v8265
    %8304 = vmatmul.bf16.gmra.mxu0 %v8262
    %v8305 = vpop.f32.mrf.mxu0
    %v8306 = vadd.f32 %v8293, %v8305
    %v8307 = vpop.f32.mrf.mxu0
    %8308 = vdwg.mxu0
    %v8317 = vunpack.c.l.b16 %v6035
    %v8318 = vunpack.c.h.b16 %v6035
    %v8319 = vunpack.c.l.b16 %v6036
    %v8320 = vunpack.c.l.b16 %v6037
    %v8321 = vunpack.c.h.b16 %v6037
    %v8322 = vunpack.c.l.b16 %v6038
    %v8323 = vunpack.c.l.b16 %v6039
    %v8324 = vunpack.c.h.b16 %v6039
    %v8325 = vunpack.c.l.b16 %v6040
    %v8326 = vunpack.c.l.b16 %v6041
    %v8327 = vunpack.c.h.b16 %v6041
    %v8328 = vunpack.c.l.b16 %v6042
    %v8329 = vpack.c.b16 %v8320, %v8317
    %v8330 = vpack.c.b16 %v8321, %v8318
    %v8331 = vpack.c.b16 %v8322, %v8319
    %v8332 = vpack.c.b16 %v8326, %v8323
    %v8333 = vpack.c.b16 %v8327, %v8324
    %v8334 = vpack.c.b16 %v8328, %v8325
    %v8340 = vsel %vm5249, %v5585, 0
    %v8343 = vsel %vm5249, %v8331, 0
    %v8346 = vsel %vm5249, %v8334, 0
    %8348 = vmatpush.bf16.xpose.msra.mxu0 0
    %8349 = vmatpush.bf16.xpose.msra.mxu0 0
    %8350 = vmatpush.bf16.xpose.msra.mxu0 0
    %8351 = vmatpush.bf16.xpose.msra.mxu0 0
    %8352 = vmatpush.bf16.xpose.msra.mxu0 0
    %8353 = vmatpush.bf16.xpose.msra.mxu0 0
    %8354 = vmatpush.bf16.xpose.msra.mxu0 %v8332
    %8355 = vmatpush.bf16.xpose.msra.mxu0 %v8329
    %8356 = vmatmul.bf16.gmra.mxu0 %v5740
    %v8357 = vpop.f32.mrf.mxu0
    %v8358 = vadd.f32 %v6166, %v8357
    %v8359 = vpop.f32.mrf.mxu0
    %8360 = vdwg.mxu0
    %8361 = vmatpush.bf16.xpose.msra.mxu0 0
    %8362 = vmatpush.bf16.xpose.msra.mxu0 0
    %8363 = vmatpush.bf16.xpose.msra.mxu0 0
    %8364 = vmatpush.bf16.xpose.msra.mxu0 0
    %8365 = vmatpush.bf16.xpose.msra.mxu0 0
    %8366 = vmatpush.bf16.xpose.msra.mxu0 0
    %8367 = vmatpush.bf16.xpose.msra.mxu0 %v8333
    %8368 = vmatpush.bf16.xpose.msra.mxu0 %v8330
    %8369 = vmatmul.bf16.gmra.mxu0 %v5741
    %v8370 = vpop.f32.mrf.mxu0
    %v8371 = vadd.f32 %v8358, %v8370
    %v8372 = vpop.f32.mrf.mxu0
    %8373 = vdwg.mxu0
    %8374 = vmatpush.bf16.xpose.msra.mxu0 0
    %8375 = vmatpush.bf16.xpose.msra.mxu0 0
    %8376 = vmatpush.bf16.xpose.msra.mxu0 0
    %8377 = vmatpush.bf16.xpose.msra.mxu0 0
    %8378 = vmatpush.bf16.xpose.msra.mxu0 0
    %8379 = vmatpush.bf16.xpose.msra.mxu0 0
    %8380 = vmatpush.bf16.xpose.msra.mxu0 %v8346
    %8381 = vmatpush.bf16.xpose.msra.mxu0 %v8343
    %8382 = vmatmul.bf16.gmra.mxu0 %v8340
    %v8383 = vpop.f32.mrf.mxu0
    %v8384 = vadd.f32 %v8371, %v8383
    %v8385 = vpop.f32.mrf.mxu0
    %8386 = vdwg.mxu0
    %v8395 = vunpack.c.l.b16 %v6043
    %v8396 = vunpack.c.h.b16 %v6043
    %v8397 = vunpack.c.l.b16 %v6044
    %v8398 = vunpack.c.l.b16 %v6045
    %v8399 = vunpack.c.h.b16 %v6045
    %v8400 = vunpack.c.l.b16 %v6046
    %v8401 = vunpack.c.l.b16 %v6047
    %v8402 = vunpack.c.h.b16 %v6047
    %v8403 = vunpack.c.l.b16 %v6048
    %v8404 = vunpack.c.l.b16 %v6049
    %v8405 = vunpack.c.h.b16 %v6049
    %v8406 = vunpack.c.l.b16 %v6050
    %v8407 = vpack.c.b16 %v8398, %v8395
    %v8408 = vpack.c.b16 %v8399, %v8396
    %v8409 = vpack.c.b16 %v8400, %v8397
    %v8410 = vpack.c.b16 %v8404, %v8401
    %v8411 = vpack.c.b16 %v8405, %v8402
    %v8412 = vpack.c.b16 %v8406, %v8403
    %v8418 = vsel %vm5249, %v5586, 0
    %v8421 = vsel %vm5249, %v8409, 0
    %v8424 = vsel %vm5249, %v8412, 0
    %8426 = vmatpush.bf16.xpose.msra.mxu0 0
    %8427 = vmatpush.bf16.xpose.msra.mxu0 0
    %8428 = vmatpush.bf16.xpose.msra.mxu0 0
    %8429 = vmatpush.bf16.xpose.msra.mxu0 0
    %8430 = vmatpush.bf16.xpose.msra.mxu0 0
    %8431 = vmatpush.bf16.xpose.msra.mxu0 0
    %8432 = vmatpush.bf16.xpose.msra.mxu0 %v8410
    %8433 = vmatpush.bf16.xpose.msra.mxu0 %v8407
    %8434 = vmatmul.bf16.gmra.mxu0 %v5742
    %v8435 = vpop.f32.mrf.mxu0
    %v8436 = vadd.f32 %v6167, %v8435
    %v8437 = vpop.f32.mrf.mxu0
    %8438 = vdwg.mxu0
    %8439 = vmatpush.bf16.xpose.msra.mxu0 0
    %8440 = vmatpush.bf16.xpose.msra.mxu0 0
    %8441 = vmatpush.bf16.xpose.msra.mxu0 0
    %8442 = vmatpush.bf16.xpose.msra.mxu0 0
    %8443 = vmatpush.bf16.xpose.msra.mxu0 0
    %8444 = vmatpush.bf16.xpose.msra.mxu0 0
    %8445 = vmatpush.bf16.xpose.msra.mxu0 %v8411
    %8446 = vmatpush.bf16.xpose.msra.mxu0 %v8408
    %8447 = vmatmul.bf16.gmra.mxu0 %v5743
    %v8448 = vpop.f32.mrf.mxu0
    %v8449 = vadd.f32 %v8436, %v8448
    %v8450 = vpop.f32.mrf.mxu0
    %8451 = vdwg.mxu0
    %8452 = vmatpush.bf16.xpose.msra.mxu0 0
    %8453 = vmatpush.bf16.xpose.msra.mxu0 0
    %8454 = vmatpush.bf16.xpose.msra.mxu0 0
    %8455 = vmatpush.bf16.xpose.msra.mxu0 0
    %8456 = vmatpush.bf16.xpose.msra.mxu0 0
    %8457 = vmatpush.bf16.xpose.msra.mxu0 0
    %8458 = vmatpush.bf16.xpose.msra.mxu0 %v8424
    %8459 = vmatpush.bf16.xpose.msra.mxu0 %v8421
    %8460 = vmatmul.bf16.gmra.mxu0 %v8418
    %v8461 = vpop.f32.mrf.mxu0
    %v8462 = vadd.f32 %v8449, %v8461
    %v8463 = vpop.f32.mrf.mxu0
    %8464 = vdwg.mxu0
    %v8473 = vunpack.c.l.b16 %v6051
    %v8474 = vunpack.c.h.b16 %v6051
    %v8475 = vunpack.c.l.b16 %v6052
    %v8476 = vunpack.c.l.b16 %v6053
    %v8477 = vunpack.c.h.b16 %v6053
    %v8478 = vunpack.c.l.b16 %v6054
    %v8479 = vunpack.c.l.b16 %v6055
    %v8480 = vunpack.c.h.b16 %v6055
    %v8481 = vunpack.c.l.b16 %v6056
    %v8482 = vunpack.c.l.b16 %v6057
    %v8483 = vunpack.c.h.b16 %v6057
    %v8484 = vunpack.c.l.b16 %v6058
    %v8485 = vpack.c.b16 %v8476, %v8473
    %v8486 = vpack.c.b16 %v8477, %v8474
    %v8487 = vpack.c.b16 %v8478, %v8475
    %v8488 = vpack.c.b16 %v8482, %v8479
    %v8489 = vpack.c.b16 %v8483, %v8480
    %v8490 = vpack.c.b16 %v8484, %v8481
    %v8496 = vsel %vm5249, %v5587, 0
    %v8499 = vsel %vm5249, %v8487, 0
    %v8502 = vsel %vm5249, %v8490, 0
    %8504 = vmatpush.bf16.xpose.msra.mxu0 0
    %8505 = vmatpush.bf16.xpose.msra.mxu0 0
    %8506 = vmatpush.bf16.xpose.msra.mxu0 0
    %8507 = vmatpush.bf16.xpose.msra.mxu0 0
    %8508 = vmatpush.bf16.xpose.msra.mxu0 0
    %8509 = vmatpush.bf16.xpose.msra.mxu0 0
    %8510 = vmatpush.bf16.xpose.msra.mxu0 %v8488
    %8511 = vmatpush.bf16.xpose.msra.mxu0 %v8485
    %8512 = vmatmul.bf16.gmra.mxu0 %v5744
    %v8513 = vpop.f32.mrf.mxu0
    %v8514 = vadd.f32 %v6168, %v8513
    %v8515 = vpop.f32.mrf.mxu0
    %8516 = vdwg.mxu0
    %8517 = vmatpush.bf16.xpose.msra.mxu0 0
    %8518 = vmatpush.bf16.xpose.msra.mxu0 0
    %8519 = vmatpush.bf16.xpose.msra.mxu0 0
    %8520 = vmatpush.bf16.xpose.msra.mxu0 0
    %8521 = vmatpush.bf16.xpose.msra.mxu0 0
    %8522 = vmatpush.bf16.xpose.msra.mxu0 0
    %8523 = vmatpush.bf16.xpose.msra.mxu0 %v8489
    %8524 = vmatpush.bf16.xpose.msra.mxu0 %v8486
    %8525 = vmatmul.bf16.gmra.mxu0 %v5745
    %v8526 = vpop.f32.mrf.mxu0
    %v8527 = vadd.f32 %v8514, %v8526
    %v8528 = vpop.f32.mrf.mxu0
    %8529 = vdwg.mxu0
    %8530 = vmatpush.bf16.xpose.msra.mxu0 0
    %8531 = vmatpush.bf16.xpose.msra.mxu0 0
    %8532 = vmatpush.bf16.xpose.msra.mxu0 0
    %8533 = vmatpush.bf16.xpose.msra.mxu0 0
    %8534 = vmatpush.bf16.xpose.msra.mxu0 0
    %8535 = vmatpush.bf16.xpose.msra.mxu0 0
    %8536 = vmatpush.bf16.xpose.msra.mxu0 %v8502
    %8537 = vmatpush.bf16.xpose.msra.mxu0 %v8499
    %8538 = vmatmul.bf16.gmra.mxu0 %v8496
    %v8539 = vpop.f32.mrf.mxu0
    %v8540 = vadd.f32 %v8527, %v8539
    %v8541 = vpop.f32.mrf.mxu0
    %8542 = vdwg.mxu0
    %v8551 = vunpack.c.l.b16 %v6059
    %v8552 = vunpack.c.h.b16 %v6059
    %v8553 = vunpack.c.l.b16 %v6060
    %v8554 = vunpack.c.l.b16 %v6061
    %v8555 = vunpack.c.h.b16 %v6061
    %v8556 = vunpack.c.l.b16 %v6062
    %v8557 = vunpack.c.l.b16 %v6063
    %v8558 = vunpack.c.h.b16 %v6063
    %v8559 = vunpack.c.l.b16 %v6064
    %v8560 = vunpack.c.l.b16 %v6065
    %v8561 = vunpack.c.h.b16 %v6065
    %v8562 = vunpack.c.l.b16 %v6066
    %v8563 = vpack.c.b16 %v8554, %v8551
    %v8564 = vpack.c.b16 %v8555, %v8552
    %v8565 = vpack.c.b16 %v8556, %v8553
    %v8566 = vpack.c.b16 %v8560, %v8557
    %v8567 = vpack.c.b16 %v8561, %v8558
    %v8568 = vpack.c.b16 %v8562, %v8559
    %v8574 = vsel %vm5249, %v5588, 0
    %v8577 = vsel %vm5249, %v8565, 0
    %v8580 = vsel %vm5249, %v8568, 0
    %8582 = vmatpush.bf16.xpose.msra.mxu0 0
    %8583 = vmatpush.bf16.xpose.msra.mxu0 0
    %8584 = vmatpush.bf16.xpose.msra.mxu0 0
    %8585 = vmatpush.bf16.xpose.msra.mxu0 0
    %8586 = vmatpush.bf16.xpose.msra.mxu0 0
    %8587 = vmatpush.bf16.xpose.msra.mxu0 0
    %8588 = vmatpush.bf16.xpose.msra.mxu0 %v8566
    %8589 = vmatpush.bf16.xpose.msra.mxu0 %v8563
    %8590 = vmatmul.bf16.gmra.mxu0 %v5746
    %v8591 = vpop.f32.mrf.mxu0
    %v8592 = vadd.f32 %v6169, %v8591
    %v8593 = vpop.f32.mrf.mxu0
    %8594 = vdwg.mxu0
    %8595 = vmatpush.bf16.xpose.msra.mxu0 0
    %8596 = vmatpush.bf16.xpose.msra.mxu0 0
    %8597 = vmatpush.bf16.xpose.msra.mxu0 0
    %8598 = vmatpush.bf16.xpose.msra.mxu0 0
    %8599 = vmatpush.bf16.xpose.msra.mxu0 0
    %8600 = vmatpush.bf16.xpose.msra.mxu0 0
    %8601 = vmatpush.bf16.xpose.msra.mxu0 %v8567
    %8602 = vmatpush.bf16.xpose.msra.mxu0 %v8564
    %8603 = vmatmul.bf16.gmra.mxu0 %v5747
    %v8604 = vpop.f32.mrf.mxu0
    %v8605 = vadd.f32 %v8592, %v8604
    %v8606 = vpop.f32.mrf.mxu0
    %8607 = vdwg.mxu0
    %8608 = vmatpush.bf16.xpose.msra.mxu0 0
    %8609 = vmatpush.bf16.xpose.msra.mxu0 0
    %8610 = vmatpush.bf16.xpose.msra.mxu0 0
    %8611 = vmatpush.bf16.xpose.msra.mxu0 0
    %8612 = vmatpush.bf16.xpose.msra.mxu0 0
    %8613 = vmatpush.bf16.xpose.msra.mxu0 0
    %8614 = vmatpush.bf16.xpose.msra.mxu0 %v8580
    %8615 = vmatpush.bf16.xpose.msra.mxu0 %v8577
    %8616 = vmatmul.bf16.gmra.mxu0 %v8574
    %v8617 = vpop.f32.mrf.mxu0
    %v8618 = vadd.f32 %v8605, %v8617
    %v8619 = vpop.f32.mrf.mxu0
    %8620 = vdwg.mxu0
    %v8629 = vunpack.c.l.b16 %v6067
    %v8630 = vunpack.c.h.b16 %v6067
    %v8631 = vunpack.c.l.b16 %v6068
    %v8632 = vunpack.c.l.b16 %v6069
    %v8633 = vunpack.c.h.b16 %v6069
    %v8634 = vunpack.c.l.b16 %v6070
    %v8635 = vunpack.c.l.b16 %v6071
    %v8636 = vunpack.c.h.b16 %v6071
    %v8637 = vunpack.c.l.b16 %v6072
    %v8638 = vunpack.c.l.b16 %v6073
    %v8639 = vunpack.c.h.b16 %v6073
    %v8640 = vunpack.c.l.b16 %v6074
    %v8641 = vpack.c.b16 %v8632, %v8629
    %v8642 = vpack.c.b16 %v8633, %v8630
    %v8643 = vpack.c.b16 %v8634, %v8631
    %v8644 = vpack.c.b16 %v8638, %v8635
    %v8645 = vpack.c.b16 %v8639, %v8636
    %v8646 = vpack.c.b16 %v8640, %v8637
    %v8652 = vsel %vm5249, %v5589, 0
    %v8655 = vsel %vm5249, %v8643, 0
    %v8658 = vsel %vm5249, %v8646, 0
    %8660 = vmatpush.bf16.xpose.msra.mxu0 0
    %8661 = vmatpush.bf16.xpose.msra.mxu0 0
    %8662 = vmatpush.bf16.xpose.msra.mxu0 0
    %8663 = vmatpush.bf16.xpose.msra.mxu0 0
    %8664 = vmatpush.bf16.xpose.msra.mxu0 0
    %8665 = vmatpush.bf16.xpose.msra.mxu0 0
    %8666 = vmatpush.bf16.xpose.msra.mxu0 %v8644
    %8667 = vmatpush.bf16.xpose.msra.mxu0 %v8641
    %8668 = vmatmul.bf16.gmra.mxu0 %v5748
    %v8669 = vpop.f32.mrf.mxu0
    %v8670 = vadd.f32 %v6170, %v8669
    %v8671 = vpop.f32.mrf.mxu0
    %8672 = vdwg.mxu0
    %8673 = vmatpush.bf16.xpose.msra.mxu0 0
    %8674 = vmatpush.bf16.xpose.msra.mxu0 0
    %8675 = vmatpush.bf16.xpose.msra.mxu0 0
    %8676 = vmatpush.bf16.xpose.msra.mxu0 0
    %8677 = vmatpush.bf16.xpose.msra.mxu0 0
    %8678 = vmatpush.bf16.xpose.msra.mxu0 0
    %8679 = vmatpush.bf16.xpose.msra.mxu0 %v8645
    %8680 = vmatpush.bf16.xpose.msra.mxu0 %v8642
    %8681 = vmatmul.bf16.gmra.mxu0 %v5749
    %v8682 = vpop.f32.mrf.mxu0
    %v8683 = vadd.f32 %v8670, %v8682
    %v8684 = vpop.f32.mrf.mxu0
    %8685 = vdwg.mxu0
    %8686 = vmatpush.bf16.xpose.msra.mxu0 0
    %8687 = vmatpush.bf16.xpose.msra.mxu0 0
    %8688 = vmatpush.bf16.xpose.msra.mxu0 0
    %8689 = vmatpush.bf16.xpose.msra.mxu0 0
    %8690 = vmatpush.bf16.xpose.msra.mxu0 0
    %8691 = vmatpush.bf16.xpose.msra.mxu0 0
    %8692 = vmatpush.bf16.xpose.msra.mxu0 %v8658
    %8693 = vmatpush.bf16.xpose.msra.mxu0 %v8655
    %8694 = vmatmul.bf16.gmra.mxu0 %v8652
    %v8695 = vpop.f32.mrf.mxu0
    %v8696 = vadd.f32 %v8683, %v8695
    %v8697 = vpop.f32.mrf.mxu0
    %8698 = vdwg.mxu0
    %v8699 = vmax.f32 %v6278, 0.0
    %v8700 = vmax.f32 %v6356, 0.0
    %v8701 = vmax.f32 %v6434, 0.0
    %v8702 = vmax.f32 %v6512, 0.0
    %v8703 = vmax.f32 %v6590, 0.0
    %v8704 = vmax.f32 %v6668, 0.0
    %v8705 = vmax.f32 %v6746, 0.0
    %v8706 = vmax.f32 %v6824, 0.0
    %v8707 = vmax.f32 %v6902, 0.0
    %v8708 = vmax.f32 %v6980, 0.0
    %v8709 = vmax.f32 %v7058, 0.0
    %v8710 = vmax.f32 %v7136, 0.0
    %v8711 = vmax.f32 %v7214, 0.0
    %v8712 = vmax.f32 %v7292, 0.0
    %v8713 = vmax.f32 %v7370, 0.0
    %v8714 = vmax.f32 %v7448, 0.0
    %v8715 = vmax.f32 %v7526, 0.0
    %v8716 = vmax.f32 %v7604, 0.0
    %v8717 = vmax.f32 %v7682, 0.0
    %v8718 = vmax.f32 %v7760, 0.0
    %v8719 = vmax.f32 %v7838, 0.0
    %v8720 = vmax.f32 %v7916, 0.0
    %v8721 = vmax.f32 %v7994, 0.0
    %v8722 = vmax.f32 %v8072, 0.0
    %v8723 = vmax.f32 %v8150, 0.0
    %v8724 = vmax.f32 %v8228, 0.0
    %v8725 = vmax.f32 %v8306, 0.0
    %v8726 = vmax.f32 %v8384, 0.0
    %v8727 = vmax.f32 %v8462, 0.0
    %v8728 = vmax.f32 %v8540, 0.0
    %v8729 = vmax.f32 %v8618, 0.0
    %v8730 = vmax.f32 %v8696, 0.0
    %v8731 = vld [vmem:[%s16] sm:$0xff]
    %v8732 = vld [vmem:[%s16 + $0x8] sm:$0xff]
    %v8733 = vld [vmem:[%s16 + $0x10] sm:$0xff]
    %v8734 = vld [vmem:[%s16 + $0x18] sm:$0xff]
    %v8735 = vld [vmem:[%s16 + $0x20] sm:$0xff]
    %v8736 = vld [vmem:[%s16 + $0x28] sm:$0xff]
    %v8737 = vld [vmem:[%s16 + $0x30] sm:$0xff]
    %v8738 = vld [vmem:[%s16 + $0x38] sm:$0xff]
    %v8739 = vld [vmem:[%s16 + $0x40] sm:$0xff]
    %v8740 = vld [vmem:[%s16 + $0x48] sm:$0xff]
    %v8741 = vld [vmem:[%s16 + $0x50] sm:$0xff]
    %v8742 = vld [vmem:[%s16 + $0x58] sm:$0xff]
    %v8743 = vld [vmem:[%s16 + $0x60] sm:$0xff]
    %v8744 = vld [vmem:[%s16 + $0x68] sm:$0xff]
    %v8745 = vld [vmem:[%s16 + $0x70] sm:$0xff]
    %v8746 = vld [vmem:[%s16 + $0x78] sm:$0xff]
    %v8747 = vld [vmem:[%s16 + $0x80] sm:$0xff]
    %v8748 = vld [vmem:[%s16 + $0x88] sm:$0xff]
    %v8749 = vld [vmem:[%s16 + $0x90] sm:$0xff]
    %v8750 = vld [vmem:[%s16 + $0x98] sm:$0xff]
    %v8751 = vld [vmem:[%s16 + $0xa0] sm:$0xff]
    %v8752 = vld [vmem:[%s16 + $0xa8] sm:$0xff]
    %v8753 = vld [vmem:[%s16 + $0xb0] sm:$0xff]
    %v8754 = vld [vmem:[%s16 + $0xb8] sm:$0xff]
    %v8755 = vld [vmem:[%s16 + $0xc0] sm:$0xff]
    %v8756 = vld [vmem:[%s16 + $0xc8] sm:$0xff]
    %v8757 = vld [vmem:[%s16 + $0xd0] sm:$0xff]
    %v8758 = vld [vmem:[%s16 + $0xd8] sm:$0xff]
    %v8759 = vld [vmem:[%s16 + $0xe0] sm:$0xff]
    %v8760 = vld [vmem:[%s16 + $0xe8] sm:$0xff]
    %v8761 = vld [vmem:[%s16 + $0xf0] sm:$0xff]
    %v8762 = vld [vmem:[%s16 + $0xf8] sm:$0xff]
    %v8763 = vld [vmem:[%s17] sm:$0x1]
    %v8764 = vld [vmem:[%s17 + $0x1] sm:$0x1]
    %v8765 = vld [vmem:[%s17 + $0x2] sm:$0x1]
    %v8766 = vld [vmem:[%s17 + $0x3] sm:$0x1]
    %v8767 = vld [vmem:[%s17 + $0x4] sm:$0x1]
    %v8768 = vld [vmem:[%s17 + $0x5] sm:$0x1]
    %v8769 = vld [vmem:[%s17 + $0x6] sm:$0x1]
    %v8770 = vld [vmem:[%s17 + $0x7] sm:$0x1]
    %v8771 = vld [vmem:[%s17 + $0x8] sm:$0x1]
    %v8772 = vld [vmem:[%s17 + $0x9] sm:$0x1]
    %v8773 = vld [vmem:[%s17 + $0xa] sm:$0x1]
    %v8774 = vld [vmem:[%s17 + $0xb] sm:$0x1]
    %v8775 = vld [vmem:[%s17 + $0xc] sm:$0x1]
    %v8776 = vld [vmem:[%s17 + $0xd] sm:$0x1]
    %v8777 = vld [vmem:[%s17 + $0xe] sm:$0x1]
    %v8778 = vld [vmem:[%s17 + $0xf] sm:$0x1]
    %v8779 = vld [vmem:[%s17 + $0x10] sm:$0x1]
    %v8780 = vld [vmem:[%s17 + $0x11] sm:$0x1]
    %v8781 = vld [vmem:[%s17 + $0x12] sm:$0x1]
    %v8782 = vld [vmem:[%s17 + $0x13] sm:$0x1]
    %v8783 = vld [vmem:[%s17 + $0x14] sm:$0x1]
    %v8784 = vld [vmem:[%s17 + $0x15] sm:$0x1]
    %v8785 = vld [vmem:[%s17 + $0x16] sm:$0x1]
    %v8786 = vld [vmem:[%s17 + $0x17] sm:$0x1]
    %v8787 = vld [vmem:[%s17 + $0x18] sm:$0x1]
    %v8788 = vld [vmem:[%s17 + $0x19] sm:$0x1]
    %v8789 = vld [vmem:[%s17 + $0x1a] sm:$0x1]
    %v8790 = vld [vmem:[%s17 + $0x1b] sm:$0x1]
    %v8791 = vld [vmem:[%s17 + $0x1c] sm:$0x1]
    %v8792 = vld [vmem:[%s17 + $0x1d] sm:$0x1]
    %v8793 = vld [vmem:[%s17 + $0x1e] sm:$0x1]
    %v8794 = vld [vmem:[%s17 + $0x1f] sm:$0x1]
    %v8827 = vperm.slane %v8763, 0
    %v8828 = vperm.slane %v8764, 0
    %v8829 = vperm.slane %v8765, 0
    %v8830 = vperm.slane %v8766, 0
    %v8831 = vperm.slane %v8767, 0
    %v8832 = vperm.slane %v8768, 0
    %v8833 = vperm.slane %v8769, 0
    %v8834 = vperm.slane %v8770, 0
    %v8835 = vperm.slane %v8771, 0
    %v8836 = vperm.slane %v8772, 0
    %v8837 = vperm.slane %v8773, 0
    %v8838 = vperm.slane %v8774, 0
    %v8839 = vperm.slane %v8775, 0
    %v8840 = vperm.slane %v8776, 0
    %v8841 = vperm.slane %v8777, 0
    %v8842 = vperm.slane %v8778, 0
    %v8843 = vperm.slane %v8779, 0
    %v8844 = vperm.slane %v8780, 0
    %v8845 = vperm.slane %v8781, 0
    %v8846 = vperm.slane %v8782, 0
    %v8847 = vperm.slane %v8783, 0
    %v8848 = vperm.slane %v8784, 0
    %v8849 = vperm.slane %v8785, 0
    %v8850 = vperm.slane %v8786, 0
    %v8851 = vperm.slane %v8787, 0
    %v8852 = vperm.slane %v8788, 0
    %v8853 = vperm.slane %v8789, 0
    %v8854 = vperm.slane %v8790, 0
    %v8855 = vperm.slane %v8791, 0
    %v8856 = vperm.slane %v8792, 0
    %v8857 = vperm.slane %v8793, 0
    %v8858 = vperm.slane %v8794, 0
    %v8892 = vsel %vm845, %v8699, 0
    %v8895 = vsel %vm845, %v8731, 0
    %8897 = vmatpush.xpose.msra.mxu0 0.0
    %8898 = vmatpush.xpose.msra.mxu0 0.0
    %8899 = vmatpush.xpose.msra.mxu0 0.0
    %8900 = vmatpush.xpose.msra.mxu0 0.0
    %8901 = vmatpush.xpose.msra.mxu0 0.0
    %8902 = vmatpush.xpose.msra.mxu0 0.0
    %8903 = vmatpush.xpose.msra.mxu0 0.0
    %8904 = vmatpush.xpose.msra.mxu0 0.0
    %8905 = vmatpush.xpose.msra.mxu0 0.0
    %8906 = vmatpush.xpose.msra.mxu0 0.0
    %8907 = vmatpush.xpose.msra.mxu0 0.0
    %8908 = vmatpush.xpose.msra.mxu0 0.0
    %8909 = vmatpush.xpose.msra.mxu0 0.0
    %8910 = vmatpush.xpose.msra.mxu0 0.0
    %8911 = vmatpush.xpose.msra.mxu0 0.0
    %8912 = vmatpush.xpose.msra.mxu0 %v8895
    %8913 = vmatmul.f32.gmra.mxu0 %v8892
    %v8914 = vpop.f32.mrf.mxu0
    %v8915 = vadd.f32 %v8827, %v8914
    %8916 = vdwg.mxu0
    %v8918 = vsel %vm845, %v8700, 0
    %v8921 = vsel %vm845, %v8732, 0
    %8923 = vmatpush.xpose.msra.mxu0 0.0
    %8924 = vmatpush.xpose.msra.mxu0 0.0
    %8925 = vmatpush.xpose.msra.mxu0 0.0
    %8926 = vmatpush.xpose.msra.mxu0 0.0
    %8927 = vmatpush.xpose.msra.mxu0 0.0
    %8928 = vmatpush.xpose.msra.mxu0 0.0
    %8929 = vmatpush.xpose.msra.mxu0 0.0
    %8930 = vmatpush.xpose.msra.mxu0 0.0
    %8931 = vmatpush.xpose.msra.mxu0 0.0
    %8932 = vmatpush.xpose.msra.mxu0 0.0
    %8933 = vmatpush.xpose.msra.mxu0 0.0
    %8934 = vmatpush.xpose.msra.mxu0 0.0
    %8935 = vmatpush.xpose.msra.mxu0 0.0
    %8936 = vmatpush.xpose.msra.mxu0 0.0
    %8937 = vmatpush.xpose.msra.mxu0 0.0
    %8938 = vmatpush.xpose.msra.mxu0 %v8921
    %8939 = vmatmul.f32.gmra.mxu0 %v8918
    %v8940 = vpop.f32.mrf.mxu0
    %v8941 = vadd.f32 %v8828, %v8940
    %8942 = vdwg.mxu0
    %v8944 = vsel %vm845, %v8701, 0
    %v8947 = vsel %vm845, %v8733, 0
    %8949 = vmatpush.xpose.msra.mxu0 0.0
    %8950 = vmatpush.xpose.msra.mxu0 0.0
    %8951 = vmatpush.xpose.msra.mxu0 0.0
    %8952 = vmatpush.xpose.msra.mxu0 0.0
    %8953 = vmatpush.xpose.msra.mxu0 0.0
    %8954 = vmatpush.xpose.msra.mxu0 0.0
    %8955 = vmatpush.xpose.msra.mxu0 0.0
    %8956 = vmatpush.xpose.msra.mxu0 0.0
    %8957 = vmatpush.xpose.msra.mxu0 0.0
    %8958 = vmatpush.xpose.msra.mxu0 0.0
    %8959 = vmatpush.xpose.msra.mxu0 0.0
    %8960 = vmatpush.xpose.msra.mxu0 0.0
    %8961 = vmatpush.xpose.msra.mxu0 0.0
    %8962 = vmatpush.xpose.msra.mxu0 0.0
    %8963 = vmatpush.xpose.msra.mxu0 0.0
    %8964 = vmatpush.xpose.msra.mxu0 %v8947
    %8965 = vmatmul.f32.gmra.mxu0 %v8944
    %v8966 = vpop.f32.mrf.mxu0
    %v8967 = vadd.f32 %v8829, %v8966
    %8968 = vdwg.mxu0
    %v8970 = vsel %vm845, %v8702, 0
    %v8973 = vsel %vm845, %v8734, 0
    %8975 = vmatpush.xpose.msra.mxu0 0.0
    %8976 = vmatpush.xpose.msra.mxu0 0.0
    %8977 = vmatpush.xpose.msra.mxu0 0.0
    %8978 = vmatpush.xpose.msra.mxu0 0.0
    %8979 = vmatpush.xpose.msra.mxu0 0.0
    %8980 = vmatpush.xpose.msra.mxu0 0.0
    %8981 = vmatpush.xpose.msra.mxu0 0.0
    %8982 = vmatpush.xpose.msra.mxu0 0.0
    %8983 = vmatpush.xpose.msra.mxu0 0.0
    %8984 = vmatpush.xpose.msra.mxu0 0.0
    %8985 = vmatpush.xpose.msra.mxu0 0.0
    %8986 = vmatpush.xpose.msra.mxu0 0.0
    %8987 = vmatpush.xpose.msra.mxu0 0.0
    %8988 = vmatpush.xpose.msra.mxu0 0.0
    %8989 = vmatpush.xpose.msra.mxu0 0.0
    %8990 = vmatpush.xpose.msra.mxu0 %v8973
    %8991 = vmatmul.f32.gmra.mxu0 %v8970
    %v8992 = vpop.f32.mrf.mxu0
    %v8993 = vadd.f32 %v8830, %v8992
    %8994 = vdwg.mxu0
    %v8996 = vsel %vm845, %v8703, 0
    %v8999 = vsel %vm845, %v8735, 0
    %9001 = vmatpush.xpose.msra.mxu0 0.0
    %9002 = vmatpush.xpose.msra.mxu0 0.0
    %9003 = vmatpush.xpose.msra.mxu0 0.0
    %9004 = vmatpush.xpose.msra.mxu0 0.0
    %9005 = vmatpush.xpose.msra.mxu0 0.0
    %9006 = vmatpush.xpose.msra.mxu0 0.0
    %9007 = vmatpush.xpose.msra.mxu0 0.0
    %9008 = vmatpush.xpose.msra.mxu0 0.0
    %9009 = vmatpush.xpose.msra.mxu0 0.0
    %9010 = vmatpush.xpose.msra.mxu0 0.0
    %9011 = vmatpush.xpose.msra.mxu0 0.0
    %9012 = vmatpush.xpose.msra.mxu0 0.0
    %9013 = vmatpush.xpose.msra.mxu0 0.0
    %9014 = vmatpush.xpose.msra.mxu0 0.0
    %9015 = vmatpush.xpose.msra.mxu0 0.0
    %9016 = vmatpush.xpose.msra.mxu0 %v8999
    %9017 = vmatmul.f32.gmra.mxu0 %v8996
    %v9018 = vpop.f32.mrf.mxu0
    %v9019 = vadd.f32 %v8831, %v9018
    %9020 = vdwg.mxu0
    %v9022 = vsel %vm845, %v8704, 0
    %v9025 = vsel %vm845, %v8736, 0
    %9027 = vmatpush.xpose.msra.mxu0 0.0
    %9028 = vmatpush.xpose.msra.mxu0 0.0
    %9029 = vmatpush.xpose.msra.mxu0 0.0
    %9030 = vmatpush.xpose.msra.mxu0 0.0
    %9031 = vmatpush.xpose.msra.mxu0 0.0
    %9032 = vmatpush.xpose.msra.mxu0 0.0
    %9033 = vmatpush.xpose.msra.mxu0 0.0
    %9034 = vmatpush.xpose.msra.mxu0 0.0
    %9035 = vmatpush.xpose.msra.mxu0 0.0
    %9036 = vmatpush.xpose.msra.mxu0 0.0
    %9037 = vmatpush.xpose.msra.mxu0 0.0
    %9038 = vmatpush.xpose.msra.mxu0 0.0
    %9039 = vmatpush.xpose.msra.mxu0 0.0
    %9040 = vmatpush.xpose.msra.mxu0 0.0
    %9041 = vmatpush.xpose.msra.mxu0 0.0
    %9042 = vmatpush.xpose.msra.mxu0 %v9025
    %9043 = vmatmul.f32.gmra.mxu0 %v9022
    %v9044 = vpop.f32.mrf.mxu0
    %v9045 = vadd.f32 %v8832, %v9044
    %9046 = vdwg.mxu0
    %v9048 = vsel %vm845, %v8705, 0
    %v9051 = vsel %vm845, %v8737, 0
    %9053 = vmatpush.xpose.msra.mxu0 0.0
    %9054 = vmatpush.xpose.msra.mxu0 0.0
    %9055 = vmatpush.xpose.msra.mxu0 0.0
    %9056 = vmatpush.xpose.msra.mxu0 0.0
    %9057 = vmatpush.xpose.msra.mxu0 0.0
    %9058 = vmatpush.xpose.msra.mxu0 0.0
    %9059 = vmatpush.xpose.msra.mxu0 0.0
    %9060 = vmatpush.xpose.msra.mxu0 0.0
    %9061 = vmatpush.xpose.msra.mxu0 0.0
    %9062 = vmatpush.xpose.msra.mxu0 0.0
    %9063 = vmatpush.xpose.msra.mxu0 0.0
    %9064 = vmatpush.xpose.msra.mxu0 0.0
    %9065 = vmatpush.xpose.msra.mxu0 0.0
    %9066 = vmatpush.xpose.msra.mxu0 0.0
    %9067 = vmatpush.xpose.msra.mxu0 0.0
    %9068 = vmatpush.xpose.msra.mxu0 %v9051
    %9069 = vmatmul.f32.gmra.mxu0 %v9048
    %v9070 = vpop.f32.mrf.mxu0
    %v9071 = vadd.f32 %v8833, %v9070
    %9072 = vdwg.mxu0
    %v9074 = vsel %vm845, %v8706, 0
    %v9077 = vsel %vm845, %v8738, 0
    %9079 = vmatpush.xpose.msra.mxu0 0.0
    %9080 = vmatpush.xpose.msra.mxu0 0.0
    %9081 = vmatpush.xpose.msra.mxu0 0.0
    %9082 = vmatpush.xpose.msra.mxu0 0.0
    %9083 = vmatpush.xpose.msra.mxu0 0.0
    %9084 = vmatpush.xpose.msra.mxu0 0.0
    %9085 = vmatpush.xpose.msra.mxu0 0.0
    %9086 = vmatpush.xpose.msra.mxu0 0.0
    %9087 = vmatpush.xpose.msra.mxu0 0.0
    %9088 = vmatpush.xpose.msra.mxu0 0.0
    %9089 = vmatpush.xpose.msra.mxu0 0.0
    %9090 = vmatpush.xpose.msra.mxu0 0.0
    %9091 = vmatpush.xpose.msra.mxu0 0.0
    %9092 = vmatpush.xpose.msra.mxu0 0.0
    %9093 = vmatpush.xpose.msra.mxu0 0.0
    %9094 = vmatpush.xpose.msra.mxu0 %v9077
    %9095 = vmatmul.f32.gmra.mxu0 %v9074
    %v9096 = vpop.f32.mrf.mxu0
    %v9097 = vadd.f32 %v8834, %v9096
    %9098 = vdwg.mxu0
    %v9100 = vsel %vm845, %v8707, 0
    %v9103 = vsel %vm845, %v8739, 0
    %9105 = vmatpush.xpose.msra.mxu0 0.0
    %9106 = vmatpush.xpose.msra.mxu0 0.0
    %9107 = vmatpush.xpose.msra.mxu0 0.0
    %9108 = vmatpush.xpose.msra.mxu0 0.0
    %9109 = vmatpush.xpose.msra.mxu0 0.0
    %9110 = vmatpush.xpose.msra.mxu0 0.0
    %9111 = vmatpush.xpose.msra.mxu0 0.0
    %9112 = vmatpush.xpose.msra.mxu0 0.0
    %9113 = vmatpush.xpose.msra.mxu0 0.0
    %9114 = vmatpush.xpose.msra.mxu0 0.0
    %9115 = vmatpush.xpose.msra.mxu0 0.0
    %9116 = vmatpush.xpose.msra.mxu0 0.0
    %9117 = vmatpush.xpose.msra.mxu0 0.0
    %9118 = vmatpush.xpose.msra.mxu0 0.0
    %9119 = vmatpush.xpose.msra.mxu0 0.0
    %9120 = vmatpush.xpose.msra.mxu0 %v9103
    %9121 = vmatmul.f32.gmra.mxu0 %v9100
    %v9122 = vpop.f32.mrf.mxu0
    %v9123 = vadd.f32 %v8835, %v9122
    %9124 = vdwg.mxu0
    %v9126 = vsel %vm845, %v8708, 0
    %v9129 = vsel %vm845, %v8740, 0
    %9131 = vmatpush.xpose.msra.mxu0 0.0
    %9132 = vmatpush.xpose.msra.mxu0 0.0
    %9133 = vmatpush.xpose.msra.mxu0 0.0
    %9134 = vmatpush.xpose.msra.mxu0 0.0
    %9135 = vmatpush.xpose.msra.mxu0 0.0
    %9136 = vmatpush.xpose.msra.mxu0 0.0
    %9137 = vmatpush.xpose.msra.mxu0 0.0
    %9138 = vmatpush.xpose.msra.mxu0 0.0
    %9139 = vmatpush.xpose.msra.mxu0 0.0
    %9140 = vmatpush.xpose.msra.mxu0 0.0
    %9141 = vmatpush.xpose.msra.mxu0 0.0
    %9142 = vmatpush.xpose.msra.mxu0 0.0
    %9143 = vmatpush.xpose.msra.mxu0 0.0
    %9144 = vmatpush.xpose.msra.mxu0 0.0
    %9145 = vmatpush.xpose.msra.mxu0 0.0
    %9146 = vmatpush.xpose.msra.mxu0 %v9129
    %9147 = vmatmul.f32.gmra.mxu0 %v9126
    %v9148 = vpop.f32.mrf.mxu0
    %v9149 = vadd.f32 %v8836, %v9148
    %9150 = vdwg.mxu0
    %v9152 = vsel %vm845, %v8709, 0
    %v9155 = vsel %vm845, %v8741, 0
    %9157 = vmatpush.xpose.msra.mxu0 0.0
    %9158 = vmatpush.xpose.msra.mxu0 0.0
    %9159 = vmatpush.xpose.msra.mxu0 0.0
    %9160 = vmatpush.xpose.msra.mxu0 0.0
    %9161 = vmatpush.xpose.msra.mxu0 0.0
    %9162 = vmatpush.xpose.msra.mxu0 0.0
    %9163 = vmatpush.xpose.msra.mxu0 0.0
    %9164 = vmatpush.xpose.msra.mxu0 0.0
    %9165 = vmatpush.xpose.msra.mxu0 0.0
    %9166 = vmatpush.xpose.msra.mxu0 0.0
    %9167 = vmatpush.xpose.msra.mxu0 0.0
    %9168 = vmatpush.xpose.msra.mxu0 0.0
    %9169 = vmatpush.xpose.msra.mxu0 0.0
    %9170 = vmatpush.xpose.msra.mxu0 0.0
    %9171 = vmatpush.xpose.msra.mxu0 0.0
    %9172 = vmatpush.xpose.msra.mxu0 %v9155
    %9173 = vmatmul.f32.gmra.mxu0 %v9152
    %v9174 = vpop.f32.mrf.mxu0
    %v9175 = vadd.f32 %v8837, %v9174
    %9176 = vdwg.mxu0
    %v9178 = vsel %vm845, %v8710, 0
    %v9181 = vsel %vm845, %v8742, 0
    %9183 = vmatpush.xpose.msra.mxu0 0.0
    %9184 = vmatpush.xpose.msra.mxu0 0.0
    %9185 = vmatpush.xpose.msra.mxu0 0.0
    %9186 = vmatpush.xpose.msra.mxu0 0.0
    %9187 = vmatpush.xpose.msra.mxu0 0.0
    %9188 = vmatpush.xpose.msra.mxu0 0.0
    %9189 = vmatpush.xpose.msra.mxu0 0.0
    %9190 = vmatpush.xpose.msra.mxu0 0.0
    %9191 = vmatpush.xpose.msra.mxu0 0.0
    %9192 = vmatpush.xpose.msra.mxu0 0.0
    %9193 = vmatpush.xpose.msra.mxu0 0.0
    %9194 = vmatpush.xpose.msra.mxu0 0.0
    %9195 = vmatpush.xpose.msra.mxu0 0.0
    %9196 = vmatpush.xpose.msra.mxu0 0.0
    %9197 = vmatpush.xpose.msra.mxu0 0.0
    %9198 = vmatpush.xpose.msra.mxu0 %v9181
    %9199 = vmatmul.f32.gmra.mxu0 %v9178
    %v9200 = vpop.f32.mrf.mxu0
    %v9201 = vadd.f32 %v8838, %v9200
    %9202 = vdwg.mxu0
    %v9204 = vsel %vm845, %v8711, 0
    %v9207 = vsel %vm845, %v8743, 0
    %9209 = vmatpush.xpose.msra.mxu0 0.0
    %9210 = vmatpush.xpose.msra.mxu0 0.0
    %9211 = vmatpush.xpose.msra.mxu0 0.0
    %9212 = vmatpush.xpose.msra.mxu0 0.0
    %9213 = vmatpush.xpose.msra.mxu0 0.0
    %9214 = vmatpush.xpose.msra.mxu0 0.0
    %9215 = vmatpush.xpose.msra.mxu0 0.0
    %9216 = vmatpush.xpose.msra.mxu0 0.0
    %9217 = vmatpush.xpose.msra.mxu0 0.0
    %9218 = vmatpush.xpose.msra.mxu0 0.0
    %9219 = vmatpush.xpose.msra.mxu0 0.0
    %9220 = vmatpush.xpose.msra.mxu0 0.0
    %9221 = vmatpush.xpose.msra.mxu0 0.0
    %9222 = vmatpush.xpose.msra.mxu0 0.0
    %9223 = vmatpush.xpose.msra.mxu0 0.0
    %9224 = vmatpush.xpose.msra.mxu0 %v9207
    %9225 = vmatmul.f32.gmra.mxu0 %v9204
    %v9226 = vpop.f32.mrf.mxu0
    %v9227 = vadd.f32 %v8839, %v9226
    %9228 = vdwg.mxu0
    %v9230 = vsel %vm845, %v8712, 0
    %v9233 = vsel %vm845, %v8744, 0
    %9235 = vmatpush.xpose.msra.mxu0 0.0
    %9236 = vmatpush.xpose.msra.mxu0 0.0
    %9237 = vmatpush.xpose.msra.mxu0 0.0
    %9238 = vmatpush.xpose.msra.mxu0 0.0
    %9239 = vmatpush.xpose.msra.mxu0 0.0
    %9240 = vmatpush.xpose.msra.mxu0 0.0
    %9241 = vmatpush.xpose.msra.mxu0 0.0
    %9242 = vmatpush.xpose.msra.mxu0 0.0
    %9243 = vmatpush.xpose.msra.mxu0 0.0
    %9244 = vmatpush.xpose.msra.mxu0 0.0
    %9245 = vmatpush.xpose.msra.mxu0 0.0
    %9246 = vmatpush.xpose.msra.mxu0 0.0
    %9247 = vmatpush.xpose.msra.mxu0 0.0
    %9248 = vmatpush.xpose.msra.mxu0 0.0
    %9249 = vmatpush.xpose.msra.mxu0 0.0
    %9250 = vmatpush.xpose.msra.mxu0 %v9233
    %9251 = vmatmul.f32.gmra.mxu0 %v9230
    %v9252 = vpop.f32.mrf.mxu0
    %v9253 = vadd.f32 %v8840, %v9252
    %9254 = vdwg.mxu0
    %v9256 = vsel %vm845, %v8713, 0
    %v9259 = vsel %vm845, %v8745, 0
    %9261 = vmatpush.xpose.msra.mxu0 0.0
    %9262 = vmatpush.xpose.msra.mxu0 0.0
    %9263 = vmatpush.xpose.msra.mxu0 0.0
    %9264 = vmatpush.xpose.msra.mxu0 0.0
    %9265 = vmatpush.xpose.msra.mxu0 0.0
    %9266 = vmatpush.xpose.msra.mxu0 0.0
    %9267 = vmatpush.xpose.msra.mxu0 0.0
    %9268 = vmatpush.xpose.msra.mxu0 0.0
    %9269 = vmatpush.xpose.msra.mxu0 0.0
    %9270 = vmatpush.xpose.msra.mxu0 0.0
    %9271 = vmatpush.xpose.msra.mxu0 0.0
    %9272 = vmatpush.xpose.msra.mxu0 0.0
    %9273 = vmatpush.xpose.msra.mxu0 0.0
    %9274 = vmatpush.xpose.msra.mxu0 0.0
    %9275 = vmatpush.xpose.msra.mxu0 0.0
    %9276 = vmatpush.xpose.msra.mxu0 %v9259
    %9277 = vmatmul.f32.gmra.mxu0 %v9256
    %v9278 = vpop.f32.mrf.mxu0
    %v9279 = vadd.f32 %v8841, %v9278
    %9280 = vdwg.mxu0
    %v9282 = vsel %vm845, %v8714, 0
    %v9285 = vsel %vm845, %v8746, 0
    %9287 = vmatpush.xpose.msra.mxu0 0.0
    %9288 = vmatpush.xpose.msra.mxu0 0.0
    %9289 = vmatpush.xpose.msra.mxu0 0.0
    %9290 = vmatpush.xpose.msra.mxu0 0.0
    %9291 = vmatpush.xpose.msra.mxu0 0.0
    %9292 = vmatpush.xpose.msra.mxu0 0.0
    %9293 = vmatpush.xpose.msra.mxu0 0.0
    %9294 = vmatpush.xpose.msra.mxu0 0.0
    %9295 = vmatpush.xpose.msra.mxu0 0.0
    %9296 = vmatpush.xpose.msra.mxu0 0.0
    %9297 = vmatpush.xpose.msra.mxu0 0.0
    %9298 = vmatpush.xpose.msra.mxu0 0.0
    %9299 = vmatpush.xpose.msra.mxu0 0.0
    %9300 = vmatpush.xpose.msra.mxu0 0.0
    %9301 = vmatpush.xpose.msra.mxu0 0.0
    %9302 = vmatpush.xpose.msra.mxu0 %v9285
    %9303 = vmatmul.f32.gmra.mxu0 %v9282
    %v9304 = vpop.f32.mrf.mxu0
    %v9305 = vadd.f32 %v8842, %v9304
    %9306 = vdwg.mxu0
    %v9308 = vsel %vm845, %v8715, 0
    %v9311 = vsel %vm845, %v8747, 0
    %9313 = vmatpush.xpose.msra.mxu0 0.0
    %9314 = vmatpush.xpose.msra.mxu0 0.0
    %9315 = vmatpush.xpose.msra.mxu0 0.0
    %9316 = vmatpush.xpose.msra.mxu0 0.0
    %9317 = vmatpush.xpose.msra.mxu0 0.0
    %9318 = vmatpush.xpose.msra.mxu0 0.0
    %9319 = vmatpush.xpose.msra.mxu0 0.0
    %9320 = vmatpush.xpose.msra.mxu0 0.0
    %9321 = vmatpush.xpose.msra.mxu0 0.0
    %9322 = vmatpush.xpose.msra.mxu0 0.0
    %9323 = vmatpush.xpose.msra.mxu0 0.0
    %9324 = vmatpush.xpose.msra.mxu0 0.0
    %9325 = vmatpush.xpose.msra.mxu0 0.0
    %9326 = vmatpush.xpose.msra.mxu0 0.0
    %9327 = vmatpush.xpose.msra.mxu0 0.0
    %9328 = vmatpush.xpose.msra.mxu0 %v9311
    %9329 = vmatmul.f32.gmra.mxu0 %v9308
    %v9330 = vpop.f32.mrf.mxu0
    %v9331 = vadd.f32 %v8843, %v9330
    %9332 = vdwg.mxu0
    %v9334 = vsel %vm845, %v8716, 0
    %v9337 = vsel %vm845, %v8748, 0
    %9339 = vmatpush.xpose.msra.mxu0 0.0
    %9340 = vmatpush.xpose.msra.mxu0 0.0
    %9341 = vmatpush.xpose.msra.mxu0 0.0
    %9342 = vmatpush.xpose.msra.mxu0 0.0
    %9343 = vmatpush.xpose.msra.mxu0 0.0
    %9344 = vmatpush.xpose.msra.mxu0 0.0
    %9345 = vmatpush.xpose.msra.mxu0 0.0
    %9346 = vmatpush.xpose.msra.mxu0 0.0
    %9347 = vmatpush.xpose.msra.mxu0 0.0
    %9348 = vmatpush.xpose.msra.mxu0 0.0
    %9349 = vmatpush.xpose.msra.mxu0 0.0
    %9350 = vmatpush.xpose.msra.mxu0 0.0
    %9351 = vmatpush.xpose.msra.mxu0 0.0
    %9352 = vmatpush.xpose.msra.mxu0 0.0
    %9353 = vmatpush.xpose.msra.mxu0 0.0
    %9354 = vmatpush.xpose.msra.mxu0 %v9337
    %9355 = vmatmul.f32.gmra.mxu0 %v9334
    %v9356 = vpop.f32.mrf.mxu0
    %v9357 = vadd.f32 %v8844, %v9356
    %9358 = vdwg.mxu0
    %v9360 = vsel %vm845, %v8717, 0
    %v9363 = vsel %vm845, %v8749, 0
    %9365 = vmatpush.xpose.msra.mxu0 0.0
    %9366 = vmatpush.xpose.msra.mxu0 0.0
    %9367 = vmatpush.xpose.msra.mxu0 0.0
    %9368 = vmatpush.xpose.msra.mxu0 0.0
    %9369 = vmatpush.xpose.msra.mxu0 0.0
    %9370 = vmatpush.xpose.msra.mxu0 0.0
    %9371 = vmatpush.xpose.msra.mxu0 0.0
    %9372 = vmatpush.xpose.msra.mxu0 0.0
    %9373 = vmatpush.xpose.msra.mxu0 0.0
    %9374 = vmatpush.xpose.msra.mxu0 0.0
    %9375 = vmatpush.xpose.msra.mxu0 0.0
    %9376 = vmatpush.xpose.msra.mxu0 0.0
    %9377 = vmatpush.xpose.msra.mxu0 0.0
    %9378 = vmatpush.xpose.msra.mxu0 0.0
    %9379 = vmatpush.xpose.msra.mxu0 0.0
    %9380 = vmatpush.xpose.msra.mxu0 %v9363
    %9381 = vmatmul.f32.gmra.mxu0 %v9360
    %v9382 = vpop.f32.mrf.mxu0
    %v9383 = vadd.f32 %v8845, %v9382
    %9384 = vdwg.mxu0
    %v9386 = vsel %vm845, %v8718, 0
    %v9389 = vsel %vm845, %v8750, 0
    %9391 = vmatpush.xpose.msra.mxu0 0.0
    %9392 = vmatpush.xpose.msra.mxu0 0.0
    %9393 = vmatpush.xpose.msra.mxu0 0.0
    %9394 = vmatpush.xpose.msra.mxu0 0.0
    %9395 = vmatpush.xpose.msra.mxu0 0.0
    %9396 = vmatpush.xpose.msra.mxu0 0.0
    %9397 = vmatpush.xpose.msra.mxu0 0.0
    %9398 = vmatpush.xpose.msra.mxu0 0.0
    %9399 = vmatpush.xpose.msra.mxu0 0.0
    %9400 = vmatpush.xpose.msra.mxu0 0.0
    %9401 = vmatpush.xpose.msra.mxu0 0.0
    %9402 = vmatpush.xpose.msra.mxu0 0.0
    %9403 = vmatpush.xpose.msra.mxu0 0.0
    %9404 = vmatpush.xpose.msra.mxu0 0.0
    %9405 = vmatpush.xpose.msra.mxu0 0.0
    %9406 = vmatpush.xpose.msra.mxu0 %v9389
    %9407 = vmatmul.f32.gmra.mxu0 %v9386
    %v9408 = vpop.f32.mrf.mxu0
    %v9409 = vadd.f32 %v8846, %v9408
    %9410 = vdwg.mxu0
    %v9412 = vsel %vm845, %v8719, 0
    %v9415 = vsel %vm845, %v8751, 0
    %9417 = vmatpush.xpose.msra.mxu0 0.0
    %9418 = vmatpush.xpose.msra.mxu0 0.0
    %9419 = vmatpush.xpose.msra.mxu0 0.0
    %9420 = vmatpush.xpose.msra.mxu0 0.0
    %9421 = vmatpush.xpose.msra.mxu0 0.0
    %9422 = vmatpush.xpose.msra.mxu0 0.0
    %9423 = vmatpush.xpose.msra.mxu0 0.0
    %9424 = vmatpush.xpose.msra.mxu0 0.0
    %9425 = vmatpush.xpose.msra.mxu0 0.0
    %9426 = vmatpush.xpose.msra.mxu0 0.0
    %9427 = vmatpush.xpose.msra.mxu0 0.0
    %9428 = vmatpush.xpose.msra.mxu0 0.0
    %9429 = vmatpush.xpose.msra.mxu0 0.0
    %9430 = vmatpush.xpose.msra.mxu0 0.0
    %9431 = vmatpush.xpose.msra.mxu0 0.0
    %9432 = vmatpush.xpose.msra.mxu0 %v9415
    %9433 = vmatmul.f32.gmra.mxu0 %v9412
    %v9434 = vpop.f32.mrf.mxu0
    %v9435 = vadd.f32 %v8847, %v9434
    %9436 = vdwg.mxu0
    %v9438 = vsel %vm845, %v8720, 0
    %v9441 = vsel %vm845, %v8752, 0
    %9443 = vmatpush.xpose.msra.mxu0 0.0
    %9444 = vmatpush.xpose.msra.mxu0 0.0
    %9445 = vmatpush.xpose.msra.mxu0 0.0
    %9446 = vmatpush.xpose.msra.mxu0 0.0
    %9447 = vmatpush.xpose.msra.mxu0 0.0
    %9448 = vmatpush.xpose.msra.mxu0 0.0
    %9449 = vmatpush.xpose.msra.mxu0 0.0
    %9450 = vmatpush.xpose.msra.mxu0 0.0
    %9451 = vmatpush.xpose.msra.mxu0 0.0
    %9452 = vmatpush.xpose.msra.mxu0 0.0
    %9453 = vmatpush.xpose.msra.mxu0 0.0
    %9454 = vmatpush.xpose.msra.mxu0 0.0
    %9455 = vmatpush.xpose.msra.mxu0 0.0
    %9456 = vmatpush.xpose.msra.mxu0 0.0
    %9457 = vmatpush.xpose.msra.mxu0 0.0
    %9458 = vmatpush.xpose.msra.mxu0 %v9441
    %9459 = vmatmul.f32.gmra.mxu0 %v9438
    %v9460 = vpop.f32.mrf.mxu0
    %v9461 = vadd.f32 %v8848, %v9460
    %9462 = vdwg.mxu0
    %v9464 = vsel %vm845, %v8721, 0
    %v9467 = vsel %vm845, %v8753, 0
    %9469 = vmatpush.xpose.msra.mxu0 0.0
    %9470 = vmatpush.xpose.msra.mxu0 0.0
    %9471 = vmatpush.xpose.msra.mxu0 0.0
    %9472 = vmatpush.xpose.msra.mxu0 0.0
    %9473 = vmatpush.xpose.msra.mxu0 0.0
    %9474 = vmatpush.xpose.msra.mxu0 0.0
    %9475 = vmatpush.xpose.msra.mxu0 0.0
    %9476 = vmatpush.xpose.msra.mxu0 0.0
    %9477 = vmatpush.xpose.msra.mxu0 0.0
    %9478 = vmatpush.xpose.msra.mxu0 0.0
    %9479 = vmatpush.xpose.msra.mxu0 0.0
    %9480 = vmatpush.xpose.msra.mxu0 0.0
    %9481 = vmatpush.xpose.msra.mxu0 0.0
    %9482 = vmatpush.xpose.msra.mxu0 0.0
    %9483 = vmatpush.xpose.msra.mxu0 0.0
    %9484 = vmatpush.xpose.msra.mxu0 %v9467
    %9485 = vmatmul.f32.gmra.mxu0 %v9464
    %v9486 = vpop.f32.mrf.mxu0
    %v9487 = vadd.f32 %v8849, %v9486
    %9488 = vdwg.mxu0
    %v9490 = vsel %vm845, %v8722, 0
    %v9493 = vsel %vm845, %v8754, 0
    %9495 = vmatpush.xpose.msra.mxu0 0.0
    %9496 = vmatpush.xpose.msra.mxu0 0.0
    %9497 = vmatpush.xpose.msra.mxu0 0.0
    %9498 = vmatpush.xpose.msra.mxu0 0.0
    %9499 = vmatpush.xpose.msra.mxu0 0.0
    %9500 = vmatpush.xpose.msra.mxu0 0.0
    %9501 = vmatpush.xpose.msra.mxu0 0.0
    %9502 = vmatpush.xpose.msra.mxu0 0.0
    %9503 = vmatpush.xpose.msra.mxu0 0.0
    %9504 = vmatpush.xpose.msra.mxu0 0.0
    %9505 = vmatpush.xpose.msra.mxu0 0.0
    %9506 = vmatpush.xpose.msra.mxu0 0.0
    %9507 = vmatpush.xpose.msra.mxu0 0.0
    %9508 = vmatpush.xpose.msra.mxu0 0.0
    %9509 = vmatpush.xpose.msra.mxu0 0.0
    %9510 = vmatpush.xpose.msra.mxu0 %v9493
    %9511 = vmatmul.f32.gmra.mxu0 %v9490
    %v9512 = vpop.f32.mrf.mxu0
    %v9513 = vadd.f32 %v8850, %v9512
    %9514 = vdwg.mxu0
    %v9516 = vsel %vm845, %v8723, 0
    %v9519 = vsel %vm845, %v8755, 0
    %9521 = vmatpush.xpose.msra.mxu0 0.0
    %9522 = vmatpush.xpose.msra.mxu0 0.0
    %9523 = vmatpush.xpose.msra.mxu0 0.0
    %9524 = vmatpush.xpose.msra.mxu0 0.0
    %9525 = vmatpush.xpose.msra.mxu0 0.0
    %9526 = vmatpush.xpose.msra.mxu0 0.0
    %9527 = vmatpush.xpose.msra.mxu0 0.0
    %9528 = vmatpush.xpose.msra.mxu0 0.0
    %9529 = vmatpush.xpose.msra.mxu0 0.0
    %9530 = vmatpush.xpose.msra.mxu0 0.0
    %9531 = vmatpush.xpose.msra.mxu0 0.0
    %9532 = vmatpush.xpose.msra.mxu0 0.0
    %9533 = vmatpush.xpose.msra.mxu0 0.0
    %9534 = vmatpush.xpose.msra.mxu0 0.0
    %9535 = vmatpush.xpose.msra.mxu0 0.0
    %9536 = vmatpush.xpose.msra.mxu0 %v9519
    %9537 = vmatmul.f32.gmra.mxu0 %v9516
    %v9538 = vpop.f32.mrf.mxu0
    %v9539 = vadd.f32 %v8851, %v9538
    %9540 = vdwg.mxu0
    %v9542 = vsel %vm845, %v8724, 0
    %v9545 = vsel %vm845, %v8756, 0
    %9547 = vmatpush.xpose.msra.mxu0 0.0
    %9548 = vmatpush.xpose.msra.mxu0 0.0
    %9549 = vmatpush.xpose.msra.mxu0 0.0
    %9550 = vmatpush.xpose.msra.mxu0 0.0
    %9551 = vmatpush.xpose.msra.mxu0 0.0
    %9552 = vmatpush.xpose.msra.mxu0 0.0
    %9553 = vmatpush.xpose.msra.mxu0 0.0
    %9554 = vmatpush.xpose.msra.mxu0 0.0
    %9555 = vmatpush.xpose.msra.mxu0 0.0
    %9556 = vmatpush.xpose.msra.mxu0 0.0
    %9557 = vmatpush.xpose.msra.mxu0 0.0
    %9558 = vmatpush.xpose.msra.mxu0 0.0
    %9559 = vmatpush.xpose.msra.mxu0 0.0
    %9560 = vmatpush.xpose.msra.mxu0 0.0
    %9561 = vmatpush.xpose.msra.mxu0 0.0
    %9562 = vmatpush.xpose.msra.mxu0 %v9545
    %9563 = vmatmul.f32.gmra.mxu0 %v9542
    %v9564 = vpop.f32.mrf.mxu0
    %v9565 = vadd.f32 %v8852, %v9564
    %9566 = vdwg.mxu0
    %v9568 = vsel %vm845, %v8725, 0
    %v9571 = vsel %vm845, %v8757, 0
    %9573 = vmatpush.xpose.msra.mxu0 0.0
    %9574 = vmatpush.xpose.msra.mxu0 0.0
    %9575 = vmatpush.xpose.msra.mxu0 0.0
    %9576 = vmatpush.xpose.msra.mxu0 0.0
    %9577 = vmatpush.xpose.msra.mxu0 0.0
    %9578 = vmatpush.xpose.msra.mxu0 0.0
    %9579 = vmatpush.xpose.msra.mxu0 0.0
    %9580 = vmatpush.xpose.msra.mxu0 0.0
    %9581 = vmatpush.xpose.msra.mxu0 0.0
    %9582 = vmatpush.xpose.msra.mxu0 0.0
    %9583 = vmatpush.xpose.msra.mxu0 0.0
    %9584 = vmatpush.xpose.msra.mxu0 0.0
    %9585 = vmatpush.xpose.msra.mxu0 0.0
    %9586 = vmatpush.xpose.msra.mxu0 0.0
    %9587 = vmatpush.xpose.msra.mxu0 0.0
    %9588 = vmatpush.xpose.msra.mxu0 %v9571
    %9589 = vmatmul.f32.gmra.mxu0 %v9568
    %v9590 = vpop.f32.mrf.mxu0
    %v9591 = vadd.f32 %v8853, %v9590
    %9592 = vdwg.mxu0
    %v9594 = vsel %vm845, %v8726, 0
    %v9597 = vsel %vm845, %v8758, 0
    %9599 = vmatpush.xpose.msra.mxu0 0.0
    %9600 = vmatpush.xpose.msra.mxu0 0.0
    %9601 = vmatpush.xpose.msra.mxu0 0.0
    %9602 = vmatpush.xpose.msra.mxu0 0.0
    %9603 = vmatpush.xpose.msra.mxu0 0.0
    %9604 = vmatpush.xpose.msra.mxu0 0.0
    %9605 = vmatpush.xpose.msra.mxu0 0.0
    %9606 = vmatpush.xpose.msra.mxu0 0.0
    %9607 = vmatpush.xpose.msra.mxu0 0.0
    %9608 = vmatpush.xpose.msra.mxu0 0.0
    %9609 = vmatpush.xpose.msra.mxu0 0.0
    %9610 = vmatpush.xpose.msra.mxu0 0.0
    %9611 = vmatpush.xpose.msra.mxu0 0.0
    %9612 = vmatpush.xpose.msra.mxu0 0.0
    %9613 = vmatpush.xpose.msra.mxu0 0.0
    %9614 = vmatpush.xpose.msra.mxu0 %v9597
    %9615 = vmatmul.f32.gmra.mxu0 %v9594
    %v9616 = vpop.f32.mrf.mxu0
    %v9617 = vadd.f32 %v8854, %v9616
    %9618 = vdwg.mxu0
    %v9620 = vsel %vm845, %v8727, 0
    %v9623 = vsel %vm845, %v8759, 0
    %9625 = vmatpush.xpose.msra.mxu0 0.0
    %9626 = vmatpush.xpose.msra.mxu0 0.0
    %9627 = vmatpush.xpose.msra.mxu0 0.0
    %9628 = vmatpush.xpose.msra.mxu0 0.0
    %9629 = vmatpush.xpose.msra.mxu0 0.0
    %9630 = vmatpush.xpose.msra.mxu0 0.0
    %9631 = vmatpush.xpose.msra.mxu0 0.0
    %9632 = vmatpush.xpose.msra.mxu0 0.0
    %9633 = vmatpush.xpose.msra.mxu0 0.0
    %9634 = vmatpush.xpose.msra.mxu0 0.0
    %9635 = vmatpush.xpose.msra.mxu0 0.0
    %9636 = vmatpush.xpose.msra.mxu0 0.0
    %9637 = vmatpush.xpose.msra.mxu0 0.0
    %9638 = vmatpush.xpose.msra.mxu0 0.0
    %9639 = vmatpush.xpose.msra.mxu0 0.0
    %9640 = vmatpush.xpose.msra.mxu0 %v9623
    %9641 = vmatmul.f32.gmra.mxu0 %v9620
    %v9642 = vpop.f32.mrf.mxu0
    %v9643 = vadd.f32 %v8855, %v9642
    %9644 = vdwg.mxu0
    %v9646 = vsel %vm845, %v8728, 0
    %v9649 = vsel %vm845, %v8760, 0
    %9651 = vmatpush.xpose.msra.mxu0 0.0
    %9652 = vmatpush.xpose.msra.mxu0 0.0
    %9653 = vmatpush.xpose.msra.mxu0 0.0
    %9654 = vmatpush.xpose.msra.mxu0 0.0
    %9655 = vmatpush.xpose.msra.mxu0 0.0
    %9656 = vmatpush.xpose.msra.mxu0 0.0
    %9657 = vmatpush.xpose.msra.mxu0 0.0
    %9658 = vmatpush.xpose.msra.mxu0 0.0
    %9659 = vmatpush.xpose.msra.mxu0 0.0
    %9660 = vmatpush.xpose.msra.mxu0 0.0
    %9661 = vmatpush.xpose.msra.mxu0 0.0
    %9662 = vmatpush.xpose.msra.mxu0 0.0
    %9663 = vmatpush.xpose.msra.mxu0 0.0
    %9664 = vmatpush.xpose.msra.mxu0 0.0
    %9665 = vmatpush.xpose.msra.mxu0 0.0
    %9666 = vmatpush.xpose.msra.mxu0 %v9649
    %9667 = vmatmul.f32.gmra.mxu0 %v9646
    %v9668 = vpop.f32.mrf.mxu0
    %v9669 = vadd.f32 %v8856, %v9668
    %9670 = vdwg.mxu0
    %v9672 = vsel %vm845, %v8729, 0
    %v9675 = vsel %vm845, %v8761, 0
    %9677 = vmatpush.xpose.msra.mxu0 0.0
    %9678 = vmatpush.xpose.msra.mxu0 0.0
    %9679 = vmatpush.xpose.msra.mxu0 0.0
    %9680 = vmatpush.xpose.msra.mxu0 0.0
    %9681 = vmatpush.xpose.msra.mxu0 0.0
    %9682 = vmatpush.xpose.msra.mxu0 0.0
    %9683 = vmatpush.xpose.msra.mxu0 0.0
    %9684 = vmatpush.xpose.msra.mxu0 0.0
    %9685 = vmatpush.xpose.msra.mxu0 0.0
    %9686 = vmatpush.xpose.msra.mxu0 0.0
    %9687 = vmatpush.xpose.msra.mxu0 0.0
    %9688 = vmatpush.xpose.msra.mxu0 0.0
    %9689 = vmatpush.xpose.msra.mxu0 0.0
    %9690 = vmatpush.xpose.msra.mxu0 0.0
    %9691 = vmatpush.xpose.msra.mxu0 0.0
    %9692 = vmatpush.xpose.msra.mxu0 %v9675
    %9693 = vmatmul.f32.gmra.mxu0 %v9672
    %v9694 = vpop.f32.mrf.mxu0
    %v9695 = vadd.f32 %v8857, %v9694
    %9696 = vdwg.mxu0
    %v9698 = vsel %vm845, %v8730, 0
    %v9701 = vsel %vm845, %v8762, 0
    %9703 = vmatpush.xpose.msra.mxu0 0.0
    %9704 = vmatpush.xpose.msra.mxu0 0.0
    %9705 = vmatpush.xpose.msra.mxu0 0.0
    %9706 = vmatpush.xpose.msra.mxu0 0.0
    %9707 = vmatpush.xpose.msra.mxu0 0.0
    %9708 = vmatpush.xpose.msra.mxu0 0.0
    %9709 = vmatpush.xpose.msra.mxu0 0.0
    %9710 = vmatpush.xpose.msra.mxu0 0.0
    %9711 = vmatpush.xpose.msra.mxu0 0.0
    %9712 = vmatpush.xpose.msra.mxu0 0.0
    %9713 = vmatpush.xpose.msra.mxu0 0.0
    %9714 = vmatpush.xpose.msra.mxu0 0.0
    %9715 = vmatpush.xpose.msra.mxu0 0.0
    %9716 = vmatpush.xpose.msra.mxu0 0.0
    %9717 = vmatpush.xpose.msra.mxu0 0.0
    %9718 = vmatpush.xpose.msra.mxu0 %v9701
    %9719 = vmatmul.f32.gmra.mxu0 %v9698
    %v9720 = vpop.f32.mrf.mxu0
    %v9721 = vadd.f32 %v8858, %v9720
    %9722 = vdwg.mxu0
    %v9723 = vrot.slane %v8967, 4
    %v9724 = vsel %vm2841, %v9723, %v8915
    %v9726 = vunpack.c.l.s4 1983009808
    %v9727 = vunpack.c.0.s8 %v9726
    %v9728 = vperm.slane %v9724, %v9727
    %v9729 = vrot.slane %v8993, 4
    %v9730 = vsel %vm2841, %v9729, %v8941
    %v9732 = vunpack.c.l.s4 1983009808
    %v9733 = vunpack.c.0.s8 %v9732
    %v9734 = vperm.slane %v9730, %v9733
    %v9735 = vrot.slane %v9071, 4
    %v9736 = vsel %vm2841, %v9735, %v9019
    %v9738 = vunpack.c.l.s4 1983009808
    %v9739 = vunpack.c.0.s8 %v9738
    %v9740 = vperm.slane %v9736, %v9739
    %v9741 = vrot.slane %v9097, 4
    %v9742 = vsel %vm2841, %v9741, %v9045
    %v9744 = vunpack.c.l.s4 1983009808
    %v9745 = vunpack.c.0.s8 %v9744
    %v9746 = vperm.slane %v9742, %v9745
    %v9747 = vrot.slane %v9734, 4
    %v9748 = vsel %vm2841, %v9747, %v9728
    %v9750 = vunpack.c.l.s4 1934713408
    %v9751 = vunpack.c.0.s8 %v9750
    %v9752 = vperm.slane %v9748, %v9751
    %v9753 = vrot.slane %v9746, 4
    %v9754 = vsel %vm2841, %v9753, %v9740
    %v9756 = vunpack.c.l.s4 1934713408
    %v9757 = vunpack.c.0.s8 %v9756
    %v9758 = vperm.slane %v9754, %v9757
    %v9759 = vrot.slane %v9758, 4
    %v9760 = vsel %vm2841, %v9759, %v9752
    %v9761 = vrot.slane %v9752, 4
    %v9762 = vsel %vm2841, %v9758, %v9761
    %v9763 = vrot.slane %v9175, 4
    %v9764 = vsel %vm2841, %v9763, %v9123
    %v9766 = vunpack.c.l.s4 1983009808
    %v9767 = vunpack.c.0.s8 %v9766
    %v9768 = vperm.slane %v9764, %v9767
    %v9769 = vrot.slane %v9201, 4
    %v9770 = vsel %vm2841, %v9769, %v9149
    %v9772 = vunpack.c.l.s4 1983009808
    %v9773 = vunpack.c.0.s8 %v9772
    %v9774 = vperm.slane %v9770, %v9773
    %v9775 = vrot.slane %v9279, 4
    %v9776 = vsel %vm2841, %v9775, %v9227
    %v9778 = vunpack.c.l.s4 1983009808
    %v9779 = vunpack.c.0.s8 %v9778
    %v9780 = vperm.slane %v9776, %v9779
    %v9781 = vrot.slane %v9305, 4
    %v9782 = vsel %vm2841, %v9781, %v9253
    %v9784 = vunpack.c.l.s4 1983009808
    %v9785 = vunpack.c.0.s8 %v9784
    %v9786 = vperm.slane %v9782, %v9785
    %v9787 = vrot.slane %v9774, 4
    %v9788 = vsel %vm2841, %v9787, %v9768
    %v9790 = vunpack.c.l.s4 1934713408
    %v9791 = vunpack.c.0.s8 %v9790
    %v9792 = vperm.slane %v9788, %v9791
    %v9793 = vrot.slane %v9786, 4
    %v9794 = vsel %vm2841, %v9793, %v9780
    %v9796 = vunpack.c.l.s4 1934713408
    %v9797 = vunpack.c.0.s8 %v9796
    %v9798 = vperm.slane %v9794, %v9797
    %v9799 = vrot.slane %v9798, 4
    %v9800 = vsel %vm2841, %v9799, %v9792
    %v9801 = vrot.slane %v9792, 4
    %v9802 = vsel %vm2841, %v9798, %v9801
    %v9803 = vrot.slane %v9383, 4
    %v9804 = vsel %vm2841, %v9803, %v9331
    %v9806 = vunpack.c.l.s4 1983009808
    %v9807 = vunpack.c.0.s8 %v9806
    %v9808 = vperm.slane %v9804, %v9807
    %v9809 = vrot.slane %v9409, 4
    %v9810 = vsel %vm2841, %v9809, %v9357
    %v9812 = vunpack.c.l.s4 1983009808
    %v9813 = vunpack.c.0.s8 %v9812
    %v9814 = vperm.slane %v9810, %v9813
    %v9815 = vrot.slane %v9487, 4
    %v9816 = vsel %vm2841, %v9815, %v9435
    %v9818 = vunpack.c.l.s4 1983009808
    %v9819 = vunpack.c.0.s8 %v9818
    %v9820 = vperm.slane %v9816, %v9819
    %v9821 = vrot.slane %v9513, 4
    %v9822 = vsel %vm2841, %v9821, %v9461
    %v9824 = vunpack.c.l.s4 1983009808
    %v9825 = vunpack.c.0.s8 %v9824
    %v9826 = vperm.slane %v9822, %v9825
    %v9827 = vrot.slane %v9814, 4
    %v9828 = vsel %vm2841, %v9827, %v9808
    %v9830 = vunpack.c.l.s4 1934713408
    %v9831 = vunpack.c.0.s8 %v9830
    %v9832 = vperm.slane %v9828, %v9831
    %v9833 = vrot.slane %v9826, 4
    %v9834 = vsel %vm2841, %v9833, %v9820
    %v9836 = vunpack.c.l.s4 1934713408
    %v9837 = vunpack.c.0.s8 %v9836
    %v9838 = vperm.slane %v9834, %v9837
    %v9839 = vrot.slane %v9838, 4
    %v9840 = vsel %vm2841, %v9839, %v9832
    %v9841 = vrot.slane %v9832, 4
    %v9842 = vsel %vm2841, %v9838, %v9841
    %v9843 = vrot.slane %v9591, 4
    %v9844 = vsel %vm2841, %v9843, %v9539
    %v9846 = vunpack.c.l.s4 1983009808
    %v9847 = vunpack.c.0.s8 %v9846
    %v9848 = vperm.slane %v9844, %v9847
    %v9849 = vrot.slane %v9617, 4
    %v9850 = vsel %vm2841, %v9849, %v9565
    %v9852 = vunpack.c.l.s4 1983009808
    %v9853 = vunpack.c.0.s8 %v9852
    %v9854 = vperm.slane %v9850, %v9853
    %v9855 = vrot.slane %v9695, 4
    %v9856 = vsel %vm2841, %v9855, %v9643
    %v9858 = vunpack.c.l.s4 1983009808
    %v9859 = vunpack.c.0.s8 %v9858
    %v9860 = vperm.slane %v9856, %v9859
    %v9861 = vrot.slane %v9721, 4
    %v9862 = vsel %vm2841, %v9861, %v9669
    %v9864 = vunpack.c.l.s4 1983009808
    %v9865 = vunpack.c.0.s8 %v9864
    %v9866 = vperm.slane %v9862, %v9865
    %v9867 = vrot.slane %v9854, 4
    %v9868 = vsel %vm2841, %v9867, %v9848
    %v9870 = vunpack.c.l.s4 1934713408
    %v9871 = vunpack.c.0.s8 %v9870
    %v9872 = vperm.slane %v9868, %v9871
    %v9873 = vrot.slane %v9866, 4
    %v9874 = vsel %vm2841, %v9873, %v9860
    %v9876 = vunpack.c.l.s4 1934713408
    %v9877 = vunpack.c.0.s8 %v9876
    %v9878 = vperm.slane %v9874, %v9877
    %v9879 = vrot.slane %v9878, 4
    %v9880 = vsel %vm2841, %v9879, %v9872
    %v9881 = vrot.slane %v9872, 4
    %v9882 = vsel %vm2841, %v9878, %v9881
    %v9883 = vrot.slane %v9760, 4
    %v9884 = vsel %vm2841, 0.0, %v9883
    %v9886 = vunpack.c.l.s4 1983009808
    %v9887 = vunpack.c.0.s8 %v9886
    %v9888 = vperm.slane %v9760, %v9887
    %v9890 = vunpack.c.l.s4 1983009808
    %v9891 = vunpack.c.0.s8 %v9890
    %v9892 = vperm.slane %v9884, %v9891
    %v9893 = vrot.slane %v9762, 4
    %v9894 = vsel %vm2841, 0.0, %v9893
    %v9896 = vunpack.c.l.s4 1983009808
    %v9897 = vunpack.c.0.s8 %v9896
    %v9898 = vperm.slane %v9762, %v9897
    %v9900 = vunpack.c.l.s4 1983009808
    %v9901 = vunpack.c.0.s8 %v9900
    %v9902 = vperm.slane %v9894, %v9901
    %v9903 = vrot.slane %v9898, 4
    %v9904 = vsel %vm2841, %v9903, %v9888
    %v9905 = vrot.slane %v9888, 4
    %v9906 = vsel %vm2841, %v9898, %v9905
    %v9908 = vunpack.c.l.s4 1934713408
    %v9909 = vunpack.c.0.s8 %v9908
    %v9910 = vperm.slane %v9904, %v9909
    %v9912 = vunpack.c.l.s4 1934713408
    %v9913 = vunpack.c.0.s8 %v9912
    %v9914 = vperm.slane %v9906, %v9913
    %v9915 = vrot.slane %v9902, 4
    %v9916 = vsel %vm2841, %v9915, %v9892
    %v9917 = vrot.slane %v9892, 4
    %v9918 = vsel %vm2841, %v9902, %v9917
    %v9920 = vunpack.c.l.s4 1934713408
    %v9921 = vunpack.c.0.s8 %v9920
    %v9922 = vperm.slane %v9916, %v9921
    %v9924 = vunpack.c.l.s4 1934713408
    %v9925 = vunpack.c.0.s8 %v9924
    %v9926 = vperm.slane %v9918, %v9925
    %v9927 = vrot.slane %v9910, 4
    %v9928 = vsel %vm2841, 0.0, %v9927
    %v9929 = vrot.slane %v9914, 4
    %v9930 = vsel %vm2841, 0.0, %v9929
    %v9931 = vrot.slane %v9922, 4
    %v9932 = vsel %vm2841, 0.0, %v9931
    %v9933 = vrot.slane %v9926, 4
    %v9934 = vsel %vm2841, 0.0, %v9933
    %v9935 = vrot.slane %v9800, 4
    %v9936 = vsel %vm2841, 0.0, %v9935
    %v9938 = vunpack.c.l.s4 1983009808
    %v9939 = vunpack.c.0.s8 %v9938
    %v9940 = vperm.slane %v9800, %v9939
    %v9942 = vunpack.c.l.s4 1983009808
    %v9943 = vunpack.c.0.s8 %v9942
    %v9944 = vperm.slane %v9936, %v9943
    %v9945 = vrot.slane %v9802, 4
    %v9946 = vsel %vm2841, 0.0, %v9945
    %v9948 = vunpack.c.l.s4 1983009808
    %v9949 = vunpack.c.0.s8 %v9948
    %v9950 = vperm.slane %v9802, %v9949
    %v9952 = vunpack.c.l.s4 1983009808
    %v9953 = vunpack.c.0.s8 %v9952
    %v9954 = vperm.slane %v9946, %v9953
    %v9955 = vrot.slane %v9950, 4
    %v9956 = vsel %vm2841, %v9955, %v9940
    %v9957 = vrot.slane %v9940, 4
    %v9958 = vsel %vm2841, %v9950, %v9957
    %v9960 = vunpack.c.l.s4 1934713408
    %v9961 = vunpack.c.0.s8 %v9960
    %v9962 = vperm.slane %v9956, %v9961
    %v9964 = vunpack.c.l.s4 1934713408
    %v9965 = vunpack.c.0.s8 %v9964
    %v9966 = vperm.slane %v9958, %v9965
    %v9967 = vrot.slane %v9954, 4
    %v9968 = vsel %vm2841, %v9967, %v9944
    %v9969 = vrot.slane %v9944, 4
    %v9970 = vsel %vm2841, %v9954, %v9969
    %v9972 = vunpack.c.l.s4 1934713408
    %v9973 = vunpack.c.0.s8 %v9972
    %v9974 = vperm.slane %v9968, %v9973
    %v9976 = vunpack.c.l.s4 1934713408
    %v9977 = vunpack.c.0.s8 %v9976
    %v9978 = vperm.slane %v9970, %v9977
    %v9979 = vrot.slane %v9962, 4
    %v9980 = vsel %vm2841, 0.0, %v9979
    %v9981 = vrot.slane %v9966, 4
    %v9982 = vsel %vm2841, 0.0, %v9981
    %v9983 = vrot.slane %v9974, 4
    %v9984 = vsel %vm2841, 0.0, %v9983
    %v9985 = vrot.slane %v9978, 4
    %v9986 = vsel %vm2841, 0.0, %v9985
    %v9987 = vrot.slane %v9840, 4
    %v9988 = vsel %vm2841, 0.0, %v9987
    %v9990 = vunpack.c.l.s4 1983009808
    %v9991 = vunpack.c.0.s8 %v9990
    %v9992 = vperm.slane %v9840, %v9991
    %v9994 = vunpack.c.l.s4 1983009808
    %v9995 = vunpack.c.0.s8 %v9994
    %v9996 = vperm.slane %v9988, %v9995
    %v9997 = vrot.slane %v9842, 4
    %v9998 = vsel %vm2841, 0.0, %v9997
    %v10000 = vunpack.c.l.s4 1983009808
    %v10001 = vunpack.c.0.s8 %v10000
    %v10002 = vperm.slane %v9842, %v10001
    %v10004 = vunpack.c.l.s4 1983009808
    %v10005 = vunpack.c.0.s8 %v10004
    %v10006 = vperm.slane %v9998, %v10005
    %v10007 = vrot.slane %v10002, 4
    %v10008 = vsel %vm2841, %v10007, %v9992
    %v10009 = vrot.slane %v9992, 4
    %v10010 = vsel %vm2841, %v10002, %v10009
    %v10012 = vunpack.c.l.s4 1934713408
    %v10013 = vunpack.c.0.s8 %v10012
    %v10014 = vperm.slane %v10008, %v10013
    %v10016 = vunpack.c.l.s4 1934713408
    %v10017 = vunpack.c.0.s8 %v10016
    %v10018 = vperm.slane %v10010, %v10017
    %v10019 = vrot.slane %v10006, 4
    %v10020 = vsel %vm2841, %v10019, %v9996
    %v10021 = vrot.slane %v9996, 4
    %v10022 = vsel %vm2841, %v10006, %v10021
    %v10024 = vunpack.c.l.s4 1934713408
    %v10025 = vunpack.c.0.s8 %v10024
    %v10026 = vperm.slane %v10020, %v10025
    %v10028 = vunpack.c.l.s4 1934713408
    %v10029 = vunpack.c.0.s8 %v10028
    %v10030 = vperm.slane %v10022, %v10029
    %v10031 = vrot.slane %v10014, 4
    %v10032 = vsel %vm2841, 0.0, %v10031
    %v10033 = vrot.slane %v10018, 4
    %v10034 = vsel %vm2841, 0.0, %v10033
    %v10035 = vrot.slane %v10026, 4
    %v10036 = vsel %vm2841, 0.0, %v10035
    %v10037 = vrot.slane %v10030, 4
    %v10038 = vsel %vm2841, 0.0, %v10037
    %v10039 = vrot.slane %v9880, 4
    %v10040 = vsel %vm2841, 0.0, %v10039
    %v10042 = vunpack.c.l.s4 1983009808
    %v10043 = vunpack.c.0.s8 %v10042
    %v10044 = vperm.slane %v9880, %v10043
    %v10046 = vunpack.c.l.s4 1983009808
    %v10047 = vunpack.c.0.s8 %v10046
    %v10048 = vperm.slane %v10040, %v10047
    %v10049 = vrot.slane %v9882, 4
    %v10050 = vsel %vm2841, 0.0, %v10049
    %v10052 = vunpack.c.l.s4 1983009808
    %v10053 = vunpack.c.0.s8 %v10052
    %v10054 = vperm.slane %v9882, %v10053
    %v10056 = vunpack.c.l.s4 1983009808
    %v10057 = vunpack.c.0.s8 %v10056
    %v10058 = vperm.slane %v10050, %v10057
    %v10059 = vrot.slane %v10054, 4
    %v10060 = vsel %vm2841, %v10059, %v10044
    %v10061 = vrot.slane %v10044, 4
    %v10062 = vsel %vm2841, %v10054, %v10061
    %v10064 = vunpack.c.l.s4 1934713408
    %v10065 = vunpack.c.0.s8 %v10064
    %v10066 = vperm.slane %v10060, %v10065
    %v10068 = vunpack.c.l.s4 1934713408
    %v10069 = vunpack.c.0.s8 %v10068
    %v10070 = vperm.slane %v10062, %v10069
    %v10071 = vrot.slane %v10058, 4
    %v10072 = vsel %vm2841, %v10071, %v10048
    %v10073 = vrot.slane %v10048, 4
    %v10074 = vsel %vm2841, %v10058, %v10073
    %v10076 = vunpack.c.l.s4 1934713408
    %v10077 = vunpack.c.0.s8 %v10076
    %v10078 = vperm.slane %v10072, %v10077
    %v10080 = vunpack.c.l.s4 1934713408
    %v10081 = vunpack.c.0.s8 %v10080
    %v10082 = vperm.slane %v10074, %v10081
    %v10083 = vrot.slane %v10066, 4
    %v10084 = vsel %vm2841, 0.0, %v10083
    %v10085 = vrot.slane %v10070, 4
    %v10086 = vsel %vm2841, 0.0, %v10085
    %v10087 = vrot.slane %v10078, 4
    %v10088 = vsel %vm2841, 0.0, %v10087
    %v10089 = vrot.slane %v10082, 4
    %v10090 = vsel %vm2841, 0.0, %v10089
    %10092 = vrot.lane.b32.xlu0 %v9928, 8
    %v10093 = vpop.permute.xlu0 %10092
    %10096 = vrot.lane.b32.xlu0 %v9914, 16
    %v10097 = vpop.permute.xlu0 %10096
    %10100 = vrot.lane.b32.xlu0 %v9930, 24
    %v10101 = vpop.permute.xlu0 %10100
    %10104 = vrot.lane.b32.xlu0 %v9922, 32
    %v10105 = vpop.permute.xlu0 %10104
    %10108 = vrot.lane.b32.xlu0 %v9932, 40
    %v10109 = vpop.permute.xlu0 %10108
    %10112 = vrot.lane.b32.xlu0 %v9926, 48
    %v10113 = vpop.permute.xlu0 %10112
    %10116 = vrot.lane.b32.xlu0 %v9934, 56
    %v10117 = vpop.permute.xlu0 %10116
    %10120 = vrot.lane.b32.xlu0 %v9962, 64
    %v10121 = vpop.permute.xlu0 %10120
    %10124 = vrot.lane.b32.xlu0 %v9980, 72
    %v10125 = vpop.permute.xlu0 %10124
    %10128 = vrot.lane.b32.xlu0 %v9966, 80
    %v10129 = vpop.permute.xlu0 %10128
    %10132 = vrot.lane.b32.xlu0 %v9982, 88
    %v10133 = vpop.permute.xlu0 %10132
    %10136 = vrot.lane.b32.xlu0 %v9974, 96
    %v10137 = vpop.permute.xlu0 %10136
    %10140 = vrot.lane.b32.xlu0 %v9984, 104
    %v10141 = vpop.permute.xlu0 %10140
    %10144 = vrot.lane.b32.xlu0 %v9978, 112
    %v10145 = vpop.permute.xlu0 %10144
    %10148 = vrot.lane.b32.xlu0 %v9986, 120
    %v10149 = vpop.permute.xlu0 %10148
    %10152 = vrot.lane.b32.xlu0 %v10032, 8
    %v10153 = vpop.permute.xlu0 %10152
    %10156 = vrot.lane.b32.xlu0 %v10018, 16
    %v10157 = vpop.permute.xlu0 %10156
    %10160 = vrot.lane.b32.xlu0 %v10034, 24
    %v10161 = vpop.permute.xlu0 %10160
    %10164 = vrot.lane.b32.xlu0 %v10026, 32
    %v10165 = vpop.permute.xlu0 %10164
    %10168 = vrot.lane.b32.xlu0 %v10036, 40
    %v10169 = vpop.permute.xlu0 %10168
    %10172 = vrot.lane.b32.xlu0 %v10030, 48
    %v10173 = vpop.permute.xlu0 %10172
    %10176 = vrot.lane.b32.xlu0 %v10038, 56
    %v10177 = vpop.permute.xlu0 %10176
    %10180 = vrot.lane.b32.xlu0 %v10066, 64
    %v10181 = vpop.permute.xlu0 %10180
    %10184 = vrot.lane.b32.xlu0 %v10084, 72
    %v10185 = vpop.permute.xlu0 %10184
    %10188 = vrot.lane.b32.xlu0 %v10070, 80
    %v10189 = vpop.permute.xlu0 %10188
    %10192 = vrot.lane.b32.xlu0 %v10086, 88
    %v10193 = vpop.permute.xlu0 %10192
    %10196 = vrot.lane.b32.xlu0 %v10078, 96
    %v10197 = vpop.permute.xlu0 %10196
    %10200 = vrot.lane.b32.xlu0 %v10088, 104
    %v10201 = vpop.permute.xlu0 %10200
    %10204 = vrot.lane.b32.xlu0 %v10082, 112
    %v10205 = vpop.permute.xlu0 %10204
    %10208 = vrot.lane.b32.xlu0 %v10090, 120
    %v10209 = vpop.permute.xlu0 %10208
    %vm10211 = vcmask 64512
    %v10212 = vsel %vm10211, %v9910, %v10093
    %v10213 = vsel %vm198, %v10212, %v10097
    %vm10214 = vcmask 195584
    %v10215 = vsel %vm10214, %v10213, %v10101
    %v10216 = vsel %vm845, %v10215, %v10105
    %vm10217 = vcmask 326656
    %v10218 = vsel %vm10217, %v10216, %v10109
    %vm10219 = vcmask 392192
    %v10220 = vsel %vm10219, %v10218, %v10113
    %vm10221 = vcmask 457728
    %v10222 = vsel %vm10221, %v10220, %v10117
    %vm10223 = vcmask 523264
    %v10224 = vsel %vm10223, %v10222, %v10121
    %vm10225 = vcmask 588800
    %v10226 = vsel %vm10225, %v10224, %v10125
    %vm10227 = vcmask 654336
    %v10228 = vsel %vm10227, %v10226, %v10129
    %vm10229 = vcmask 719872
    %v10230 = vsel %vm10229, %v10228, %v10133
    %vm10231 = vcmask 785408
    %v10232 = vsel %vm10231, %v10230, %v10137
    %vm10233 = vcmask 850944
    %v10234 = vsel %vm10233, %v10232, %v10141
    %v10235 = vsel %vm164, %v10234, %v10145
    %vm10236 = vcmask 982016
    %v10237 = vsel %vm10236, %v10235, %v10149
    %v10238 = vsel %vm10211, %v10014, %v10153
    %v10239 = vsel %vm198, %v10238, %v10157
    %v10240 = vsel %vm10214, %v10239, %v10161
    %v10241 = vsel %vm845, %v10240, %v10165
    %v10242 = vsel %vm10217, %v10241, %v10169
    %v10243 = vsel %vm10219, %v10242, %v10173
    %v10244 = vsel %vm10221, %v10243, %v10177
    %v10245 = vsel %vm10223, %v10244, %v10181
    %v10246 = vsel %vm10225, %v10245, %v10185
    %v10247 = vsel %vm10227, %v10246, %v10189
    %v10248 = vsel %vm10229, %v10247, %v10193
    %v10249 = vsel %vm10231, %v10248, %v10197
    %v10250 = vsel %vm10233, %v10249, %v10201
    %v10251 = vsel %vm164, %v10250, %v10205
    %v10252 = vsel %vm10236, %v10251, %v10209
    %v10253 = vld [vmem:[%s18] sm:$0xff]
    %v10254 = vld [vmem:[%s18 + $0x8] sm:$0xff]
    %v10255 = vld [vmem:[%s18 + $0x10] sm:$0xff]
    %v10256 = vld [vmem:[%s18 + $0x18] sm:$0xff]
    %v10257 = vld [vmem:[%s18 + $0x20] sm:$0xff]
    %v10258 = vld [vmem:[%s18 + $0x28] sm:$0xff]
    %v10259 = vld [vmem:[%s18 + $0x30] sm:$0xff]
    %v10260 = vld [vmem:[%s18 + $0x38] sm:$0xff]
    %v10261 = vld [vmem:[%s18 + $0x40] sm:$0xff]
    %v10262 = vld [vmem:[%s18 + $0x48] sm:$0xff]
    %v10263 = vld [vmem:[%s18 + $0x50] sm:$0xff]
    %v10264 = vld [vmem:[%s18 + $0x58] sm:$0xff]
    %v10265 = vld [vmem:[%s18 + $0x60] sm:$0xff]
    %v10266 = vld [vmem:[%s18 + $0x68] sm:$0xff]
    %v10267 = vld [vmem:[%s18 + $0x70] sm:$0xff]
    %v10268 = vld [vmem:[%s18 + $0x78] sm:$0xff]
    %v10269 = vld [vmem:[%s18 + $0x80] sm:$0xff]
    %v10270 = vld [vmem:[%s18 + $0x88] sm:$0xff]
    %v10271 = vld [vmem:[%s18 + $0x90] sm:$0xff]
    %v10272 = vld [vmem:[%s18 + $0x98] sm:$0xff]
    %v10273 = vld [vmem:[%s18 + $0xa0] sm:$0xff]
    %v10274 = vld [vmem:[%s18 + $0xa8] sm:$0xff]
    %v10275 = vld [vmem:[%s18 + $0xb0] sm:$0xff]
    %v10276 = vld [vmem:[%s18 + $0xb8] sm:$0xff]
    %v10277 = vld [vmem:[%s18 + $0xc0] sm:$0xff]
    %v10278 = vld [vmem:[%s18 + $0xc8] sm:$0xff]
    %v10279 = vld [vmem:[%s18 + $0xd0] sm:$0xff]
    %v10280 = vld [vmem:[%s18 + $0xd8] sm:$0xff]
    %v10281 = vld [vmem:[%s18 + $0xe0] sm:$0xff]
    %v10282 = vld [vmem:[%s18 + $0xe8] sm:$0xff]
    %v10283 = vld [vmem:[%s18 + $0xf0] sm:$0xff]
    %v10284 = vld [vmem:[%s18 + $0xf8] sm:$0xff]
    %v10285 = vld [vmem:[%s19] sm:$0x1]
    %v10287 = vperm.slane %v10285, 0
    %10289 = vmatpush.msra.mxu0 %v10268
    %10290 = vmatpush.msra.mxu0 %v10267
    %10291 = vmatpush.msra.mxu0 %v10266
    %10292 = vmatpush.msra.mxu0 %v10265
    %10293 = vmatpush.msra.mxu0 %v10264
    %10294 = vmatpush.msra.mxu0 %v10263
    %10295 = vmatpush.msra.mxu0 %v10262
    %10296 = vmatpush.msra.mxu0 %v10261
    %10297 = vmatpush.msra.mxu0 %v10260
    %10298 = vmatpush.msra.mxu0 %v10259
    %10299 = vmatpush.msra.mxu0 %v10258
    %10300 = vmatpush.msra.mxu0 %v10257
    %10301 = vmatpush.msra.mxu0 %v10256
    %10302 = vmatpush.msra.mxu0 %v10255
    %10303 = vmatpush.msra.mxu0 %v10254
    %10304 = vmatpush.msra.mxu0 %v10253
    %10305 = vmatmul.f32.gmra.mxu0 %v10237
    %v10306 = vpop.f32.mrf.mxu0
    %v10307 = vadd.f32 %v10287, %v10306
    %10308 = vdwg.mxu0
    %10309 = vmatpush.msra.mxu0 %v10284
    %10310 = vmatpush.msra.mxu0 %v10283
    %10311 = vmatpush.msra.mxu0 %v10282
    %10312 = vmatpush.msra.mxu0 %v10281
    %10313 = vmatpush.msra.mxu0 %v10280
    %10314 = vmatpush.msra.mxu0 %v10279
    %10315 = vmatpush.msra.mxu0 %v10278
    %10316 = vmatpush.msra.mxu0 %v10277
    %10317 = vmatpush.msra.mxu0 %v10276
    %10318 = vmatpush.msra.mxu0 %v10275
    %10319 = vmatpush.msra.mxu0 %v10274
    %10320 = vmatpush.msra.mxu0 %v10273
    %10321 = vmatpush.msra.mxu0 %v10272
    %10322 = vmatpush.msra.mxu0 %v10271
    %10323 = vmatpush.msra.mxu0 %v10270
    %10324 = vmatpush.msra.mxu0 %v10269
    %10325 = vmatmul.f32.gmra.mxu0 %v10252
    %v10326 = vpop.f32.mrf.mxu0
    %v10327 = vadd.f32 %v10307, %v10326
    %10328 = vdwg.mxu0
    %vm10329 = vcmask 123904
    %10330 = vst.msk [vmem:[#allocation7] sm:$0x3] %vm10329, %v10327
    // Predicated region
    $region82: #{prototype1_forward.1} parent=1 // pred_check
      _
    $region83: #{prototype1_forward.1} parent=1 // pred_check_branch
      %10332 = sbr.rel (0) target = $region85
    $region84: #{prototype1_forward.1} parent=1 // pred_region
      %10334 = vsyncadd [#allocation8], 0
      %s10336 = sshll.u32 [#allocation7], 4
      %s10337 = int_to_ptr.vmem [resolvable:$true] %s10336
      %s10338 = sshll.u32 %s20, 4
      %s10339 = int_to_ptr.hbm [resolvable:$true] %s10338
      %10341 = dma.vmem_to_hbm [thread:$0]  %s10337, 32, %s10339, [#allocation8]
    $region85: #{prototype1_forward.1} parent=1 // pred_fallthru
      _
    // Predicated region
    $region86: #{prototype1_forward.1} parent=1 // pred_check
      _
    $region87: #{prototype1_forward.1} parent=1 // pred_check_branch
      %10343 = sbr.rel (0) target = $region89
    $region88: #{prototype1_forward.1} parent=1 // pred_region
      %10345 = dma.done [#allocation8], 32
    $region89: #{prototype1_forward.1} parent=1 // pred_fallthru
      _
    %10346 = vsyncpa [#allocation8], 1
  %10347 = vsyncmov [#allocation6]
  %s10348 = vpop.sfrf %10347
  %p10349 = scmp.eq.s32.totalorder %s10348, 0
  %p10350 = pneg %p10349
  %10352 = shalt.err (%p10350)

</llo_original>
